<compile_context>
chip_gen: v7x
topology: tpu7x:2x2x1
jax: 0.10.0
libtpu: 0.0.40
codegen_flags: <defaults>
</compile_context>

<pallas_src>
import math
import functools

import jax
import jax.numpy as jnp
from jax import lax
from jax.experimental import pallas as pl
from jax.experimental.pallas import tpu as pltpu


# --------------------------- in-kernel helpers ------------------------------

def _scalenorm(x, g, eps=1e-5):
    # g * x / max(||x||_2, eps)  ==  x * g * rsqrt(max(sum(x^2), eps^2))
    ss = jnp.sum(x * x, axis=-1, keepdims=True)
    return x * (g * lax.rsqrt(jnp.maximum(ss, eps * eps)))


def _mha_heads(q_all, k_all, v_all, bias, wo, num_heads, head_dim, scale):
    """All-head attention with the output projection folded in per head.

    q_all: [Sq, H*Dh], k_all/v_all: [Sk, H*Dh], bias: [Sq, Sk] (broadcast over
    heads), wo: [H*Dh, D].  Returns sum_h softmax(q_h k_h^T*scale + bias) v_h @ wo_h,
    i.e. attention followed by the out-projection, WITHOUT the lane-axis concat.
    """
    out = None
    for h in range(num_heads):                       # unrolled (H is small/static)
        sl = slice(h * head_dim, (h + 1) * head_dim)
        # contract the head dims directly (no materialized k.T)
        s = lax.dot_general(q_all[:, sl], k_all[:, sl],
                            (((1,), (1,)), ((), ())),
                            preferred_element_type=jnp.float32)
        s = s * scale + bias
        s = s - jnp.max(s, axis=-1, keepdims=True)
        p = jnp.exp(s)
        p = p * pl.reciprocal(jnp.sum(p, axis=-1, keepdims=True), approx=False)
        ov = jnp.dot(p, v_all[:, sl], preferred_element_type=jnp.float32)
        # W_o row-slice: 8-sublane aligned -> free, replaces the lane concat.
        contrib = jnp.dot(ov, wo[sl, :], preferred_element_type=jnp.float32)
        out = contrib if out is None else out + contrib
    return out


# --------------------------- fused stack kernels ----------------------------

def _encoder_stack_kernel(g_ref, gf_ref, x_ref, bias_ref,
                          wqkv_ref, bqkv_ref, wo_ref, bo_ref,
                          w1_ref, b1_ref, w2_ref, b2_ref,
                          o_ref, x_sc, *, num_heads, scale, eps):
    l = pl.program_id(1)
    n_layers = pl.num_programs(1)

    @pl.when(l == 0)
    def _():
        x_sc[...] = x_ref[0]                 # load the embedded source once

    x = x_sc[...]                            # [S, D] residual stream (VMEM-resident)
    D = x.shape[-1]
    Dh = D // num_heads
    bias = bias_ref[0, 0]                    # [S, S], broadcast over heads

    # sublayer 0: ScaleNorm -> fused QKV -> MHA (+ out-proj folded) -> residual
    xn = _scalenorm(x, g_ref[l, 0], eps)
    qkv = jnp.dot(xn, wqkv_ref[0], preferred_element_type=jnp.float32) + bqkv_ref[0]
    attn = _mha_heads(qkv[:, :D], qkv[:, D:2 * D], qkv[:, 2 * D:], bias,
                      wo_ref[0], num_heads, Dh, scale)
    x = x + attn + bo_ref[0]

    # sublayer 1: ScaleNorm -> FFN (ReLU) -> residual
    xn = _scalenorm(x, g_ref[l, 1], eps)
    h = jnp.maximum(jnp.dot(xn, w1_ref[0], preferred_element_type=jnp.float32)
                    + b1_ref[0], 0.0)
    x = x + jnp.dot(h, w2_ref[0], preferred_element_type=jnp.float32) + b2_ref[0]

    x_sc[...] = x

    @pl.when(l == n_layers - 1)
    def _():
        # Encoder.norm fused into the last layer step.
        o_ref[0] = _scalenorm(x, gf_ref[0, 0], eps)


def _decoder_stack_kernel(g_ref, gf_ref, y_ref, m_ref, tb_ref, sb_ref,
                          wqkv_ref, bqkv_ref, wo_ref, bo_ref,
                          cwq_ref, cbq_ref, cwkv_ref, cbkv_ref, cwo_ref, cbo_ref,
                          w1_ref, b1_ref, w2_ref, b2_ref, emb_ref,
                          o_ref, y_sc, *, num_heads, scale, eps):
    l = pl.program_id(1)
    n_layers = pl.num_programs(1)

    @pl.when(l == 0)
    def _():
        y_sc[...] = y_ref[0]                 # load the embedded target once

    y = y_sc[...]                            # [St, D]
    m = m_ref[0]                             # [Ss, D] encoder memory (already normed)
    D = y.shape[-1]
    Dh = D // num_heads
    tbias = tb_ref[0, 0]                     # [St, St]
    sbias = sb_ref[0, 0]                     # [St, Ss]

    # sublayer 0: masked self-attention
    yn = _scalenorm(y, g_ref[l, 0], eps)
    qkv = jnp.dot(yn, wqkv_ref[0], preferred_element_type=jnp.float32) + bqkv_ref[0]
    attn = _mha_heads(qkv[:, :D], qkv[:, D:2 * D], qkv[:, 2 * D:], tbias,
                      wo_ref[0], num_heads, Dh, scale)
    y = y + attn + bo_ref[0]

    # sublayer 1: cross-attention (K/V from memory, fused KV matmul)
    yn = _scalenorm(y, g_ref[l, 1], eps)
    q = jnp.dot(yn, cwq_ref[0], preferred_element_type=jnp.float32) + cbq_ref[0]
    kv = jnp.dot(m, cwkv_ref[0], preferred_element_type=jnp.float32) + cbkv_ref[0]
    attn = _mha_heads(q, kv[:, :D], kv[:, D:], sbias, cwo_ref[0],
                      num_heads, Dh, scale)
    y = y + attn + cbo_ref[0]

    # sublayer 2: FFN
    yn = _scalenorm(y, g_ref[l, 2], eps)
    h = jnp.maximum(jnp.dot(yn, w1_ref[0], preferred_element_type=jnp.float32)
                    + b1_ref[0], 0.0)
    y = y + jnp.dot(h, w2_ref[0], preferred_element_type=jnp.float32) + b2_ref[0]

    y_sc[...] = y

    @pl.when(l == n_layers - 1)
    def _():
        # Decoder.norm + out_embed(inverse=True) fused into the last layer step.
        yn = _scalenorm(y, gf_ref[0, 0], eps)
        o_ref[0] = lax.dot_general(yn, emb_ref[...], (((1,), (1,)), ((), ())),
                                   preferred_element_type=jnp.float32)


# ------------------------------ call wrappers --------------------------------

def _nbytes(*arrs):
    return int(sum(a.size * a.dtype.itemsize for a in arrs))


def _wspec(*shape):
    # Stacked layer weight: block (1, *shape), indexed by the layer grid axis.
    zeros = (0,) * len(shape)
    return pl.BlockSpec((1,) + shape, lambda b, l, _z=zeros: (l,) + _z)


_SMEM_SPEC = pl.BlockSpec(memory_space=pltpu.MemorySpace.SMEM)


def encoder_forward(p, enc_g, x, bias, num_heads):
    B, S, D = x.shape
    L = p['wqkv'].shape[0]
    F = p['w1'].shape[2]
    H = num_heads
    Dh = D // H

    flops = int(B * L * (6 * S * D * D            # fused QKV
                         + H * (4 * S * S * Dh + 2 * S * Dh * D)   # attn + wo fold
                         + 4 * S * D * F))        # FFN
    bytes_acc = (B * _nbytes(p['wqkv'], p['bqkv'], p['wo'], p['bo'],
                             p['w1'], p['b1'], p['w2'], p['b2'])
                 + 2 * _nbytes(x) + _nbytes(bias))

    return pl.pallas_call(
        functools.partial(_encoder_stack_kernel, num_heads=H,
                          scale=1.0 / math.sqrt(Dh), eps=1e-5),
        out_shape=jax.ShapeDtypeStruct((B, S, D), jnp.float32),
        grid=(B, L),                                 # batch outer (parallel), layer inner
        in_specs=[
            _SMEM_SPEC,                              # layer gains (L, 2) in SMEM
            _SMEM_SPEC,                              # final norm gain (1, 1) in SMEM
            pl.BlockSpec((1, S, D), lambda b, l: (b, 0, 0)),        # src embeds
            pl.BlockSpec((1, 1, S, S), lambda b, l: (b, 0, 0, 0)),  # bias (bcast over H)
            _wspec(D, 3 * D), _wspec(1, 3 * D),      # fused QKV
            _wspec(D, D), _wspec(1, D),              # out proj
            _wspec(D, F), _wspec(1, F),              # ffn 1
            _wspec(F, D), _wspec(1, D),              # ffn 2
        ],
        out_specs=pl.BlockSpec((1, S, D), lambda b, l: (b, 0, 0)),  # constant over l
        scratch_shapes=[pltpu.VMEM((S, D), jnp.float32)],           # residual stream
        compiler_params=pltpu.CompilerParams(
            dimension_semantics=("parallel", "arbitrary")),
        cost_estimate=pl.CostEstimate(flops=flops,
                                      transcendentals=int(B * L * (H * S * S + 3 * S)),
                                      bytes_accessed=int(bytes_acc)),
    )(p['g'], enc_g, x, bias,
      p['wqkv'], p['bqkv'], p['wo'], p['bo'],
      p['w1'], p['b1'], p['w2'], p['b2'])


def decoder_forward(p, dec_g, y, m, self_bias, cross_bias, emb, num_heads):
    B, St, D = y.shape
    Ss = m.shape[1]
    L = p['wqkv'].shape[0]
    F = p['w1'].shape[2]
    V = emb.shape[0]
    H = num_heads
    Dh = D // H

    flops = int(B * L * (6 * S_flops_helper(St, D)                 # self QKV
                         + H * (4 * St * St * Dh + 2 * St * Dh * D)
                         + 2 * St * D * D + 2 * Ss * D * 2 * D     # cross q / kv
                         + H * (4 * St * Ss * Dh + 2 * St * Dh * D)
                         + 4 * St * D * F)
                 + B * 2 * St * D * V)                             # logits
    bytes_acc = (B * _nbytes(p['wqkv'], p['bqkv'], p['wo'], p['bo'],
                             p['cwq'], p['cbq'], p['cwkv'], p['cbkv'],
                             p['cwo'], p['cbo'],
                             p['w1'], p['b1'], p['w2'], p['b2'])
                 + 2 * _nbytes(y) + _nbytes(m) + _nbytes(self_bias)
                 + _nbytes(cross_bias) + _nbytes(emb) + B * St * V * 4)

    return pl.pallas_call(
        functools.partial(_decoder_stack_kernel, num_heads=H,
                          scale=1.0 / math.sqrt(Dh), eps=1e-5),
        out_shape=jax.ShapeDtypeStruct((B, St, V), jnp.float32),
        grid=(B, L),
        in_specs=[
            _SMEM_SPEC,                              # layer gains (L, 3)
            _SMEM_SPEC,                              # final norm gain (1, 1)
            pl.BlockSpec((1, St, D), lambda b, l: (b, 0, 0)),         # tgt embeds
            pl.BlockSpec((1, Ss, D), lambda b, l: (b, 0, 0)),         # encoder memory
            pl.BlockSpec((1, 1, St, St), lambda b, l: (b, 0, 0, 0)),  # self bias
            pl.BlockSpec((1, 1, St, Ss), lambda b, l: (b, 0, 0, 0)),  # cross bias
            _wspec(D, 3 * D), _wspec(1, 3 * D),      # self fused QKV
            _wspec(D, D), _wspec(1, D),              # self out proj
            _wspec(D, D), _wspec(1, D),              # cross Q
            _wspec(D, 2 * D), _wspec(1, 2 * D),      # cross fused KV
            _wspec(D, D), _wspec(1, D),              # cross out proj
            _wspec(D, F), _wspec(1, F),              # ffn 1
            _wspec(F, D), _wspec(1, D),              # ffn 2
            pl.BlockSpec((V, D), lambda b, l: (0, 0)),                # embedding (logits)
        ],
        out_specs=pl.BlockSpec((1, St, V), lambda b, l: (b, 0, 0)),   # constant over l
        scratch_shapes=[pltpu.VMEM((St, D), jnp.float32)],
        compiler_params=pltpu.CompilerParams(
            dimension_semantics=("parallel", "arbitrary")),
        cost_estimate=pl.CostEstimate(flops=flops,
                                      transcendentals=int(B * L * H * St * (St + Ss)),
                                      bytes_accessed=int(bytes_acc)),
    )(p['g'], dec_g, y, m, self_bias, cross_bias,
      p['wqkv'], p['bqkv'], p['wo'], p['bo'],
      p['cwq'], p['cbq'], p['cwkv'], p['cbkv'], p['cwo'], p['cbo'],
      p['w1'], p['b1'], p['w2'], p['b2'], emb)


def S_flops_helper(S, D):
    return S * D * D


# -------------------------------- model glue ---------------------------------

def mask_to_bias(mask, B, Sq, Sk):
    # (B, 1, Sq, Sk) — broadcast over heads happens inside the kernel (free).
    if mask is None:
        return jnp.zeros((B, 1, Sq, Sk), jnp.float32)
    bias = jnp.where(mask, 0.0, -1e9).astype(jnp.float32)
    return jnp.broadcast_to(bias, (B, 1, Sq, Sk))


def embed(params, nums, pe, embed_dim):
    # TODO(synk): token-id gather kept as XLA glue (no win from a Pallas gather here)
    x = params['emb'][nums] * math.sqrt(embed_dim)
    S = nums.shape[1]
    return x + pe[None, :S, :]


def model_forward(params, src_nums, tgt_nums, src_mask, tgt_mask,
                  *, num_heads, embed_dim, pe):
    B, Ss = src_nums.shape
    St = tgt_nums.shape[1]

    # attention biases computed ONCE per forward (shared by all layers/heads)
    enc_bias = mask_to_bias(src_mask, B, Ss, Ss)
    dec_self_bias = mask_to_bias(tgt_mask, B, St, St)
    dec_cross_bias = mask_to_bias(src_mask, B, St, Ss)

    # encode: one pallas_call for the whole encoder stack (+ final ScaleNorm)
    x = embed(params, src_nums, pe, embed_dim)
    src_encs = encoder_forward(params['enc'], params['enc_g'], x, enc_bias, num_heads)

    # decode: one pallas_call for the whole decoder stack (+ final norm + logits)
    y = embed(params, tgt_nums, pe, embed_dim)
    logits = decoder_forward(params['dec'], params['dec_g'], y, src_encs,
                             dec_self_bias, dec_cross_bias, params['emb'], num_heads)
    return logits


# ------------------------------ initialization --------------------------------

class KeyGen:
    def __init__(self, key):
        self.key = key

    def __call__(self):
        self.key, sub = jax.random.split(self.key)
        return sub


def init_encoder_params(kg, L, D, F):
    n = lambda shape: 0.02 * jax.random.normal(kg(), shape, jnp.float32)
    z = lambda shape: jnp.zeros(shape, jnp.float32)
    return dict(
        wqkv=n((L, D, 3 * D)), bqkv=z((L, 1, 3 * D)),
        wo=n((L, D, D)), bo=z((L, 1, D)),
        w1=n((L, D, F)), b1=z((L, 1, F)),
        w2=n((L, F, D)), b2=z((L, 1, D)),
        g=jnp.full((L, 2), math.sqrt(D), jnp.float32),
    )


def init_decoder_params(kg, L, D, F):
    n = lambda shape: 0.02 * jax.random.normal(kg(), shape, jnp.float32)
    z = lambda shape: jnp.zeros(shape, jnp.float32)
    p = init_encoder_params(kg, L, D, F)
    p['g'] = jnp.full((L, 3), math.sqrt(D), jnp.float32)
    p.update(
        cwq=n((L, D, D)), cbq=z((L, 1, D)),
        cwkv=n((L, D, 2 * D)), cbkv=z((L, 1, 2 * D)),
        cwo=n((L, D, D)), cbo=z((L, 1, D)),
    )
    return p


def init_params(key, vocab_pad, D, F, num_layers):
    kg = KeyGen(key)
    enc = init_encoder_params(kg, num_layers, D, F)
    dec = init_decoder_params(kg, num_layers, D, F)
    emb = 0.02 * jax.random.normal(kg(), (vocab_pad, D), jnp.float32)
    return dict(enc=enc, dec=dec,
                enc_g=jnp.full((1, 1), math.sqrt(D), jnp.float32),
                dec_g=jnp.full((1, 1), math.sqrt(D), jnp.float32),
                emb=emb)


def make_positional_encoding(max_len, D):
    pos = jnp.arange(max_len, dtype=jnp.float32)[:, None]
    i = jnp.arange(0, D, 2, dtype=jnp.float32)[None, :]
    div = jnp.exp(-math.log(10000.0) * i / D)
    pe = jnp.zeros((max_len, D), jnp.float32)
    pe = pe.at[:, 0::2].set(jnp.sin(pos * div))
    pe = pe.at[:, 1::2].set(jnp.cos(pos * div))
    return pe


# ----------------------------------- main -------------------------------------

if __name__ == "__main__":
    vocab_dim = 128
    vocab_pad = math.ceil(vocab_dim / 8) * 8      # 128
    embed_dim = 32
    ff_dim = 64
    num_heads = 4
    num_layers = 2
    B, S_src, S_tgt = 2, 8, 8

    key = jax.random.PRNGKey(0)
    k_p, k_src, k_tgt = jax.random.split(key, 3)

    params = init_params(k_p, vocab_pad, embed_dim, ff_dim, num_layers)
    pe = make_positional_encoding(64, embed_dim)

    src_nums = jax.random.randint(k_src, (B, S_src), 0, vocab_dim, jnp.int32)
    tgt_nums = jax.random.randint(k_tgt, (B, S_tgt), 0, vocab_dim, jnp.int32)

    # src padding mask (all valid) and causal target mask
    src_mask = jnp.ones((B, 1, 1, S_src), dtype=bool)
    tgt_mask = jnp.tril(jnp.ones((S_tgt, S_tgt), dtype=bool))[None, None, :, :]

    fwd = jax.jit(functools.partial(model_forward, num_heads=num_heads,
                                    embed_dim=embed_dim, pe=pe))
    logits = fwd(params, src_nums, tgt_nums, src_mask, tgt_mask)
    jax.block_until_ready(logits)
    assert logits.shape == (B, S_tgt, vocab_pad)
    assert bool(jnp.all(jnp.isfinite(logits)))
    print("KERNEL_OK")
</pallas_src>

<mosaic_0001>
module attributes {stable_mosaic.version = 11 : i64} {
  func.func @_decoder_stack_kernel(%arg0: i32, %arg1: i32, %arg2: memref<2x3xf32, #tpu.memory_space<smem>>, %arg3: memref<1x1xf32, #tpu.memory_space<smem>>, %arg4: memref<1x8x32xf32, #tpu.memory_space<vmem>>, %arg5: memref<1x8x32xf32, #tpu.memory_space<vmem>>, %arg6: memref<1x1x8x8xf32, #tpu.memory_space<vmem>>, %arg7: memref<1x1x8x8xf32, #tpu.memory_space<vmem>>, %arg8: memref<1x32x96xf32, #tpu.memory_space<vmem>>, %arg9: memref<1x1x96xf32, #tpu.memory_space<vmem>>, %arg10: memref<1x32x32xf32, #tpu.memory_space<vmem>>, %arg11: memref<1x1x32xf32, #tpu.memory_space<vmem>>, %arg12: memref<1x32x32xf32, #tpu.memory_space<vmem>>, %arg13: memref<1x1x32xf32, #tpu.memory_space<vmem>>, %arg14: memref<1x32x64xf32, #tpu.memory_space<vmem>>, %arg15: memref<1x1x64xf32, #tpu.memory_space<vmem>>, %arg16: memref<1x32x32xf32, #tpu.memory_space<vmem>>, %arg17: memref<1x1x32xf32, #tpu.memory_space<vmem>>, %arg18: memref<1x32x64xf32, #tpu.memory_space<vmem>>, %arg19: memref<1x1x64xf32, #tpu.memory_space<vmem>>, %arg20: memref<1x64x32xf32, #tpu.memory_space<vmem>>, %arg21: memref<1x1x32xf32, #tpu.memory_space<vmem>>, %arg22: memref<128x32xf32, #tpu.memory_space<vmem>>, %arg23: memref<1x8x128xf32, #tpu.memory_space<vmem>>, %arg24: memref<8x32xf32, #tpu.memory_space<vmem>>) attributes {dimension_semantics = [#tpu.dimension_semantics<parallel>, #tpu.dimension_semantics<arbitrary>], iteration_bounds = array<i64: 2, 2>, scalar_prefetch = 0 : i64, scratch_operands = 1 : i64, tpu.core_type = #tpu.core_type<tc>, window_params = [{transform_indices = @transform_0, window_bounds = array<i64: 2, 3>}, {transform_indices = @transform_1, window_bounds = array<i64: 1, 1>}, {transform_indices = @transform_2, window_bounds = array<i64: 1, 8, 32>}, {transform_indices = @transform_3, window_bounds = array<i64: 1, 8, 32>}, {transform_indices = @transform_4, window_bounds = array<i64: 1, 1, 8, 8>}, {transform_indices = @transform_5, window_bounds = array<i64: 1, 1, 8, 8>}, {transform_indices = @transform_6, window_bounds = array<i64: 1, 32, 96>}, {transform_indices = @transform_7, window_bounds = array<i64: 1, 1, 96>}, {transform_indices = @transform_8, window_bounds = array<i64: 1, 32, 32>}, {transform_indices = @transform_9, window_bounds = array<i64: 1, 1, 32>}, {transform_indices = @transform_10, window_bounds = array<i64: 1, 32, 32>}, {transform_indices = @transform_11, window_bounds = array<i64: 1, 1, 32>}, {transform_indices = @transform_12, window_bounds = array<i64: 1, 32, 64>}, {transform_indices = @transform_13, window_bounds = array<i64: 1, 1, 64>}, {transform_indices = @transform_14, window_bounds = array<i64: 1, 32, 32>}, {transform_indices = @transform_15, window_bounds = array<i64: 1, 1, 32>}, {transform_indices = @transform_16, window_bounds = array<i64: 1, 32, 64>}, {transform_indices = @transform_17, window_bounds = array<i64: 1, 1, 64>}, {transform_indices = @transform_18, window_bounds = array<i64: 1, 64, 32>}, {transform_indices = @transform_19, window_bounds = array<i64: 1, 1, 32>}, {pipeline_mode = #tpu.pipeline_mode<synchronous>, transform_indices = @transform_20, window_bounds = array<i64: 128, 32>}, {transform_indices = @transform_21, window_bounds = array<i64: 1, 8, 128>}]} {
    %c0_i32 = arith.constant 0 : i32
    %0 = arith.cmpi eq, %arg1, %c0_i32 : i32
    %1 = arith.extui %0 : i1 to i32
    %c0_i32_0 = arith.constant 0 : i32
    %2 = arith.cmpi ne, %1, %c0_i32_0 : i32
    scf.if %2 {
      %c0_118 = arith.constant 0 : index
      %c0_119 = arith.constant 0 : index
      %c0_120 = arith.constant 0 : index
      %273 = vector.load %arg4[%c0_118, %c0_119, %c0_120] : memref<1x8x32xf32, #tpu.memory_space<vmem>>, vector<1x8x32xf32>
      %274 = vector.shape_cast %273 : vector<1x8x32xf32> to vector<8x32xf32>
      %c0_121 = arith.constant 0 : index
      %c0_122 = arith.constant 0 : index
      %275 = vector.load %arg24[%c0_121, %c0_122] : memref<8x32xf32, #tpu.memory_space<vmem>>, vector<8x32xf32>
      tpu.vector_store %arg24[%c0_121, %c0_122], %274 {strides = array<i32>} : memref<8x32xf32, #tpu.memory_space<vmem>>, vector<8x32xf32>,
    } else {
    }
    %c0 = arith.constant 0 : index
    %c0_1 = arith.constant 0 : index
    %3 = vector.load %arg24[%c0, %c0_1] : memref<8x32xf32, #tpu.memory_space<vmem>>, vector<8x32xf32>
    %c0_2 = arith.constant 0 : index
    %c0_3 = arith.constant 0 : index
    %c0_4 = arith.constant 0 : index
    %4 = vector.load %arg5[%c0_2, %c0_3, %c0_4] : memref<1x8x32xf32, #tpu.memory_space<vmem>>, vector<1x8x32xf32>
    %5 = vector.shape_cast %4 : vector<1x8x32xf32> to vector<8x32xf32>
    %c0_5 = arith.constant 0 : index
    %c0_6 = arith.constant 0 : index
    %c0_7 = arith.constant 0 : index
    %c0_8 = arith.constant 0 : index
    %6 = vector.load %arg6[%c0_5, %c0_6, %c0_7, %c0_8] : memref<1x1x8x8xf32, #tpu.memory_space<vmem>>, vector<1x1x8x8xf32>
    %7 = vector.shape_cast %6 : vector<1x1x8x8xf32> to vector<8x8xf32>
    %c0_9 = arith.constant 0 : index
    %c0_10 = arith.constant 0 : index
    %c0_11 = arith.constant 0 : index
    %c0_12 = arith.constant 0 : index
    %8 = vector.load %arg7[%c0_9, %c0_10, %c0_11, %c0_12] : memref<1x1x8x8xf32, #tpu.memory_space<vmem>>, vector<1x1x8x8xf32>
    %9 = vector.shape_cast %8 : vector<1x1x8x8xf32> to vector<8x8xf32>
    %10 = arith.index_cast %arg1 : i32 to index
    %c0_13 = arith.constant 0 : index
    %11 = memref.load %arg2[%10, %c0_13] : memref<2x3xf32, #tpu.memory_space<smem>>
    %12 = arith.mulf %3, %3 : vector<8x32xf32>
    %cst = arith.constant dense<0.000000e+00> : vector<8xf32>
    %13 = vector.multi_reduction <add>, %12, %cst [1] : vector<8x32xf32> to vector<8xf32>
    %14 = vector.shape_cast %13 : vector<8xf32> to vector<8x1xf32>
    %cst_14 = arith.constant 1.000000e-10 : f32
    %15 = vector.broadcast %cst_14 : f32 to vector<8x1xf32>
    %16 = arith.maximumf %14, %15 : vector<8x1xf32>
    %17 = math.rsqrt %16 : vector<8x1xf32>
    %18 = vector.broadcast %11 : f32 to vector<8x1xf32>
    %19 = arith.mulf %18, %17 : vector<8x1xf32>
    %20 = vector.broadcast %19 : vector<8x1xf32> to vector<8x32xf32>
    %21 = arith.mulf %3, %20 : vector<8x32xf32>
    %c0_15 = arith.constant 0 : index
    %c0_16 = arith.constant 0 : index
    %c0_17 = arith.constant 0 : index
    %22 = vector.load %arg8[%c0_15, %c0_16, %c0_17] : memref<1x32x96xf32, #tpu.memory_space<vmem>>, vector<1x32x96xf32>
    %23 = vector.shape_cast %22 : vector<1x32x96xf32> to vector<32x96xf32>
    %cst_18 = arith.constant dense<0.000000e+00> : vector<8x96xf32>
    %24 = tpu.matmul %21, %23, %cst_18 {dimension_numbers = #tpu.dot_dimension_numbers<[1], [0], [0], [1], [0, 0, 1, 1], [], []>} : vector<8x32xf32>, vector<32x96xf32>, vector<8x96xf32> -> vector<8x96xf32>
    %c0_19 = arith.constant 0 : index
    %c0_20 = arith.constant 0 : index
    %c0_21 = arith.constant 0 : index
    %25 = vector.load %arg9[%c0_19, %c0_20, %c0_21] : memref<1x1x96xf32, #tpu.memory_space<vmem>>, vector<1x1x96xf32>
    %26 = vector.shape_cast %25 : vector<1x1x96xf32> to vector<1x96xf32>
    %27 = vector.broadcast %26 : vector<1x96xf32> to vector<8x96xf32>
    %28 = arith.addf %24, %27 : vector<8x96xf32>
    %29 = vector.extract_strided_slice %28 {offsets = [0, 0], sizes = [8, 32], strides = [1, 1]} : vector<8x96xf32> to vector<8x32xf32>
    %30 = vector.extract_strided_slice %28 {offsets = [0, 32], sizes = [8, 32], strides = [1, 1]} : vector<8x96xf32> to vector<8x32xf32>
    %31 = vector.extract_strided_slice %28 {offsets = [0, 64], sizes = [8, 32], strides = [1, 1]} : vector<8x96xf32> to vector<8x32xf32>
    %c0_22 = arith.constant 0 : index
    %c0_23 = arith.constant 0 : index
    %c0_24 = arith.constant 0 : index
    %32 = vector.load %arg10[%c0_22, %c0_23, %c0_24] : memref<1x32x32xf32, #tpu.memory_space<vmem>>, vector<1x32x32xf32>
    %33 = vector.shape_cast %32 : vector<1x32x32xf32> to vector<32x32xf32>
    %34 = vector.extract_strided_slice %29 {offsets = [0, 0], sizes = [8, 8], strides = [1, 1]} : vector<8x32xf32> to vector<8x8xf32>
    %35 = vector.extract_strided_slice %30 {offsets = [0, 0], sizes = [8, 8], strides = [1, 1]} : vector<8x32xf32> to vector<8x8xf32>
    %cst_25 = arith.constant dense<0.000000e+00> : vector<8x8xf32>
    %36 = tpu.matmul %34, %35, %cst_25 {dimension_numbers = #tpu.dot_dimension_numbers<[1], [1], [0], [0], [0, 0, 1, 0], [], []>} : vector<8x8xf32>, vector<8x8xf32>, vector<8x8xf32> -> vector<8x8xf32>
    %cst_26 = arith.constant 0.353553385 : f32
    %37 = vector.broadcast %cst_26 : f32 to vector<8x8xf32>
    %38 = arith.mulf %36, %37 : vector<8x8xf32>
    %39 = arith.addf %38, %7 : vector<8x8xf32>
    %cst_27 = arith.constant dense<0xFF800000> : vector<8xf32>
    %40 = vector.multi_reduction <maximumf>, %39, %cst_27 [1] : vector<8x8xf32> to vector<8xf32>
    %41 = vector.shape_cast %40 : vector<8xf32> to vector<8x1xf32>
    %42 = vector.broadcast %41 : vector<8x1xf32> to vector<8x8xf32>
    %43 = arith.subf %39, %42 : vector<8x8xf32>
    %44 = math.exp %43 : vector<8x8xf32>
    %cst_28 = arith.constant dense<0.000000e+00> : vector<8xf32>
    %45 = vector.multi_reduction <add>, %44, %cst_28 [1] : vector<8x8xf32> to vector<8xf32>
    %46 = vector.shape_cast %45 : vector<8xf32> to vector<8x1xf32>
    %47 = tpu.reciprocal %46 : vector<8x1xf32> -> vector<8x1xf32>
    %48 = vector.broadcast %47 : vector<8x1xf32> to vector<8x8xf32>
    %49 = arith.mulf %44, %48 : vector<8x8xf32>
    %50 = vector.extract_strided_slice %31 {offsets = [0, 0], sizes = [8, 8], strides = [1, 1]} : vector<8x32xf32> to vector<8x8xf32>
    %cst_29 = arith.constant dense<0.000000e+00> : vector<8x8xf32>
    %51 = tpu.matmul %49, %50, %cst_29 {dimension_numbers = #tpu.dot_dimension_numbers<[1], [0], [0], [1], [0, 0, 1, 1], [], []>} : vector<8x8xf32>, vector<8x8xf32>, vector<8x8xf32> -> vector<8x8xf32>
    %52 = vector.extract_strided_slice %33 {offsets = [0, 0], sizes = [8, 32], strides = [1, 1]} : vector<32x32xf32> to vector<8x32xf32>
    %cst_30 = arith.constant dense<0.000000e+00> : vector<8x32xf32>
    %53 = tpu.matmul %51, %52, %cst_30 {dimension_numbers = #tpu.dot_dimension_numbers<[1], [0], [0], [1], [0, 0, 1, 1], [], []>} : vector<8x8xf32>, vector<8x32xf32>, vector<8x32xf32> -> vector<8x32xf32>
    %54 = vector.extract_strided_slice %29 {offsets = [0, 8], sizes = [8, 8], strides = [1, 1]} : vector<8x32xf32> to vector<8x8xf32>
    %55 = vector.extract_strided_slice %30 {offsets = [0, 8], sizes = [8, 8], strides = [1, 1]} : vector<8x32xf32> to vector<8x8xf32>
    %cst_31 = arith.constant dense<0.000000e+00> : vector<8x8xf32>
    %56 = tpu.matmul %54, %55, %cst_31 {dimension_numbers = #tpu.dot_dimension_numbers<[1], [1], [0], [0], [0, 0, 1, 0], [], []>} : vector<8x8xf32>, vector<8x8xf32>, vector<8x8xf32> -> vector<8x8xf32>
    %cst_32 = arith.constant 0.353553385 : f32
    %57 = vector.broadcast %cst_32 : f32 to vector<8x8xf32>
    %58 = arith.mulf %56, %57 : vector<8x8xf32>
    %59 = arith.addf %58, %7 : vector<8x8xf32>
    %cst_33 = arith.constant dense<0xFF800000> : vector<8xf32>
    %60 = vector.multi_reduction <maximumf>, %59, %cst_33 [1] : vector<8x8xf32> to vector<8xf32>
    %61 = vector.shape_cast %60 : vector<8xf32> to vector<8x1xf32>
    %62 = vector.broadcast %61 : vector<8x1xf32> to vector<8x8xf32>
    %63 = arith.subf %59, %62 : vector<8x8xf32>
    %64 = math.exp %63 : vector<8x8xf32>
    %cst_34 = arith.constant dense<0.000000e+00> : vector<8xf32>
    %65 = vector.multi_reduction <add>, %64, %cst_34 [1] : vector<8x8xf32> to vector<8xf32>
    %66 = vector.shape_cast %65 : vector<8xf32> to vector<8x1xf32>
    %67 = tpu.reciprocal %66 : vector<8x1xf32> -> vector<8x1xf32>
    %68 = vector.broadcast %67 : vector<8x1xf32> to vector<8x8xf32>
    %69 = arith.mulf %64, %68 : vector<8x8xf32>
    %70 = vector.extract_strided_slice %31 {offsets = [0, 8], sizes = [8, 8], strides = [1, 1]} : vector<8x32xf32> to vector<8x8xf32>
    %cst_35 = arith.constant dense<0.000000e+00> : vector<8x8xf32>
    %71 = tpu.matmul %69, %70, %cst_35 {dimension_numbers = #tpu.dot_dimension_numbers<[1], [0], [0], [1], [0, 0, 1, 1], [], []>} : vector<8x8xf32>, vector<8x8xf32>, vector<8x8xf32> -> vector<8x8xf32>
    %72 = vector.extract_strided_slice %33 {offsets = [8, 0], sizes = [8, 32], strides = [1, 1]} : vector<32x32xf32> to vector<8x32xf32>
    %cst_36 = arith.constant dense<0.000000e+00> : vector<8x32xf32>
    %73 = tpu.matmul %71, %72, %cst_36 {dimension_numbers = #tpu.dot_dimension_numbers<[1], [0], [0], [1], [0, 0, 1, 1], [], []>} : vector<8x8xf32>, vector<8x32xf32>, vector<8x32xf32> -> vector<8x32xf32>
    %74 = arith.addf %53, %73 : vector<8x32xf32>
    %75 = vector.extract_strided_slice %29 {offsets = [0, 16], sizes = [8, 8], strides = [1, 1]} : vector<8x32xf32> to vector<8x8xf32>
    %76 = vector.extract_strided_slice %30 {offsets = [0, 16], sizes = [8, 8], strides = [1, 1]} : vector<8x32xf32> to vector<8x8xf32>
    %cst_37 = arith.constant dense<0.000000e+00> : vector<8x8xf32>
    %77 = tpu.matmul %75, %76, %cst_37 {dimension_numbers = #tpu.dot_dimension_numbers<[1], [1], [0], [0], [0, 0, 1, 0], [], []>} : vector<8x8xf32>, vector<8x8xf32>, vector<8x8xf32> -> vector<8x8xf32>
    %cst_38 = arith.constant 0.353553385 : f32
    %78 = vector.broadcast %cst_38 : f32 to vector<8x8xf32>
    %79 = arith.mulf %77, %78 : vector<8x8xf32>
    %80 = arith.addf %79, %7 : vector<8x8xf32>
    %cst_39 = arith.constant dense<0xFF800000> : vector<8xf32>
    %81 = vector.multi_reduction <maximumf>, %80, %cst_39 [1] : vector<8x8xf32> to vector<8xf32>
    %82 = vector.shape_cast %81 : vector<8xf32> to vector<8x1xf32>
    %83 = vector.broadcast %82 : vector<8x1xf32> to vector<8x8xf32>
    %84 = arith.subf %80, %83 : vector<8x8xf32>
    %85 = math.exp %84 : vector<8x8xf32>
    %cst_40 = arith.constant dense<0.000000e+00> : vector<8xf32>
    %86 = vector.multi_reduction <add>, %85, %cst_40 [1] : vector<8x8xf32> to vector<8xf32>
    %87 = vector.shape_cast %86 : vector<8xf32> to vector<8x1xf32>
    %88 = tpu.reciprocal %87 : vector<8x1xf32> -> vector<8x1xf32>
    %89 = vector.broadcast %88 : vector<8x1xf32> to vector<8x8xf32>
    %90 = arith.mulf %85, %89 : vector<8x8xf32>
    %91 = vector.extract_strided_slice %31 {offsets = [0, 16], sizes = [8, 8], strides = [1, 1]} : vector<8x32xf32> to vector<8x8xf32>
    %cst_41 = arith.constant dense<0.000000e+00> : vector<8x8xf32>
    %92 = tpu.matmul %90, %91, %cst_41 {dimension_numbers = #tpu.dot_dimension_numbers<[1], [0], [0], [1], [0, 0, 1, 1], [], []>} : vector<8x8xf32>, vector<8x8xf32>, vector<8x8xf32> -> vector<8x8xf32>
    %93 = vector.extract_strided_slice %33 {offsets = [16, 0], sizes = [8, 32], strides = [1, 1]} : vector<32x32xf32> to vector<8x32xf32>
    %cst_42 = arith.constant dense<0.000000e+00> : vector<8x32xf32>
    %94 = tpu.matmul %92, %93, %cst_42 {dimension_numbers = #tpu.dot_dimension_numbers<[1], [0], [0], [1], [0, 0, 1, 1], [], []>} : vector<8x8xf32>, vector<8x32xf32>, vector<8x32xf32> -> vector<8x32xf32>
    %95 = arith.addf %74, %94 : vector<8x32xf32>
    %96 = vector.extract_strided_slice %29 {offsets = [0, 24], sizes = [8, 8], strides = [1, 1]} : vector<8x32xf32> to vector<8x8xf32>
    %97 = vector.extract_strided_slice %30 {offsets = [0, 24], sizes = [8, 8], strides = [1, 1]} : vector<8x32xf32> to vector<8x8xf32>
    %cst_43 = arith.constant dense<0.000000e+00> : vector<8x8xf32>
    %98 = tpu.matmul %96, %97, %cst_43 {dimension_numbers = #tpu.dot_dimension_numbers<[1], [1], [0], [0], [0, 0, 1, 0], [], []>} : vector<8x8xf32>, vector<8x8xf32>, vector<8x8xf32> -> vector<8x8xf32>
    %cst_44 = arith.constant 0.353553385 : f32
    %99 = vector.broadcast %cst_44 : f32 to vector<8x8xf32>
    %100 = arith.mulf %98, %99 : vector<8x8xf32>
    %101 = arith.addf %100, %7 : vector<8x8xf32>
    %cst_45 = arith.constant dense<0xFF800000> : vector<8xf32>
    %102 = vector.multi_reduction <maximumf>, %101, %cst_45 [1] : vector<8x8xf32> to vector<8xf32>
    %103 = vector.shape_cast %102 : vector<8xf32> to vector<8x1xf32>
    %104 = vector.broadcast %103 : vector<8x1xf32> to vector<8x8xf32>
    %105 = arith.subf %101, %104 : vector<8x8xf32>
    %106 = math.exp %105 : vector<8x8xf32>
    %cst_46 = arith.constant dense<0.000000e+00> : vector<8xf32>
    %107 = vector.multi_reduction <add>, %106, %cst_46 [1] : vector<8x8xf32> to vector<8xf32>
    %108 = vector.shape_cast %107 : vector<8xf32> to vector<8x1xf32>
    %109 = tpu.reciprocal %108 : vector<8x1xf32> -> vector<8x1xf32>
    %110 = vector.broadcast %109 : vector<8x1xf32> to vector<8x8xf32>
    %111 = arith.mulf %106, %110 : vector<8x8xf32>
    %112 = vector.extract_strided_slice %31 {offsets = [0, 24], sizes = [8, 8], strides = [1, 1]} : vector<8x32xf32> to vector<8x8xf32>
    %cst_47 = arith.constant dense<0.000000e+00> : vector<8x8xf32>
    %113 = tpu.matmul %111, %112, %cst_47 {dimension_numbers = #tpu.dot_dimension_numbers<[1], [0], [0], [1], [0, 0, 1, 1], [], []>} : vector<8x8xf32>, vector<8x8xf32>, vector<8x8xf32> -> vector<8x8xf32>
    %114 = vector.extract_strided_slice %33 {offsets = [24, 0], sizes = [8, 32], strides = [1, 1]} : vector<32x32xf32> to vector<8x32xf32>
    %cst_48 = arith.constant dense<0.000000e+00> : vector<8x32xf32>
    %115 = tpu.matmul %113, %114, %cst_48 {dimension_numbers = #tpu.dot_dimension_numbers<[1], [0], [0], [1], [0, 0, 1, 1], [], []>} : vector<8x8xf32>, vector<8x32xf32>, vector<8x32xf32> -> vector<8x32xf32>
    %116 = arith.addf %95, %115 : vector<8x32xf32>
    %117 = arith.addf %3, %116 : vector<8x32xf32>
    %c0_49 = arith.constant 0 : index
    %c0_50 = arith.constant 0 : index
    %c0_51 = arith.constant 0 : index
    %118 = vector.load %arg11[%c0_49, %c0_50, %c0_51] : memref<1x1x32xf32, #tpu.memory_space<vmem>>, vector<1x1x32xf32>
    %119 = vector.shape_cast %118 : vector<1x1x32xf32> to vector<1x32xf32>
    %120 = vector.broadcast %119 : vector<1x32xf32> to vector<8x32xf32>
    %121 = arith.addf %117, %120 : vector<8x32xf32>
    %122 = arith.index_cast %arg1 : i32 to index
    %c1 = arith.constant 1 : index
    %123 = memref.load %arg2[%122, %c1] : memref<2x3xf32, #tpu.memory_space<smem>>
    %124 = arith.mulf %121, %121 : vector<8x32xf32>
    %cst_52 = arith.constant dense<0.000000e+00> : vector<8xf32>
    %125 = vector.multi_reduction <add>, %124, %cst_52 [1] : vector<8x32xf32> to vector<8xf32>
    %126 = vector.shape_cast %125 : vector<8xf32> to vector<8x1xf32>
    %cst_53 = arith.constant 1.000000e-10 : f32
    %127 = vector.broadcast %cst_53 : f32 to vector<8x1xf32>
    %128 = arith.maximumf %126, %127 : vector<8x1xf32>
    %129 = math.rsqrt %128 : vector<8x1xf32>
    %130 = vector.broadcast %123 : f32 to vector<8x1xf32>
    %131 = arith.mulf %130, %129 : vector<8x1xf32>
    %132 = vector.broadcast %131 : vector<8x1xf32> to vector<8x32xf32>
    %133 = arith.mulf %121, %132 : vector<8x32xf32>
    %c0_54 = arith.constant 0 : index
    %c0_55 = arith.constant 0 : index
    %c0_56 = arith.constant 0 : index
    %134 = vector.load %arg12[%c0_54, %c0_55, %c0_56] : memref<1x32x32xf32, #tpu.memory_space<vmem>>, vector<1x32x32xf32>
    %135 = vector.shape_cast %134 : vector<1x32x32xf32> to vector<32x32xf32>
    %cst_57 = arith.constant dense<0.000000e+00> : vector<8x32xf32>
    %136 = tpu.matmul %133, %135, %cst_57 {dimension_numbers = #tpu.dot_dimension_numbers<[1], [0], [0], [1], [0, 0, 1, 1], [], []>} : vector<8x32xf32>, vector<32x32xf32>, vector<8x32xf32> -> vector<8x32xf32>
    %c0_58 = arith.constant 0 : index
    %c0_59 = arith.constant 0 : index
    %c0_60 = arith.constant 0 : index
    %137 = vector.load %arg13[%c0_58, %c0_59, %c0_60] : memref<1x1x32xf32, #tpu.memory_space<vmem>>, vector<1x1x32xf32>
    %138 = vector.shape_cast %137 : vector<1x1x32xf32> to vector<1x32xf32>
    %139 = vector.broadcast %138 : vector<1x32xf32> to vector<8x32xf32>
    %140 = arith.addf %136, %139 : vector<8x32xf32>
    %c0_61 = arith.constant 0 : index
    %c0_62 = arith.constant 0 : index
    %c0_63 = arith.constant 0 : index
    %141 = vector.load %arg14[%c0_61, %c0_62, %c0_63] : memref<1x32x64xf32, #tpu.memory_space<vmem>>, vector<1x32x64xf32>
    %142 = vector.shape_cast %141 : vector<1x32x64xf32> to vector<32x64xf32>
    %cst_64 = arith.constant dense<0.000000e+00> : vector<8x64xf32>
    %143 = tpu.matmul %5, %142, %cst_64 {dimension_numbers = #tpu.dot_dimension_numbers<[1], [0], [0], [1], [0, 0, 1, 1], [], []>} : vector<8x32xf32>, vector<32x64xf32>, vector<8x64xf32> -> vector<8x64xf32>
    %c0_65 = arith.constant 0 : index
    %c0_66 = arith.constant 0 : index
    %c0_67 = arith.constant 0 : index
    %144 = vector.load %arg15[%c0_65, %c0_66, %c0_67] : memref<1x1x64xf32, #tpu.memory_space<vmem>>, vector<1x1x64xf32>
    %145 = vector.shape_cast %144 : vector<1x1x64xf32> to vector<1x64xf32>
    %146 = vector.broadcast %145 : vector<1x64xf32> to vector<8x64xf32>
    %147 = arith.addf %143, %146 : vector<8x64xf32>
    %148 = vector.extract_strided_slice %147 {offsets = [0, 0], sizes = [8, 32], strides = [1, 1]} : vector<8x64xf32> to vector<8x32xf32>
    %149 = vector.extract_strided_slice %147 {offsets = [0, 32], sizes = [8, 32], strides = [1, 1]} : vector<8x64xf32> to vector<8x32xf32>
    %c0_68 = arith.constant 0 : index
    %c0_69 = arith.constant 0 : index
    %c0_70 = arith.constant 0 : index
    %150 = vector.load %arg16[%c0_68, %c0_69, %c0_70] : memref<1x32x32xf32, #tpu.memory_space<vmem>>, vector<1x32x32xf32>
    %151 = vector.shape_cast %150 : vector<1x32x32xf32> to vector<32x32xf32>
    %152 = vector.extract_strided_slice %140 {offsets = [0, 0], sizes = [8, 8], strides = [1, 1]} : vector<8x32xf32> to vector<8x8xf32>
    %153 = vector.extract_strided_slice %148 {offsets = [0, 0], sizes = [8, 8], strides = [1, 1]} : vector<8x32xf32> to vector<8x8xf32>
    %cst_71 = arith.constant dense<0.000000e+00> : vector<8x8xf32>
    %154 = tpu.matmul %152, %153, %cst_71 {dimension_numbers = #tpu.dot_dimension_numbers<[1], [1], [0], [0], [0, 0, 1, 0], [], []>} : vector<8x8xf32>, vector<8x8xf32>, vector<8x8xf32> -> vector<8x8xf32>
    %cst_72 = arith.constant 0.353553385 : f32
    %155 = vector.broadcast %cst_72 : f32 to vector<8x8xf32>
    %156 = arith.mulf %154, %155 : vector<8x8xf32>
    %157 = arith.addf %156, %9 : vector<8x8xf32>
    %cst_73 = arith.constant dense<0xFF800000> : vector<8xf32>
    %158 = vector.multi_reduction <maximumf>, %157, %cst_73 [1] : vector<8x8xf32> to vector<8xf32>
    %159 = vector.shape_cast %158 : vector<8xf32> to vector<8x1xf32>
    %160 = vector.broadcast %159 : vector<8x1xf32> to vector<8x8xf32>
    %161 = arith.subf %157, %160 : vector<8x8xf32>
    %162 = math.exp %161 : vector<8x8xf32>
    %cst_74 = arith.constant dense<0.000000e+00> : vector<8xf32>
    %163 = vector.multi_reduction <add>, %162, %cst_74 [1] : vector<8x8xf32> to vector<8xf32>
    %164 = vector.shape_cast %163 : vector<8xf32> to vector<8x1xf32>
    %165 = tpu.reciprocal %164 : vector<8x1xf32> -> vector<8x1xf32>
    %166 = vector.broadcast %165 : vector<8x1xf32> to vector<8x8xf32>
    %167 = arith.mulf %162, %166 : vector<8x8xf32>
    %168 = vector.extract_strided_slice %149 {offsets = [0, 0], sizes = [8, 8], strides = [1, 1]} : vector<8x32xf32> to vector<8x8xf32>
    %cst_75 = arith.constant dense<0.000000e+00> : vector<8x8xf32>
    %169 = tpu.matmul %167, %168, %cst_75 {dimension_numbers = #tpu.dot_dimension_numbers<[1], [0], [0], [1], [0, 0, 1, 1], [], []>} : vector<8x8xf32>, vector<8x8xf32>, vector<8x8xf32> -> vector<8x8xf32>
    %170 = vector.extract_strided_slice %151 {offsets = [0, 0], sizes = [8, 32], strides = [1, 1]} : vector<32x32xf32> to vector<8x32xf32>
    %cst_76 = arith.constant dense<0.000000e+00> : vector<8x32xf32>
    %171 = tpu.matmul %169, %170, %cst_76 {dimension_numbers = #tpu.dot_dimension_numbers<[1], [0], [0], [1], [0, 0, 1, 1], [], []>} : vector<8x8xf32>, vector<8x32xf32>, vector<8x32xf32> -> vector<8x32xf32>
    %172 = vector.extract_strided_slice %140 {offsets = [0, 8], sizes = [8, 8], strides = [1, 1]} : vector<8x32xf32> to vector<8x8xf32>
    %173 = vector.extract_strided_slice %148 {offsets = [0, 8], sizes = [8, 8], strides = [1, 1]} : vector<8x32xf32> to vector<8x8xf32>
    %cst_77 = arith.constant dense<0.000000e+00> : vector<8x8xf32>
    %174 = tpu.matmul %172, %173, %cst_77 {dimension_numbers = #tpu.dot_dimension_numbers<[1], [1], [0], [0], [0, 0, 1, 0], [], []>} : vector<8x8xf32>, vector<8x8xf32>, vector<8x8xf32> -> vector<8x8xf32>
    %cst_78 = arith.constant 0.353553385 : f32
    %175 = vector.broadcast %cst_78 : f32 to vector<8x8xf32>
    %176 = arith.mulf %174, %175 : vector<8x8xf32>
    %177 = arith.addf %176, %9 : vector<8x8xf32>
    %cst_79 = arith.constant dense<0xFF800000> : vector<8xf32>
    %178 = vector.multi_reduction <maximumf>, %177, %cst_79 [1] : vector<8x8xf32> to vector<8xf32>
    %179 = vector.shape_cast %178 : vector<8xf32> to vector<8x1xf32>
    %180 = vector.broadcast %179 : vector<8x1xf32> to vector<8x8xf32>
    %181 = arith.subf %177, %180 : vector<8x8xf32>
    %182 = math.exp %181 : vector<8x8xf32>
    %cst_80 = arith.constant dense<0.000000e+00> : vector<8xf32>
    %183 = vector.multi_reduction <add>, %182, %cst_80 [1] : vector<8x8xf32> to vector<8xf32>
    %184 = vector.shape_cast %183 : vector<8xf32> to vector<8x1xf32>
    %185 = tpu.reciprocal %184 : vector<8x1xf32> -> vector<8x1xf32>
    %186 = vector.broadcast %185 : vector<8x1xf32> to vector<8x8xf32>
    %187 = arith.mulf %182, %186 : vector<8x8xf32>
    %188 = vector.extract_strided_slice %149 {offsets = [0, 8], sizes = [8, 8], strides = [1, 1]} : vector<8x32xf32> to vector<8x8xf32>
    %cst_81 = arith.constant dense<0.000000e+00> : vector<8x8xf32>
    %189 = tpu.matmul %187, %188, %cst_81 {dimension_numbers = #tpu.dot_dimension_numbers<[1], [0], [0], [1], [0, 0, 1, 1], [], []>} : vector<8x8xf32>, vector<8x8xf32>, vector<8x8xf32> -> vector<8x8xf32>
    %190 = vector.extract_strided_slice %151 {offsets = [8, 0], sizes = [8, 32], strides = [1, 1]} : vector<32x32xf32> to vector<8x32xf32>
    %cst_82 = arith.constant dense<0.000000e+00> : vector<8x32xf32>
    %191 = tpu.matmul %189, %190, %cst_82 {dimension_numbers = #tpu.dot_dimension_numbers<[1], [0], [0], [1], [0, 0, 1, 1], [], []>} : vector<8x8xf32>, vector<8x32xf32>, vector<8x32xf32> -> vector<8x32xf32>
    %192 = arith.addf %171, %191 : vector<8x32xf32>
    %193 = vector.extract_strided_slice %140 {offsets = [0, 16], sizes = [8, 8], strides = [1, 1]} : vector<8x32xf32> to vector<8x8xf32>
    %194 = vector.extract_strided_slice %148 {offsets = [0, 16], sizes = [8, 8], strides = [1, 1]} : vector<8x32xf32> to vector<8x8xf32>
    %cst_83 = arith.constant dense<0.000000e+00> : vector<8x8xf32>
    %195 = tpu.matmul %193, %194, %cst_83 {dimension_numbers = #tpu.dot_dimension_numbers<[1], [1], [0], [0], [0, 0, 1, 0], [], []>} : vector<8x8xf32>, vector<8x8xf32>, vector<8x8xf32> -> vector<8x8xf32>
    %cst_84 = arith.constant 0.353553385 : f32
    %196 = vector.broadcast %cst_84 : f32 to vector<8x8xf32>
    %197 = arith.mulf %195, %196 : vector<8x8xf32>
    %198 = arith.addf %197, %9 : vector<8x8xf32>
    %cst_85 = arith.constant dense<0xFF800000> : vector<8xf32>
    %199 = vector.multi_reduction <maximumf>, %198, %cst_85 [1] : vector<8x8xf32> to vector<8xf32>
    %200 = vector.shape_cast %199 : vector<8xf32> to vector<8x1xf32>
    %201 = vector.broadcast %200 : vector<8x1xf32> to vector<8x8xf32>
    %202 = arith.subf %198, %201 : vector<8x8xf32>
    %203 = math.exp %202 : vector<8x8xf32>
    %cst_86 = arith.constant dense<0.000000e+00> : vector<8xf32>
    %204 = vector.multi_reduction <add>, %203, %cst_86 [1] : vector<8x8xf32> to vector<8xf32>
    %205 = vector.shape_cast %204 : vector<8xf32> to vector<8x1xf32>
    %206 = tpu.reciprocal %205 : vector<8x1xf32> -> vector<8x1xf32>
    %207 = vector.broadcast %206 : vector<8x1xf32> to vector<8x8xf32>
    %208 = arith.mulf %203, %207 : vector<8x8xf32>
    %209 = vector.extract_strided_slice %149 {offsets = [0, 16], sizes = [8, 8], strides = [1, 1]} : vector<8x32xf32> to vector<8x8xf32>
    %cst_87 = arith.constant dense<0.000000e+00> : vector<8x8xf32>
    %210 = tpu.matmul %208, %209, %cst_87 {dimension_numbers = #tpu.dot_dimension_numbers<[1], [0], [0], [1], [0, 0, 1, 1], [], []>} : vector<8x8xf32>, vector<8x8xf32>, vector<8x8xf32> -> vector<8x8xf32>
    %211 = vector.extract_strided_slice %151 {offsets = [16, 0], sizes = [8, 32], strides = [1, 1]} : vector<32x32xf32> to vector<8x32xf32>
    %cst_88 = arith.constant dense<0.000000e+00> : vector<8x32xf32>
    %212 = tpu.matmul %210, %211, %cst_88 {dimension_numbers = #tpu.dot_dimension_numbers<[1], [0], [0], [1], [0, 0, 1, 1], [], []>} : vector<8x8xf32>, vector<8x32xf32>, vector<8x32xf32> -> vector<8x32xf32>
    %213 = arith.addf %192, %212 : vector<8x32xf32>
    %214 = vector.extract_strided_slice %140 {offsets = [0, 24], sizes = [8, 8], strides = [1, 1]} : vector<8x32xf32> to vector<8x8xf32>
    %215 = vector.extract_strided_slice %148 {offsets = [0, 24], sizes = [8, 8], strides = [1, 1]} : vector<8x32xf32> to vector<8x8xf32>
    %cst_89 = arith.constant dense<0.000000e+00> : vector<8x8xf32>
    %216 = tpu.matmul %214, %215, %cst_89 {dimension_numbers = #tpu.dot_dimension_numbers<[1], [1], [0], [0], [0, 0, 1, 0], [], []>} : vector<8x8xf32>, vector<8x8xf32>, vector<8x8xf32> -> vector<8x8xf32>
    %cst_90 = arith.constant 0.353553385 : f32
    %217 = vector.broadcast %cst_90 : f32 to vector<8x8xf32>
    %218 = arith.mulf %216, %217 : vector<8x8xf32>
    %219 = arith.addf %218, %9 : vector<8x8xf32>
    %cst_91 = arith.constant dense<0xFF800000> : vector<8xf32>
    %220 = vector.multi_reduction <maximumf>, %219, %cst_91 [1] : vector<8x8xf32> to vector<8xf32>
    %221 = vector.shape_cast %220 : vector<8xf32> to vector<8x1xf32>
    %222 = vector.broadcast %221 : vector<8x1xf32> to vector<8x8xf32>
    %223 = arith.subf %219, %222 : vector<8x8xf32>
    %224 = math.exp %223 : vector<8x8xf32>
    %cst_92 = arith.constant dense<0.000000e+00> : vector<8xf32>
    %225 = vector.multi_reduction <add>, %224, %cst_92 [1] : vector<8x8xf32> to vector<8xf32>
    %226 = vector.shape_cast %225 : vector<8xf32> to vector<8x1xf32>
    %227 = tpu.reciprocal %226 : vector<8x1xf32> -> vector<8x1xf32>
    %228 = vector.broadcast %227 : vector<8x1xf32> to vector<8x8xf32>
    %229 = arith.mulf %224, %228 : vector<8x8xf32>
    %230 = vector.extract_strided_slice %149 {offsets = [0, 24], sizes = [8, 8], strides = [1, 1]} : vector<8x32xf32> to vector<8x8xf32>
    %cst_93 = arith.constant dense<0.000000e+00> : vector<8x8xf32>
    %231 = tpu.matmul %229, %230, %cst_93 {dimension_numbers = #tpu.dot_dimension_numbers<[1], [0], [0], [1], [0, 0, 1, 1], [], []>} : vector<8x8xf32>, vector<8x8xf32>, vector<8x8xf32> -> vector<8x8xf32>
    %232 = vector.extract_strided_slice %151 {offsets = [24, 0], sizes = [8, 32], strides = [1, 1]} : vector<32x32xf32> to vector<8x32xf32>
    %cst_94 = arith.constant dense<0.000000e+00> : vector<8x32xf32>
    %233 = tpu.matmul %231, %232, %cst_94 {dimension_numbers = #tpu.dot_dimension_numbers<[1], [0], [0], [1], [0, 0, 1, 1], [], []>} : vector<8x8xf32>, vector<8x32xf32>, vector<8x32xf32> -> vector<8x32xf32>
    %234 = arith.addf %213, %233 : vector<8x32xf32>
    %235 = arith.addf %121, %234 : vector<8x32xf32>
    %c0_95 = arith.constant 0 : index
    %c0_96 = arith.constant 0 : index
    %c0_97 = arith.constant 0 : index
    %236 = vector.load %arg17[%c0_95, %c0_96, %c0_97] : memref<1x1x32xf32, #tpu.memory_space<vmem>>, vector<1x1x32xf32>
    %237 = vector.shape_cast %236 : vector<1x1x32xf32> to vector<1x32xf32>
    %238 = vector.broadcast %237 : vector<1x32xf32> to vector<8x32xf32>
    %239 = arith.addf %235, %238 : vector<8x32xf32>
    %240 = arith.index_cast %arg1 : i32 to index
    %c2 = arith.constant 2 : index
    %241 = memref.load %arg2[%240, %c2] : memref<2x3xf32, #tpu.memory_space<smem>>
    %242 = arith.mulf %239, %239 : vector<8x32xf32>
    %cst_98 = arith.constant dense<0.000000e+00> : vector<8xf32>
    %243 = vector.multi_reduction <add>, %242, %cst_98 [1] : vector<8x32xf32> to vector<8xf32>
    %244 = vector.shape_cast %243 : vector<8xf32> to vector<8x1xf32>
    %cst_99 = arith.constant 1.000000e-10 : f32
    %245 = vector.broadcast %cst_99 : f32 to vector<8x1xf32>
    %246 = arith.maximumf %244, %245 : vector<8x1xf32>
    %247 = math.rsqrt %246 : vector<8x1xf32>
    %248 = vector.broadcast %241 : f32 to vector<8x1xf32>
    %249 = arith.mulf %248, %247 : vector<8x1xf32>
    %250 = vector.broadcast %249 : vector<8x1xf32> to vector<8x32xf32>
    %251 = arith.mulf %239, %250 : vector<8x32xf32>
    %c0_100 = arith.constant 0 : index
    %c0_101 = arith.constant 0 : index
    %c0_102 = arith.constant 0 : index
    %252 = vector.load %arg18[%c0_100, %c0_101, %c0_102] : memref<1x32x64xf32, #tpu.memory_space<vmem>>, vector<1x32x64xf32>
    %253 = vector.shape_cast %252 : vector<1x32x64xf32> to vector<32x64xf32>
    %cst_103 = arith.constant dense<0.000000e+00> : vector<8x64xf32>
    %254 = tpu.matmul %251, %253, %cst_103 {dimension_numbers = #tpu.dot_dimension_numbers<[1], [0], [0], [1], [0, 0, 1, 1], [], []>} : vector<8x32xf32>, vector<32x64xf32>, vector<8x64xf32> -> vector<8x64xf32>
    %c0_104 = arith.constant 0 : index
    %c0_105 = arith.constant 0 : index
    %c0_106 = arith.constant 0 : index
    %255 = vector.load %arg19[%c0_104, %c0_105, %c0_106] : memref<1x1x64xf32, #tpu.memory_space<vmem>>, vector<1x1x64xf32>
    %256 = vector.shape_cast %255 : vector<1x1x64xf32> to vector<1x64xf32>
    %257 = vector.broadcast %256 : vector<1x64xf32> to vector<8x64xf32>
    %258 = arith.addf %254, %257 : vector<8x64xf32>
    %cst_107 = arith.constant 0.000000e+00 : f32
    %259 = vector.broadcast %cst_107 : f32 to vector<8x64xf32>
    %260 = arith.maximumf %258, %259 : vector<8x64xf32>
    %c0_108 = arith.constant 0 : index
    %c0_109 = arith.constant 0 : index
    %c0_110 = arith.constant 0 : index
    %261 = vector.load %arg20[%c0_108, %c0_109, %c0_110] : memref<1x64x32xf32, #tpu.memory_space<vmem>>, vector<1x64x32xf32>
    %262 = vector.shape_cast %261 : vector<1x64x32xf32> to vector<64x32xf32>
    %cst_111 = arith.constant dense<0.000000e+00> : vector<8x32xf32>
    %263 = tpu.matmul %260, %262, %cst_111 {dimension_numbers = #tpu.dot_dimension_numbers<[1], [0], [0], [1], [0, 0, 1, 1], [], []>} : vector<8x64xf32>, vector<64x32xf32>, vector<8x32xf32> -> vector<8x32xf32>
    %264 = arith.addf %239, %263 : vector<8x32xf32>
    %c0_112 = arith.constant 0 : index
    %c0_113 = arith.constant 0 : index
    %c0_114 = arith.constant 0 : index
    %265 = vector.load %arg21[%c0_112, %c0_113, %c0_114] : memref<1x1x32xf32, #tpu.memory_space<vmem>>, vector<1x1x32xf32>
    %266 = vector.shape_cast %265 : vector<1x1x32xf32> to vector<1x32xf32>
    %267 = vector.broadcast %266 : vector<1x32xf32> to vector<8x32xf32>
    %268 = arith.addf %264, %267 : vector<8x32xf32>
    %c0_115 = arith.constant 0 : index
    %c0_116 = arith.constant 0 : index
    %269 = vector.load %arg24[%c0_115, %c0_116] : memref<8x32xf32, #tpu.memory_space<vmem>>, vector<8x32xf32>
    tpu.vector_store %arg24[%c0_115, %c0_116], %268 {strides = array<i32>} : memref<8x32xf32, #tpu.memory_space<vmem>>, vector<8x32xf32>,
    %c1_i32 = arith.constant 1 : i32
    %270 = arith.cmpi eq, %arg1, %c1_i32 : i32
    %271 = arith.extui %270 : i1 to i32
    %c0_i32_117 = arith.constant 0 : i32
    %272 = arith.cmpi ne, %271, %c0_i32_117 : i32
    scf.if %272 {
      %c0_118 = arith.constant 0 : index
      %c0_119 = arith.constant 0 : index
      %273 = memref.load %arg3[%c0_118, %c0_119] : memref<1x1xf32, #tpu.memory_space<smem>>
      %274 = arith.mulf %268, %268 : vector<8x32xf32>
      %cst_120 = arith.constant dense<0.000000e+00> : vector<8xf32>
      %275 = vector.multi_reduction <add>, %274, %cst_120 [1] : vector<8x32xf32> to vector<8xf32>
      %276 = vector.shape_cast %275 : vector<8xf32> to vector<8x1xf32>
      %cst_121 = arith.constant 1.000000e-10 : f32
      %277 = vector.broadcast %cst_121 : f32 to vector<8x1xf32>
      %278 = arith.maximumf %276, %277 : vector<8x1xf32>
      %279 = math.rsqrt %278 : vector<8x1xf32>
      %280 = vector.broadcast %273 : f32 to vector<8x1xf32>
      %281 = arith.mulf %280, %279 : vector<8x1xf32>
      %282 = vector.broadcast %281 : vector<8x1xf32> to vector<8x32xf32>
      %283 = arith.mulf %268, %282 : vector<8x32xf32>
      %c0_122 = arith.constant 0 : index
      %c0_123 = arith.constant 0 : index
      %284 = vector.load %arg22[%c0_122, %c0_123] : memref<128x32xf32, #tpu.memory_space<vmem>>, vector<128x32xf32>
      %cst_124 = arith.constant dense<0.000000e+00> : vector<8x128xf32>
      %285 = tpu.matmul %283, %284, %cst_124 {dimension_numbers = #tpu.dot_dimension_numbers<[1], [1], [0], [0], [0, 0, 1, 0], [], []>} : vector<8x32xf32>, vector<128x32xf32>, vector<8x128xf32> -> vector<8x128xf32>
      %c0_125 = arith.constant 0 : index
      %c0_126 = arith.constant 0 : index
      %c0_127 = arith.constant 0 : index
      %286 = vector.load %arg23[%c0_125, %c0_126, %c0_127] : memref<1x8x128xf32, #tpu.memory_space<vmem>>, vector<1x8x128xf32>
      %287 = vector.shape_cast %286 : vector<1x8x128xf32> to vector<8x128xf32>
      %288 = vector.shape_cast %285 : vector<8x128xf32> to vector<1x8x128xf32>
      tpu.vector_store %arg23[%c0_125, %c0_126, %c0_127], %288 {strides = array<i32>} : memref<1x8x128xf32, #tpu.memory_space<vmem>>, vector<1x8x128xf32>,
    } else {
    }
    return
  }
  func.func @transform_0(%arg0: i32, %arg1: i32) -> (i32, i32) {
    %c0_i32 = arith.constant 0 : i32
    %c0_i32_0 = arith.constant 0 : i32
    %c0_i32_1 = arith.constant 0 : i32
    return %c0_i32, %c0_i32_0 : i32, i32
  }
  func.func @transform_1(%arg0: i32, %arg1: i32) -> (i32, i32) {
    %c0_i32 = arith.constant 0 : i32
    %c0_i32_0 = arith.constant 0 : i32
    %c0_i32_1 = arith.constant 0 : i32
    return %c0_i32, %c0_i32_0 : i32, i32
  }
  func.func @transform_2(%arg0: i32, %arg1: i32) -> (i32, i32, i32) {
    %c0_i32 = arith.constant 0 : i32
    %c0_i32_0 = arith.constant 0 : i32
    %c0_i32_1 = arith.constant 0 : i32
    return %arg0, %c0_i32, %c0_i32_0 : i32, i32, i32
  }
  func.func @transform_3(%arg0: i32, %arg1: i32) -> (i32, i32, i32) {
    %c0_i32 = arith.constant 0 : i32
    %c0_i32_0 = arith.constant 0 : i32
    %c0_i32_1 = arith.constant 0 : i32
    return %arg0, %c0_i32, %c0_i32_0 : i32, i32, i32
  }
  func.func @transform_4(%arg0: i32, %arg1: i32) -> (i32, i32, i32, i32) {
    %c0_i32 = arith.constant 0 : i32
    %c0_i32_0 = arith.constant 0 : i32
    %c0_i32_1 = arith.constant 0 : i32
    %c0_i32_2 = arith.constant 0 : i32
    return %arg0, %c0_i32, %c0_i32_0, %c0_i32_1 : i32, i32, i32, i32
  }
  func.func @transform_5(%arg0: i32, %arg1: i32) -> (i32, i32, i32, i32) {
    %c0_i32 = arith.constant 0 : i32
    %c0_i32_0 = arith.constant 0 : i32
    %c0_i32_1 = arith.constant 0 : i32
    %c0_i32_2 = arith.constant 0 : i32
    return %arg0, %c0_i32, %c0_i32_0, %c0_i32_1 : i32, i32, i32, i32
  }
  func.func @transform_6(%arg0: i32, %arg1: i32) -> (i32, i32, i32) {
    %c0_i32 = arith.constant 0 : i32
    %c0_i32_0 = arith.constant 0 : i32
    %c0_i32_1 = arith.constant 0 : i32
    return %arg1, %c0_i32, %c0_i32_0 : i32, i32, i32
  }
  func.func @transform_7(%arg0: i32, %arg1: i32) -> (i32, i32, i32) {
    %c0_i32 = arith.constant 0 : i32
    %c0_i32_0 = arith.constant 0 : i32
    %c0_i32_1 = arith.constant 0 : i32
    return %arg1, %c0_i32, %c0_i32_0 : i32, i32, i32
  }
  func.func @transform_8(%arg0: i32, %arg1: i32) -> (i32, i32, i32) {
    %c0_i32 = arith.constant 0 : i32
    %c0_i32_0 = arith.constant 0 : i32
    %c0_i32_1 = arith.constant 0 : i32
    return %arg1, %c0_i32, %c0_i32_0 : i32, i32, i32
  }
  func.func @transform_9(%arg0: i32, %arg1: i32) -> (i32, i32, i32) {
    %c0_i32 = arith.constant 0 : i32
    %c0_i32_0 = arith.constant 0 : i32
    %c0_i32_1 = arith.constant 0 : i32
    return %arg1, %c0_i32, %c0_i32_0 : i32, i32, i32
  }
  func.func @transform_10(%arg0: i32, %arg1: i32) -> (i32, i32, i32) {
    %c0_i32 = arith.constant 0 : i32
    %c0_i32_0 = arith.constant 0 : i32
    %c0_i32_1 = arith.constant 0 : i32
    return %arg1, %c0_i32, %c0_i32_0 : i32, i32, i32
  }
  func.func @transform_11(%arg0: i32, %arg1: i32) -> (i32, i32, i32) {
    %c0_i32 = arith.constant 0 : i32
    %c0_i32_0 = arith.constant 0 : i32
    %c0_i32_1 = arith.constant 0 : i32
    return %arg1, %c0_i32, %c0_i32_0 : i32, i32, i32
  }
  func.func @transform_12(%arg0: i32, %arg1: i32) -> (i32, i32, i32) {
    %c0_i32 = arith.constant 0 : i32
    %c0_i32_0 = arith.constant 0 : i32
    %c0_i32_1 = arith.constant 0 : i32
    return %arg1, %c0_i32, %c0_i32_0 : i32, i32, i32
  }
  func.func @transform_13(%arg0: i32, %arg1: i32) -> (i32, i32, i32) {
    %c0_i32 = arith.constant 0 : i32
    %c0_i32_0 = arith.constant 0 : i32
    %c0_i32_1 = arith.constant 0 : i32
    return %arg1, %c0_i32, %c0_i32_0 : i32, i32, i32
  }
  func.func @transform_14(%arg0: i32, %arg1: i32) -> (i32, i32, i32) {
    %c0_i32 = arith.constant 0 : i32
    %c0_i32_0 = arith.constant 0 : i32
    %c0_i32_1 = arith.constant 0 : i32
    return %arg1, %c0_i32, %c0_i32_0 : i32, i32, i32
  }
  func.func @transform_15(%arg0: i32, %arg1: i32) -> (i32, i32, i32) {
    %c0_i32 = arith.constant 0 : i32
    %c0_i32_0 = arith.constant 0 : i32
    %c0_i32_1 = arith.constant 0 : i32
    return %arg1, %c0_i32, %c0_i32_0 : i32, i32, i32
  }
  func.func @transform_16(%arg0: i32, %arg1: i32) -> (i32, i32, i32) {
    %c0_i32 = arith.constant 0 : i32
    %c0_i32_0 = arith.constant 0 : i32
    %c0_i32_1 = arith.constant 0 : i32
    return %arg1, %c0_i32, %c0_i32_0 : i32, i32, i32
  }
  func.func @transform_17(%arg0: i32, %arg1: i32) -> (i32, i32, i32) {
    %c0_i32 = arith.constant 0 : i32
    %c0_i32_0 = arith.constant 0 : i32
    %c0_i32_1 = arith.constant 0 : i32
    return %arg1, %c0_i32, %c0_i32_0 : i32, i32, i32
  }
  func.func @transform_18(%arg0: i32, %arg1: i32) -> (i32, i32, i32) {
    %c0_i32 = arith.constant 0 : i32
    %c0_i32_0 = arith.constant 0 : i32
    %c0_i32_1 = arith.constant 0 : i32
    return %arg1, %c0_i32, %c0_i32_0 : i32, i32, i32
  }
  func.func @transform_19(%arg0: i32, %arg1: i32) -> (i32, i32, i32) {
    %c0_i32 = arith.constant 0 : i32
    %c0_i32_0 = arith.constant 0 : i32
    %c0_i32_1 = arith.constant 0 : i32
    return %arg1, %c0_i32, %c0_i32_0 : i32, i32, i32
  }
  func.func @transform_20(%arg0: i32, %arg1: i32) -> (i32, i32) {
    %c0_i32 = arith.constant 0 : i32
    %c0_i32_0 = arith.constant 0 : i32
    %c0_i32_1 = arith.constant 0 : i32
    return %c0_i32, %c0_i32_0 : i32, i32
  }
  func.func @transform_21(%arg0: i32, %arg1: i32) -> (i32, i32, i32) {
    %c0_i32 = arith.constant 0 : i32
    %c0_i32_0 = arith.constant 0 : i32
    %c0_i32_1 = arith.constant 0 : i32
    return %arg0, %c0_i32, %c0_i32_0 : i32, i32, i32
  }
}

module attributes {stable_mosaic.version = 11 : i64} {
  func.func @_encoder_stack_kernel(%arg0: i32, %arg1: i32, %arg2: memref<2x2xf32, #tpu.memory_space<smem>>, %arg3: memref<1x1xf32, #tpu.memory_space<smem>>, %arg4: memref<1x8x32xf32, #tpu.memory_space<vmem>>, %arg5: memref<1x1x8x8xf32, #tpu.memory_space<vmem>>, %arg6: memref<1x32x96xf32, #tpu.memory_space<vmem>>, %arg7: memref<1x1x96xf32, #tpu.memory_space<vmem>>, %arg8: memref<1x32x32xf32, #tpu.memory_space<vmem>>, %arg9: memref<1x1x32xf32, #tpu.memory_space<vmem>>, %arg10: memref<1x32x64xf32, #tpu.memory_space<vmem>>, %arg11: memref<1x1x64xf32, #tpu.memory_space<vmem>>, %arg12: memref<1x64x32xf32, #tpu.memory_space<vmem>>, %arg13: memref<1x1x32xf32, #tpu.memory_space<vmem>>, %arg14: memref<1x8x32xf32, #tpu.memory_space<vmem>>, %arg15: memref<8x32xf32, #tpu.memory_space<vmem>>) attributes {dimension_semantics = [#tpu.dimension_semantics<parallel>, #tpu.dimension_semantics<arbitrary>], iteration_bounds = array<i64: 2, 2>, scalar_prefetch = 0 : i64, scratch_operands = 1 : i64, tpu.core_type = #tpu.core_type<tc>, window_params = [{transform_indices = @transform_0, window_bounds = array<i64: 2, 2>}, {transform_indices = @transform_1, window_bounds = array<i64: 1, 1>}, {transform_indices = @transform_2, window_bounds = array<i64: 1, 8, 32>}, {transform_indices = @transform_3, window_bounds = array<i64: 1, 1, 8, 8>}, {transform_indices = @transform_4, window_bounds = array<i64: 1, 32, 96>}, {transform_indices = @transform_5, window_bounds = array<i64: 1, 1, 96>}, {transform_indices = @transform_6, window_bounds = array<i64: 1, 32, 32>}, {transform_indices = @transform_7, window_bounds = array<i64: 1, 1, 32>}, {transform_indices = @transform_8, window_bounds = array<i64: 1, 32, 64>}, {transform_indices = @transform_9, window_bounds = array<i64: 1, 1, 64>}, {transform_indices = @transform_10, window_bounds = array<i64: 1, 64, 32>}, {transform_indices = @transform_11, window_bounds = array<i64: 1, 1, 32>}, {transform_indices = @transform_12, window_bounds = array<i64: 1, 8, 32>}]} {
    %c0_i32 = arith.constant 0 : i32
    %0 = arith.cmpi eq, %arg1, %c0_i32 : i32
    %1 = arith.extui %0 : i1 to i32
    %c0_i32_0 = arith.constant 0 : i32
    %2 = arith.cmpi ne, %1, %c0_i32_0 : i32
    scf.if %2 {
      %c0_65 = arith.constant 0 : index
      %c0_66 = arith.constant 0 : index
      %c0_67 = arith.constant 0 : index
      %151 = vector.load %arg4[%c0_65, %c0_66, %c0_67] : memref<1x8x32xf32, #tpu.memory_space<vmem>>, vector<1x8x32xf32>
      %152 = vector.shape_cast %151 : vector<1x8x32xf32> to vector<8x32xf32>
      %c0_68 = arith.constant 0 : index
      %c0_69 = arith.constant 0 : index
      %153 = vector.load %arg15[%c0_68, %c0_69] : memref<8x32xf32, #tpu.memory_space<vmem>>, vector<8x32xf32>
      tpu.vector_store %arg15[%c0_68, %c0_69], %152 {strides = array<i32>} : memref<8x32xf32, #tpu.memory_space<vmem>>, vector<8x32xf32>,
    } else {
    }
    %c0 = arith.constant 0 : index
    %c0_1 = arith.constant 0 : index
    %3 = vector.load %arg15[%c0, %c0_1] : memref<8x32xf32, #tpu.memory_space<vmem>>, vector<8x32xf32>
    %c0_2 = arith.constant 0 : index
    %c0_3 = arith.constant 0 : index
    %c0_4 = arith.constant 0 : index
    %c0_5 = arith.constant 0 : index
    %4 = vector.load %arg5[%c0_2, %c0_3, %c0_4, %c0_5] : memref<1x1x8x8xf32, #tpu.memory_space<vmem>>, vector<1x1x8x8xf32>
    %5 = vector.shape_cast %4 : vector<1x1x8x8xf32> to vector<8x8xf32>
    %6 = arith.index_cast %arg1 : i32 to index
    %c0_6 = arith.constant 0 : index
    %7 = memref.load %arg2[%6, %c0_6] : memref<2x2xf32, #tpu.memory_space<smem>>
    %8 = arith.mulf %3, %3 : vector<8x32xf32>
    %cst = arith.constant dense<0.000000e+00> : vector<8xf32>
    %9 = vector.multi_reduction <add>, %8, %cst [1] : vector<8x32xf32> to vector<8xf32>
    %10 = vector.shape_cast %9 : vector<8xf32> to vector<8x1xf32>
    %cst_7 = arith.constant 1.000000e-10 : f32
    %11 = vector.broadcast %cst_7 : f32 to vector<8x1xf32>
    %12 = arith.maximumf %10, %11 : vector<8x1xf32>
    %13 = math.rsqrt %12 : vector<8x1xf32>
    %14 = vector.broadcast %7 : f32 to vector<8x1xf32>
    %15 = arith.mulf %14, %13 : vector<8x1xf32>
    %16 = vector.broadcast %15 : vector<8x1xf32> to vector<8x32xf32>
    %17 = arith.mulf %3, %16 : vector<8x32xf32>
    %c0_8 = arith.constant 0 : index
    %c0_9 = arith.constant 0 : index
    %c0_10 = arith.constant 0 : index
    %18 = vector.load %arg6[%c0_8, %c0_9, %c0_10] : memref<1x32x96xf32, #tpu.memory_space<vmem>>, vector<1x32x96xf32>
    %19 = vector.shape_cast %18 : vector<1x32x96xf32> to vector<32x96xf32>
    %cst_11 = arith.constant dense<0.000000e+00> : vector<8x96xf32>
    %20 = tpu.matmul %17, %19, %cst_11 {dimension_numbers = #tpu.dot_dimension_numbers<[1], [0], [0], [1], [0, 0, 1, 1], [], []>} : vector<8x32xf32>, vector<32x96xf32>, vector<8x96xf32> -> vector<8x96xf32>
    %c0_12 = arith.constant 0 : index
    %c0_13 = arith.constant 0 : index
    %c0_14 = arith.constant 0 : index
    %21 = vector.load %arg7[%c0_12, %c0_13, %c0_14] : memref<1x1x96xf32, #tpu.memory_space<vmem>>, vector<1x1x96xf32>
    %22 = vector.shape_cast %21 : vector<1x1x96xf32> to vector<1x96xf32>
    %23 = vector.broadcast %22 : vector<1x96xf32> to vector<8x96xf32>
    %24 = arith.addf %20, %23 : vector<8x96xf32>
    %25 = vector.extract_strided_slice %24 {offsets = [0, 0], sizes = [8, 32], strides = [1, 1]} : vector<8x96xf32> to vector<8x32xf32>
    %26 = vector.extract_strided_slice %24 {offsets = [0, 32], sizes = [8, 32], strides = [1, 1]} : vector<8x96xf32> to vector<8x32xf32>
    %27 = vector.extract_strided_slice %24 {offsets = [0, 64], sizes = [8, 32], strides = [1, 1]} : vector<8x96xf32> to vector<8x32xf32>
    %c0_15 = arith.constant 0 : index
    %c0_16 = arith.constant 0 : index
    %c0_17 = arith.constant 0 : index
    %28 = vector.load %arg8[%c0_15, %c0_16, %c0_17] : memref<1x32x32xf32, #tpu.memory_space<vmem>>, vector<1x32x32xf32>
    %29 = vector.shape_cast %28 : vector<1x32x32xf32> to vector<32x32xf32>
    %30 = vector.extract_strided_slice %25 {offsets = [0, 0], sizes = [8, 8], strides = [1, 1]} : vector<8x32xf32> to vector<8x8xf32>
    %31 = vector.extract_strided_slice %26 {offsets = [0, 0], sizes = [8, 8], strides = [1, 1]} : vector<8x32xf32> to vector<8x8xf32>
    %cst_18 = arith.constant dense<0.000000e+00> : vector<8x8xf32>
    %32 = tpu.matmul %30, %31, %cst_18 {dimension_numbers = #tpu.dot_dimension_numbers<[1], [1], [0], [0], [0, 0, 1, 0], [], []>} : vector<8x8xf32>, vector<8x8xf32>, vector<8x8xf32> -> vector<8x8xf32>
    %cst_19 = arith.constant 0.353553385 : f32
    %33 = vector.broadcast %cst_19 : f32 to vector<8x8xf32>
    %34 = arith.mulf %32, %33 : vector<8x8xf32>
    %35 = arith.addf %34, %5 : vector<8x8xf32>
    %cst_20 = arith.constant dense<0xFF800000> : vector<8xf32>
    %36 = vector.multi_reduction <maximumf>, %35, %cst_20 [1] : vector<8x8xf32> to vector<8xf32>
    %37 = vector.shape_cast %36 : vector<8xf32> to vector<8x1xf32>
    %38 = vector.broadcast %37 : vector<8x1xf32> to vector<8x8xf32>
    %39 = arith.subf %35, %38 : vector<8x8xf32>
    %40 = math.exp %39 : vector<8x8xf32>
    %cst_21 = arith.constant dense<0.000000e+00> : vector<8xf32>
    %41 = vector.multi_reduction <add>, %40, %cst_21 [1] : vector<8x8xf32> to vector<8xf32>
    %42 = vector.shape_cast %41 : vector<8xf32> to vector<8x1xf32>
    %43 = tpu.reciprocal %42 : vector<8x1xf32> -> vector<8x1xf32>
    %44 = vector.broadcast %43 : vector<8x1xf32> to vector<8x8xf32>
    %45 = arith.mulf %40, %44 : vector<8x8xf32>
    %46 = vector.extract_strided_slice %27 {offsets = [0, 0], sizes = [8, 8], strides = [1, 1]} : vector<8x32xf32> to vector<8x8xf32>
    %cst_22 = arith.constant dense<0.000000e+00> : vector<8x8xf32>
    %47 = tpu.matmul %45, %46, %cst_22 {dimension_numbers = #tpu.dot_dimension_numbers<[1], [0], [0], [1], [0, 0, 1, 1], [], []>} : vector<8x8xf32>, vector<8x8xf32>, vector<8x8xf32> -> vector<8x8xf32>
    %48 = vector.extract_strided_slice %29 {offsets = [0, 0], sizes = [8, 32], strides = [1, 1]} : vector<32x32xf32> to vector<8x32xf32>
    %cst_23 = arith.constant dense<0.000000e+00> : vector<8x32xf32>
    %49 = tpu.matmul %47, %48, %cst_23 {dimension_numbers = #tpu.dot_dimension_numbers<[1], [0], [0], [1], [0, 0, 1, 1], [], []>} : vector<8x8xf32>, vector<8x32xf32>, vector<8x32xf32> -> vector<8x32xf32>
    %50 = vector.extract_strided_slice %25 {offsets = [0, 8], sizes = [8, 8], strides = [1, 1]} : vector<8x32xf32> to vector<8x8xf32>
    %51 = vector.extract_strided_slice %26 {offsets = [0, 8], sizes = [8, 8], strides = [1, 1]} : vector<8x32xf32> to vector<8x8xf32>
    %cst_24 = arith.constant dense<0.000000e+00> : vector<8x8xf32>
    %52 = tpu.matmul %50, %51, %cst_24 {dimension_numbers = #tpu.dot_dimension_numbers<[1], [1], [0], [0], [0, 0, 1, 0], [], []>} : vector<8x8xf32>, vector<8x8xf32>, vector<8x8xf32> -> vector<8x8xf32>
    %cst_25 = arith.constant 0.353553385 : f32
    %53 = vector.broadcast %cst_25 : f32 to vector<8x8xf32>
    %54 = arith.mulf %52, %53 : vector<8x8xf32>
    %55 = arith.addf %54, %5 : vector<8x8xf32>
    %cst_26 = arith.constant dense<0xFF800000> : vector<8xf32>
    %56 = vector.multi_reduction <maximumf>, %55, %cst_26 [1] : vector<8x8xf32> to vector<8xf32>
    %57 = vector.shape_cast %56 : vector<8xf32> to vector<8x1xf32>
    %58 = vector.broadcast %57 : vector<8x1xf32> to vector<8x8xf32>
    %59 = arith.subf %55, %58 : vector<8x8xf32>
    %60 = math.exp %59 : vector<8x8xf32>
    %cst_27 = arith.constant dense<0.000000e+00> : vector<8xf32>
    %61 = vector.multi_reduction <add>, %60, %cst_27 [1] : vector<8x8xf32> to vector<8xf32>
    %62 = vector.shape_cast %61 : vector<8xf32> to vector<8x1xf32>
    %63 = tpu.reciprocal %62 : vector<8x1xf32> -> vector<8x1xf32>
    %64 = vector.broadcast %63 : vector<8x1xf32> to vector<8x8xf32>
    %65 = arith.mulf %60, %64 : vector<8x8xf32>
    %66 = vector.extract_strided_slice %27 {offsets = [0, 8], sizes = [8, 8], strides = [1, 1]} : vector<8x32xf32> to vector<8x8xf32>
    %cst_28 = arith.constant dense<0.000000e+00> : vector<8x8xf32>
    %67 = tpu.matmul %65, %66, %cst_28 {dimension_numbers = #tpu.dot_dimension_numbers<[1], [0], [0], [1], [0, 0, 1, 1], [], []>} : vector<8x8xf32>, vector<8x8xf32>, vector<8x8xf32> -> vector<8x8xf32>
    %68 = vector.extract_strided_slice %29 {offsets = [8, 0], sizes = [8, 32], strides = [1, 1]} : vector<32x32xf32> to vector<8x32xf32>
    %cst_29 = arith.constant dense<0.000000e+00> : vector<8x32xf32>
    %69 = tpu.matmul %67, %68, %cst_29 {dimension_numbers = #tpu.dot_dimension_numbers<[1], [0], [0], [1], [0, 0, 1, 1], [], []>} : vector<8x8xf32>, vector<8x32xf32>, vector<8x32xf32> -> vector<8x32xf32>
    %70 = arith.addf %49, %69 : vector<8x32xf32>
    %71 = vector.extract_strided_slice %25 {offsets = [0, 16], sizes = [8, 8], strides = [1, 1]} : vector<8x32xf32> to vector<8x8xf32>
    %72 = vector.extract_strided_slice %26 {offsets = [0, 16], sizes = [8, 8], strides = [1, 1]} : vector<8x32xf32> to vector<8x8xf32>
    %cst_30 = arith.constant dense<0.000000e+00> : vector<8x8xf32>
    %73 = tpu.matmul %71, %72, %cst_30 {dimension_numbers = #tpu.dot_dimension_numbers<[1], [1], [0], [0], [0, 0, 1, 0], [], []>} : vector<8x8xf32>, vector<8x8xf32>, vector<8x8xf32> -> vector<8x8xf32>
    %cst_31 = arith.constant 0.353553385 : f32
    %74 = vector.broadcast %cst_31 : f32 to vector<8x8xf32>
    %75 = arith.mulf %73, %74 : vector<8x8xf32>
    %76 = arith.addf %75, %5 : vector<8x8xf32>
    %cst_32 = arith.constant dense<0xFF800000> : vector<8xf32>
    %77 = vector.multi_reduction <maximumf>, %76, %cst_32 [1] : vector<8x8xf32> to vector<8xf32>
    %78 = vector.shape_cast %77 : vector<8xf32> to vector<8x1xf32>
    %79 = vector.broadcast %78 : vector<8x1xf32> to vector<8x8xf32>
    %80 = arith.subf %76, %79 : vector<8x8xf32>
    %81 = math.exp %80 : vector<8x8xf32>
    %cst_33 = arith.constant dense<0.000000e+00> : vector<8xf32>
    %82 = vector.multi_reduction <add>, %81, %cst_33 [1] : vector<8x8xf32> to vector<8xf32>
    %83 = vector.shape_cast %82 : vector<8xf32> to vector<8x1xf32>
    %84 = tpu.reciprocal %83 : vector<8x1xf32> -> vector<8x1xf32>
    %85 = vector.broadcast %84 : vector<8x1xf32> to vector<8x8xf32>
    %86 = arith.mulf %81, %85 : vector<8x8xf32>
    %87 = vector.extract_strided_slice %27 {offsets = [0, 16], sizes = [8, 8], strides = [1, 1]} : vector<8x32xf32> to vector<8x8xf32>
    %cst_34 = arith.constant dense<0.000000e+00> : vector<8x8xf32>
    %88 = tpu.matmul %86, %87, %cst_34 {dimension_numbers = #tpu.dot_dimension_numbers<[1], [0], [0], [1], [0, 0, 1, 1], [], []>} : vector<8x8xf32>, vector<8x8xf32>, vector<8x8xf32> -> vector<8x8xf32>
    %89 = vector.extract_strided_slice %29 {offsets = [16, 0], sizes = [8, 32], strides = [1, 1]} : vector<32x32xf32> to vector<8x32xf32>
    %cst_35 = arith.constant dense<0.000000e+00> : vector<8x32xf32>
    %90 = tpu.matmul %88, %89, %cst_35 {dimension_numbers = #tpu.dot_dimension_numbers<[1], [0], [0], [1], [0, 0, 1, 1], [], []>} : vector<8x8xf32>, vector<8x32xf32>, vector<8x32xf32> -> vector<8x32xf32>
    %91 = arith.addf %70, %90 : vector<8x32xf32>
    %92 = vector.extract_strided_slice %25 {offsets = [0, 24], sizes = [8, 8], strides = [1, 1]} : vector<8x32xf32> to vector<8x8xf32>
    %93 = vector.extract_strided_slice %26 {offsets = [0, 24], sizes = [8, 8], strides = [1, 1]} : vector<8x32xf32> to vector<8x8xf32>
    %cst_36 = arith.constant dense<0.000000e+00> : vector<8x8xf32>
    %94 = tpu.matmul %92, %93, %cst_36 {dimension_numbers = #tpu.dot_dimension_numbers<[1], [1], [0], [0], [0, 0, 1, 0], [], []>} : vector<8x8xf32>, vector<8x8xf32>, vector<8x8xf32> -> vector<8x8xf32>
    %cst_37 = arith.constant 0.353553385 : f32
    %95 = vector.broadcast %cst_37 : f32 to vector<8x8xf32>
    %96 = arith.mulf %94, %95 : vector<8x8xf32>
    %97 = arith.addf %96, %5 : vector<8x8xf32>
    %cst_38 = arith.constant dense<0xFF800000> : vector<8xf32>
    %98 = vector.multi_reduction <maximumf>, %97, %cst_38 [1] : vector<8x8xf32> to vector<8xf32>
    %99 = vector.shape_cast %98 : vector<8xf32> to vector<8x1xf32>
    %100 = vector.broadcast %99 : vector<8x1xf32> to vector<8x8xf32>
    %101 = arith.subf %97, %100 : vector<8x8xf32>
    %102 = math.exp %101 : vector<8x8xf32>
    %cst_39 = arith.constant dense<0.000000e+00> : vector<8xf32>
    %103 = vector.multi_reduction <add>, %102, %cst_39 [1] : vector<8x8xf32> to vector<8xf32>
    %104 = vector.shape_cast %103 : vector<8xf32> to vector<8x1xf32>
    %105 = tpu.reciprocal %104 : vector<8x1xf32> -> vector<8x1xf32>
    %106 = vector.broadcast %105 : vector<8x1xf32> to vector<8x8xf32>
    %107 = arith.mulf %102, %106 : vector<8x8xf32>
    %108 = vector.extract_strided_slice %27 {offsets = [0, 24], sizes = [8, 8], strides = [1, 1]} : vector<8x32xf32> to vector<8x8xf32>
    %cst_40 = arith.constant dense<0.000000e+00> : vector<8x8xf32>
    %109 = tpu.matmul %107, %108, %cst_40 {dimension_numbers = #tpu.dot_dimension_numbers<[1], [0], [0], [1], [0, 0, 1, 1], [], []>} : vector<8x8xf32>, vector<8x8xf32>, vector<8x8xf32> -> vector<8x8xf32>
    %110 = vector.extract_strided_slice %29 {offsets = [24, 0], sizes = [8, 32], strides = [1, 1]} : vector<32x32xf32> to vector<8x32xf32>
    %cst_41 = arith.constant dense<0.000000e+00> : vector<8x32xf32>
    %111 = tpu.matmul %109, %110, %cst_41 {dimension_numbers = #tpu.dot_dimension_numbers<[1], [0], [0], [1], [0, 0, 1, 1], [], []>} : vector<8x8xf32>, vector<8x32xf32>, vector<8x32xf32> -> vector<8x32xf32>
    %112 = arith.addf %91, %111 : vector<8x32xf32>
    %113 = arith.addf %3, %112 : vector<8x32xf32>
    %c0_42 = arith.constant 0 : index
    %c0_43 = arith.constant 0 : index
    %c0_44 = arith.constant 0 : index
    %114 = vector.load %arg9[%c0_42, %c0_43, %c0_44] : memref<1x1x32xf32, #tpu.memory_space<vmem>>, vector<1x1x32xf32>
    %115 = vector.shape_cast %114 : vector<1x1x32xf32> to vector<1x32xf32>
    %116 = vector.broadcast %115 : vector<1x32xf32> to vector<8x32xf32>
    %117 = arith.addf %113, %116 : vector<8x32xf32>
    %118 = arith.index_cast %arg1 : i32 to index
    %c1 = arith.constant 1 : index
    %119 = memref.load %arg2[%118, %c1] : memref<2x2xf32, #tpu.memory_space<smem>>
    %120 = arith.mulf %117, %117 : vector<8x32xf32>
    %cst_45 = arith.constant dense<0.000000e+00> : vector<8xf32>
    %121 = vector.multi_reduction <add>, %120, %cst_45 [1] : vector<8x32xf32> to vector<8xf32>
    %122 = vector.shape_cast %121 : vector<8xf32> to vector<8x1xf32>
    %cst_46 = arith.constant 1.000000e-10 : f32
    %123 = vector.broadcast %cst_46 : f32 to vector<8x1xf32>
    %124 = arith.maximumf %122, %123 : vector<8x1xf32>
    %125 = math.rsqrt %124 : vector<8x1xf32>
    %126 = vector.broadcast %119 : f32 to vector<8x1xf32>
    %127 = arith.mulf %126, %125 : vector<8x1xf32>
    %128 = vector.broadcast %127 : vector<8x1xf32> to vector<8x32xf32>
    %129 = arith.mulf %117, %128 : vector<8x32xf32>
    %c0_47 = arith.constant 0 : index
    %c0_48 = arith.constant 0 : index
    %c0_49 = arith.constant 0 : index
    %130 = vector.load %arg10[%c0_47, %c0_48, %c0_49] : memref<1x32x64xf32, #tpu.memory_space<vmem>>, vector<1x32x64xf32>
    %131 = vector.shape_cast %130 : vector<1x32x64xf32> to vector<32x64xf32>
    %cst_50 = arith.constant dense<0.000000e+00> : vector<8x64xf32>
    %132 = tpu.matmul %129, %131, %cst_50 {dimension_numbers = #tpu.dot_dimension_numbers<[1], [0], [0], [1], [0, 0, 1, 1], [], []>} : vector<8x32xf32>, vector<32x64xf32>, vector<8x64xf32> -> vector<8x64xf32>
    %c0_51 = arith.constant 0 : index
    %c0_52 = arith.constant 0 : index
    %c0_53 = arith.constant 0 : index
    %133 = vector.load %arg11[%c0_51, %c0_52, %c0_53] : memref<1x1x64xf32, #tpu.memory_space<vmem>>, vector<1x1x64xf32>
    %134 = vector.shape_cast %133 : vector<1x1x64xf32> to vector<1x64xf32>
    %135 = vector.broadcast %134 : vector<1x64xf32> to vector<8x64xf32>
    %136 = arith.addf %132, %135 : vector<8x64xf32>
    %cst_54 = arith.constant 0.000000e+00 : f32
    %137 = vector.broadcast %cst_54 : f32 to vector<8x64xf32>
    %138 = arith.maximumf %136, %137 : vector<8x64xf32>
    %c0_55 = arith.constant 0 : index
    %c0_56 = arith.constant 0 : index
    %c0_57 = arith.constant 0 : index
    %139 = vector.load %arg12[%c0_55, %c0_56, %c0_57] : memref<1x64x32xf32, #tpu.memory_space<vmem>>, vector<1x64x32xf32>
    %140 = vector.shape_cast %139 : vector<1x64x32xf32> to vector<64x32xf32>
    %cst_58 = arith.constant dense<0.000000e+00> : vector<8x32xf32>
    %141 = tpu.matmul %138, %140, %cst_58 {dimension_numbers = #tpu.dot_dimension_numbers<[1], [0], [0], [1], [0, 0, 1, 1], [], []>} : vector<8x64xf32>, vector<64x32xf32>, vector<8x32xf32> -> vector<8x32xf32>
    %142 = arith.addf %117, %141 : vector<8x32xf32>
    %c0_59 = arith.constant 0 : index
    %c0_60 = arith.constant 0 : index
    %c0_61 = arith.constant 0 : index
    %143 = vector.load %arg13[%c0_59, %c0_60, %c0_61] : memref<1x1x32xf32, #tpu.memory_space<vmem>>, vector<1x1x32xf32>
    %144 = vector.shape_cast %143 : vector<1x1x32xf32> to vector<1x32xf32>
    %145 = vector.broadcast %144 : vector<1x32xf32> to vector<8x32xf32>
    %146 = arith.addf %142, %145 : vector<8x32xf32>
    %c0_62 = arith.constant 0 : index
    %c0_63 = arith.constant 0 : index
    %147 = vector.load %arg15[%c0_62, %c0_63] : memref<8x32xf32, #tpu.memory_space<vmem>>, vector<8x32xf32>
    tpu.vector_store %arg15[%c0_62, %c0_63], %146 {strides = array<i32>} : memref<8x32xf32, #tpu.memory_space<vmem>>, vector<8x32xf32>,
    %c1_i32 = arith.constant 1 : i32
    %148 = arith.cmpi eq, %arg1, %c1_i32 : i32
    %149 = arith.extui %148 : i1 to i32
    %c0_i32_64 = arith.constant 0 : i32
    %150 = arith.cmpi ne, %149, %c0_i32_64 : i32
    scf.if %150 {
      %c0_65 = arith.constant 0 : index
      %c0_66 = arith.constant 0 : index
      %151 = memref.load %arg3[%c0_65, %c0_66] : memref<1x1xf32, #tpu.memory_space<smem>>
      %152 = arith.mulf %146, %146 : vector<8x32xf32>
      %cst_67 = arith.constant dense<0.000000e+00> : vector<8xf32>
      %153 = vector.multi_reduction <add>, %152, %cst_67 [1] : vector<8x32xf32> to vector<8xf32>
      %154 = vector.shape_cast %153 : vector<8xf32> to vector<8x1xf32>
      %cst_68 = arith.constant 1.000000e-10 : f32
      %155 = vector.broadcast %cst_68 : f32 to vector<8x1xf32>
      %156 = arith.maximumf %154, %155 : vector<8x1xf32>
      %157 = math.rsqrt %156 : vector<8x1xf32>
      %158 = vector.broadcast %151 : f32 to vector<8x1xf32>
      %159 = arith.mulf %158, %157 : vector<8x1xf32>
      %160 = vector.broadcast %159 : vector<8x1xf32> to vector<8x32xf32>
      %161 = arith.mulf %146, %160 : vector<8x32xf32>
      %c0_69 = arith.constant 0 : index
      %c0_70 = arith.constant 0 : index
      %c0_71 = arith.constant 0 : index
      %162 = vector.load %arg14[%c0_69, %c0_70, %c0_71] : memref<1x8x32xf32, #tpu.memory_space<vmem>>, vector<1x8x32xf32>
      %163 = vector.shape_cast %162 : vector<1x8x32xf32> to vector<8x32xf32>
      %164 = vector.shape_cast %161 : vector<8x32xf32> to vector<1x8x32xf32>
      tpu.vector_store %arg14[%c0_69, %c0_70, %c0_71], %164 {strides = array<i32>} : memref<1x8x32xf32, #tpu.memory_space<vmem>>, vector<1x8x32xf32>,
    } else {
    }
    return
  }
  func.func @transform_0(%arg0: i32, %arg1: i32) -> (i32, i32) {
    %c0_i32 = arith.constant 0 : i32
    %c0_i32_0 = arith.constant 0 : i32
    %c0_i32_1 = arith.constant 0 : i32
    return %c0_i32, %c0_i32_0 : i32, i32
  }
  func.func @transform_1(%arg0: i32, %arg1: i32) -> (i32, i32) {
    %c0_i32 = arith.constant 0 : i32
    %c0_i32_0 = arith.constant 0 : i32
    %c0_i32_1 = arith.constant 0 : i32
    return %c0_i32, %c0_i32_0 : i32, i32
  }
  func.func @transform_2(%arg0: i32, %arg1: i32) -> (i32, i32, i32) {
    %c0_i32 = arith.constant 0 : i32
    %c0_i32_0 = arith.constant 0 : i32
    %c0_i32_1 = arith.constant 0 : i32
    return %arg0, %c0_i32, %c0_i32_0 : i32, i32, i32
  }
  func.func @transform_3(%arg0: i32, %arg1: i32) -> (i32, i32, i32, i32) {
    %c0_i32 = arith.constant 0 : i32
    %c0_i32_0 = arith.constant 0 : i32
    %c0_i32_1 = arith.constant 0 : i32
    %c0_i32_2 = arith.constant 0 : i32
    return %arg0, %c0_i32, %c0_i32_0, %c0_i32_1 : i32, i32, i32, i32
  }
  func.func @transform_4(%arg0: i32, %arg1: i32) -> (i32, i32, i32) {
    %c0_i32 = arith.constant 0 : i32
    %c0_i32_0 = arith.constant 0 : i32
    %c0_i32_1 = arith.constant 0 : i32
    return %arg1, %c0_i32, %c0_i32_0 : i32, i32, i32
  }
  func.func @transform_5(%arg0: i32, %arg1: i32) -> (i32, i32, i32) {
    %c0_i32 = arith.constant 0 : i32
    %c0_i32_0 = arith.constant 0 : i32
    %c0_i32_1 = arith.constant 0 : i32
    return %arg1, %c0_i32, %c0_i32_0 : i32, i32, i32
  }
  func.func @transform_6(%arg0: i32, %arg1: i32) -> (i32, i32, i32) {
    %c0_i32 = arith.constant 0 : i32
    %c0_i32_0 = arith.constant 0 : i32
    %c0_i32_1 = arith.constant 0 : i32
    return %arg1, %c0_i32, %c0_i32_0 : i32, i32, i32
  }
  func.func @transform_7(%arg0: i32, %arg1: i32) -> (i32, i32, i32) {
    %c0_i32 = arith.constant 0 : i32
    %c0_i32_0 = arith.constant 0 : i32
    %c0_i32_1 = arith.constant 0 : i32
    return %arg1, %c0_i32, %c0_i32_0 : i32, i32, i32
  }
  func.func @transform_8(%arg0: i32, %arg1: i32) -> (i32, i32, i32) {
    %c0_i32 = arith.constant 0 : i32
    %c0_i32_0 = arith.constant 0 : i32
    %c0_i32_1 = arith.constant 0 : i32
    return %arg1, %c0_i32, %c0_i32_0 : i32, i32, i32
  }
  func.func @transform_9(%arg0: i32, %arg1: i32) -> (i32, i32, i32) {
    %c0_i32 = arith.constant 0 : i32
    %c0_i32_0 = arith.constant 0 : i32
    %c0_i32_1 = arith.constant 0 : i32
    return %arg1, %c0_i32, %c0_i32_0 : i32, i32, i32
  }
  func.func @transform_10(%arg0: i32, %arg1: i32) -> (i32, i32, i32) {
    %c0_i32 = arith.constant 0 : i32
    %c0_i32_0 = arith.constant 0 : i32
    %c0_i32_1 = arith.constant 0 : i32
    return %arg1, %c0_i32, %c0_i32_0 : i32, i32, i32
  }
  func.func @transform_11(%arg0: i32, %arg1: i32) -> (i32, i32, i32) {
    %c0_i32 = arith.constant 0 : i32
    %c0_i32_0 = arith.constant 0 : i32
    %c0_i32_1 = arith.constant 0 : i32
    return %arg1, %c0_i32, %c0_i32_0 : i32, i32, i32
  }
  func.func @transform_12(%arg0: i32, %arg1: i32) -> (i32, i32, i32) {
    %c0_i32 = arith.constant 0 : i32
    %c0_i32_0 = arith.constant 0 : i32
    %c0_i32_1 = arith.constant 0 : i32
    return %arg0, %c0_i32, %c0_i32_0 : i32, i32, i32
  }
}

</mosaic_0001>

<llo_original>
// kernel: model_forward.2
$region0: #{model_forward.2}
  #allocation0 [shape = 'u32[]', space=smem, size = 0x4, offset = 0x4, fixed_abs, tag = 'smem constant byte address 0x4 - core index']
  #allocation1 [shape = 'u32[144,128]{1,0:T(1,128)}', space=vmem, size = 0x12000, scoped, tag = 'internal scratch']
  #allocation2 [shape = 'f32[8,32]{1,0:T(8,128)}', space=vmem, size = 0x1000, scoped, tag = 'scratch operand']
  #allocation3 [shape = 'f32[1,1]{1,0:T(1,128)S(6)}', space=smem, size = 0x200, scoped, tag = 'scoped memory for model_forward.2']
  %s0 = inlined_call_operand.vmem [shape: f32[2,2], index: 0, kind: input, shape index: {}]
  %s1 = inlined_call_operand.<no memory space> [shape: f32[1,1], index: 1, kind: input, shape index: {}]
  %s2 = inlined_call_operand.vmem [shape: f32[2,8,32], index: 2, kind: input, shape index: {}]
  %s3 = inlined_call_operand.vmem [shape: f32[2,1,8,8], index: 3, kind: input, shape index: {}]
  %s4 = inlined_call_operand.vmem [shape: f32[2,32,96], index: 4, kind: input, shape index: {}]
  %s5 = inlined_call_operand.vmem [shape: f32[2,1,96], index: 5, kind: input, shape index: {}]
  %s6 = inlined_call_operand.vmem [shape: f32[2,32,32], index: 6, kind: input, shape index: {}]
  %s7 = inlined_call_operand.vmem [shape: f32[2,1,32], index: 7, kind: input, shape index: {}]
  %s8 = inlined_call_operand.vmem [shape: f32[2,32,64], index: 8, kind: input, shape index: {}]
  %s9 = inlined_call_operand.vmem [shape: f32[2,1,64], index: 9, kind: input, shape index: {}]
  %s10 = inlined_call_operand.vmem [shape: f32[2,64,32], index: 10, kind: input, shape index: {}]
  %s11 = inlined_call_operand.vmem [shape: f32[2,1,32], index: 11, kind: input, shape index: {}]
  %s12 = inlined_call_operand.vmem [shape: f32[2,8,32], index: 12, kind: output, shape index: {}]
  %s13 = sld [smem:[#allocation0]]
  $region93: #{model_forward.2} parent=0
    _
  %s15 = ssub.s32 1, %s13
  %s16 = scalar_select 0, %s15, %s13
  %17 = sst [smem:[#allocation3]] %s1
  $region1: #{model_forward.2} parent=0
    #allocation4 [shape = 'u8[1024]{0}', space=smem, size = 0x400, scoped, tag = 'input window, operand 0, single buffered']
    #allocation5 [shape = 's32[2]{0}', space=sflag, size = 0x8, scoped, tag = 'scoped memory for model_forward.2']
    %18 = vsyncpa [#allocation5], 0
    loop: start=0, step=1, limit=6
    $region2: #{model_forward.2} parent=1 // loop_pre_header
      _
    $region3: #{model_forward.2} parent=1 // loop_header
      %s20 = sphi 0, %s24
      %p21 = scmp.ge.s32.totalorder %s20, 6
      %s27 = sphi 0, %s39
      %s28 = sphi 0, %s35
      %s29 = sphi 0, %s27
      %s30 = sphi 0, %s28
      %s31 = sphi 0, %s29
      %s32 = sphi 0, %s30
      %s40 = sphi 0, %s40
      %s42 = sphi 0, %s40
      %s43 = sphi 0, %s42
      %s57 = sphi 0, %s43
      %s61 = sphi 0, %s61
      %s63 = sphi 0, %s61
      %s64 = sphi 0, %s63
      %s78 = sphi 0, %s64
      %s84 = sphi 0, %s86
      %s87 = sphi 0, %s84
      %s88 = sphi 0, %s87
      %s104 = sphi 0, %s88
      %s110 = sphi 0, %s112
      %s113 = sphi 0, %s110
      %s114 = sphi 0, %s113
      %s130 = sphi 0, %s114
      %s136 = sphi 0, %s138
      %s139 = sphi 0, %s136
      %s140 = sphi 0, %s139
      %s156 = sphi 0, %s140
      %s162 = sphi 0, %s164
      %s165 = sphi 0, %s162
      %s166 = sphi 0, %s165
      %s182 = sphi 0, %s166
      %s188 = sphi 0, %s190
      %s191 = sphi 0, %s188
      %s192 = sphi 0, %s191
      %s208 = sphi 0, %s192
      %s214 = sphi 0, %s216
      %s217 = sphi 0, %s214
      %s218 = sphi 0, %s217
      %s234 = sphi 0, %s218
      %s240 = sphi 0, %s242
      %s243 = sphi 0, %s240
      %s244 = sphi 0, %s243
      %s260 = sphi 0, %s244
      %s266 = sphi 0, %s268
      %s269 = sphi 0, %s266
      %s270 = sphi 0, %s269
      %s286 = sphi 0, %s270
      %s292 = sphi 0, %s294
      %s295 = sphi 0, %s292
      %s296 = sphi 0, %s295
      %s312 = sphi 0, %s296
      %s318 = sphi 0, %s320
      %s321 = sphi 0, %s318
      %s322 = sphi 0, %s321
      %s338 = sphi 0, %s322
      %s344 = sphi 0, %s346
      %s347 = sphi 0, %s344
      %s348 = sphi 0, %s347
      %s364 = sphi 0, %s348
    $region4: #{model_forward.2} parent=1 // loop_header_branch
      %23 = sbr.rel (%p21) target = $region8
    $region5: #{model_forward.2} parent=1 // loop_body
      %s25 = ssub.s32 %s20, 1
      %s26 = ssub.s32 %s20, 2
      %s33 = sadd.s32 1, %s28
      %p34 = scmp.ge.s32.totalorder %s33, 2
      %s35 = scalar_select %p34, 0, %s33
      %s36 = sadd.s32 1, %s27
      %s37 = scalar_select %p34, %s36, %s27
      %p38 = scmp.ge.s32.totalorder %s37, 2
      %s39 = scalar_select %p38, 0, %s37
      %s41 = sadd.s32 %s40, 1
      %p44 = scmp.eq.s32.totalorder %s20, 3
      %p45 = scmp.ne.s32.totalorder %s40, %s42
      %p46 = scmp.eq.s32.totalorder %s20, 0
      %p47 = por %p45, %p46
      %p48 = scmp.ne.s32.totalorder %s40, %s42
      %p49 = scmp.eq.s32.totalorder %s25, 3
      %p50 = por %p48, %p49
      %p51 = scmp.ne.s32.totalorder %s42, %s43
      %p52 = scmp.eq.s32.totalorder %s25, 0
      %p53 = por %p51, %p52
      %p54 = scmp.ne.s32.totalorder %s42, %s43
      %p55 = scmp.eq.s32.totalorder %s26, 3
      %p56 = por %p54, %p55
      %p58 = scmp.ne.s32.totalorder %s43, %s57
      %p59 = scmp.eq.s32.totalorder %s26, 0
      %p60 = por %p58, %p59
      %s62 = sadd.s32 %s61, 1
      %p65 = scmp.eq.s32.totalorder %s20, 3
      %p66 = scmp.ne.s32.totalorder %s61, %s63
      %p67 = scmp.eq.s32.totalorder %s20, 0
      %p68 = por %p66, %p67
      %p69 = scmp.ne.s32.totalorder %s61, %s63
      %p70 = scmp.eq.s32.totalorder %s25, 3
      %p71 = por %p69, %p70
      %p72 = scmp.ne.s32.totalorder %s63, %s64
      %p73 = scmp.eq.s32.totalorder %s25, 0
      %p74 = por %p72, %p73
      %p75 = scmp.ne.s32.totalorder %s63, %s64
      %p76 = scmp.eq.s32.totalorder %s26, 3
      %p77 = por %p75, %p76
      %p79 = scmp.ne.s32.totalorder %s64, %s78
      %p80 = scmp.eq.s32.totalorder %s26, 0
      %p81 = por %p79, %p80
      %s82 = ssub.s32 %s27, %s39
      %p83 = scmp.eq.s32.totalorder %s82, 0
      %s85 = sadd.s32 %s84, 1
      %s86 = scalar_select %p83, %s84, %s85
      %p89 = pneg %p83
      %p90 = scmp.eq.s32.totalorder %s20, 3
      %p91 = por %p89, %p90
      %p92 = scmp.ne.s32.totalorder %s84, %s87
      %p93 = scmp.eq.s32.totalorder %s20, 0
      %p94 = por %p92, %p93
      %p95 = scmp.ne.s32.totalorder %s84, %s87
      %p96 = scmp.eq.s32.totalorder %s25, 3
      %p97 = por %p95, %p96
      %p98 = scmp.ne.s32.totalorder %s87, %s88
      %p99 = scmp.eq.s32.totalorder %s25, 0
      %p100 = por %p98, %p99
      %p101 = scmp.ne.s32.totalorder %s87, %s88
      %p102 = scmp.eq.s32.totalorder %s26, 3
      %p103 = por %p101, %p102
      %p105 = scmp.ne.s32.totalorder %s88, %s104
      %p106 = scmp.eq.s32.totalorder %s26, 0
      %p107 = por %p105, %p106
      %s108 = ssub.s32 %s27, %s39
      %p109 = scmp.eq.s32.totalorder %s108, 0
      %s111 = sadd.s32 %s110, 1
      %s112 = scalar_select %p109, %s110, %s111
      %p115 = pneg %p109
      %p116 = scmp.eq.s32.totalorder %s20, 3
      %p117 = por %p115, %p116
      %p118 = scmp.ne.s32.totalorder %s110, %s113
      %p119 = scmp.eq.s32.totalorder %s20, 0
      %p120 = por %p118, %p119
      %p121 = scmp.ne.s32.totalorder %s110, %s113
      %p122 = scmp.eq.s32.totalorder %s25, 3
      %p123 = por %p121, %p122
      %p124 = scmp.ne.s32.totalorder %s113, %s114
      %p125 = scmp.eq.s32.totalorder %s25, 0
      %p126 = por %p124, %p125
      %p127 = scmp.ne.s32.totalorder %s113, %s114
      %p128 = scmp.eq.s32.totalorder %s26, 3
      %p129 = por %p127, %p128
      %p131 = scmp.ne.s32.totalorder %s114, %s130
      %p132 = scmp.eq.s32.totalorder %s26, 0
      %p133 = por %p131, %p132
      %s134 = ssub.s32 %s28, %s35
      %p135 = scmp.eq.s32.totalorder %s134, 0
      %s137 = sadd.s32 %s136, 1
      %s138 = scalar_select %p135, %s136, %s137
      %p141 = pneg %p135
      %p142 = scmp.eq.s32.totalorder %s20, 3
      %p143 = por %p141, %p142
      %p144 = scmp.ne.s32.totalorder %s136, %s139
      %p145 = scmp.eq.s32.totalorder %s20, 0
      %p146 = por %p144, %p145
      %p147 = scmp.ne.s32.totalorder %s136, %s139
      %p148 = scmp.eq.s32.totalorder %s25, 3
      %p149 = por %p147, %p148
      %p150 = scmp.ne.s32.totalorder %s139, %s140
      %p151 = scmp.eq.s32.totalorder %s25, 0
      %p152 = por %p150, %p151
      %p153 = scmp.ne.s32.totalorder %s139, %s140
      %p154 = scmp.eq.s32.totalorder %s26, 3
      %p155 = por %p153, %p154
      %p157 = scmp.ne.s32.totalorder %s140, %s156
      %p158 = scmp.eq.s32.totalorder %s26, 0
      %p159 = por %p157, %p158
      %s160 = ssub.s32 %s28, %s35
      %p161 = scmp.eq.s32.totalorder %s160, 0
      %s163 = sadd.s32 %s162, 1
      %s164 = scalar_select %p161, %s162, %s163
      %p167 = pneg %p161
      %p168 = scmp.eq.s32.totalorder %s20, 3
      %p169 = por %p167, %p168
      %p170 = scmp.ne.s32.totalorder %s162, %s165
      %p171 = scmp.eq.s32.totalorder %s20, 0
      %p172 = por %p170, %p171
      %p173 = scmp.ne.s32.totalorder %s162, %s165
      %p174 = scmp.eq.s32.totalorder %s25, 3
      %p175 = por %p173, %p174
      %p176 = scmp.ne.s32.totalorder %s165, %s166
      %p177 = scmp.eq.s32.totalorder %s25, 0
      %p178 = por %p176, %p177
      %p179 = scmp.ne.s32.totalorder %s165, %s166
      %p180 = scmp.eq.s32.totalorder %s26, 3
      %p181 = por %p179, %p180
      %p183 = scmp.ne.s32.totalorder %s166, %s182
      %p184 = scmp.eq.s32.totalorder %s26, 0
      %p185 = por %p183, %p184
      %s186 = ssub.s32 %s28, %s35
      %p187 = scmp.eq.s32.totalorder %s186, 0
      %s189 = sadd.s32 %s188, 1
      %s190 = scalar_select %p187, %s188, %s189
      %p193 = pneg %p187
      %p194 = scmp.eq.s32.totalorder %s20, 3
      %p195 = por %p193, %p194
      %p196 = scmp.ne.s32.totalorder %s188, %s191
      %p197 = scmp.eq.s32.totalorder %s20, 0
      %p198 = por %p196, %p197
      %p199 = scmp.ne.s32.totalorder %s188, %s191
      %p200 = scmp.eq.s32.totalorder %s25, 3
      %p201 = por %p199, %p200
      %p202 = scmp.ne.s32.totalorder %s191, %s192
      %p203 = scmp.eq.s32.totalorder %s25, 0
      %p204 = por %p202, %p203
      %p205 = scmp.ne.s32.totalorder %s191, %s192
      %p206 = scmp.eq.s32.totalorder %s26, 3
      %p207 = por %p205, %p206
      %p209 = scmp.ne.s32.totalorder %s192, %s208
      %p210 = scmp.eq.s32.totalorder %s26, 0
      %p211 = por %p209, %p210
      %s212 = ssub.s32 %s28, %s35
      %p213 = scmp.eq.s32.totalorder %s212, 0
      %s215 = sadd.s32 %s214, 1
      %s216 = scalar_select %p213, %s214, %s215
      %p219 = pneg %p213
      %p220 = scmp.eq.s32.totalorder %s20, 3
      %p221 = por %p219, %p220
      %p222 = scmp.ne.s32.totalorder %s214, %s217
      %p223 = scmp.eq.s32.totalorder %s20, 0
      %p224 = por %p222, %p223
      %p225 = scmp.ne.s32.totalorder %s214, %s217
      %p226 = scmp.eq.s32.totalorder %s25, 3
      %p227 = por %p225, %p226
      %p228 = scmp.ne.s32.totalorder %s217, %s218
      %p229 = scmp.eq.s32.totalorder %s25, 0
      %p230 = por %p228, %p229
      %p231 = scmp.ne.s32.totalorder %s217, %s218
      %p232 = scmp.eq.s32.totalorder %s26, 3
      %p233 = por %p231, %p232
      %p235 = scmp.ne.s32.totalorder %s218, %s234
      %p236 = scmp.eq.s32.totalorder %s26, 0
      %p237 = por %p235, %p236
      %s238 = ssub.s32 %s28, %s35
      %p239 = scmp.eq.s32.totalorder %s238, 0
      %s241 = sadd.s32 %s240, 1
      %s242 = scalar_select %p239, %s240, %s241
      %p245 = pneg %p239
      %p246 = scmp.eq.s32.totalorder %s20, 3
      %p247 = por %p245, %p246
      %p248 = scmp.ne.s32.totalorder %s240, %s243
      %p249 = scmp.eq.s32.totalorder %s20, 0
      %p250 = por %p248, %p249
      %p251 = scmp.ne.s32.totalorder %s240, %s243
      %p252 = scmp.eq.s32.totalorder %s25, 3
      %p253 = por %p251, %p252
      %p254 = scmp.ne.s32.totalorder %s243, %s244
      %p255 = scmp.eq.s32.totalorder %s25, 0
      %p256 = por %p254, %p255
      %p257 = scmp.ne.s32.totalorder %s243, %s244
      %p258 = scmp.eq.s32.totalorder %s26, 3
      %p259 = por %p257, %p258
      %p261 = scmp.ne.s32.totalorder %s244, %s260
      %p262 = scmp.eq.s32.totalorder %s26, 0
      %p263 = por %p261, %p262
      %s264 = ssub.s32 %s28, %s35
      %p265 = scmp.eq.s32.totalorder %s264, 0
      %s267 = sadd.s32 %s266, 1
      %s268 = scalar_select %p265, %s266, %s267
      %p271 = pneg %p265
      %p272 = scmp.eq.s32.totalorder %s20, 3
      %p273 = por %p271, %p272
      %p274 = scmp.ne.s32.totalorder %s266, %s269
      %p275 = scmp.eq.s32.totalorder %s20, 0
      %p276 = por %p274, %p275
      %p277 = scmp.ne.s32.totalorder %s266, %s269
      %p278 = scmp.eq.s32.totalorder %s25, 3
      %p279 = por %p277, %p278
      %p280 = scmp.ne.s32.totalorder %s269, %s270
      %p281 = scmp.eq.s32.totalorder %s25, 0
      %p282 = por %p280, %p281
      %p283 = scmp.ne.s32.totalorder %s269, %s270
      %p284 = scmp.eq.s32.totalorder %s26, 3
      %p285 = por %p283, %p284
      %p287 = scmp.ne.s32.totalorder %s270, %s286
      %p288 = scmp.eq.s32.totalorder %s26, 0
      %p289 = por %p287, %p288
      %s290 = ssub.s32 %s28, %s35
      %p291 = scmp.eq.s32.totalorder %s290, 0
      %s293 = sadd.s32 %s292, 1
      %s294 = scalar_select %p291, %s292, %s293
      %p297 = pneg %p291
      %p298 = scmp.eq.s32.totalorder %s20, 3
      %p299 = por %p297, %p298
      %p300 = scmp.ne.s32.totalorder %s292, %s295
      %p301 = scmp.eq.s32.totalorder %s20, 0
      %p302 = por %p300, %p301
      %p303 = scmp.ne.s32.totalorder %s292, %s295
      %p304 = scmp.eq.s32.totalorder %s25, 3
      %p305 = por %p303, %p304
      %p306 = scmp.ne.s32.totalorder %s295, %s296
      %p307 = scmp.eq.s32.totalorder %s25, 0
      %p308 = por %p306, %p307
      %p309 = scmp.ne.s32.totalorder %s295, %s296
      %p310 = scmp.eq.s32.totalorder %s26, 3
      %p311 = por %p309, %p310
      %p313 = scmp.ne.s32.totalorder %s296, %s312
      %p314 = scmp.eq.s32.totalorder %s26, 0
      %p315 = por %p313, %p314
      %s316 = ssub.s32 %s28, %s35
      %p317 = scmp.eq.s32.totalorder %s316, 0
      %s319 = sadd.s32 %s318, 1
      %s320 = scalar_select %p317, %s318, %s319
      %p323 = pneg %p317
      %p324 = scmp.eq.s32.totalorder %s20, 3
      %p325 = por %p323, %p324
      %p326 = scmp.ne.s32.totalorder %s318, %s321
      %p327 = scmp.eq.s32.totalorder %s20, 0
      %p328 = por %p326, %p327
      %p329 = scmp.ne.s32.totalorder %s318, %s321
      %p330 = scmp.eq.s32.totalorder %s25, 3
      %p331 = por %p329, %p330
      %p332 = scmp.ne.s32.totalorder %s321, %s322
      %p333 = scmp.eq.s32.totalorder %s25, 0
      %p334 = por %p332, %p333
      %p335 = scmp.ne.s32.totalorder %s321, %s322
      %p336 = scmp.eq.s32.totalorder %s26, 3
      %p337 = por %p335, %p336
      %p339 = scmp.ne.s32.totalorder %s322, %s338
      %p340 = scmp.eq.s32.totalorder %s26, 0
      %p341 = por %p339, %p340
      %s342 = ssub.s32 %s27, %s39
      %p343 = scmp.eq.s32.totalorder %s342, 0
      %s345 = sadd.s32 %s344, 1
      %s346 = scalar_select %p343, %s344, %s345
      %p349 = pneg %p343
      %p350 = scmp.eq.s32.totalorder %s20, 3
      %p351 = por %p349, %p350
      %p352 = scmp.ne.s32.totalorder %s344, %s347
      %p353 = scmp.eq.s32.totalorder %s20, 0
      %p354 = por %p352, %p353
      %p355 = scmp.ne.s32.totalorder %s344, %s347
      %p356 = scmp.eq.s32.totalorder %s25, 3
      %p357 = por %p355, %p356
      %p358 = scmp.ne.s32.totalorder %s347, %s348
      %p359 = scmp.eq.s32.totalorder %s25, 0
      %p360 = por %p358, %p359
      %p361 = scmp.ne.s32.totalorder %s347, %s348
      %p362 = scmp.eq.s32.totalorder %s26, 3
      %p363 = por %p361, %p362
      %p365 = scmp.ne.s32.totalorder %s348, %s364
      %p366 = scmp.eq.s32.totalorder %s26, 0
      %p367 = por %p365, %p366
      %p368 = scmp.le.s32.totalorder 1, %s20
      %p369 = scmp.lt.s32.totalorder %s20, 5
      %p370 = pnand %p368, %p369
      %p371 = pneg %p370
      // Predicated region
      $region9: #{model_forward.2} parent=5 // pred_check
        _
      $region10: #{model_forward.2} parent=5 // pred_check_branch
        %373 = sbr.rel (%p370) target = $region12
      $region11: #{model_forward.2} parent=5 // pred_region
        %s374 = ssub.s32 %s20, 1
        // Predicated region
        $region13: #{model_forward.2} parent=11 // pred_check
          %p375 = pneg %p53
        $region14: #{model_forward.2} parent=11 // pred_check_branch
          %377 = sbr.rel (%p375) target = $region16
        $region15: #{model_forward.2} parent=11 // pred_region
          %s379 = ssub.s32 32, 32
          %380 = vsyncadd [#allocation5], %s379
          %s382 = sshll.u32 %s0, 4
          %s383 = int_to_ptr.vmem [resolvable:$true] %s382
          %385 = dma.vmem_to_smem %s383, 32, [#allocation4], [#allocation5]
        $region16: #{model_forward.2} parent=11 // pred_fallthru
          _
        // Predicated region
        $region17: #{model_forward.2} parent=11 // pred_check
          %p386 = pneg %p74
        $region18: #{model_forward.2} parent=11 // pred_check_branch
          %388 = sbr.rel (%p386) target = $region20
        $region19: #{model_forward.2} parent=11 // pred_region
          _
        $region20: #{model_forward.2} parent=11 // pred_fallthru
          _
      $region12: #{model_forward.2} parent=5 // pred_fallthru
        _
      %p389 = scmp.lt.s32.totalorder %s20, 4
      // Predicated region
      $region21: #{model_forward.2} parent=5 // pred_check
        %p390 = pneg %p389
      $region22: #{model_forward.2} parent=5 // pred_check_branch
        %392 = sbr.rel (%p390) target = $region24
      $region23: #{model_forward.2} parent=5 // pred_region
        // Predicated region
        $region25: #{model_forward.2} parent=23 // pred_check
          %p393 = pneg %p94
        $region26: #{model_forward.2} parent=23 // pred_check_branch
          %395 = sbr.rel (%p393) target = $region28
        $region27: #{model_forward.2} parent=23 // pred_region
          %p396 = scmp.lt.s32.totalorder %s27, 1
          %s397 = scalar_select %p396, %s27, 1
          %s398 = smul.addr %s397, 8
          %s399 = scalar_lea.vmem %s2, %s398
        $region28: #{model_forward.2} parent=23 // pred_fallthru
          _
        // Predicated region
        $region29: #{model_forward.2} parent=23 // pred_check
          %p400 = pneg %p120
        $region30: #{model_forward.2} parent=23 // pred_check_branch
          %402 = sbr.rel (%p400) target = $region32
        $region31: #{model_forward.2} parent=23 // pred_region
          %p403 = scmp.lt.s32.totalorder %s27, 1
          %s404 = scalar_select %p403, %s27, 1
          %s405 = smul.addr %s404, 8
          %s406 = scalar_lea.vmem %s3, %s405
        $region32: #{model_forward.2} parent=23 // pred_fallthru
          _
        // Predicated region
        $region33: #{model_forward.2} parent=23 // pred_check
          %p407 = pneg %p146
        $region34: #{model_forward.2} parent=23 // pred_check_branch
          %409 = sbr.rel (%p407) target = $region36
        $region35: #{model_forward.2} parent=23 // pred_region
          %p410 = scmp.lt.s32.totalorder %s28, 1
          %s411 = scalar_select %p410, %s28, 1
          %s412 = smul.addr %s411, 4
          %s413 = smul.addr %s412, 8
          %s414 = scalar_lea.vmem %s4, %s413
        $region36: #{model_forward.2} parent=23 // pred_fallthru
          _
        // Predicated region
        $region37: #{model_forward.2} parent=23 // pred_check
          %p415 = pneg %p172
        $region38: #{model_forward.2} parent=23 // pred_check_branch
          %417 = sbr.rel (%p415) target = $region40
        $region39: #{model_forward.2} parent=23 // pred_region
          %p418 = scmp.lt.s32.totalorder %s28, 1
          %s419 = scalar_select %p418, %s28, 1
          %s420 = scalar_lea.vmem %s5, %s419
        $region40: #{model_forward.2} parent=23 // pred_fallthru
          _
        // Predicated region
        $region41: #{model_forward.2} parent=23 // pred_check
          %p421 = pneg %p198
        $region42: #{model_forward.2} parent=23 // pred_check_branch
          %423 = sbr.rel (%p421) target = $region44
        $region43: #{model_forward.2} parent=23 // pred_region
          %p424 = scmp.lt.s32.totalorder %s28, 1
          %s425 = scalar_select %p424, %s28, 1
          %s426 = smul.addr %s425, 4
          %s427 = smul.addr %s426, 8
          %s428 = scalar_lea.vmem %s6, %s427
        $region44: #{model_forward.2} parent=23 // pred_fallthru
          _
        // Predicated region
        $region45: #{model_forward.2} parent=23 // pred_check
          %p429 = pneg %p224
        $region46: #{model_forward.2} parent=23 // pred_check_branch
          %431 = sbr.rel (%p429) target = $region48
        $region47: #{model_forward.2} parent=23 // pred_region
          %p432 = scmp.lt.s32.totalorder %s28, 1
          %s433 = scalar_select %p432, %s28, 1
          %s434 = scalar_lea.vmem %s7, %s433
        $region48: #{model_forward.2} parent=23 // pred_fallthru
          _
        // Predicated region
        $region49: #{model_forward.2} parent=23 // pred_check
          %p435 = pneg %p250
        $region50: #{model_forward.2} parent=23 // pred_check_branch
          %437 = sbr.rel (%p435) target = $region52
        $region51: #{model_forward.2} parent=23 // pred_region
          %p438 = scmp.lt.s32.totalorder %s28, 1
          %s439 = scalar_select %p438, %s28, 1
          %s440 = smul.addr %s439, 4
          %s441 = smul.addr %s440, 8
          %s442 = scalar_lea.vmem %s8, %s441
        $region52: #{model_forward.2} parent=23 // pred_fallthru
          _
        // Predicated region
        $region53: #{model_forward.2} parent=23 // pred_check
          %p443 = pneg %p276
        $region54: #{model_forward.2} parent=23 // pred_check_branch
          %445 = sbr.rel (%p443) target = $region56
        $region55: #{model_forward.2} parent=23 // pred_region
          %p446 = scmp.lt.s32.totalorder %s28, 1
          %s447 = scalar_select %p446, %s28, 1
          %s448 = scalar_lea.vmem %s9, %s447
        $region56: #{model_forward.2} parent=23 // pred_fallthru
          _
        // Predicated region
        $region57: #{model_forward.2} parent=23 // pred_check
          %p449 = pneg %p302
        $region58: #{model_forward.2} parent=23 // pred_check_branch
          %451 = sbr.rel (%p449) target = $region60
        $region59: #{model_forward.2} parent=23 // pred_region
          %p452 = scmp.lt.s32.totalorder %s28, 1
          %s453 = scalar_select %p452, %s28, 1
          %s454 = smul.addr %s453, 8
          %s455 = smul.addr %s454, 8
          %s456 = scalar_lea.vmem %s10, %s455
        $region60: #{model_forward.2} parent=23 // pred_fallthru
          _
        // Predicated region
        $region61: #{model_forward.2} parent=23 // pred_check
          %p457 = pneg %p328
        $region62: #{model_forward.2} parent=23 // pred_check_branch
          %459 = sbr.rel (%p457) target = $region64
        $region63: #{model_forward.2} parent=23 // pred_region
          %p460 = scmp.lt.s32.totalorder %s28, 1
          %s461 = scalar_select %p460, %s28, 1
          %s462 = scalar_lea.vmem %s11, %s461
        $region64: #{model_forward.2} parent=23 // pred_fallthru
          _
      $region24: #{model_forward.2} parent=5 // pred_fallthru
        _
      %p463 = scmp.le.s32.totalorder 1, %s20
      %p464 = scmp.lt.s32.totalorder %s20, 5
      %p465 = pnand %p463, %p464
      %p466 = pneg %p465
      // Predicated region
      $region65: #{model_forward.2} parent=5 // pred_check
        _
      $region66: #{model_forward.2} parent=5 // pred_check_branch
        %468 = sbr.rel (%p465) target = $region68
      $region67: #{model_forward.2} parent=5 // pred_region
        %s469 = ssub.s32 %s20, 1
        // Predicated region
        $region69: #{model_forward.2} parent=67 // pred_check
          %p470 = pneg %p53
        $region70: #{model_forward.2} parent=67 // pred_check_branch
          %472 = sbr.rel (%p470) target = $region72
        $region71: #{model_forward.2} parent=67 // pred_region
          %473 = dma.done [#allocation5], 32
        $region72: #{model_forward.2} parent=67 // pred_fallthru
          _
        %474 = sfence
        %p475 = pneg %p53
        %p476 = pneg %p50
        %p477 = pneg %p74
        %p478 = pneg %p71
        %p479 = scmp.lt.s32.totalorder %s29, 1
        %s480 = scalar_select %p479, %s29, 1
        %s481 = smul.addr %s480, 8
        %s482 = scalar_lea.vmem %s2, %s481
        %p483 = pneg %p100
        %p484 = pneg %p97
        %p485 = scmp.lt.s32.totalorder %s29, 1
        %s486 = scalar_select %p485, %s29, 1
        %s487 = smul.addr %s486, 8
        %s488 = scalar_lea.vmem %s3, %s487
        %p489 = pneg %p126
        %p490 = pneg %p123
        %p491 = scmp.lt.s32.totalorder %s30, 1
        %s492 = scalar_select %p491, %s30, 1
        %s493 = smul.addr %s492, 4
        %s494 = smul.addr %s493, 8
        %s495 = scalar_lea.vmem %s4, %s494
        %p496 = pneg %p152
        %p497 = pneg %p149
        %p498 = scmp.lt.s32.totalorder %s30, 1
        %s499 = scalar_select %p498, %s30, 1
        %s500 = scalar_lea.vmem %s5, %s499
        %p501 = pneg %p178
        %p502 = pneg %p175
        %p503 = scmp.lt.s32.totalorder %s30, 1
        %s504 = scalar_select %p503, %s30, 1
        %s505 = smul.addr %s504, 4
        %s506 = smul.addr %s505, 8
        %s507 = scalar_lea.vmem %s6, %s506
        %p508 = pneg %p204
        %p509 = pneg %p201
        %p510 = scmp.lt.s32.totalorder %s30, 1
        %s511 = scalar_select %p510, %s30, 1
        %s512 = scalar_lea.vmem %s7, %s511
        %p513 = pneg %p230
        %p514 = pneg %p227
        %p515 = scmp.lt.s32.totalorder %s30, 1
        %s516 = scalar_select %p515, %s30, 1
        %s517 = smul.addr %s516, 4
        %s518 = smul.addr %s517, 8
        %s519 = scalar_lea.vmem %s8, %s518
        %p520 = pneg %p256
        %p521 = pneg %p253
        %p522 = scmp.lt.s32.totalorder %s30, 1
        %s523 = scalar_select %p522, %s30, 1
        %s524 = scalar_lea.vmem %s9, %s523
        %p525 = pneg %p282
        %p526 = pneg %p279
        %p527 = scmp.lt.s32.totalorder %s30, 1
        %s528 = scalar_select %p527, %s30, 1
        %s529 = smul.addr %s528, 8
        %s530 = smul.addr %s529, 8
        %s531 = scalar_lea.vmem %s10, %s530
        %p532 = pneg %p308
        %p533 = pneg %p305
        %p534 = scmp.lt.s32.totalorder %s30, 1
        %s535 = scalar_select %p534, %s30, 1
        %s536 = scalar_lea.vmem %s11, %s535
        %p537 = pneg %p334
        %p538 = pneg %p331
        %p539 = pneg %p360
        %p540 = pneg %p357
        %p541 = scmp.lt.s32.totalorder %s29, 1
        %s542 = scalar_select %p541, %s29, 1
        %s543 = smul.addr %s542, 8
        %s544 = scalar_lea.vmem %s12, %s543
        %p545 = scmp.lt.s32.totalorder %s29, 1
        %s546 = scalar_select %p545, %s29, 1
        %s547 = smul.addr %s546, 8
        %s548 = scalar_lea.vmem %s2, %s547
        %p549 = scmp.lt.s32.totalorder %s29, 1
        %s550 = scalar_select %p549, %s29, 1
        %s551 = smul.addr %s550, 8
        %s552 = scalar_lea.vmem %s3, %s551
        %p553 = scmp.lt.s32.totalorder %s30, 1
        %s554 = scalar_select %p553, %s30, 1
        %s555 = smul.addr %s554, 4
        %s556 = smul.addr %s555, 8
        %s557 = scalar_lea.vmem %s4, %s556
        %p558 = scmp.lt.s32.totalorder %s30, 1
        %s559 = scalar_select %p558, %s30, 1
        %s560 = scalar_lea.vmem %s5, %s559
        %p561 = scmp.lt.s32.totalorder %s30, 1
        %s562 = scalar_select %p561, %s30, 1
        %s563 = smul.addr %s562, 4
        %s564 = smul.addr %s563, 8
        %s565 = scalar_lea.vmem %s6, %s564
        %p566 = scmp.lt.s32.totalorder %s30, 1
        %s567 = scalar_select %p566, %s30, 1
        %s568 = scalar_lea.vmem %s7, %s567
        %p569 = scmp.lt.s32.totalorder %s30, 1
        %s570 = scalar_select %p569, %s30, 1
        %s571 = smul.addr %s570, 4
        %s572 = smul.addr %s571, 8
        %s573 = scalar_lea.vmem %s8, %s572
        %p574 = scmp.lt.s32.totalorder %s30, 1
        %s575 = scalar_select %p574, %s30, 1
        %s576 = scalar_lea.vmem %s9, %s575
        %p577 = scmp.lt.s32.totalorder %s30, 1
        %s578 = scalar_select %p577, %s30, 1
        %s579 = smul.addr %s578, 8
        %s580 = smul.addr %s579, 8
        %s581 = scalar_lea.vmem %s10, %s580
        %p582 = scmp.lt.s32.totalorder %s30, 1
        %s583 = scalar_select %p582, %s30, 1
        %s584 = scalar_lea.vmem %s11, %s583
        %p585 = scmp.lt.s32.totalorder %s29, 1
        %s586 = scalar_select %p585, %s29, 1
        %s587 = smul.addr %s586, 8
        %s588 = scalar_lea.vmem %s12, %s587
        %p589 = scmp.eq.s32.totalorder %s30, 0
        // Predicated region
        $region73: #{model_forward.2} parent=67 // pred_check
          %p590 = pneg %p589
        $region74: #{model_forward.2} parent=67 // pred_check_branch
          %592 = sbr.rel (%p590) target = $region76
        $region75: #{model_forward.2} parent=67 // pred_region
          %v593 = vld [vmem:[%s548] sm:$0xff]
          %vm594 = vcmask 261120
          %595 = vst.msk [vmem:[#allocation2] sm:$0xff] %vm594, %v593
        $region76: #{model_forward.2} parent=67 // pred_fallthru
          _
        %v596 = vld [vmem:[#allocation2] sm:$0xff]
        %v597 = vld [vmem:[%s552] sm:$0xff]
        %s598 = smul.u32 %s30, 128
        %s599 = sld [smem:[#allocation4 + %s598]]
        %v600 = vmul.f32 %v596, %v596
        %vm601 = vcmask 261120
        %v602 = vsel %vm601, %v600, 0.0
        %603 = vadd.xlane.f32.xlu0 %v602
        %v604 = vpop.xlane.xlu0 %603
        %v605 = vmax.f32 %v604, 1e-10
        %v606 = vrsqrt.pop %v605
        %v607 = vstv %s599
        %v608 = vmul.f32 %v607, %v606
        %v609 = vmul.f32 %v596, %v608
        %v610 = vld [vmem:[%s557] sm:$0xff]
        %v611 = vld [vmem:[%s557 + $0x8] sm:$0xff]
        %v612 = vld [vmem:[%s557 + $0x10] sm:$0xff]
        %v613 = vld [vmem:[%s557 + $0x18] sm:$0xff]
        %v614 = vld [vmem:[%s560] sm:$0x1]
        %v616 = vlaneseq
        %v617 = vshrl.u32 %v616, 7
        %v618 = vsub.s32 0, %v617
        %v619 = vrot.slane %v614, %v618
        %v622 = vsel %vm601, %v609, 0
        %624 = vmatprep.subr.mxu0 0.0
        %625 = vmatpush1.msra.mxu0 %v610
        %626 = vmatprep.subr.mxu0 0.0
        %627 = vmatpush1.msra.mxu0 %v611
        %628 = vmatprep.subr.mxu0 0.0
        %629 = vmatpush1.msra.mxu0 %v612
        %630 = vmatprep.subr.mxu0 0.0
        %631 = vmatpush1.msra.mxu0 %v613
        %632 = vmatprep.subr.mxu0 0.0
        %633 = vmatpush1.msra.mxu0 0.0
        %634 = vmatprep.subr.mxu0 0.0
        %635 = vmatpush1.msra.mxu0 0.0
        %636 = vmatprep.subr.mxu0 0.0
        %637 = vmatpush1.msra.mxu0 0.0
        %638 = vmatprep.subr.mxu0 0.0
        %639 = vmatpush1.msra.mxu0 0.0
        %640 = vmatprep.subr.mxu0 0.0
        %641 = vmatpush1.msra.mxu0 0.0
        %642 = vmatprep.subr.mxu0 0.0
        %643 = vmatpush1.msra.mxu0 0.0
        %644 = vmatprep.subr.mxu0 0.0
        %645 = vmatpush1.msra.mxu0 0.0
        %646 = vmatprep.subr.mxu0 0.0
        %647 = vmatpush1.msra.mxu0 0.0
        %648 = vmatprep.subr.mxu0 0.0
        %649 = vmatpush1.msra.mxu0 0.0
        %650 = vmatprep.subr.mxu0 0.0
        %651 = vmatpush1.msra.mxu0 0.0
        %652 = vmatprep.subr.mxu0 0.0
        %653 = vmatpush1.msra.mxu0 0.0
        %654 = vmatprep.subr.mxu0 0.0
        %655 = vmatpush1.msra.mxu0 0.0
        %656 = vmatprep.subr.mxu0 0.0
        %657 = vmatpush1.msra.mxu0 0.0
        %658 = vmatprep.subr.mxu0 0.0
        %659 = vmatpush1.msra.mxu0 0.0
        %660 = vmatprep.subr.mxu0 0.0
        %661 = vmatpush1.msra.mxu0 0.0
        %662 = vmatprep.subr.mxu0 0.0
        %663 = vmatpush1.msra.mxu0 0.0
        %664 = vmatprep.subr.mxu0 0.0
        %665 = vmatpush1.msra.mxu0 0.0
        %666 = vmatprep.subr.mxu0 0.0
        %667 = vmatpush1.msra.mxu0 0.0
        %668 = vmatprep.subr.mxu0 0.0
        %669 = vmatpush1.msra.mxu0 0.0
        %670 = vmatprep.subr.mxu0 0.0
        %671 = vmatpush1.msra.mxu0 0.0
        %672 = vmatprep.subr.mxu0 0.0
        %673 = vmatpush1.msra.mxu0 0.0
        %674 = vmatprep.subr.mxu0 0.0
        %675 = vmatpush1.msra.mxu0 0.0
        %676 = vmatprep.subr.mxu0 0.0
        %677 = vmatpush1.msra.mxu0 0.0
        %678 = vmatprep.subr.mxu0 0.0
        %679 = vmatpush1.msra.mxu0 0.0
        %680 = vmatprep.subr.mxu0 0.0
        %681 = vmatpush1.msra.mxu0 0.0
        %682 = vmatprep.subr.mxu0 0.0
        %683 = vmatpush1.msra.mxu0 0.0
        %684 = vmatprep.subr.mxu0 0.0
        %685 = vmatpush1.msra.mxu0 0.0
        %686 = vmatprep.subr.mxu0 0.0
        %687 = vmatpush1.msra.mxu0 0.0
        %688 = vmatprep.mubr.f32.mxu0 0.0
        %689 = vmatmul.mubr.f32.gmra.mrb[0].mxu0 %v622
        %v690 = vpop.f32.mrb[0].mxu0
        %v691 = vadd.f32 %v619, %v690
        %v692 = vpop.f32.mrb[0].mxu0
        %693 = vdwg.mxu0
        %v694 = vld [vmem:[%s565] sm:$0xff]
        %v695 = vld [vmem:[%s565 + $0x8] sm:$0xff]
        %v696 = vld [vmem:[%s565 + $0x10] sm:$0xff]
        %v697 = vld [vmem:[%s565 + $0x18] sm:$0xff]
        %699 = vrot.lane.b32.xlu0 %v691, 96
        %v700 = vpop.permute.xlu0 %699
        %vm701 = vcmask 64512
        %v702 = vsel %vm701, %v691, 0
        %v704 = vsel %vm701, %v700, 0
        %706 = vmatprep.subr.mxu0 0.0
        %707 = vmatpush1.xpose.msra.mxu0 %v704
        %708 = vmatprep.subr.mxu0 0.0
        %709 = vmatpush1.xpose.msra.mxu0 0.0
        %710 = vmatprep.subr.mxu0 0.0
        %711 = vmatpush1.xpose.msra.mxu0 0.0
        %712 = vmatprep.subr.mxu0 0.0
        %713 = vmatpush1.xpose.msra.mxu0 0.0
        %714 = vmatprep.subr.mxu0 0.0
        %715 = vmatpush1.xpose.msra.mxu0 0.0
        %716 = vmatprep.subr.mxu0 0.0
        %717 = vmatpush1.xpose.msra.mxu0 0.0
        %718 = vmatprep.subr.mxu0 0.0
        %719 = vmatpush1.xpose.msra.mxu0 0.0
        %720 = vmatprep.subr.mxu0 0.0
        %721 = vmatpush1.xpose.msra.mxu0 0.0
        %722 = vmatprep.subr.mxu0 0.0
        %723 = vmatpush1.xpose.msra.mxu0 0.0
        %724 = vmatprep.subr.mxu0 0.0
        %725 = vmatpush1.xpose.msra.mxu0 0.0
        %726 = vmatprep.subr.mxu0 0.0
        %727 = vmatpush1.xpose.msra.mxu0 0.0
        %728 = vmatprep.subr.mxu0 0.0
        %729 = vmatpush1.xpose.msra.mxu0 0.0
        %730 = vmatprep.subr.mxu0 0.0
        %731 = vmatpush1.xpose.msra.mxu0 0.0
        %732 = vmatprep.subr.mxu0 0.0
        %733 = vmatpush1.xpose.msra.mxu0 0.0
        %734 = vmatprep.subr.mxu0 0.0
        %735 = vmatpush1.xpose.msra.mxu0 0.0
        %736 = vmatprep.subr.mxu0 0.0
        %737 = vmatpush1.xpose.msra.mxu0 0.0
        %738 = vmatprep.subr.mxu0 0.0
        %739 = vmatpush1.xpose.msra.mxu0 0.0
        %740 = vmatprep.subr.mxu0 0.0
        %741 = vmatpush1.xpose.msra.mxu0 0.0
        %742 = vmatprep.subr.mxu0 0.0
        %743 = vmatpush1.xpose.msra.mxu0 0.0
        %744 = vmatprep.subr.mxu0 0.0
        %745 = vmatpush1.xpose.msra.mxu0 0.0
        %746 = vmatprep.subr.mxu0 0.0
        %747 = vmatpush1.xpose.msra.mxu0 0.0
        %748 = vmatprep.subr.mxu0 0.0
        %749 = vmatpush1.xpose.msra.mxu0 0.0
        %750 = vmatprep.subr.mxu0 0.0
        %751 = vmatpush1.xpose.msra.mxu0 0.0
        %752 = vmatprep.subr.mxu0 0.0
        %753 = vmatpush1.xpose.msra.mxu0 0.0
        %754 = vmatprep.subr.mxu0 0.0
        %755 = vmatpush1.xpose.msra.mxu0 0.0
        %756 = vmatprep.subr.mxu0 0.0
        %757 = vmatpush1.xpose.msra.mxu0 0.0
        %758 = vmatprep.subr.mxu0 0.0
        %759 = vmatpush1.xpose.msra.mxu0 0.0
        %760 = vmatprep.subr.mxu0 0.0
        %761 = vmatpush1.xpose.msra.mxu0 0.0
        %762 = vmatprep.subr.mxu0 0.0
        %763 = vmatpush1.xpose.msra.mxu0 0.0
        %764 = vmatprep.subr.mxu0 0.0
        %765 = vmatpush1.xpose.msra.mxu0 0.0
        %766 = vmatprep.subr.mxu0 0.0
        %767 = vmatpush1.xpose.msra.mxu0 0.0
        %768 = vmatprep.subr.mxu0 0.0
        %769 = vmatpush1.xpose.msra.mxu0 0.0
        %770 = vmatprep.mubr.f32.mxu0 0.0
        %771 = vmatmul.mubr.f32.gmra.mrb[0].mxu0 %v702
        %v772 = vpop.f32.mrb[0].mxu0
        %v773 = vadd.f32 0.0, %v772
        %v774 = vpop.f32.mrb[0].mxu0
        %775 = vdwg.mxu0
        %v776 = vmul.f32 %v773, 0.35355338
        %v777 = vadd.f32 %v776, %v597
        %v778 = vsel %vm701, %v777, -inf
        %779 = vmax.xlane.f32.xlu0 %v778
        %v780 = vpop.xlane.xlu0 %779
        %v781 = vsub.f32 %v777, %v780
        %v782 = vmul.f32 %v781, 1.442695
        %v783 = vpow.pop %v782
        %v784 = vsel %vm701, %v783, 0.0
        %785 = vadd.xlane.f32.xlu0 %v784
        %v786 = vpop.xlane.xlu0 %785
        %v787 = vrcp.pop %v786
        %v788 = vmul.f32 %v783, %v787
        %789 = vrot.lane.b32.xlu0 %v691, 64
        %v790 = vpop.permute.xlu0 %789
        %v793 = vsel %vm701, %v788, 0
        %795 = vmatprep.subr.mxu0 0.0
        %796 = vmatpush1.msra.mxu0 %v790
        %797 = vmatprep.subr.mxu0 0.0
        %798 = vmatpush1.msra.mxu0 0.0
        %799 = vmatprep.subr.mxu0 0.0
        %800 = vmatpush1.msra.mxu0 0.0
        %801 = vmatprep.subr.mxu0 0.0
        %802 = vmatpush1.msra.mxu0 0.0
        %803 = vmatprep.subr.mxu0 0.0
        %804 = vmatpush1.msra.mxu0 0.0
        %805 = vmatprep.subr.mxu0 0.0
        %806 = vmatpush1.msra.mxu0 0.0
        %807 = vmatprep.subr.mxu0 0.0
        %808 = vmatpush1.msra.mxu0 0.0
        %809 = vmatprep.subr.mxu0 0.0
        %810 = vmatpush1.msra.mxu0 0.0
        %811 = vmatprep.subr.mxu0 0.0
        %812 = vmatpush1.msra.mxu0 0.0
        %813 = vmatprep.subr.mxu0 0.0
        %814 = vmatpush1.msra.mxu0 0.0
        %815 = vmatprep.subr.mxu0 0.0
        %816 = vmatpush1.msra.mxu0 0.0
        %817 = vmatprep.subr.mxu0 0.0
        %818 = vmatpush1.msra.mxu0 0.0
        %819 = vmatprep.subr.mxu0 0.0
        %820 = vmatpush1.msra.mxu0 0.0
        %821 = vmatprep.subr.mxu0 0.0
        %822 = vmatpush1.msra.mxu0 0.0
        %823 = vmatprep.subr.mxu0 0.0
        %824 = vmatpush1.msra.mxu0 0.0
        %825 = vmatprep.subr.mxu0 0.0
        %826 = vmatpush1.msra.mxu0 0.0
        %827 = vmatprep.subr.mxu0 0.0
        %828 = vmatpush1.msra.mxu0 0.0
        %829 = vmatprep.subr.mxu0 0.0
        %830 = vmatpush1.msra.mxu0 0.0
        %831 = vmatprep.subr.mxu0 0.0
        %832 = vmatpush1.msra.mxu0 0.0
        %833 = vmatprep.subr.mxu0 0.0
        %834 = vmatpush1.msra.mxu0 0.0
        %835 = vmatprep.subr.mxu0 0.0
        %836 = vmatpush1.msra.mxu0 0.0
        %837 = vmatprep.subr.mxu0 0.0
        %838 = vmatpush1.msra.mxu0 0.0
        %839 = vmatprep.subr.mxu0 0.0
        %840 = vmatpush1.msra.mxu0 0.0
        %841 = vmatprep.subr.mxu0 0.0
        %842 = vmatpush1.msra.mxu0 0.0
        %843 = vmatprep.subr.mxu0 0.0
        %844 = vmatpush1.msra.mxu0 0.0
        %845 = vmatprep.subr.mxu0 0.0
        %846 = vmatpush1.msra.mxu0 0.0
        %847 = vmatprep.subr.mxu0 0.0
        %848 = vmatpush1.msra.mxu0 0.0
        %849 = vmatprep.subr.mxu0 0.0
        %850 = vmatpush1.msra.mxu0 0.0
        %851 = vmatprep.subr.mxu0 0.0
        %852 = vmatpush1.msra.mxu0 0.0
        %853 = vmatprep.subr.mxu0 0.0
        %854 = vmatpush1.msra.mxu0 0.0
        %855 = vmatprep.subr.mxu0 0.0
        %856 = vmatpush1.msra.mxu0 0.0
        %857 = vmatprep.subr.mxu0 0.0
        %858 = vmatpush1.msra.mxu0 0.0
        %859 = vmatprep.mubr.f32.mxu0 0.0
        %860 = vmatmul.mubr.f32.gmra.mrb[0].mxu0 %v793
        %v861 = vpop.f32.mrb[0].mxu0
        %v862 = vadd.f32 0.0, %v861
        %v863 = vpop.f32.mrb[0].mxu0
        %864 = vdwg.mxu0
        %865 = vrot.lane.b32.xlu0 %v691, 120
        %v866 = vpop.permute.xlu0 %865
        %867 = vrot.lane.b32.xlu0 %v691, 88
        %v868 = vpop.permute.xlu0 %867
        %v869 = vsel %vm701, %v866, 0
        %v871 = vsel %vm701, %v868, 0
        %873 = vmatprep.subr.mxu0 0.0
        %874 = vmatpush1.xpose.msra.mxu0 %v871
        %875 = vmatprep.subr.mxu0 0.0
        %876 = vmatpush1.xpose.msra.mxu0 0.0
        %877 = vmatprep.subr.mxu0 0.0
        %878 = vmatpush1.xpose.msra.mxu0 0.0
        %879 = vmatprep.subr.mxu0 0.0
        %880 = vmatpush1.xpose.msra.mxu0 0.0
        %881 = vmatprep.subr.mxu0 0.0
        %882 = vmatpush1.xpose.msra.mxu0 0.0
        %883 = vmatprep.subr.mxu0 0.0
        %884 = vmatpush1.xpose.msra.mxu0 0.0
        %885 = vmatprep.subr.mxu0 0.0
        %886 = vmatpush1.xpose.msra.mxu0 0.0
        %887 = vmatprep.subr.mxu0 0.0
        %888 = vmatpush1.xpose.msra.mxu0 0.0
        %889 = vmatprep.subr.mxu0 0.0
        %890 = vmatpush1.xpose.msra.mxu0 0.0
        %891 = vmatprep.subr.mxu0 0.0
        %892 = vmatpush1.xpose.msra.mxu0 0.0
        %893 = vmatprep.subr.mxu0 0.0
        %894 = vmatpush1.xpose.msra.mxu0 0.0
        %895 = vmatprep.subr.mxu0 0.0
        %896 = vmatpush1.xpose.msra.mxu0 0.0
        %897 = vmatprep.subr.mxu0 0.0
        %898 = vmatpush1.xpose.msra.mxu0 0.0
        %899 = vmatprep.subr.mxu0 0.0
        %900 = vmatpush1.xpose.msra.mxu0 0.0
        %901 = vmatprep.subr.mxu0 0.0
        %902 = vmatpush1.xpose.msra.mxu0 0.0
        %903 = vmatprep.subr.mxu0 0.0
        %904 = vmatpush1.xpose.msra.mxu0 0.0
        %905 = vmatprep.subr.mxu0 0.0
        %906 = vmatpush1.xpose.msra.mxu0 0.0
        %907 = vmatprep.subr.mxu0 0.0
        %908 = vmatpush1.xpose.msra.mxu0 0.0
        %909 = vmatprep.subr.mxu0 0.0
        %910 = vmatpush1.xpose.msra.mxu0 0.0
        %911 = vmatprep.subr.mxu0 0.0
        %912 = vmatpush1.xpose.msra.mxu0 0.0
        %913 = vmatprep.subr.mxu0 0.0
        %914 = vmatpush1.xpose.msra.mxu0 0.0
        %915 = vmatprep.subr.mxu0 0.0
        %916 = vmatpush1.xpose.msra.mxu0 0.0
        %917 = vmatprep.subr.mxu0 0.0
        %918 = vmatpush1.xpose.msra.mxu0 0.0
        %919 = vmatprep.subr.mxu0 0.0
        %920 = vmatpush1.xpose.msra.mxu0 0.0
        %921 = vmatprep.subr.mxu0 0.0
        %922 = vmatpush1.xpose.msra.mxu0 0.0
        %923 = vmatprep.subr.mxu0 0.0
        %924 = vmatpush1.xpose.msra.mxu0 0.0
        %925 = vmatprep.subr.mxu0 0.0
        %926 = vmatpush1.xpose.msra.mxu0 0.0
        %927 = vmatprep.subr.mxu0 0.0
        %928 = vmatpush1.xpose.msra.mxu0 0.0
        %929 = vmatprep.subr.mxu0 0.0
        %930 = vmatpush1.xpose.msra.mxu0 0.0
        %931 = vmatprep.subr.mxu0 0.0
        %932 = vmatpush1.xpose.msra.mxu0 0.0
        %933 = vmatprep.subr.mxu0 0.0
        %934 = vmatpush1.xpose.msra.mxu0 0.0
        %935 = vmatprep.subr.mxu0 0.0
        %936 = vmatpush1.xpose.msra.mxu0 0.0
        %937 = vmatprep.mubr.f32.mxu0 0.0
        %938 = vmatmul.mubr.f32.gmra.mrb[0].mxu0 %v869
        %v939 = vpop.f32.mrb[0].mxu0
        %v940 = vadd.f32 0.0, %v939
        %v941 = vpop.f32.mrb[0].mxu0
        %942 = vdwg.mxu0
        %v943 = vmul.f32 %v940, 0.35355338
        %v944 = vadd.f32 %v943, %v597
        %v945 = vsel %vm701, %v944, -inf
        %946 = vmax.xlane.f32.xlu0 %v945
        %v947 = vpop.xlane.xlu0 %946
        %v948 = vsub.f32 %v944, %v947
        %v949 = vmul.f32 %v948, 1.442695
        %v950 = vpow.pop %v949
        %v951 = vsel %vm701, %v950, 0.0
        %952 = vadd.xlane.f32.xlu0 %v951
        %v953 = vpop.xlane.xlu0 %952
        %v954 = vrcp.pop %v953
        %v955 = vmul.f32 %v950, %v954
        %956 = vrot.lane.b32.xlu0 %v691, 56
        %v957 = vpop.permute.xlu0 %956
        %v960 = vsel %vm701, %v955, 0
        %962 = vmatprep.subr.mxu0 0.0
        %963 = vmatpush1.msra.mxu0 %v957
        %964 = vmatprep.subr.mxu0 0.0
        %965 = vmatpush1.msra.mxu0 0.0
        %966 = vmatprep.subr.mxu0 0.0
        %967 = vmatpush1.msra.mxu0 0.0
        %968 = vmatprep.subr.mxu0 0.0
        %969 = vmatpush1.msra.mxu0 0.0
        %970 = vmatprep.subr.mxu0 0.0
        %971 = vmatpush1.msra.mxu0 0.0
        %972 = vmatprep.subr.mxu0 0.0
        %973 = vmatpush1.msra.mxu0 0.0
        %974 = vmatprep.subr.mxu0 0.0
        %975 = vmatpush1.msra.mxu0 0.0
        %976 = vmatprep.subr.mxu0 0.0
        %977 = vmatpush1.msra.mxu0 0.0
        %978 = vmatprep.subr.mxu0 0.0
        %979 = vmatpush1.msra.mxu0 0.0
        %980 = vmatprep.subr.mxu0 0.0
        %981 = vmatpush1.msra.mxu0 0.0
        %982 = vmatprep.subr.mxu0 0.0
        %983 = vmatpush1.msra.mxu0 0.0
        %984 = vmatprep.subr.mxu0 0.0
        %985 = vmatpush1.msra.mxu0 0.0
        %986 = vmatprep.subr.mxu0 0.0
        %987 = vmatpush1.msra.mxu0 0.0
        %988 = vmatprep.subr.mxu0 0.0
        %989 = vmatpush1.msra.mxu0 0.0
        %990 = vmatprep.subr.mxu0 0.0
        %991 = vmatpush1.msra.mxu0 0.0
        %992 = vmatprep.subr.mxu0 0.0
        %993 = vmatpush1.msra.mxu0 0.0
        %994 = vmatprep.subr.mxu0 0.0
        %995 = vmatpush1.msra.mxu0 0.0
        %996 = vmatprep.subr.mxu0 0.0
        %997 = vmatpush1.msra.mxu0 0.0
        %998 = vmatprep.subr.mxu0 0.0
        %999 = vmatpush1.msra.mxu0 0.0
        %1000 = vmatprep.subr.mxu0 0.0
        %1001 = vmatpush1.msra.mxu0 0.0
        %1002 = vmatprep.subr.mxu0 0.0
        %1003 = vmatpush1.msra.mxu0 0.0
        %1004 = vmatprep.subr.mxu0 0.0
        %1005 = vmatpush1.msra.mxu0 0.0
        %1006 = vmatprep.subr.mxu0 0.0
        %1007 = vmatpush1.msra.mxu0 0.0
        %1008 = vmatprep.subr.mxu0 0.0
        %1009 = vmatpush1.msra.mxu0 0.0
        %1010 = vmatprep.subr.mxu0 0.0
        %1011 = vmatpush1.msra.mxu0 0.0
        %1012 = vmatprep.subr.mxu0 0.0
        %1013 = vmatpush1.msra.mxu0 0.0
        %1014 = vmatprep.subr.mxu0 0.0
        %1015 = vmatpush1.msra.mxu0 0.0
        %1016 = vmatprep.subr.mxu0 0.0
        %1017 = vmatpush1.msra.mxu0 0.0
        %1018 = vmatprep.subr.mxu0 0.0
        %1019 = vmatpush1.msra.mxu0 0.0
        %1020 = vmatprep.subr.mxu0 0.0
        %1021 = vmatpush1.msra.mxu0 0.0
        %1022 = vmatprep.subr.mxu0 0.0
        %1023 = vmatpush1.msra.mxu0 0.0
        %1024 = vmatprep.subr.mxu0 0.0
        %1025 = vmatpush1.msra.mxu0 0.0
        %1026 = vmatprep.mubr.f32.mxu0 0.0
        %1027 = vmatmul.mubr.f32.gmra.mrb[0].mxu0 %v960
        %v1028 = vpop.f32.mrb[0].mxu0
        %v1029 = vadd.f32 0.0, %v1028
        %v1030 = vpop.f32.mrb[0].mxu0
        %1031 = vdwg.mxu0
        %v1033 = vsel %vm701, %v1029, 0
        %1035 = vmatprep.subr.mxu0 0.0
        %1036 = vmatpush1.msra.mxu0 %v695
        %1037 = vmatprep.subr.mxu0 0.0
        %1038 = vmatpush1.msra.mxu0 0.0
        %1039 = vmatprep.subr.mxu0 0.0
        %1040 = vmatpush1.msra.mxu0 0.0
        %1041 = vmatprep.subr.mxu0 0.0
        %1042 = vmatpush1.msra.mxu0 0.0
        %1043 = vmatprep.subr.mxu0 0.0
        %1044 = vmatpush1.msra.mxu0 0.0
        %1045 = vmatprep.subr.mxu0 0.0
        %1046 = vmatpush1.msra.mxu0 0.0
        %1047 = vmatprep.subr.mxu0 0.0
        %1048 = vmatpush1.msra.mxu0 0.0
        %1049 = vmatprep.subr.mxu0 0.0
        %1050 = vmatpush1.msra.mxu0 0.0
        %1051 = vmatprep.subr.mxu0 0.0
        %1052 = vmatpush1.msra.mxu0 0.0
        %1053 = vmatprep.subr.mxu0 0.0
        %1054 = vmatpush1.msra.mxu0 0.0
        %1055 = vmatprep.subr.mxu0 0.0
        %1056 = vmatpush1.msra.mxu0 0.0
        %1057 = vmatprep.subr.mxu0 0.0
        %1058 = vmatpush1.msra.mxu0 0.0
        %1059 = vmatprep.subr.mxu0 0.0
        %1060 = vmatpush1.msra.mxu0 0.0
        %1061 = vmatprep.subr.mxu0 0.0
        %1062 = vmatpush1.msra.mxu0 0.0
        %1063 = vmatprep.subr.mxu0 0.0
        %1064 = vmatpush1.msra.mxu0 0.0
        %1065 = vmatprep.subr.mxu0 0.0
        %1066 = vmatpush1.msra.mxu0 0.0
        %1067 = vmatprep.subr.mxu0 0.0
        %1068 = vmatpush1.msra.mxu0 0.0
        %1069 = vmatprep.subr.mxu0 0.0
        %1070 = vmatpush1.msra.mxu0 0.0
        %1071 = vmatprep.subr.mxu0 0.0
        %1072 = vmatpush1.msra.mxu0 0.0
        %1073 = vmatprep.subr.mxu0 0.0
        %1074 = vmatpush1.msra.mxu0 0.0
        %1075 = vmatprep.subr.mxu0 0.0
        %1076 = vmatpush1.msra.mxu0 0.0
        %1077 = vmatprep.subr.mxu0 0.0
        %1078 = vmatpush1.msra.mxu0 0.0
        %1079 = vmatprep.subr.mxu0 0.0
        %1080 = vmatpush1.msra.mxu0 0.0
        %1081 = vmatprep.subr.mxu0 0.0
        %1082 = vmatpush1.msra.mxu0 0.0
        %1083 = vmatprep.subr.mxu0 0.0
        %1084 = vmatpush1.msra.mxu0 0.0
        %1085 = vmatprep.subr.mxu0 0.0
        %1086 = vmatpush1.msra.mxu0 0.0
        %1087 = vmatprep.subr.mxu0 0.0
        %1088 = vmatpush1.msra.mxu0 0.0
        %1089 = vmatprep.subr.mxu0 0.0
        %1090 = vmatpush1.msra.mxu0 0.0
        %1091 = vmatprep.subr.mxu0 0.0
        %1092 = vmatpush1.msra.mxu0 0.0
        %1093 = vmatprep.subr.mxu0 0.0
        %1094 = vmatpush1.msra.mxu0 0.0
        %1095 = vmatprep.subr.mxu0 0.0
        %1096 = vmatpush1.msra.mxu0 0.0
        %1097 = vmatprep.subr.mxu0 0.0
        %1098 = vmatpush1.msra.mxu0 0.0
        %1099 = vmatprep.mubr.f32.mxu0 0.0
        %1100 = vmatmul.mubr.f32.gmra.mrb[0].mxu0 %v1033
        %v1101 = vpop.f32.mrb[0].mxu0
        %v1102 = vadd.f32 0.0, %v1101
        %v1103 = vpop.f32.mrb[0].mxu0
        %1104 = vdwg.mxu0
        %v1106 = vsel %vm701, %v862, 0
        %1108 = vmatprep.subr.mxu0 0.0
        %1109 = vmatpush1.msra.mxu0 %v694
        %1110 = vmatprep.subr.mxu0 0.0
        %1111 = vmatpush1.msra.mxu0 0.0
        %1112 = vmatprep.subr.mxu0 0.0
        %1113 = vmatpush1.msra.mxu0 0.0
        %1114 = vmatprep.subr.mxu0 0.0
        %1115 = vmatpush1.msra.mxu0 0.0
        %1116 = vmatprep.subr.mxu0 0.0
        %1117 = vmatpush1.msra.mxu0 0.0
        %1118 = vmatprep.subr.mxu0 0.0
        %1119 = vmatpush1.msra.mxu0 0.0
        %1120 = vmatprep.subr.mxu0 0.0
        %1121 = vmatpush1.msra.mxu0 0.0
        %1122 = vmatprep.subr.mxu0 0.0
        %1123 = vmatpush1.msra.mxu0 0.0
        %1124 = vmatprep.subr.mxu0 0.0
        %1125 = vmatpush1.msra.mxu0 0.0
        %1126 = vmatprep.subr.mxu0 0.0
        %1127 = vmatpush1.msra.mxu0 0.0
        %1128 = vmatprep.subr.mxu0 0.0
        %1129 = vmatpush1.msra.mxu0 0.0
        %1130 = vmatprep.subr.mxu0 0.0
        %1131 = vmatpush1.msra.mxu0 0.0
        %1132 = vmatprep.subr.mxu0 0.0
        %1133 = vmatpush1.msra.mxu0 0.0
        %1134 = vmatprep.subr.mxu0 0.0
        %1135 = vmatpush1.msra.mxu0 0.0
        %1136 = vmatprep.subr.mxu0 0.0
        %1137 = vmatpush1.msra.mxu0 0.0
        %1138 = vmatprep.subr.mxu0 0.0
        %1139 = vmatpush1.msra.mxu0 0.0
        %1140 = vmatprep.subr.mxu0 0.0
        %1141 = vmatpush1.msra.mxu0 0.0
        %1142 = vmatprep.subr.mxu0 0.0
        %1143 = vmatpush1.msra.mxu0 0.0
        %1144 = vmatprep.subr.mxu0 0.0
        %1145 = vmatpush1.msra.mxu0 0.0
        %1146 = vmatprep.subr.mxu0 0.0
        %1147 = vmatpush1.msra.mxu0 0.0
        %1148 = vmatprep.subr.mxu0 0.0
        %1149 = vmatpush1.msra.mxu0 0.0
        %1150 = vmatprep.subr.mxu0 0.0
        %1151 = vmatpush1.msra.mxu0 0.0
        %1152 = vmatprep.subr.mxu0 0.0
        %1153 = vmatpush1.msra.mxu0 0.0
        %1154 = vmatprep.subr.mxu0 0.0
        %1155 = vmatpush1.msra.mxu0 0.0
        %1156 = vmatprep.subr.mxu0 0.0
        %1157 = vmatpush1.msra.mxu0 0.0
        %1158 = vmatprep.subr.mxu0 0.0
        %1159 = vmatpush1.msra.mxu0 0.0
        %1160 = vmatprep.subr.mxu0 0.0
        %1161 = vmatpush1.msra.mxu0 0.0
        %1162 = vmatprep.subr.mxu0 0.0
        %1163 = vmatpush1.msra.mxu0 0.0
        %1164 = vmatprep.subr.mxu0 0.0
        %1165 = vmatpush1.msra.mxu0 0.0
        %1166 = vmatprep.subr.mxu0 0.0
        %1167 = vmatpush1.msra.mxu0 0.0
        %1168 = vmatprep.subr.mxu0 0.0
        %1169 = vmatpush1.msra.mxu0 0.0
        %1170 = vmatprep.subr.mxu0 0.0
        %1171 = vmatpush1.msra.mxu0 0.0
        %1172 = vmatprep.mubr.f32.mxu0 0.0
        %1173 = vmatmul.mubr.f32.gmra.mrb[0].mxu0 %v1106
        %v1174 = vpop.f32.mrb[0].mxu0
        %v1175 = vadd.f32 %v1102, %v1174
        %v1176 = vpop.f32.mrb[0].mxu0
        %1177 = vdwg.mxu0
        %1178 = vrot.lane.b32.xlu0 %v691, 112
        %v1179 = vpop.permute.xlu0 %1178
        %1180 = vrot.lane.b32.xlu0 %v691, 80
        %v1181 = vpop.permute.xlu0 %1180
        %v1182 = vsel %vm701, %v1179, 0
        %v1184 = vsel %vm701, %v1181, 0
        %1186 = vmatprep.subr.mxu0 0.0
        %1187 = vmatpush1.xpose.msra.mxu0 %v1184
        %1188 = vmatprep.subr.mxu0 0.0
        %1189 = vmatpush1.xpose.msra.mxu0 0.0
        %1190 = vmatprep.subr.mxu0 0.0
        %1191 = vmatpush1.xpose.msra.mxu0 0.0
        %1192 = vmatprep.subr.mxu0 0.0
        %1193 = vmatpush1.xpose.msra.mxu0 0.0
        %1194 = vmatprep.subr.mxu0 0.0
        %1195 = vmatpush1.xpose.msra.mxu0 0.0
        %1196 = vmatprep.subr.mxu0 0.0
        %1197 = vmatpush1.xpose.msra.mxu0 0.0
        %1198 = vmatprep.subr.mxu0 0.0
        %1199 = vmatpush1.xpose.msra.mxu0 0.0
        %1200 = vmatprep.subr.mxu0 0.0
        %1201 = vmatpush1.xpose.msra.mxu0 0.0
        %1202 = vmatprep.subr.mxu0 0.0
        %1203 = vmatpush1.xpose.msra.mxu0 0.0
        %1204 = vmatprep.subr.mxu0 0.0
        %1205 = vmatpush1.xpose.msra.mxu0 0.0
        %1206 = vmatprep.subr.mxu0 0.0
        %1207 = vmatpush1.xpose.msra.mxu0 0.0
        %1208 = vmatprep.subr.mxu0 0.0
        %1209 = vmatpush1.xpose.msra.mxu0 0.0
        %1210 = vmatprep.subr.mxu0 0.0
        %1211 = vmatpush1.xpose.msra.mxu0 0.0
        %1212 = vmatprep.subr.mxu0 0.0
        %1213 = vmatpush1.xpose.msra.mxu0 0.0
        %1214 = vmatprep.subr.mxu0 0.0
        %1215 = vmatpush1.xpose.msra.mxu0 0.0
        %1216 = vmatprep.subr.mxu0 0.0
        %1217 = vmatpush1.xpose.msra.mxu0 0.0
        %1218 = vmatprep.subr.mxu0 0.0
        %1219 = vmatpush1.xpose.msra.mxu0 0.0
        %1220 = vmatprep.subr.mxu0 0.0
        %1221 = vmatpush1.xpose.msra.mxu0 0.0
        %1222 = vmatprep.subr.mxu0 0.0
        %1223 = vmatpush1.xpose.msra.mxu0 0.0
        %1224 = vmatprep.subr.mxu0 0.0
        %1225 = vmatpush1.xpose.msra.mxu0 0.0
        %1226 = vmatprep.subr.mxu0 0.0
        %1227 = vmatpush1.xpose.msra.mxu0 0.0
        %1228 = vmatprep.subr.mxu0 0.0
        %1229 = vmatpush1.xpose.msra.mxu0 0.0
        %1230 = vmatprep.subr.mxu0 0.0
        %1231 = vmatpush1.xpose.msra.mxu0 0.0
        %1232 = vmatprep.subr.mxu0 0.0
        %1233 = vmatpush1.xpose.msra.mxu0 0.0
        %1234 = vmatprep.subr.mxu0 0.0
        %1235 = vmatpush1.xpose.msra.mxu0 0.0
        %1236 = vmatprep.subr.mxu0 0.0
        %1237 = vmatpush1.xpose.msra.mxu0 0.0
        %1238 = vmatprep.subr.mxu0 0.0
        %1239 = vmatpush1.xpose.msra.mxu0 0.0
        %1240 = vmatprep.subr.mxu0 0.0
        %1241 = vmatpush1.xpose.msra.mxu0 0.0
        %1242 = vmatprep.subr.mxu0 0.0
        %1243 = vmatpush1.xpose.msra.mxu0 0.0
        %1244 = vmatprep.subr.mxu0 0.0
        %1245 = vmatpush1.xpose.msra.mxu0 0.0
        %1246 = vmatprep.subr.mxu0 0.0
        %1247 = vmatpush1.xpose.msra.mxu0 0.0
        %1248 = vmatprep.subr.mxu0 0.0
        %1249 = vmatpush1.xpose.msra.mxu0 0.0
        %1250 = vmatprep.mubr.f32.mxu0 0.0
        %1251 = vmatmul.mubr.f32.gmra.mrb[0].mxu0 %v1182
        %v1252 = vpop.f32.mrb[0].mxu0
        %v1253 = vadd.f32 0.0, %v1252
        %v1254 = vpop.f32.mrb[0].mxu0
        %1255 = vdwg.mxu0
        %v1256 = vmul.f32 %v1253, 0.35355338
        %v1257 = vadd.f32 %v1256, %v597
        %v1258 = vsel %vm701, %v1257, -inf
        %1259 = vmax.xlane.f32.xlu0 %v1258
        %v1260 = vpop.xlane.xlu0 %1259
        %v1261 = vsub.f32 %v1257, %v1260
        %v1262 = vmul.f32 %v1261, 1.442695
        %v1263 = vpow.pop %v1262
        %v1264 = vsel %vm701, %v1263, 0.0
        %1265 = vadd.xlane.f32.xlu0 %v1264
        %v1266 = vpop.xlane.xlu0 %1265
        %v1267 = vrcp.pop %v1266
        %v1268 = vmul.f32 %v1263, %v1267
        %1269 = vrot.lane.b32.xlu0 %v691, 48
        %v1270 = vpop.permute.xlu0 %1269
        %v1273 = vsel %vm701, %v1268, 0
        %1275 = vmatprep.subr.mxu0 0.0
        %1276 = vmatpush1.msra.mxu0 %v1270
        %1277 = vmatprep.subr.mxu0 0.0
        %1278 = vmatpush1.msra.mxu0 0.0
        %1279 = vmatprep.subr.mxu0 0.0
        %1280 = vmatpush1.msra.mxu0 0.0
        %1281 = vmatprep.subr.mxu0 0.0
        %1282 = vmatpush1.msra.mxu0 0.0
        %1283 = vmatprep.subr.mxu0 0.0
        %1284 = vmatpush1.msra.mxu0 0.0
        %1285 = vmatprep.subr.mxu0 0.0
        %1286 = vmatpush1.msra.mxu0 0.0
        %1287 = vmatprep.subr.mxu0 0.0
        %1288 = vmatpush1.msra.mxu0 0.0
        %1289 = vmatprep.subr.mxu0 0.0
        %1290 = vmatpush1.msra.mxu0 0.0
        %1291 = vmatprep.subr.mxu0 0.0
        %1292 = vmatpush1.msra.mxu0 0.0
        %1293 = vmatprep.subr.mxu0 0.0
        %1294 = vmatpush1.msra.mxu0 0.0
        %1295 = vmatprep.subr.mxu0 0.0
        %1296 = vmatpush1.msra.mxu0 0.0
        %1297 = vmatprep.subr.mxu0 0.0
        %1298 = vmatpush1.msra.mxu0 0.0
        %1299 = vmatprep.subr.mxu0 0.0
        %1300 = vmatpush1.msra.mxu0 0.0
        %1301 = vmatprep.subr.mxu0 0.0
        %1302 = vmatpush1.msra.mxu0 0.0
        %1303 = vmatprep.subr.mxu0 0.0
        %1304 = vmatpush1.msra.mxu0 0.0
        %1305 = vmatprep.subr.mxu0 0.0
        %1306 = vmatpush1.msra.mxu0 0.0
        %1307 = vmatprep.subr.mxu0 0.0
        %1308 = vmatpush1.msra.mxu0 0.0
        %1309 = vmatprep.subr.mxu0 0.0
        %1310 = vmatpush1.msra.mxu0 0.0
        %1311 = vmatprep.subr.mxu0 0.0
        %1312 = vmatpush1.msra.mxu0 0.0
        %1313 = vmatprep.subr.mxu0 0.0
        %1314 = vmatpush1.msra.mxu0 0.0
        %1315 = vmatprep.subr.mxu0 0.0
        %1316 = vmatpush1.msra.mxu0 0.0
        %1317 = vmatprep.subr.mxu0 0.0
        %1318 = vmatpush1.msra.mxu0 0.0
        %1319 = vmatprep.subr.mxu0 0.0
        %1320 = vmatpush1.msra.mxu0 0.0
        %1321 = vmatprep.subr.mxu0 0.0
        %1322 = vmatpush1.msra.mxu0 0.0
        %1323 = vmatprep.subr.mxu0 0.0
        %1324 = vmatpush1.msra.mxu0 0.0
        %1325 = vmatprep.subr.mxu0 0.0
        %1326 = vmatpush1.msra.mxu0 0.0
        %1327 = vmatprep.subr.mxu0 0.0
        %1328 = vmatpush1.msra.mxu0 0.0
        %1329 = vmatprep.subr.mxu0 0.0
        %1330 = vmatpush1.msra.mxu0 0.0
        %1331 = vmatprep.subr.mxu0 0.0
        %1332 = vmatpush1.msra.mxu0 0.0
        %1333 = vmatprep.subr.mxu0 0.0
        %1334 = vmatpush1.msra.mxu0 0.0
        %1335 = vmatprep.subr.mxu0 0.0
        %1336 = vmatpush1.msra.mxu0 0.0
        %1337 = vmatprep.subr.mxu0 0.0
        %1338 = vmatpush1.msra.mxu0 0.0
        %1339 = vmatprep.mubr.f32.mxu0 0.0
        %1340 = vmatmul.mubr.f32.gmra.mrb[0].mxu0 %v1273
        %v1341 = vpop.f32.mrb[0].mxu0
        %v1342 = vadd.f32 0.0, %v1341
        %v1343 = vpop.f32.mrb[0].mxu0
        %1344 = vdwg.mxu0
        %v1346 = vsel %vm701, %v1342, 0
        %1348 = vmatprep.subr.mxu0 0.0
        %1349 = vmatpush1.msra.mxu0 %v696
        %1350 = vmatprep.subr.mxu0 0.0
        %1351 = vmatpush1.msra.mxu0 0.0
        %1352 = vmatprep.subr.mxu0 0.0
        %1353 = vmatpush1.msra.mxu0 0.0
        %1354 = vmatprep.subr.mxu0 0.0
        %1355 = vmatpush1.msra.mxu0 0.0
        %1356 = vmatprep.subr.mxu0 0.0
        %1357 = vmatpush1.msra.mxu0 0.0
        %1358 = vmatprep.subr.mxu0 0.0
        %1359 = vmatpush1.msra.mxu0 0.0
        %1360 = vmatprep.subr.mxu0 0.0
        %1361 = vmatpush1.msra.mxu0 0.0
        %1362 = vmatprep.subr.mxu0 0.0
        %1363 = vmatpush1.msra.mxu0 0.0
        %1364 = vmatprep.subr.mxu0 0.0
        %1365 = vmatpush1.msra.mxu0 0.0
        %1366 = vmatprep.subr.mxu0 0.0
        %1367 = vmatpush1.msra.mxu0 0.0
        %1368 = vmatprep.subr.mxu0 0.0
        %1369 = vmatpush1.msra.mxu0 0.0
        %1370 = vmatprep.subr.mxu0 0.0
        %1371 = vmatpush1.msra.mxu0 0.0
        %1372 = vmatprep.subr.mxu0 0.0
        %1373 = vmatpush1.msra.mxu0 0.0
        %1374 = vmatprep.subr.mxu0 0.0
        %1375 = vmatpush1.msra.mxu0 0.0
        %1376 = vmatprep.subr.mxu0 0.0
        %1377 = vmatpush1.msra.mxu0 0.0
        %1378 = vmatprep.subr.mxu0 0.0
        %1379 = vmatpush1.msra.mxu0 0.0
        %1380 = vmatprep.subr.mxu0 0.0
        %1381 = vmatpush1.msra.mxu0 0.0
        %1382 = vmatprep.subr.mxu0 0.0
        %1383 = vmatpush1.msra.mxu0 0.0
        %1384 = vmatprep.subr.mxu0 0.0
        %1385 = vmatpush1.msra.mxu0 0.0
        %1386 = vmatprep.subr.mxu0 0.0
        %1387 = vmatpush1.msra.mxu0 0.0
        %1388 = vmatprep.subr.mxu0 0.0
        %1389 = vmatpush1.msra.mxu0 0.0
        %1390 = vmatprep.subr.mxu0 0.0
        %1391 = vmatpush1.msra.mxu0 0.0
        %1392 = vmatprep.subr.mxu0 0.0
        %1393 = vmatpush1.msra.mxu0 0.0
        %1394 = vmatprep.subr.mxu0 0.0
        %1395 = vmatpush1.msra.mxu0 0.0
        %1396 = vmatprep.subr.mxu0 0.0
        %1397 = vmatpush1.msra.mxu0 0.0
        %1398 = vmatprep.subr.mxu0 0.0
        %1399 = vmatpush1.msra.mxu0 0.0
        %1400 = vmatprep.subr.mxu0 0.0
        %1401 = vmatpush1.msra.mxu0 0.0
        %1402 = vmatprep.subr.mxu0 0.0
        %1403 = vmatpush1.msra.mxu0 0.0
        %1404 = vmatprep.subr.mxu0 0.0
        %1405 = vmatpush1.msra.mxu0 0.0
        %1406 = vmatprep.subr.mxu0 0.0
        %1407 = vmatpush1.msra.mxu0 0.0
        %1408 = vmatprep.subr.mxu0 0.0
        %1409 = vmatpush1.msra.mxu0 0.0
        %1410 = vmatprep.subr.mxu0 0.0
        %1411 = vmatpush1.msra.mxu0 0.0
        %1412 = vmatprep.mubr.f32.mxu0 0.0
        %1413 = vmatmul.mubr.f32.gmra.mrb[0].mxu0 %v1346
        %v1414 = vpop.f32.mrb[0].mxu0
        %v1415 = vadd.f32 0.0, %v1414
        %v1416 = vpop.f32.mrb[0].mxu0
        %1417 = vdwg.mxu0
        %v1418 = vadd.f32 %v1175, %v1415
        %1419 = vrot.lane.b32.xlu0 %v691, 104
        %v1420 = vpop.permute.xlu0 %1419
        %1421 = vrot.lane.b32.xlu0 %v691, 72
        %v1422 = vpop.permute.xlu0 %1421
        %v1423 = vsel %vm701, %v1420, 0
        %v1425 = vsel %vm701, %v1422, 0
        %1427 = vmatprep.subr.mxu0 0.0
        %1428 = vmatpush1.xpose.msra.mxu0 %v1425
        %1429 = vmatprep.subr.mxu0 0.0
        %1430 = vmatpush1.xpose.msra.mxu0 0.0
        %1431 = vmatprep.subr.mxu0 0.0
        %1432 = vmatpush1.xpose.msra.mxu0 0.0
        %1433 = vmatprep.subr.mxu0 0.0
        %1434 = vmatpush1.xpose.msra.mxu0 0.0
        %1435 = vmatprep.subr.mxu0 0.0
        %1436 = vmatpush1.xpose.msra.mxu0 0.0
        %1437 = vmatprep.subr.mxu0 0.0
        %1438 = vmatpush1.xpose.msra.mxu0 0.0
        %1439 = vmatprep.subr.mxu0 0.0
        %1440 = vmatpush1.xpose.msra.mxu0 0.0
        %1441 = vmatprep.subr.mxu0 0.0
        %1442 = vmatpush1.xpose.msra.mxu0 0.0
        %1443 = vmatprep.subr.mxu0 0.0
        %1444 = vmatpush1.xpose.msra.mxu0 0.0
        %1445 = vmatprep.subr.mxu0 0.0
        %1446 = vmatpush1.xpose.msra.mxu0 0.0
        %1447 = vmatprep.subr.mxu0 0.0
        %1448 = vmatpush1.xpose.msra.mxu0 0.0
        %1449 = vmatprep.subr.mxu0 0.0
        %1450 = vmatpush1.xpose.msra.mxu0 0.0
        %1451 = vmatprep.subr.mxu0 0.0
        %1452 = vmatpush1.xpose.msra.mxu0 0.0
        %1453 = vmatprep.subr.mxu0 0.0
        %1454 = vmatpush1.xpose.msra.mxu0 0.0
        %1455 = vmatprep.subr.mxu0 0.0
        %1456 = vmatpush1.xpose.msra.mxu0 0.0
        %1457 = vmatprep.subr.mxu0 0.0
        %1458 = vmatpush1.xpose.msra.mxu0 0.0
        %1459 = vmatprep.subr.mxu0 0.0
        %1460 = vmatpush1.xpose.msra.mxu0 0.0
        %1461 = vmatprep.subr.mxu0 0.0
        %1462 = vmatpush1.xpose.msra.mxu0 0.0
        %1463 = vmatprep.subr.mxu0 0.0
        %1464 = vmatpush1.xpose.msra.mxu0 0.0
        %1465 = vmatprep.subr.mxu0 0.0
        %1466 = vmatpush1.xpose.msra.mxu0 0.0
        %1467 = vmatprep.subr.mxu0 0.0
        %1468 = vmatpush1.xpose.msra.mxu0 0.0
        %1469 = vmatprep.subr.mxu0 0.0
        %1470 = vmatpush1.xpose.msra.mxu0 0.0
        %1471 = vmatprep.subr.mxu0 0.0
        %1472 = vmatpush1.xpose.msra.mxu0 0.0
        %1473 = vmatprep.subr.mxu0 0.0
        %1474 = vmatpush1.xpose.msra.mxu0 0.0
        %1475 = vmatprep.subr.mxu0 0.0
        %1476 = vmatpush1.xpose.msra.mxu0 0.0
        %1477 = vmatprep.subr.mxu0 0.0
        %1478 = vmatpush1.xpose.msra.mxu0 0.0
        %1479 = vmatprep.subr.mxu0 0.0
        %1480 = vmatpush1.xpose.msra.mxu0 0.0
        %1481 = vmatprep.subr.mxu0 0.0
        %1482 = vmatpush1.xpose.msra.mxu0 0.0
        %1483 = vmatprep.subr.mxu0 0.0
        %1484 = vmatpush1.xpose.msra.mxu0 0.0
        %1485 = vmatprep.subr.mxu0 0.0
        %1486 = vmatpush1.xpose.msra.mxu0 0.0
        %1487 = vmatprep.subr.mxu0 0.0
        %1488 = vmatpush1.xpose.msra.mxu0 0.0
        %1489 = vmatprep.subr.mxu0 0.0
        %1490 = vmatpush1.xpose.msra.mxu0 0.0
        %1491 = vmatprep.mubr.f32.mxu0 0.0
        %1492 = vmatmul.mubr.f32.gmra.mrb[0].mxu0 %v1423
        %v1493 = vpop.f32.mrb[0].mxu0
        %v1494 = vadd.f32 0.0, %v1493
        %v1495 = vpop.f32.mrb[0].mxu0
        %1496 = vdwg.mxu0
        %v1497 = vmul.f32 %v1494, 0.35355338
        %v1498 = vadd.f32 %v1497, %v597
        %v1499 = vsel %vm701, %v1498, -inf
        %1500 = vmax.xlane.f32.xlu0 %v1499
        %v1501 = vpop.xlane.xlu0 %1500
        %v1502 = vsub.f32 %v1498, %v1501
        %v1503 = vmul.f32 %v1502, 1.442695
        %v1504 = vpow.pop %v1503
        %v1505 = vsel %vm701, %v1504, 0.0
        %1506 = vadd.xlane.f32.xlu0 %v1505
        %v1507 = vpop.xlane.xlu0 %1506
        %v1508 = vrcp.pop %v1507
        %v1509 = vmul.f32 %v1504, %v1508
        %1510 = vrot.lane.b32.xlu0 %v691, 40
        %v1511 = vpop.permute.xlu0 %1510
        %v1514 = vsel %vm701, %v1509, 0
        %1516 = vmatprep.subr.mxu0 0.0
        %1517 = vmatpush1.msra.mxu0 %v1511
        %1518 = vmatprep.subr.mxu0 0.0
        %1519 = vmatpush1.msra.mxu0 0.0
        %1520 = vmatprep.subr.mxu0 0.0
        %1521 = vmatpush1.msra.mxu0 0.0
        %1522 = vmatprep.subr.mxu0 0.0
        %1523 = vmatpush1.msra.mxu0 0.0
        %1524 = vmatprep.subr.mxu0 0.0
        %1525 = vmatpush1.msra.mxu0 0.0
        %1526 = vmatprep.subr.mxu0 0.0
        %1527 = vmatpush1.msra.mxu0 0.0
        %1528 = vmatprep.subr.mxu0 0.0
        %1529 = vmatpush1.msra.mxu0 0.0
        %1530 = vmatprep.subr.mxu0 0.0
        %1531 = vmatpush1.msra.mxu0 0.0
        %1532 = vmatprep.subr.mxu0 0.0
        %1533 = vmatpush1.msra.mxu0 0.0
        %1534 = vmatprep.subr.mxu0 0.0
        %1535 = vmatpush1.msra.mxu0 0.0
        %1536 = vmatprep.subr.mxu0 0.0
        %1537 = vmatpush1.msra.mxu0 0.0
        %1538 = vmatprep.subr.mxu0 0.0
        %1539 = vmatpush1.msra.mxu0 0.0
        %1540 = vmatprep.subr.mxu0 0.0
        %1541 = vmatpush1.msra.mxu0 0.0
        %1542 = vmatprep.subr.mxu0 0.0
        %1543 = vmatpush1.msra.mxu0 0.0
        %1544 = vmatprep.subr.mxu0 0.0
        %1545 = vmatpush1.msra.mxu0 0.0
        %1546 = vmatprep.subr.mxu0 0.0
        %1547 = vmatpush1.msra.mxu0 0.0
        %1548 = vmatprep.subr.mxu0 0.0
        %1549 = vmatpush1.msra.mxu0 0.0
        %1550 = vmatprep.subr.mxu0 0.0
        %1551 = vmatpush1.msra.mxu0 0.0
        %1552 = vmatprep.subr.mxu0 0.0
        %1553 = vmatpush1.msra.mxu0 0.0
        %1554 = vmatprep.subr.mxu0 0.0
        %1555 = vmatpush1.msra.mxu0 0.0
        %1556 = vmatprep.subr.mxu0 0.0
        %1557 = vmatpush1.msra.mxu0 0.0
        %1558 = vmatprep.subr.mxu0 0.0
        %1559 = vmatpush1.msra.mxu0 0.0
        %1560 = vmatprep.subr.mxu0 0.0
        %1561 = vmatpush1.msra.mxu0 0.0
        %1562 = vmatprep.subr.mxu0 0.0
        %1563 = vmatpush1.msra.mxu0 0.0
        %1564 = vmatprep.subr.mxu0 0.0
        %1565 = vmatpush1.msra.mxu0 0.0
        %1566 = vmatprep.subr.mxu0 0.0
        %1567 = vmatpush1.msra.mxu0 0.0
        %1568 = vmatprep.subr.mxu0 0.0
        %1569 = vmatpush1.msra.mxu0 0.0
        %1570 = vmatprep.subr.mxu0 0.0
        %1571 = vmatpush1.msra.mxu0 0.0
        %1572 = vmatprep.subr.mxu0 0.0
        %1573 = vmatpush1.msra.mxu0 0.0
        %1574 = vmatprep.subr.mxu0 0.0
        %1575 = vmatpush1.msra.mxu0 0.0
        %1576 = vmatprep.subr.mxu0 0.0
        %1577 = vmatpush1.msra.mxu0 0.0
        %1578 = vmatprep.subr.mxu0 0.0
        %1579 = vmatpush1.msra.mxu0 0.0
        %1580 = vmatprep.mubr.f32.mxu0 0.0
        %1581 = vmatmul.mubr.f32.gmra.mrb[0].mxu0 %v1514
        %v1582 = vpop.f32.mrb[0].mxu0
        %v1583 = vadd.f32 0.0, %v1582
        %v1584 = vpop.f32.mrb[0].mxu0
        %1585 = vdwg.mxu0
        %v1587 = vsel %vm701, %v1583, 0
        %1589 = vmatprep.subr.mxu0 0.0
        %1590 = vmatpush1.msra.mxu0 %v697
        %1591 = vmatprep.subr.mxu0 0.0
        %1592 = vmatpush1.msra.mxu0 0.0
        %1593 = vmatprep.subr.mxu0 0.0
        %1594 = vmatpush1.msra.mxu0 0.0
        %1595 = vmatprep.subr.mxu0 0.0
        %1596 = vmatpush1.msra.mxu0 0.0
        %1597 = vmatprep.subr.mxu0 0.0
        %1598 = vmatpush1.msra.mxu0 0.0
        %1599 = vmatprep.subr.mxu0 0.0
        %1600 = vmatpush1.msra.mxu0 0.0
        %1601 = vmatprep.subr.mxu0 0.0
        %1602 = vmatpush1.msra.mxu0 0.0
        %1603 = vmatprep.subr.mxu0 0.0
        %1604 = vmatpush1.msra.mxu0 0.0
        %1605 = vmatprep.subr.mxu0 0.0
        %1606 = vmatpush1.msra.mxu0 0.0
        %1607 = vmatprep.subr.mxu0 0.0
        %1608 = vmatpush1.msra.mxu0 0.0
        %1609 = vmatprep.subr.mxu0 0.0
        %1610 = vmatpush1.msra.mxu0 0.0
        %1611 = vmatprep.subr.mxu0 0.0
        %1612 = vmatpush1.msra.mxu0 0.0
        %1613 = vmatprep.subr.mxu0 0.0
        %1614 = vmatpush1.msra.mxu0 0.0
        %1615 = vmatprep.subr.mxu0 0.0
        %1616 = vmatpush1.msra.mxu0 0.0
        %1617 = vmatprep.subr.mxu0 0.0
        %1618 = vmatpush1.msra.mxu0 0.0
        %1619 = vmatprep.subr.mxu0 0.0
        %1620 = vmatpush1.msra.mxu0 0.0
        %1621 = vmatprep.subr.mxu0 0.0
        %1622 = vmatpush1.msra.mxu0 0.0
        %1623 = vmatprep.subr.mxu0 0.0
        %1624 = vmatpush1.msra.mxu0 0.0
        %1625 = vmatprep.subr.mxu0 0.0
        %1626 = vmatpush1.msra.mxu0 0.0
        %1627 = vmatprep.subr.mxu0 0.0
        %1628 = vmatpush1.msra.mxu0 0.0
        %1629 = vmatprep.subr.mxu0 0.0
        %1630 = vmatpush1.msra.mxu0 0.0
        %1631 = vmatprep.subr.mxu0 0.0
        %1632 = vmatpush1.msra.mxu0 0.0
        %1633 = vmatprep.subr.mxu0 0.0
        %1634 = vmatpush1.msra.mxu0 0.0
        %1635 = vmatprep.subr.mxu0 0.0
        %1636 = vmatpush1.msra.mxu0 0.0
        %1637 = vmatprep.subr.mxu0 0.0
        %1638 = vmatpush1.msra.mxu0 0.0
        %1639 = vmatprep.subr.mxu0 0.0
        %1640 = vmatpush1.msra.mxu0 0.0
        %1641 = vmatprep.subr.mxu0 0.0
        %1642 = vmatpush1.msra.mxu0 0.0
        %1643 = vmatprep.subr.mxu0 0.0
        %1644 = vmatpush1.msra.mxu0 0.0
        %1645 = vmatprep.subr.mxu0 0.0
        %1646 = vmatpush1.msra.mxu0 0.0
        %1647 = vmatprep.subr.mxu0 0.0
        %1648 = vmatpush1.msra.mxu0 0.0
        %1649 = vmatprep.subr.mxu0 0.0
        %1650 = vmatpush1.msra.mxu0 0.0
        %1651 = vmatprep.subr.mxu0 0.0
        %1652 = vmatpush1.msra.mxu0 0.0
        %1653 = vmatprep.mubr.f32.mxu0 0.0
        %1654 = vmatmul.mubr.f32.gmra.mrb[0].mxu0 %v1587
        %v1655 = vpop.f32.mrb[0].mxu0
        %v1656 = vadd.f32 0.0, %v1655
        %v1657 = vpop.f32.mrb[0].mxu0
        %1658 = vdwg.mxu0
        %v1659 = vadd.f32 %v1418, %v1656
        %v1660 = vadd.f32 %v596, %v1659
        %v1661 = vld [vmem:[%s568] sm:$0x1]
        %v1663 = vlaneseq
        %v1664 = vshrl.u32 %v1663, 7
        %v1665 = vsub.s32 0, %v1664
        %v1666 = vrot.slane %v1661, %v1665
        %v1668 = vadd.f32 %v1660, %v1666
        %s1669 = sadd.s32 %s598, 1
        %s1670 = sld [smem:[#allocation4 + %s1669]]
        %v1671 = vmul.f32 %v1668, %v1668
        %v1672 = vsel %vm601, %v1671, 0.0
        %1673 = vadd.xlane.f32.xlu0 %v1672
        %v1674 = vpop.xlane.xlu0 %1673
        %v1675 = vmax.f32 %v1674, 1e-10
        %v1676 = vrsqrt.pop %v1675
        %v1677 = vstv %s1670
        %v1678 = vmul.f32 %v1677, %v1676
        %v1679 = vmul.f32 %v1668, %v1678
        %v1680 = vld [vmem:[%s573] sm:$0xff]
        %v1681 = vld [vmem:[%s573 + $0x8] sm:$0xff]
        %v1682 = vld [vmem:[%s573 + $0x10] sm:$0xff]
        %v1683 = vld [vmem:[%s573 + $0x18] sm:$0xff]
        %v1684 = vld [vmem:[%s576] sm:$0x1]
        %v1686 = vlaneseq
        %v1687 = vshrl.u32 %v1686, 7
        %v1688 = vsub.s32 0, %v1687
        %v1689 = vrot.slane %v1684, %v1688
        %v1692 = vsel %vm601, %v1679, 0
        %1694 = vmatprep.subr.mxu0 0.0
        %1695 = vmatpush1.msra.mxu0 %v1680
        %1696 = vmatprep.subr.mxu0 0.0
        %1697 = vmatpush1.msra.mxu0 %v1681
        %1698 = vmatprep.subr.mxu0 0.0
        %1699 = vmatpush1.msra.mxu0 %v1682
        %1700 = vmatprep.subr.mxu0 0.0
        %1701 = vmatpush1.msra.mxu0 %v1683
        %1702 = vmatprep.subr.mxu0 0.0
        %1703 = vmatpush1.msra.mxu0 0.0
        %1704 = vmatprep.subr.mxu0 0.0
        %1705 = vmatpush1.msra.mxu0 0.0
        %1706 = vmatprep.subr.mxu0 0.0
        %1707 = vmatpush1.msra.mxu0 0.0
        %1708 = vmatprep.subr.mxu0 0.0
        %1709 = vmatpush1.msra.mxu0 0.0
        %1710 = vmatprep.subr.mxu0 0.0
        %1711 = vmatpush1.msra.mxu0 0.0
        %1712 = vmatprep.subr.mxu0 0.0
        %1713 = vmatpush1.msra.mxu0 0.0
        %1714 = vmatprep.subr.mxu0 0.0
        %1715 = vmatpush1.msra.mxu0 0.0
        %1716 = vmatprep.subr.mxu0 0.0
        %1717 = vmatpush1.msra.mxu0 0.0
        %1718 = vmatprep.subr.mxu0 0.0
        %1719 = vmatpush1.msra.mxu0 0.0
        %1720 = vmatprep.subr.mxu0 0.0
        %1721 = vmatpush1.msra.mxu0 0.0
        %1722 = vmatprep.subr.mxu0 0.0
        %1723 = vmatpush1.msra.mxu0 0.0
        %1724 = vmatprep.subr.mxu0 0.0
        %1725 = vmatpush1.msra.mxu0 0.0
        %1726 = vmatprep.subr.mxu0 0.0
        %1727 = vmatpush1.msra.mxu0 0.0
        %1728 = vmatprep.subr.mxu0 0.0
        %1729 = vmatpush1.msra.mxu0 0.0
        %1730 = vmatprep.subr.mxu0 0.0
        %1731 = vmatpush1.msra.mxu0 0.0
        %1732 = vmatprep.subr.mxu0 0.0
        %1733 = vmatpush1.msra.mxu0 0.0
        %1734 = vmatprep.subr.mxu0 0.0
        %1735 = vmatpush1.msra.mxu0 0.0
        %1736 = vmatprep.subr.mxu0 0.0
        %1737 = vmatpush1.msra.mxu0 0.0
        %1738 = vmatprep.subr.mxu0 0.0
        %1739 = vmatpush1.msra.mxu0 0.0
        %1740 = vmatprep.subr.mxu0 0.0
        %1741 = vmatpush1.msra.mxu0 0.0
        %1742 = vmatprep.subr.mxu0 0.0
        %1743 = vmatpush1.msra.mxu0 0.0
        %1744 = vmatprep.subr.mxu0 0.0
        %1745 = vmatpush1.msra.mxu0 0.0
        %1746 = vmatprep.subr.mxu0 0.0
        %1747 = vmatpush1.msra.mxu0 0.0
        %1748 = vmatprep.subr.mxu0 0.0
        %1749 = vmatpush1.msra.mxu0 0.0
        %1750 = vmatprep.subr.mxu0 0.0
        %1751 = vmatpush1.msra.mxu0 0.0
        %1752 = vmatprep.subr.mxu0 0.0
        %1753 = vmatpush1.msra.mxu0 0.0
        %1754 = vmatprep.subr.mxu0 0.0
        %1755 = vmatpush1.msra.mxu0 0.0
        %1756 = vmatprep.subr.mxu0 0.0
        %1757 = vmatpush1.msra.mxu0 0.0
        %1758 = vmatprep.mubr.f32.mxu0 0.0
        %1759 = vmatmul.mubr.f32.gmra.mrb[0].mxu0 %v1692
        %v1760 = vpop.f32.mrb[0].mxu0
        %v1761 = vadd.f32 %v1689, %v1760
        %v1762 = vpop.f32.mrb[0].mxu0
        %1763 = vdwg.mxu0
        %v1764 = vmax.f32 %v1761, 0.0
        %v1765 = vld [vmem:[%s581] sm:$0xff]
        %v1766 = vld [vmem:[%s581 + $0x8] sm:$0xff]
        %v1767 = vld [vmem:[%s581 + $0x10] sm:$0xff]
        %v1768 = vld [vmem:[%s581 + $0x18] sm:$0xff]
        %v1769 = vld [vmem:[%s581 + $0x20] sm:$0xff]
        %v1770 = vld [vmem:[%s581 + $0x28] sm:$0xff]
        %v1771 = vld [vmem:[%s581 + $0x30] sm:$0xff]
        %v1772 = vld [vmem:[%s581 + $0x38] sm:$0xff]
        %vm1773 = vcmask 523264
        %v1775 = vsel %vm1773, %v1764, 0
        %1777 = vmatprep.subr.mxu0 0.0
        %1778 = vmatpush1.msra.mxu0 %v1765
        %1779 = vmatprep.subr.mxu0 0.0
        %1780 = vmatpush1.msra.mxu0 %v1766
        %1781 = vmatprep.subr.mxu0 0.0
        %1782 = vmatpush1.msra.mxu0 %v1767
        %1783 = vmatprep.subr.mxu0 0.0
        %1784 = vmatpush1.msra.mxu0 %v1768
        %1785 = vmatprep.subr.mxu0 0.0
        %1786 = vmatpush1.msra.mxu0 %v1769
        %1787 = vmatprep.subr.mxu0 0.0
        %1788 = vmatpush1.msra.mxu0 %v1770
        %1789 = vmatprep.subr.mxu0 0.0
        %1790 = vmatpush1.msra.mxu0 %v1771
        %1791 = vmatprep.subr.mxu0 0.0
        %1792 = vmatpush1.msra.mxu0 %v1772
        %1793 = vmatprep.subr.mxu0 0.0
        %1794 = vmatpush1.msra.mxu0 0.0
        %1795 = vmatprep.subr.mxu0 0.0
        %1796 = vmatpush1.msra.mxu0 0.0
        %1797 = vmatprep.subr.mxu0 0.0
        %1798 = vmatpush1.msra.mxu0 0.0
        %1799 = vmatprep.subr.mxu0 0.0
        %1800 = vmatpush1.msra.mxu0 0.0
        %1801 = vmatprep.subr.mxu0 0.0
        %1802 = vmatpush1.msra.mxu0 0.0
        %1803 = vmatprep.subr.mxu0 0.0
        %1804 = vmatpush1.msra.mxu0 0.0
        %1805 = vmatprep.subr.mxu0 0.0
        %1806 = vmatpush1.msra.mxu0 0.0
        %1807 = vmatprep.subr.mxu0 0.0
        %1808 = vmatpush1.msra.mxu0 0.0
        %1809 = vmatprep.subr.mxu0 0.0
        %1810 = vmatpush1.msra.mxu0 0.0
        %1811 = vmatprep.subr.mxu0 0.0
        %1812 = vmatpush1.msra.mxu0 0.0
        %1813 = vmatprep.subr.mxu0 0.0
        %1814 = vmatpush1.msra.mxu0 0.0
        %1815 = vmatprep.subr.mxu0 0.0
        %1816 = vmatpush1.msra.mxu0 0.0
        %1817 = vmatprep.subr.mxu0 0.0
        %1818 = vmatpush1.msra.mxu0 0.0
        %1819 = vmatprep.subr.mxu0 0.0
        %1820 = vmatpush1.msra.mxu0 0.0
        %1821 = vmatprep.subr.mxu0 0.0
        %1822 = vmatpush1.msra.mxu0 0.0
        %1823 = vmatprep.subr.mxu0 0.0
        %1824 = vmatpush1.msra.mxu0 0.0
        %1825 = vmatprep.subr.mxu0 0.0
        %1826 = vmatpush1.msra.mxu0 0.0
        %1827 = vmatprep.subr.mxu0 0.0
        %1828 = vmatpush1.msra.mxu0 0.0
        %1829 = vmatprep.subr.mxu0 0.0
        %1830 = vmatpush1.msra.mxu0 0.0
        %1831 = vmatprep.subr.mxu0 0.0
        %1832 = vmatpush1.msra.mxu0 0.0
        %1833 = vmatprep.subr.mxu0 0.0
        %1834 = vmatpush1.msra.mxu0 0.0
        %1835 = vmatprep.subr.mxu0 0.0
        %1836 = vmatpush1.msra.mxu0 0.0
        %1837 = vmatprep.subr.mxu0 0.0
        %1838 = vmatpush1.msra.mxu0 0.0
        %1839 = vmatprep.subr.mxu0 0.0
        %1840 = vmatpush1.msra.mxu0 0.0
        %1841 = vmatprep.mubr.f32.mxu0 0.0
        %1842 = vmatmul.mubr.f32.gmra.mrb[0].mxu0 %v1775
        %v1843 = vpop.f32.mrb[0].mxu0
        %v1844 = vadd.f32 0.0, %v1843
        %v1845 = vpop.f32.mrb[0].mxu0
        %1846 = vdwg.mxu0
        %v1847 = vadd.f32 %v1668, %v1844
        %v1848 = vld [vmem:[%s584] sm:$0x1]
        %v1850 = vlaneseq
        %v1851 = vshrl.u32 %v1850, 7
        %v1852 = vsub.s32 0, %v1851
        %v1853 = vrot.slane %v1848, %v1852
        %v1855 = vadd.f32 %v1847, %v1853
        %1856 = vst.msk [vmem:[#allocation2] sm:$0xff] %vm601, %v1855
        %p1857 = scmp.eq.s32.totalorder %s30, 1
        // Predicated region
        $region77: #{model_forward.2} parent=67 // pred_check
          %p1858 = pneg %p1857
        $region78: #{model_forward.2} parent=67 // pred_check_branch
          %1860 = sbr.rel (%p1858) target = $region80
        $region79: #{model_forward.2} parent=67 // pred_region
          %s1861 = sld [smem:[#allocation3]]
          %v1862 = vmul.f32 %v1855, %v1855
          %v1863 = vsel %vm601, %v1862, 0.0
          %1864 = vadd.xlane.f32.xlu0 %v1863
          %v1865 = vpop.xlane.xlu0 %1864
          %v1866 = vmax.f32 %v1865, 1e-10
          %v1867 = vrsqrt.pop %v1866
          %v1868 = vstv %s1861
          %v1869 = vmul.f32 %v1868, %v1867
          %v1870 = vmul.f32 %v1855, %v1869
          %1871 = vst.msk [vmem:[%s588] sm:$0xff] %vm601, %v1870
        $region80: #{model_forward.2} parent=67 // pred_fallthru
          _
        %p1872 = scmp.lt.s32.totalorder %s29, 1
        %s1873 = scalar_select %p1872, %s29, 1
        %s1874 = smul.addr %s1873, 8
        %s1875 = scalar_lea.vmem %s12, %s1874
        // Predicated region
        $region81: #{model_forward.2} parent=67 // pred_check
          %p1876 = pneg %p357
        $region82: #{model_forward.2} parent=67 // pred_check_branch
          %1878 = sbr.rel (%p1876) target = $region84
        $region83: #{model_forward.2} parent=67 // pred_region
          _
        $region84: #{model_forward.2} parent=67 // pred_fallthru
          _
      $region68: #{model_forward.2} parent=5 // pred_fallthru
        _
      %p1879 = scmp.le.s32.totalorder 2, %s20
      // Predicated region
      $region85: #{model_forward.2} parent=5 // pred_check
        %p1880 = pneg %p1879
      $region86: #{model_forward.2} parent=5 // pred_check_branch
        %1882 = sbr.rel (%p1880) target = $region88
      $region87: #{model_forward.2} parent=5 // pred_region
        %s1883 = ssub.s32 %s20, 2
        // Predicated region
        $region89: #{model_forward.2} parent=87 // pred_check
          %p1884 = pneg %p363
        $region90: #{model_forward.2} parent=87 // pred_check_branch
          %1886 = sbr.rel (%p1884) target = $region92
        $region91: #{model_forward.2} parent=87 // pred_region
          %p1887 = scmp.lt.s32.totalorder %s31, 1
          %s1888 = scalar_select %p1887, %s31, 1
          %s1889 = smul.addr %s1888, 8
          %s1890 = scalar_lea.vmem %s12, %s1889
        $region92: #{model_forward.2} parent=87 // pred_fallthru
          _
      $region88: #{model_forward.2} parent=5 // pred_fallthru
        _
    $region6: #{model_forward.2} parent=1 // loop_footer
      %s24 = sadd.s32 1, %s20
    $region7: #{model_forward.2} parent=1 // loop_footer_branch
      %19 = sbr.rel target = $region3
    $region8: #{model_forward.2} parent=1 // loop_exit
      _
    %1891 = vsyncpa [#allocation5], 1
    %s1892 = scalar_lea.sflag [#allocation5], 1
    %1893 = vsyncpa %s1892, 1

// kernel: model_forward.3
$region0: #{model_forward.3}
  #allocation0 [shape = 'u32[]', space=smem, size = 0x4, offset = 0x4, fixed_abs, tag = 'smem constant byte address 0x4 - core index']
  #allocation1 [shape = 'u32[144,128]{1,0:T(1,128)}', space=vmem, size = 0x12000, scoped, tag = 'internal scratch']
  #allocation2 [shape = 'f32[8,32]{1,0:T(8,128)}', space=vmem, size = 0x1000, scoped, tag = 'scratch operand']
  #allocation3 [shape = 'f32[1,1]{1,0:T(1,128)S(6)}', space=smem, size = 0x200, scoped, tag = 'scoped memory for model_forward.3']
  %s0 = inlined_call_operand.vmem [shape: f32[2,3], index: 0, kind: input, shape index: {}]
  %s1 = inlined_call_operand.<no memory space> [shape: f32[1,1], index: 1, kind: input, shape index: {}]
  %s2 = inlined_call_operand.vmem [shape: f32[2,8,32], index: 2, kind: input, shape index: {}]
  %s3 = inlined_call_operand.vmem [shape: f32[2,8,32], index: 3, kind: input, shape index: {}]
  %s4 = inlined_call_operand.vmem [shape: f32[2,1,8,8], index: 4, kind: input, shape index: {}]
  %s5 = inlined_call_operand.vmem [shape: f32[2,1,8,8], index: 5, kind: input, shape index: {}]
  %s6 = inlined_call_operand.vmem [shape: f32[2,32,96], index: 6, kind: input, shape index: {}]
  %s7 = inlined_call_operand.vmem [shape: f32[2,1,96], index: 7, kind: input, shape index: {}]
  %s8 = inlined_call_operand.vmem [shape: f32[2,32,32], index: 8, kind: input, shape index: {}]
  %s9 = inlined_call_operand.vmem [shape: f32[2,1,32], index: 9, kind: input, shape index: {}]
  %s10 = inlined_call_operand.vmem [shape: f32[2,32,32], index: 10, kind: input, shape index: {}]
  %s11 = inlined_call_operand.vmem [shape: f32[2,1,32], index: 11, kind: input, shape index: {}]
  %s12 = inlined_call_operand.vmem [shape: f32[2,32,64], index: 12, kind: input, shape index: {}]
  %s13 = inlined_call_operand.vmem [shape: f32[2,1,64], index: 13, kind: input, shape index: {}]
  %s14 = inlined_call_operand.vmem [shape: f32[2,32,32], index: 14, kind: input, shape index: {}]
  %s15 = inlined_call_operand.vmem [shape: f32[2,1,32], index: 15, kind: input, shape index: {}]
  %s16 = inlined_call_operand.vmem [shape: f32[2,32,64], index: 16, kind: input, shape index: {}]
  %s17 = inlined_call_operand.vmem [shape: f32[2,1,64], index: 17, kind: input, shape index: {}]
  %s18 = inlined_call_operand.vmem [shape: f32[2,64,32], index: 18, kind: input, shape index: {}]
  %s19 = inlined_call_operand.vmem [shape: f32[2,1,32], index: 19, kind: input, shape index: {}]
  %s20 = inlined_call_operand.vmem [shape: f32[128,32], index: 20, kind: input, shape index: {}]
  %s21 = inlined_call_operand.hbm [shape: f32[2,8,128], index: 21, kind: output, shape index: {}]
  %s22 = sld [smem:[#allocation0]]
  $region129: #{model_forward.3} parent=0
    _
  %s24 = ssub.s32 1, %s22
  %s25 = scalar_select 0, %s24, %s22
  %26 = sst [smem:[#allocation3]] %s1
  $region1: #{model_forward.3} parent=0
    #allocation4 [shape = 'u8[1024]{0}', space=smem, size = 0x400, scoped, tag = 'input window, operand 0, single buffered']
    #allocation5 [shape = 's32[2]{0}', space=sflag, size = 0x8, scoped, tag = 'scoped memory for model_forward.3']
    #allocation6 [shape = 's32[2]{0}', space=sflag, size = 0x8, scoped, tag = 'scoped memory for model_forward.3']
    #allocation7 [shape = 'u8[8192]{0}', space=vmem, size = 0x2000, scoped, tag = 'output window, operand 0']
    %27 = vsyncpa [#allocation6], 0
    %28 = vsyncpa [#allocation5], 0
    %s29 = scalar_lea.sflag [#allocation5], 1
    %30 = vsyncpa %s29, 0
    loop: start=0, step=1, limit=6
    $region2: #{model_forward.3} parent=1 // loop_pre_header
      _
    $region3: #{model_forward.3} parent=1 // loop_header
      %s32 = sphi 0, %s36
      %p33 = scmp.ge.s32.totalorder %s32, 6
      %s39 = sphi 0, %s51
      %s40 = sphi 0, %s47
      %s41 = sphi 0, %s39
      %s42 = sphi 0, %s40
      %s43 = sphi 0, %s41
      %s44 = sphi 0, %s42
      %s52 = sphi 0, %s52
      %s54 = sphi 0, %s52
      %s55 = sphi 0, %s54
      %s69 = sphi 0, %s55
      %s73 = sphi 0, %s73
      %s75 = sphi 0, %s73
      %s76 = sphi 0, %s75
      %s90 = sphi 0, %s76
      %s96 = sphi 0, %s98
      %s99 = sphi 0, %s96
      %s100 = sphi 0, %s99
      %s116 = sphi 0, %s100
      %s122 = sphi 0, %s124
      %s125 = sphi 0, %s122
      %s126 = sphi 0, %s125
      %s142 = sphi 0, %s126
      %s148 = sphi 0, %s150
      %s151 = sphi 0, %s148
      %s152 = sphi 0, %s151
      %s168 = sphi 0, %s152
      %s174 = sphi 0, %s176
      %s177 = sphi 0, %s174
      %s178 = sphi 0, %s177
      %s194 = sphi 0, %s178
      %s200 = sphi 0, %s202
      %s203 = sphi 0, %s200
      %s204 = sphi 0, %s203
      %s220 = sphi 0, %s204
      %s226 = sphi 0, %s228
      %s229 = sphi 0, %s226
      %s230 = sphi 0, %s229
      %s246 = sphi 0, %s230
      %s252 = sphi 0, %s254
      %s255 = sphi 0, %s252
      %s256 = sphi 0, %s255
      %s272 = sphi 0, %s256
      %s278 = sphi 0, %s280
      %s281 = sphi 0, %s278
      %s282 = sphi 0, %s281
      %s298 = sphi 0, %s282
      %s304 = sphi 0, %s306
      %s307 = sphi 0, %s304
      %s308 = sphi 0, %s307
      %s324 = sphi 0, %s308
      %s330 = sphi 0, %s332
      %s333 = sphi 0, %s330
      %s334 = sphi 0, %s333
      %s350 = sphi 0, %s334
      %s356 = sphi 0, %s358
      %s359 = sphi 0, %s356
      %s360 = sphi 0, %s359
      %s376 = sphi 0, %s360
      %s382 = sphi 0, %s384
      %s385 = sphi 0, %s382
      %s386 = sphi 0, %s385
      %s402 = sphi 0, %s386
      %s408 = sphi 0, %s410
      %s411 = sphi 0, %s408
      %s412 = sphi 0, %s411
      %s428 = sphi 0, %s412
      %s434 = sphi 0, %s436
      %s437 = sphi 0, %s434
      %s438 = sphi 0, %s437
      %s454 = sphi 0, %s438
      %s460 = sphi 0, %s462
      %s463 = sphi 0, %s460
      %s464 = sphi 0, %s463
      %s480 = sphi 0, %s464
      %s486 = sphi 0, %s488
      %s489 = sphi 0, %s486
      %s490 = sphi 0, %s489
      %s506 = sphi 0, %s490
      %s512 = sphi 0, %s514
      %s515 = sphi 0, %s512
      %s516 = sphi 0, %s515
      %s532 = sphi 0, %s516
      %s538 = sphi 0, %s540
      %s541 = sphi 0, %s538
      %s542 = sphi 0, %s541
      %s558 = sphi 0, %s542
      %s562 = sphi 0, %s562
      %s564 = sphi 0, %s562
      %s565 = sphi 0, %s564
      %s579 = sphi 0, %s565
      %s585 = sphi 0, %s587
      %s588 = sphi 0, %s585
      %s589 = sphi 0, %s588
      %s605 = sphi 0, %s589
    $region4: #{model_forward.3} parent=1 // loop_header_branch
      %35 = sbr.rel (%p33) target = $region8
    $region5: #{model_forward.3} parent=1 // loop_body
      %s37 = ssub.s32 %s32, 1
      %s38 = ssub.s32 %s32, 2
      %s45 = sadd.s32 1, %s40
      %p46 = scmp.ge.s32.totalorder %s45, 2
      %s47 = scalar_select %p46, 0, %s45
      %s48 = sadd.s32 1, %s39
      %s49 = scalar_select %p46, %s48, %s39
      %p50 = scmp.ge.s32.totalorder %s49, 2
      %s51 = scalar_select %p50, 0, %s49
      %s53 = sadd.s32 %s52, 1
      %p56 = scmp.eq.s32.totalorder %s32, 3
      %p57 = scmp.ne.s32.totalorder %s52, %s54
      %p58 = scmp.eq.s32.totalorder %s32, 0
      %p59 = por %p57, %p58
      %p60 = scmp.ne.s32.totalorder %s52, %s54
      %p61 = scmp.eq.s32.totalorder %s37, 3
      %p62 = por %p60, %p61
      %p63 = scmp.ne.s32.totalorder %s54, %s55
      %p64 = scmp.eq.s32.totalorder %s37, 0
      %p65 = por %p63, %p64
      %p66 = scmp.ne.s32.totalorder %s54, %s55
      %p67 = scmp.eq.s32.totalorder %s38, 3
      %p68 = por %p66, %p67
      %p70 = scmp.ne.s32.totalorder %s55, %s69
      %p71 = scmp.eq.s32.totalorder %s38, 0
      %p72 = por %p70, %p71
      %s74 = sadd.s32 %s73, 1
      %p77 = scmp.eq.s32.totalorder %s32, 3
      %p78 = scmp.ne.s32.totalorder %s73, %s75
      %p79 = scmp.eq.s32.totalorder %s32, 0
      %p80 = por %p78, %p79
      %p81 = scmp.ne.s32.totalorder %s73, %s75
      %p82 = scmp.eq.s32.totalorder %s37, 3
      %p83 = por %p81, %p82
      %p84 = scmp.ne.s32.totalorder %s75, %s76
      %p85 = scmp.eq.s32.totalorder %s37, 0
      %p86 = por %p84, %p85
      %p87 = scmp.ne.s32.totalorder %s75, %s76
      %p88 = scmp.eq.s32.totalorder %s38, 3
      %p89 = por %p87, %p88
      %p91 = scmp.ne.s32.totalorder %s76, %s90
      %p92 = scmp.eq.s32.totalorder %s38, 0
      %p93 = por %p91, %p92
      %s94 = ssub.s32 %s39, %s51
      %p95 = scmp.eq.s32.totalorder %s94, 0
      %s97 = sadd.s32 %s96, 1
      %s98 = scalar_select %p95, %s96, %s97
      %p101 = pneg %p95
      %p102 = scmp.eq.s32.totalorder %s32, 3
      %p103 = por %p101, %p102
      %p104 = scmp.ne.s32.totalorder %s96, %s99
      %p105 = scmp.eq.s32.totalorder %s32, 0
      %p106 = por %p104, %p105
      %p107 = scmp.ne.s32.totalorder %s96, %s99
      %p108 = scmp.eq.s32.totalorder %s37, 3
      %p109 = por %p107, %p108
      %p110 = scmp.ne.s32.totalorder %s99, %s100
      %p111 = scmp.eq.s32.totalorder %s37, 0
      %p112 = por %p110, %p111
      %p113 = scmp.ne.s32.totalorder %s99, %s100
      %p114 = scmp.eq.s32.totalorder %s38, 3
      %p115 = por %p113, %p114
      %p117 = scmp.ne.s32.totalorder %s100, %s116
      %p118 = scmp.eq.s32.totalorder %s38, 0
      %p119 = por %p117, %p118
      %s120 = ssub.s32 %s39, %s51
      %p121 = scmp.eq.s32.totalorder %s120, 0
      %s123 = sadd.s32 %s122, 1
      %s124 = scalar_select %p121, %s122, %s123
      %p127 = pneg %p121
      %p128 = scmp.eq.s32.totalorder %s32, 3
      %p129 = por %p127, %p128
      %p130 = scmp.ne.s32.totalorder %s122, %s125
      %p131 = scmp.eq.s32.totalorder %s32, 0
      %p132 = por %p130, %p131
      %p133 = scmp.ne.s32.totalorder %s122, %s125
      %p134 = scmp.eq.s32.totalorder %s37, 3
      %p135 = por %p133, %p134
      %p136 = scmp.ne.s32.totalorder %s125, %s126
      %p137 = scmp.eq.s32.totalorder %s37, 0
      %p138 = por %p136, %p137
      %p139 = scmp.ne.s32.totalorder %s125, %s126
      %p140 = scmp.eq.s32.totalorder %s38, 3
      %p141 = por %p139, %p140
      %p143 = scmp.ne.s32.totalorder %s126, %s142
      %p144 = scmp.eq.s32.totalorder %s38, 0
      %p145 = por %p143, %p144
      %s146 = ssub.s32 %s39, %s51
      %p147 = scmp.eq.s32.totalorder %s146, 0
      %s149 = sadd.s32 %s148, 1
      %s150 = scalar_select %p147, %s148, %s149
      %p153 = pneg %p147
      %p154 = scmp.eq.s32.totalorder %s32, 3
      %p155 = por %p153, %p154
      %p156 = scmp.ne.s32.totalorder %s148, %s151
      %p157 = scmp.eq.s32.totalorder %s32, 0
      %p158 = por %p156, %p157
      %p159 = scmp.ne.s32.totalorder %s148, %s151
      %p160 = scmp.eq.s32.totalorder %s37, 3
      %p161 = por %p159, %p160
      %p162 = scmp.ne.s32.totalorder %s151, %s152
      %p163 = scmp.eq.s32.totalorder %s37, 0
      %p164 = por %p162, %p163
      %p165 = scmp.ne.s32.totalorder %s151, %s152
      %p166 = scmp.eq.s32.totalorder %s38, 3
      %p167 = por %p165, %p166
      %p169 = scmp.ne.s32.totalorder %s152, %s168
      %p170 = scmp.eq.s32.totalorder %s38, 0
      %p171 = por %p169, %p170
      %s172 = ssub.s32 %s39, %s51
      %p173 = scmp.eq.s32.totalorder %s172, 0
      %s175 = sadd.s32 %s174, 1
      %s176 = scalar_select %p173, %s174, %s175
      %p179 = pneg %p173
      %p180 = scmp.eq.s32.totalorder %s32, 3
      %p181 = por %p179, %p180
      %p182 = scmp.ne.s32.totalorder %s174, %s177
      %p183 = scmp.eq.s32.totalorder %s32, 0
      %p184 = por %p182, %p183
      %p185 = scmp.ne.s32.totalorder %s174, %s177
      %p186 = scmp.eq.s32.totalorder %s37, 3
      %p187 = por %p185, %p186
      %p188 = scmp.ne.s32.totalorder %s177, %s178
      %p189 = scmp.eq.s32.totalorder %s37, 0
      %p190 = por %p188, %p189
      %p191 = scmp.ne.s32.totalorder %s177, %s178
      %p192 = scmp.eq.s32.totalorder %s38, 3
      %p193 = por %p191, %p192
      %p195 = scmp.ne.s32.totalorder %s178, %s194
      %p196 = scmp.eq.s32.totalorder %s38, 0
      %p197 = por %p195, %p196
      %s198 = ssub.s32 %s40, %s47
      %p199 = scmp.eq.s32.totalorder %s198, 0
      %s201 = sadd.s32 %s200, 1
      %s202 = scalar_select %p199, %s200, %s201
      %p205 = pneg %p199
      %p206 = scmp.eq.s32.totalorder %s32, 3
      %p207 = por %p205, %p206
      %p208 = scmp.ne.s32.totalorder %s200, %s203
      %p209 = scmp.eq.s32.totalorder %s32, 0
      %p210 = por %p208, %p209
      %p211 = scmp.ne.s32.totalorder %s200, %s203
      %p212 = scmp.eq.s32.totalorder %s37, 3
      %p213 = por %p211, %p212
      %p214 = scmp.ne.s32.totalorder %s203, %s204
      %p215 = scmp.eq.s32.totalorder %s37, 0
      %p216 = por %p214, %p215
      %p217 = scmp.ne.s32.totalorder %s203, %s204
      %p218 = scmp.eq.s32.totalorder %s38, 3
      %p219 = por %p217, %p218
      %p221 = scmp.ne.s32.totalorder %s204, %s220
      %p222 = scmp.eq.s32.totalorder %s38, 0
      %p223 = por %p221, %p222
      %s224 = ssub.s32 %s40, %s47
      %p225 = scmp.eq.s32.totalorder %s224, 0
      %s227 = sadd.s32 %s226, 1
      %s228 = scalar_select %p225, %s226, %s227
      %p231 = pneg %p225
      %p232 = scmp.eq.s32.totalorder %s32, 3
      %p233 = por %p231, %p232
      %p234 = scmp.ne.s32.totalorder %s226, %s229
      %p235 = scmp.eq.s32.totalorder %s32, 0
      %p236 = por %p234, %p235
      %p237 = scmp.ne.s32.totalorder %s226, %s229
      %p238 = scmp.eq.s32.totalorder %s37, 3
      %p239 = por %p237, %p238
      %p240 = scmp.ne.s32.totalorder %s229, %s230
      %p241 = scmp.eq.s32.totalorder %s37, 0
      %p242 = por %p240, %p241
      %p243 = scmp.ne.s32.totalorder %s229, %s230
      %p244 = scmp.eq.s32.totalorder %s38, 3
      %p245 = por %p243, %p244
      %p247 = scmp.ne.s32.totalorder %s230, %s246
      %p248 = scmp.eq.s32.totalorder %s38, 0
      %p249 = por %p247, %p248
      %s250 = ssub.s32 %s40, %s47
      %p251 = scmp.eq.s32.totalorder %s250, 0
      %s253 = sadd.s32 %s252, 1
      %s254 = scalar_select %p251, %s252, %s253
      %p257 = pneg %p251
      %p258 = scmp.eq.s32.totalorder %s32, 3
      %p259 = por %p257, %p258
      %p260 = scmp.ne.s32.totalorder %s252, %s255
      %p261 = scmp.eq.s32.totalorder %s32, 0
      %p262 = por %p260, %p261
      %p263 = scmp.ne.s32.totalorder %s252, %s255
      %p264 = scmp.eq.s32.totalorder %s37, 3
      %p265 = por %p263, %p264
      %p266 = scmp.ne.s32.totalorder %s255, %s256
      %p267 = scmp.eq.s32.totalorder %s37, 0
      %p268 = por %p266, %p267
      %p269 = scmp.ne.s32.totalorder %s255, %s256
      %p270 = scmp.eq.s32.totalorder %s38, 3
      %p271 = por %p269, %p270
      %p273 = scmp.ne.s32.totalorder %s256, %s272
      %p274 = scmp.eq.s32.totalorder %s38, 0
      %p275 = por %p273, %p274
      %s276 = ssub.s32 %s40, %s47
      %p277 = scmp.eq.s32.totalorder %s276, 0
      %s279 = sadd.s32 %s278, 1
      %s280 = scalar_select %p277, %s278, %s279
      %p283 = pneg %p277
      %p284 = scmp.eq.s32.totalorder %s32, 3
      %p285 = por %p283, %p284
      %p286 = scmp.ne.s32.totalorder %s278, %s281
      %p287 = scmp.eq.s32.totalorder %s32, 0
      %p288 = por %p286, %p287
      %p289 = scmp.ne.s32.totalorder %s278, %s281
      %p290 = scmp.eq.s32.totalorder %s37, 3
      %p291 = por %p289, %p290
      %p292 = scmp.ne.s32.totalorder %s281, %s282
      %p293 = scmp.eq.s32.totalorder %s37, 0
      %p294 = por %p292, %p293
      %p295 = scmp.ne.s32.totalorder %s281, %s282
      %p296 = scmp.eq.s32.totalorder %s38, 3
      %p297 = por %p295, %p296
      %p299 = scmp.ne.s32.totalorder %s282, %s298
      %p300 = scmp.eq.s32.totalorder %s38, 0
      %p301 = por %p299, %p300
      %s302 = ssub.s32 %s40, %s47
      %p303 = scmp.eq.s32.totalorder %s302, 0
      %s305 = sadd.s32 %s304, 1
      %s306 = scalar_select %p303, %s304, %s305
      %p309 = pneg %p303
      %p310 = scmp.eq.s32.totalorder %s32, 3
      %p311 = por %p309, %p310
      %p312 = scmp.ne.s32.totalorder %s304, %s307
      %p313 = scmp.eq.s32.totalorder %s32, 0
      %p314 = por %p312, %p313
      %p315 = scmp.ne.s32.totalorder %s304, %s307
      %p316 = scmp.eq.s32.totalorder %s37, 3
      %p317 = por %p315, %p316
      %p318 = scmp.ne.s32.totalorder %s307, %s308
      %p319 = scmp.eq.s32.totalorder %s37, 0
      %p320 = por %p318, %p319
      %p321 = scmp.ne.s32.totalorder %s307, %s308
      %p322 = scmp.eq.s32.totalorder %s38, 3
      %p323 = por %p321, %p322
      %p325 = scmp.ne.s32.totalorder %s308, %s324
      %p326 = scmp.eq.s32.totalorder %s38, 0
      %p327 = por %p325, %p326
      %s328 = ssub.s32 %s40, %s47
      %p329 = scmp.eq.s32.totalorder %s328, 0
      %s331 = sadd.s32 %s330, 1
      %s332 = scalar_select %p329, %s330, %s331
      %p335 = pneg %p329
      %p336 = scmp.eq.s32.totalorder %s32, 3
      %p337 = por %p335, %p336
      %p338 = scmp.ne.s32.totalorder %s330, %s333
      %p339 = scmp.eq.s32.totalorder %s32, 0
      %p340 = por %p338, %p339
      %p341 = scmp.ne.s32.totalorder %s330, %s333
      %p342 = scmp.eq.s32.totalorder %s37, 3
      %p343 = por %p341, %p342
      %p344 = scmp.ne.s32.totalorder %s333, %s334
      %p345 = scmp.eq.s32.totalorder %s37, 0
      %p346 = por %p344, %p345
      %p347 = scmp.ne.s32.totalorder %s333, %s334
      %p348 = scmp.eq.s32.totalorder %s38, 3
      %p349 = por %p347, %p348
      %p351 = scmp.ne.s32.totalorder %s334, %s350
      %p352 = scmp.eq.s32.totalorder %s38, 0
      %p353 = por %p351, %p352
      %s354 = ssub.s32 %s40, %s47
      %p355 = scmp.eq.s32.totalorder %s354, 0
      %s357 = sadd.s32 %s356, 1
      %s358 = scalar_select %p355, %s356, %s357
      %p361 = pneg %p355
      %p362 = scmp.eq.s32.totalorder %s32, 3
      %p363 = por %p361, %p362
      %p364 = scmp.ne.s32.totalorder %s356, %s359
      %p365 = scmp.eq.s32.totalorder %s32, 0
      %p366 = por %p364, %p365
      %p367 = scmp.ne.s32.totalorder %s356, %s359
      %p368 = scmp.eq.s32.totalorder %s37, 3
      %p369 = por %p367, %p368
      %p370 = scmp.ne.s32.totalorder %s359, %s360
      %p371 = scmp.eq.s32.totalorder %s37, 0
      %p372 = por %p370, %p371
      %p373 = scmp.ne.s32.totalorder %s359, %s360
      %p374 = scmp.eq.s32.totalorder %s38, 3
      %p375 = por %p373, %p374
      %p377 = scmp.ne.s32.totalorder %s360, %s376
      %p378 = scmp.eq.s32.totalorder %s38, 0
      %p379 = por %p377, %p378
      %s380 = ssub.s32 %s40, %s47
      %p381 = scmp.eq.s32.totalorder %s380, 0
      %s383 = sadd.s32 %s382, 1
      %s384 = scalar_select %p381, %s382, %s383
      %p387 = pneg %p381
      %p388 = scmp.eq.s32.totalorder %s32, 3
      %p389 = por %p387, %p388
      %p390 = scmp.ne.s32.totalorder %s382, %s385
      %p391 = scmp.eq.s32.totalorder %s32, 0
      %p392 = por %p390, %p391
      %p393 = scmp.ne.s32.totalorder %s382, %s385
      %p394 = scmp.eq.s32.totalorder %s37, 3
      %p395 = por %p393, %p394
      %p396 = scmp.ne.s32.totalorder %s385, %s386
      %p397 = scmp.eq.s32.totalorder %s37, 0
      %p398 = por %p396, %p397
      %p399 = scmp.ne.s32.totalorder %s385, %s386
      %p400 = scmp.eq.s32.totalorder %s38, 3
      %p401 = por %p399, %p400
      %p403 = scmp.ne.s32.totalorder %s386, %s402
      %p404 = scmp.eq.s32.totalorder %s38, 0
      %p405 = por %p403, %p404
      %s406 = ssub.s32 %s40, %s47
      %p407 = scmp.eq.s32.totalorder %s406, 0
      %s409 = sadd.s32 %s408, 1
      %s410 = scalar_select %p407, %s408, %s409
      %p413 = pneg %p407
      %p414 = scmp.eq.s32.totalorder %s32, 3
      %p415 = por %p413, %p414
      %p416 = scmp.ne.s32.totalorder %s408, %s411
      %p417 = scmp.eq.s32.totalorder %s32, 0
      %p418 = por %p416, %p417
      %p419 = scmp.ne.s32.totalorder %s408, %s411
      %p420 = scmp.eq.s32.totalorder %s37, 3
      %p421 = por %p419, %p420
      %p422 = scmp.ne.s32.totalorder %s411, %s412
      %p423 = scmp.eq.s32.totalorder %s37, 0
      %p424 = por %p422, %p423
      %p425 = scmp.ne.s32.totalorder %s411, %s412
      %p426 = scmp.eq.s32.totalorder %s38, 3
      %p427 = por %p425, %p426
      %p429 = scmp.ne.s32.totalorder %s412, %s428
      %p430 = scmp.eq.s32.totalorder %s38, 0
      %p431 = por %p429, %p430
      %s432 = ssub.s32 %s40, %s47
      %p433 = scmp.eq.s32.totalorder %s432, 0
      %s435 = sadd.s32 %s434, 1
      %s436 = scalar_select %p433, %s434, %s435
      %p439 = pneg %p433
      %p440 = scmp.eq.s32.totalorder %s32, 3
      %p441 = por %p439, %p440
      %p442 = scmp.ne.s32.totalorder %s434, %s437
      %p443 = scmp.eq.s32.totalorder %s32, 0
      %p444 = por %p442, %p443
      %p445 = scmp.ne.s32.totalorder %s434, %s437
      %p446 = scmp.eq.s32.totalorder %s37, 3
      %p447 = por %p445, %p446
      %p448 = scmp.ne.s32.totalorder %s437, %s438
      %p449 = scmp.eq.s32.totalorder %s37, 0
      %p450 = por %p448, %p449
      %p451 = scmp.ne.s32.totalorder %s437, %s438
      %p452 = scmp.eq.s32.totalorder %s38, 3
      %p453 = por %p451, %p452
      %p455 = scmp.ne.s32.totalorder %s438, %s454
      %p456 = scmp.eq.s32.totalorder %s38, 0
      %p457 = por %p455, %p456
      %s458 = ssub.s32 %s40, %s47
      %p459 = scmp.eq.s32.totalorder %s458, 0
      %s461 = sadd.s32 %s460, 1
      %s462 = scalar_select %p459, %s460, %s461
      %p465 = pneg %p459
      %p466 = scmp.eq.s32.totalorder %s32, 3
      %p467 = por %p465, %p466
      %p468 = scmp.ne.s32.totalorder %s460, %s463
      %p469 = scmp.eq.s32.totalorder %s32, 0
      %p470 = por %p468, %p469
      %p471 = scmp.ne.s32.totalorder %s460, %s463
      %p472 = scmp.eq.s32.totalorder %s37, 3
      %p473 = por %p471, %p472
      %p474 = scmp.ne.s32.totalorder %s463, %s464
      %p475 = scmp.eq.s32.totalorder %s37, 0
      %p476 = por %p474, %p475
      %p477 = scmp.ne.s32.totalorder %s463, %s464
      %p478 = scmp.eq.s32.totalorder %s38, 3
      %p479 = por %p477, %p478
      %p481 = scmp.ne.s32.totalorder %s464, %s480
      %p482 = scmp.eq.s32.totalorder %s38, 0
      %p483 = por %p481, %p482
      %s484 = ssub.s32 %s40, %s47
      %p485 = scmp.eq.s32.totalorder %s484, 0
      %s487 = sadd.s32 %s486, 1
      %s488 = scalar_select %p485, %s486, %s487
      %p491 = pneg %p485
      %p492 = scmp.eq.s32.totalorder %s32, 3
      %p493 = por %p491, %p492
      %p494 = scmp.ne.s32.totalorder %s486, %s489
      %p495 = scmp.eq.s32.totalorder %s32, 0
      %p496 = por %p494, %p495
      %p497 = scmp.ne.s32.totalorder %s486, %s489
      %p498 = scmp.eq.s32.totalorder %s37, 3
      %p499 = por %p497, %p498
      %p500 = scmp.ne.s32.totalorder %s489, %s490
      %p501 = scmp.eq.s32.totalorder %s37, 0
      %p502 = por %p500, %p501
      %p503 = scmp.ne.s32.totalorder %s489, %s490
      %p504 = scmp.eq.s32.totalorder %s38, 3
      %p505 = por %p503, %p504
      %p507 = scmp.ne.s32.totalorder %s490, %s506
      %p508 = scmp.eq.s32.totalorder %s38, 0
      %p509 = por %p507, %p508
      %s510 = ssub.s32 %s40, %s47
      %p511 = scmp.eq.s32.totalorder %s510, 0
      %s513 = sadd.s32 %s512, 1
      %s514 = scalar_select %p511, %s512, %s513
      %p517 = pneg %p511
      %p518 = scmp.eq.s32.totalorder %s32, 3
      %p519 = por %p517, %p518
      %p520 = scmp.ne.s32.totalorder %s512, %s515
      %p521 = scmp.eq.s32.totalorder %s32, 0
      %p522 = por %p520, %p521
      %p523 = scmp.ne.s32.totalorder %s512, %s515
      %p524 = scmp.eq.s32.totalorder %s37, 3
      %p525 = por %p523, %p524
      %p526 = scmp.ne.s32.totalorder %s515, %s516
      %p527 = scmp.eq.s32.totalorder %s37, 0
      %p528 = por %p526, %p527
      %p529 = scmp.ne.s32.totalorder %s515, %s516
      %p530 = scmp.eq.s32.totalorder %s38, 3
      %p531 = por %p529, %p530
      %p533 = scmp.ne.s32.totalorder %s516, %s532
      %p534 = scmp.eq.s32.totalorder %s38, 0
      %p535 = por %p533, %p534
      %s536 = ssub.s32 %s40, %s47
      %p537 = scmp.eq.s32.totalorder %s536, 0
      %s539 = sadd.s32 %s538, 1
      %s540 = scalar_select %p537, %s538, %s539
      %p543 = pneg %p537
      %p544 = scmp.eq.s32.totalorder %s32, 3
      %p545 = por %p543, %p544
      %p546 = scmp.ne.s32.totalorder %s538, %s541
      %p547 = scmp.eq.s32.totalorder %s32, 0
      %p548 = por %p546, %p547
      %p549 = scmp.ne.s32.totalorder %s538, %s541
      %p550 = scmp.eq.s32.totalorder %s37, 3
      %p551 = por %p549, %p550
      %p552 = scmp.ne.s32.totalorder %s541, %s542
      %p553 = scmp.eq.s32.totalorder %s37, 0
      %p554 = por %p552, %p553
      %p555 = scmp.ne.s32.totalorder %s541, %s542
      %p556 = scmp.eq.s32.totalorder %s38, 3
      %p557 = por %p555, %p556
      %p559 = scmp.ne.s32.totalorder %s542, %s558
      %p560 = scmp.eq.s32.totalorder %s38, 0
      %p561 = por %p559, %p560
      %s563 = sadd.s32 %s562, 1
      %p566 = scmp.eq.s32.totalorder %s32, 3
      %p567 = scmp.ne.s32.totalorder %s562, %s564
      %p568 = scmp.eq.s32.totalorder %s32, 0
      %p569 = por %p567, %p568
      %p570 = scmp.ne.s32.totalorder %s562, %s564
      %p571 = scmp.eq.s32.totalorder %s37, 3
      %p572 = por %p570, %p571
      %p573 = scmp.ne.s32.totalorder %s564, %s565
      %p574 = scmp.eq.s32.totalorder %s37, 0
      %p575 = por %p573, %p574
      %p576 = scmp.ne.s32.totalorder %s564, %s565
      %p577 = scmp.eq.s32.totalorder %s38, 3
      %p578 = por %p576, %p577
      %p580 = scmp.ne.s32.totalorder %s565, %s579
      %p581 = scmp.eq.s32.totalorder %s38, 0
      %p582 = por %p580, %p581
      %s583 = ssub.s32 %s39, %s51
      %p584 = scmp.eq.s32.totalorder %s583, 0
      %s586 = sadd.s32 %s585, 1
      %s587 = scalar_select %p584, %s585, %s586
      %p590 = pneg %p584
      %p591 = scmp.eq.s32.totalorder %s32, 3
      %p592 = por %p590, %p591
      %p593 = scmp.ne.s32.totalorder %s585, %s588
      %p594 = scmp.eq.s32.totalorder %s32, 0
      %p595 = por %p593, %p594
      %p596 = scmp.ne.s32.totalorder %s585, %s588
      %p597 = scmp.eq.s32.totalorder %s37, 3
      %p598 = por %p596, %p597
      %p599 = scmp.ne.s32.totalorder %s588, %s589
      %p600 = scmp.eq.s32.totalorder %s37, 0
      %p601 = por %p599, %p600
      %p602 = scmp.ne.s32.totalorder %s588, %s589
      %p603 = scmp.eq.s32.totalorder %s38, 3
      %p604 = por %p602, %p603
      %p606 = scmp.ne.s32.totalorder %s589, %s605
      %p607 = scmp.eq.s32.totalorder %s38, 0
      %p608 = por %p606, %p607
      %p609 = scmp.le.s32.totalorder 1, %s32
      %p610 = scmp.lt.s32.totalorder %s32, 5
      %p611 = pnand %p609, %p610
      %p612 = pneg %p611
      // Predicated region
      $region9: #{model_forward.3} parent=5 // pred_check
        _
      $region10: #{model_forward.3} parent=5 // pred_check_branch
        %614 = sbr.rel (%p611) target = $region12
      $region11: #{model_forward.3} parent=5 // pred_region
        %s615 = ssub.s32 %s32, 1
        // Predicated region
        $region13: #{model_forward.3} parent=11 // pred_check
          %p616 = pneg %p65
        $region14: #{model_forward.3} parent=11 // pred_check_branch
          %618 = sbr.rel (%p616) target = $region16
        $region15: #{model_forward.3} parent=11 // pred_region
          %s620 = ssub.s32 32, 32
          %621 = vsyncadd [#allocation6], %s620
          %s623 = sshll.u32 %s0, 4
          %s624 = int_to_ptr.vmem [resolvable:$true] %s623
          %626 = dma.vmem_to_smem %s624, 32, [#allocation4], [#allocation6]
        $region16: #{model_forward.3} parent=11 // pred_fallthru
          _
        // Predicated region
        $region17: #{model_forward.3} parent=11 // pred_check
          %p627 = pneg %p86
        $region18: #{model_forward.3} parent=11 // pred_check_branch
          %629 = sbr.rel (%p627) target = $region20
        $region19: #{model_forward.3} parent=11 // pred_region
          _
        $region20: #{model_forward.3} parent=11 // pred_fallthru
          _
        // Predicated region
        $region21: #{model_forward.3} parent=11 // pred_check
          %p630 = pneg %p575
        $region22: #{model_forward.3} parent=11 // pred_check_branch
          %632 = sbr.rel (%p630) target = $region24
        $region23: #{model_forward.3} parent=11 // pred_region
          _
        $region24: #{model_forward.3} parent=11 // pred_fallthru
          _
      $region12: #{model_forward.3} parent=5 // pred_fallthru
        _
      %p633 = scmp.lt.s32.totalorder %s32, 4
      // Predicated region
      $region25: #{model_forward.3} parent=5 // pred_check
        %p634 = pneg %p633
      $region26: #{model_forward.3} parent=5 // pred_check_branch
        %636 = sbr.rel (%p634) target = $region28
      $region27: #{model_forward.3} parent=5 // pred_region
        // Predicated region
        $region29: #{model_forward.3} parent=27 // pred_check
          %p637 = pneg %p106
        $region30: #{model_forward.3} parent=27 // pred_check_branch
          %639 = sbr.rel (%p637) target = $region32
        $region31: #{model_forward.3} parent=27 // pred_region
          %p640 = scmp.lt.s32.totalorder %s39, 1
          %s641 = scalar_select %p640, %s39, 1
          %s642 = smul.addr %s641, 8
          %s643 = scalar_lea.vmem %s2, %s642
        $region32: #{model_forward.3} parent=27 // pred_fallthru
          _
        // Predicated region
        $region33: #{model_forward.3} parent=27 // pred_check
          %p644 = pneg %p132
        $region34: #{model_forward.3} parent=27 // pred_check_branch
          %646 = sbr.rel (%p644) target = $region36
        $region35: #{model_forward.3} parent=27 // pred_region
          %p647 = scmp.lt.s32.totalorder %s39, 1
          %s648 = scalar_select %p647, %s39, 1
          %s649 = smul.addr %s648, 8
          %s650 = scalar_lea.vmem %s3, %s649
        $region36: #{model_forward.3} parent=27 // pred_fallthru
          _
        // Predicated region
        $region37: #{model_forward.3} parent=27 // pred_check
          %p651 = pneg %p158
        $region38: #{model_forward.3} parent=27 // pred_check_branch
          %653 = sbr.rel (%p651) target = $region40
        $region39: #{model_forward.3} parent=27 // pred_region
          %p654 = scmp.lt.s32.totalorder %s39, 1
          %s655 = scalar_select %p654, %s39, 1
          %s656 = smul.addr %s655, 8
          %s657 = scalar_lea.vmem %s4, %s656
        $region40: #{model_forward.3} parent=27 // pred_fallthru
          _
        // Predicated region
        $region41: #{model_forward.3} parent=27 // pred_check
          %p658 = pneg %p184
        $region42: #{model_forward.3} parent=27 // pred_check_branch
          %660 = sbr.rel (%p658) target = $region44
        $region43: #{model_forward.3} parent=27 // pred_region
          %p661 = scmp.lt.s32.totalorder %s39, 1
          %s662 = scalar_select %p661, %s39, 1
          %s663 = smul.addr %s662, 8
          %s664 = scalar_lea.vmem %s5, %s663
        $region44: #{model_forward.3} parent=27 // pred_fallthru
          _
        // Predicated region
        $region45: #{model_forward.3} parent=27 // pred_check
          %p665 = pneg %p210
        $region46: #{model_forward.3} parent=27 // pred_check_branch
          %667 = sbr.rel (%p665) target = $region48
        $region47: #{model_forward.3} parent=27 // pred_region
          %p668 = scmp.lt.s32.totalorder %s40, 1
          %s669 = scalar_select %p668, %s40, 1
          %s670 = smul.addr %s669, 4
          %s671 = smul.addr %s670, 8
          %s672 = scalar_lea.vmem %s6, %s671
        $region48: #{model_forward.3} parent=27 // pred_fallthru
          _
        // Predicated region
        $region49: #{model_forward.3} parent=27 // pred_check
          %p673 = pneg %p236
        $region50: #{model_forward.3} parent=27 // pred_check_branch
          %675 = sbr.rel (%p673) target = $region52
        $region51: #{model_forward.3} parent=27 // pred_region
          %p676 = scmp.lt.s32.totalorder %s40, 1
          %s677 = scalar_select %p676, %s40, 1
          %s678 = scalar_lea.vmem %s7, %s677
        $region52: #{model_forward.3} parent=27 // pred_fallthru
          _
        // Predicated region
        $region53: #{model_forward.3} parent=27 // pred_check
          %p679 = pneg %p262
        $region54: #{model_forward.3} parent=27 // pred_check_branch
          %681 = sbr.rel (%p679) target = $region56
        $region55: #{model_forward.3} parent=27 // pred_region
          %p682 = scmp.lt.s32.totalorder %s40, 1
          %s683 = scalar_select %p682, %s40, 1
          %s684 = smul.addr %s683, 4
          %s685 = smul.addr %s684, 8
          %s686 = scalar_lea.vmem %s8, %s685
        $region56: #{model_forward.3} parent=27 // pred_fallthru
          _
        // Predicated region
        $region57: #{model_forward.3} parent=27 // pred_check
          %p687 = pneg %p288
        $region58: #{model_forward.3} parent=27 // pred_check_branch
          %689 = sbr.rel (%p687) target = $region60
        $region59: #{model_forward.3} parent=27 // pred_region
          %p690 = scmp.lt.s32.totalorder %s40, 1
          %s691 = scalar_select %p690, %s40, 1
          %s692 = scalar_lea.vmem %s9, %s691
        $region60: #{model_forward.3} parent=27 // pred_fallthru
          _
        // Predicated region
        $region61: #{model_forward.3} parent=27 // pred_check
          %p693 = pneg %p314
        $region62: #{model_forward.3} parent=27 // pred_check_branch
          %695 = sbr.rel (%p693) target = $region64
        $region63: #{model_forward.3} parent=27 // pred_region
          %p696 = scmp.lt.s32.totalorder %s40, 1
          %s697 = scalar_select %p696, %s40, 1
          %s698 = smul.addr %s697, 4
          %s699 = smul.addr %s698, 8
          %s700 = scalar_lea.vmem %s10, %s699
        $region64: #{model_forward.3} parent=27 // pred_fallthru
          _
        // Predicated region
        $region65: #{model_forward.3} parent=27 // pred_check
          %p701 = pneg %p340
        $region66: #{model_forward.3} parent=27 // pred_check_branch
          %703 = sbr.rel (%p701) target = $region68
        $region67: #{model_forward.3} parent=27 // pred_region
          %p704 = scmp.lt.s32.totalorder %s40, 1
          %s705 = scalar_select %p704, %s40, 1
          %s706 = scalar_lea.vmem %s11, %s705
        $region68: #{model_forward.3} parent=27 // pred_fallthru
          _
        // Predicated region
        $region69: #{model_forward.3} parent=27 // pred_check
          %p707 = pneg %p366
        $region70: #{model_forward.3} parent=27 // pred_check_branch
          %709 = sbr.rel (%p707) target = $region72
        $region71: #{model_forward.3} parent=27 // pred_region
          %p710 = scmp.lt.s32.totalorder %s40, 1
          %s711 = scalar_select %p710, %s40, 1
          %s712 = smul.addr %s711, 4
          %s713 = smul.addr %s712, 8
          %s714 = scalar_lea.vmem %s12, %s713
        $region72: #{model_forward.3} parent=27 // pred_fallthru
          _
        // Predicated region
        $region73: #{model_forward.3} parent=27 // pred_check
          %p715 = pneg %p392
        $region74: #{model_forward.3} parent=27 // pred_check_branch
          %717 = sbr.rel (%p715) target = $region76
        $region75: #{model_forward.3} parent=27 // pred_region
          %p718 = scmp.lt.s32.totalorder %s40, 1
          %s719 = scalar_select %p718, %s40, 1
          %s720 = scalar_lea.vmem %s13, %s719
        $region76: #{model_forward.3} parent=27 // pred_fallthru
          _
        // Predicated region
        $region77: #{model_forward.3} parent=27 // pred_check
          %p721 = pneg %p418
        $region78: #{model_forward.3} parent=27 // pred_check_branch
          %723 = sbr.rel (%p721) target = $region80
        $region79: #{model_forward.3} parent=27 // pred_region
          %p724 = scmp.lt.s32.totalorder %s40, 1
          %s725 = scalar_select %p724, %s40, 1
          %s726 = smul.addr %s725, 4
          %s727 = smul.addr %s726, 8
          %s728 = scalar_lea.vmem %s14, %s727
        $region80: #{model_forward.3} parent=27 // pred_fallthru
          _
        // Predicated region
        $region81: #{model_forward.3} parent=27 // pred_check
          %p729 = pneg %p444
        $region82: #{model_forward.3} parent=27 // pred_check_branch
          %731 = sbr.rel (%p729) target = $region84
        $region83: #{model_forward.3} parent=27 // pred_region
          %p732 = scmp.lt.s32.totalorder %s40, 1
          %s733 = scalar_select %p732, %s40, 1
          %s734 = scalar_lea.vmem %s15, %s733
        $region84: #{model_forward.3} parent=27 // pred_fallthru
          _
        // Predicated region
        $region85: #{model_forward.3} parent=27 // pred_check
          %p735 = pneg %p470
        $region86: #{model_forward.3} parent=27 // pred_check_branch
          %737 = sbr.rel (%p735) target = $region88
        $region87: #{model_forward.3} parent=27 // pred_region
          %p738 = scmp.lt.s32.totalorder %s40, 1
          %s739 = scalar_select %p738, %s40, 1
          %s740 = smul.addr %s739, 4
          %s741 = smul.addr %s740, 8
          %s742 = scalar_lea.vmem %s16, %s741
        $region88: #{model_forward.3} parent=27 // pred_fallthru
          _
        // Predicated region
        $region89: #{model_forward.3} parent=27 // pred_check
          %p743 = pneg %p496
        $region90: #{model_forward.3} parent=27 // pred_check_branch
          %745 = sbr.rel (%p743) target = $region92
        $region91: #{model_forward.3} parent=27 // pred_region
          %p746 = scmp.lt.s32.totalorder %s40, 1
          %s747 = scalar_select %p746, %s40, 1
          %s748 = scalar_lea.vmem %s17, %s747
        $region92: #{model_forward.3} parent=27 // pred_fallthru
          _
        // Predicated region
        $region93: #{model_forward.3} parent=27 // pred_check
          %p749 = pneg %p522
        $region94: #{model_forward.3} parent=27 // pred_check_branch
          %751 = sbr.rel (%p749) target = $region96
        $region95: #{model_forward.3} parent=27 // pred_region
          %p752 = scmp.lt.s32.totalorder %s40, 1
          %s753 = scalar_select %p752, %s40, 1
          %s754 = smul.addr %s753, 8
          %s755 = smul.addr %s754, 8
          %s756 = scalar_lea.vmem %s18, %s755
        $region96: #{model_forward.3} parent=27 // pred_fallthru
          _
        // Predicated region
        $region97: #{model_forward.3} parent=27 // pred_check
          %p757 = pneg %p548
        $region98: #{model_forward.3} parent=27 // pred_check_branch
          %759 = sbr.rel (%p757) target = $region100
        $region99: #{model_forward.3} parent=27 // pred_region
          %p760 = scmp.lt.s32.totalorder %s40, 1
          %s761 = scalar_select %p760, %s40, 1
          %s762 = scalar_lea.vmem %s19, %s761
        $region100: #{model_forward.3} parent=27 // pred_fallthru
          _
      $region28: #{model_forward.3} parent=5 // pred_fallthru
        _
      %p763 = scmp.le.s32.totalorder 1, %s32
      %p764 = scmp.lt.s32.totalorder %s32, 5
      %p765 = pnand %p763, %p764
      %p766 = pneg %p765
      // Predicated region
      $region101: #{model_forward.3} parent=5 // pred_check
        _
      $region102: #{model_forward.3} parent=5 // pred_check_branch
        %768 = sbr.rel (%p765) target = $region104
      $region103: #{model_forward.3} parent=5 // pred_region
        %s769 = ssub.s32 %s32, 1
        // Predicated region
        $region105: #{model_forward.3} parent=103 // pred_check
          %p770 = pneg %p65
        $region106: #{model_forward.3} parent=103 // pred_check_branch
          %772 = sbr.rel (%p770) target = $region108
        $region107: #{model_forward.3} parent=103 // pred_region
          %773 = dma.done [#allocation6], 32
        $region108: #{model_forward.3} parent=103 // pred_fallthru
          _
        %774 = sfence
        %p775 = pneg %p65
        %p776 = pneg %p62
        %p777 = pneg %p86
        %p778 = pneg %p83
        %p779 = scmp.lt.s32.totalorder %s41, 1
        %s780 = scalar_select %p779, %s41, 1
        %s781 = smul.addr %s780, 8
        %s782 = scalar_lea.vmem %s2, %s781
        %p783 = pneg %p112
        %p784 = pneg %p109
        %p785 = scmp.lt.s32.totalorder %s41, 1
        %s786 = scalar_select %p785, %s41, 1
        %s787 = smul.addr %s786, 8
        %s788 = scalar_lea.vmem %s3, %s787
        %p789 = pneg %p138
        %p790 = pneg %p135
        %p791 = scmp.lt.s32.totalorder %s41, 1
        %s792 = scalar_select %p791, %s41, 1
        %s793 = smul.addr %s792, 8
        %s794 = scalar_lea.vmem %s4, %s793
        %p795 = pneg %p164
        %p796 = pneg %p161
        %p797 = scmp.lt.s32.totalorder %s41, 1
        %s798 = scalar_select %p797, %s41, 1
        %s799 = smul.addr %s798, 8
        %s800 = scalar_lea.vmem %s5, %s799
        %p801 = pneg %p190
        %p802 = pneg %p187
        %p803 = scmp.lt.s32.totalorder %s42, 1
        %s804 = scalar_select %p803, %s42, 1
        %s805 = smul.addr %s804, 4
        %s806 = smul.addr %s805, 8
        %s807 = scalar_lea.vmem %s6, %s806
        %p808 = pneg %p216
        %p809 = pneg %p213
        %p810 = scmp.lt.s32.totalorder %s42, 1
        %s811 = scalar_select %p810, %s42, 1
        %s812 = scalar_lea.vmem %s7, %s811
        %p813 = pneg %p242
        %p814 = pneg %p239
        %p815 = scmp.lt.s32.totalorder %s42, 1
        %s816 = scalar_select %p815, %s42, 1
        %s817 = smul.addr %s816, 4
        %s818 = smul.addr %s817, 8
        %s819 = scalar_lea.vmem %s8, %s818
        %p820 = pneg %p268
        %p821 = pneg %p265
        %p822 = scmp.lt.s32.totalorder %s42, 1
        %s823 = scalar_select %p822, %s42, 1
        %s824 = scalar_lea.vmem %s9, %s823
        %p825 = pneg %p294
        %p826 = pneg %p291
        %p827 = scmp.lt.s32.totalorder %s42, 1
        %s828 = scalar_select %p827, %s42, 1
        %s829 = smul.addr %s828, 4
        %s830 = smul.addr %s829, 8
        %s831 = scalar_lea.vmem %s10, %s830
        %p832 = pneg %p320
        %p833 = pneg %p317
        %p834 = scmp.lt.s32.totalorder %s42, 1
        %s835 = scalar_select %p834, %s42, 1
        %s836 = scalar_lea.vmem %s11, %s835
        %p837 = pneg %p346
        %p838 = pneg %p343
        %p839 = scmp.lt.s32.totalorder %s42, 1
        %s840 = scalar_select %p839, %s42, 1
        %s841 = smul.addr %s840, 4
        %s842 = smul.addr %s841, 8
        %s843 = scalar_lea.vmem %s12, %s842
        %p844 = pneg %p372
        %p845 = pneg %p369
        %p846 = scmp.lt.s32.totalorder %s42, 1
        %s847 = scalar_select %p846, %s42, 1
        %s848 = scalar_lea.vmem %s13, %s847
        %p849 = pneg %p398
        %p850 = pneg %p395
        %p851 = scmp.lt.s32.totalorder %s42, 1
        %s852 = scalar_select %p851, %s42, 1
        %s853 = smul.addr %s852, 4
        %s854 = smul.addr %s853, 8
        %s855 = scalar_lea.vmem %s14, %s854
        %p856 = pneg %p424
        %p857 = pneg %p421
        %p858 = scmp.lt.s32.totalorder %s42, 1
        %s859 = scalar_select %p858, %s42, 1
        %s860 = scalar_lea.vmem %s15, %s859
        %p861 = pneg %p450
        %p862 = pneg %p447
        %p863 = scmp.lt.s32.totalorder %s42, 1
        %s864 = scalar_select %p863, %s42, 1
        %s865 = smul.addr %s864, 4
        %s866 = smul.addr %s865, 8
        %s867 = scalar_lea.vmem %s16, %s866
        %p868 = pneg %p476
        %p869 = pneg %p473
        %p870 = scmp.lt.s32.totalorder %s42, 1
        %s871 = scalar_select %p870, %s42, 1
        %s872 = scalar_lea.vmem %s17, %s871
        %p873 = pneg %p502
        %p874 = pneg %p499
        %p875 = scmp.lt.s32.totalorder %s42, 1
        %s876 = scalar_select %p875, %s42, 1
        %s877 = smul.addr %s876, 8
        %s878 = smul.addr %s877, 8
        %s879 = scalar_lea.vmem %s18, %s878
        %p880 = pneg %p528
        %p881 = pneg %p525
        %p882 = scmp.lt.s32.totalorder %s42, 1
        %s883 = scalar_select %p882, %s42, 1
        %s884 = scalar_lea.vmem %s19, %s883
        %p885 = pneg %p554
        %p886 = pneg %p551
        %p887 = pneg %p575
        %p888 = pneg %p572
        %p889 = pneg %p601
        %p890 = pneg %p598
        %s891 = sand.u32 %s588, 1
        %s892 = scalar_lea.sflag [#allocation5], %s891
        %s893 = sand.u32 %s588, 1
        %s894 = smul.addr %s893, 8
        %s895 = scalar_lea.vmem [#allocation7], %s894
        %p896 = scmp.lt.s32.totalorder %s41, 1
        %s897 = scalar_select %p896, %s41, 1
        %s898 = smul.addr %s897, 8
        %s899 = scalar_lea.vmem %s2, %s898
        %p900 = scmp.lt.s32.totalorder %s41, 1
        %s901 = scalar_select %p900, %s41, 1
        %s902 = smul.addr %s901, 8
        %s903 = scalar_lea.vmem %s3, %s902
        %p904 = scmp.lt.s32.totalorder %s41, 1
        %s905 = scalar_select %p904, %s41, 1
        %s906 = smul.addr %s905, 8
        %s907 = scalar_lea.vmem %s4, %s906
        %p908 = scmp.lt.s32.totalorder %s41, 1
        %s909 = scalar_select %p908, %s41, 1
        %s910 = smul.addr %s909, 8
        %s911 = scalar_lea.vmem %s5, %s910
        %p912 = scmp.lt.s32.totalorder %s42, 1
        %s913 = scalar_select %p912, %s42, 1
        %s914 = smul.addr %s913, 4
        %s915 = smul.addr %s914, 8
        %s916 = scalar_lea.vmem %s6, %s915
        %p917 = scmp.lt.s32.totalorder %s42, 1
        %s918 = scalar_select %p917, %s42, 1
        %s919 = scalar_lea.vmem %s7, %s918
        %p920 = scmp.lt.s32.totalorder %s42, 1
        %s921 = scalar_select %p920, %s42, 1
        %s922 = smul.addr %s921, 4
        %s923 = smul.addr %s922, 8
        %s924 = scalar_lea.vmem %s8, %s923
        %p925 = scmp.lt.s32.totalorder %s42, 1
        %s926 = scalar_select %p925, %s42, 1
        %s927 = scalar_lea.vmem %s9, %s926
        %p928 = scmp.lt.s32.totalorder %s42, 1
        %s929 = scalar_select %p928, %s42, 1
        %s930 = smul.addr %s929, 4
        %s931 = smul.addr %s930, 8
        %s932 = scalar_lea.vmem %s10, %s931
        %p933 = scmp.lt.s32.totalorder %s42, 1
        %s934 = scalar_select %p933, %s42, 1
        %s935 = scalar_lea.vmem %s11, %s934
        %p936 = scmp.lt.s32.totalorder %s42, 1
        %s937 = scalar_select %p936, %s42, 1
        %s938 = smul.addr %s937, 4
        %s939 = smul.addr %s938, 8
        %s940 = scalar_lea.vmem %s12, %s939
        %p941 = scmp.lt.s32.totalorder %s42, 1
        %s942 = scalar_select %p941, %s42, 1
        %s943 = scalar_lea.vmem %s13, %s942
        %p944 = scmp.lt.s32.totalorder %s42, 1
        %s945 = scalar_select %p944, %s42, 1
        %s946 = smul.addr %s945, 4
        %s947 = smul.addr %s946, 8
        %s948 = scalar_lea.vmem %s14, %s947
        %p949 = scmp.lt.s32.totalorder %s42, 1
        %s950 = scalar_select %p949, %s42, 1
        %s951 = scalar_lea.vmem %s15, %s950
        %p952 = scmp.lt.s32.totalorder %s42, 1
        %s953 = scalar_select %p952, %s42, 1
        %s954 = smul.addr %s953, 4
        %s955 = smul.addr %s954, 8
        %s956 = scalar_lea.vmem %s16, %s955
        %p957 = scmp.lt.s32.totalorder %s42, 1
        %s958 = scalar_select %p957, %s42, 1
        %s959 = scalar_lea.vmem %s17, %s958
        %p960 = scmp.lt.s32.totalorder %s42, 1
        %s961 = scalar_select %p960, %s42, 1
        %s962 = smul.addr %s961, 8
        %s963 = smul.addr %s962, 8
        %s964 = scalar_lea.vmem %s18, %s963
        %p965 = scmp.lt.s32.totalorder %s42, 1
        %s966 = scalar_select %p965, %s42, 1
        %s967 = scalar_lea.vmem %s19, %s966
        %p968 = scmp.eq.s32.totalorder %s42, 0
        // Predicated region
        $region109: #{model_forward.3} parent=103 // pred_check
          %p969 = pneg %p968
        $region110: #{model_forward.3} parent=103 // pred_check_branch
          %971 = sbr.rel (%p969) target = $region112
        $region111: #{model_forward.3} parent=103 // pred_region
          %v972 = vld [vmem:[%s899] sm:$0xff]
          %vm973 = vcmask 261120
          %974 = vst.msk [vmem:[#allocation2] sm:$0xff] %vm973, %v972
        $region112: #{model_forward.3} parent=103 // pred_fallthru
          _
        %v975 = vld [vmem:[#allocation2] sm:$0xff]
        %v976 = vld [vmem:[%s903] sm:$0xff]
        %v977 = vld [vmem:[%s907] sm:$0xff]
        %v978 = vld [vmem:[%s911] sm:$0xff]
        %s979 = smul.u32 %s42, 128
        %s980 = sld [smem:[#allocation4 + %s979]]
        %v981 = vmul.f32 %v975, %v975
        %vm982 = vcmask 261120
        %v983 = vsel %vm982, %v981, 0.0
        %984 = vadd.xlane.f32.xlu0 %v983
        %v985 = vpop.xlane.xlu0 %984
        %v986 = vmax.f32 %v985, 1e-10
        %v987 = vrsqrt.pop %v986
        %v988 = vstv %s980
        %v989 = vmul.f32 %v988, %v987
        %v990 = vmul.f32 %v975, %v989
        %v991 = vld [vmem:[%s916] sm:$0xff]
        %v992 = vld [vmem:[%s916 + $0x8] sm:$0xff]
        %v993 = vld [vmem:[%s916 + $0x10] sm:$0xff]
        %v994 = vld [vmem:[%s916 + $0x18] sm:$0xff]
        %v995 = vld [vmem:[%s919] sm:$0x1]
        %v997 = vlaneseq
        %v998 = vshrl.u32 %v997, 7
        %v999 = vsub.s32 0, %v998
        %v1000 = vrot.slane %v995, %v999
        %v1003 = vsel %vm982, %v990, 0
        %1005 = vmatprep.subr.mxu0 0.0
        %1006 = vmatpush1.msra.mxu0 %v991
        %1007 = vmatprep.subr.mxu0 0.0
        %1008 = vmatpush1.msra.mxu0 %v992
        %1009 = vmatprep.subr.mxu0 0.0
        %1010 = vmatpush1.msra.mxu0 %v993
        %1011 = vmatprep.subr.mxu0 0.0
        %1012 = vmatpush1.msra.mxu0 %v994
        %1013 = vmatprep.subr.mxu0 0.0
        %1014 = vmatpush1.msra.mxu0 0.0
        %1015 = vmatprep.subr.mxu0 0.0
        %1016 = vmatpush1.msra.mxu0 0.0
        %1017 = vmatprep.subr.mxu0 0.0
        %1018 = vmatpush1.msra.mxu0 0.0
        %1019 = vmatprep.subr.mxu0 0.0
        %1020 = vmatpush1.msra.mxu0 0.0
        %1021 = vmatprep.subr.mxu0 0.0
        %1022 = vmatpush1.msra.mxu0 0.0
        %1023 = vmatprep.subr.mxu0 0.0
        %1024 = vmatpush1.msra.mxu0 0.0
        %1025 = vmatprep.subr.mxu0 0.0
        %1026 = vmatpush1.msra.mxu0 0.0
        %1027 = vmatprep.subr.mxu0 0.0
        %1028 = vmatpush1.msra.mxu0 0.0
        %1029 = vmatprep.subr.mxu0 0.0
        %1030 = vmatpush1.msra.mxu0 0.0
        %1031 = vmatprep.subr.mxu0 0.0
        %1032 = vmatpush1.msra.mxu0 0.0
        %1033 = vmatprep.subr.mxu0 0.0
        %1034 = vmatpush1.msra.mxu0 0.0
        %1035 = vmatprep.subr.mxu0 0.0
        %1036 = vmatpush1.msra.mxu0 0.0
        %1037 = vmatprep.subr.mxu0 0.0
        %1038 = vmatpush1.msra.mxu0 0.0
        %1039 = vmatprep.subr.mxu0 0.0
        %1040 = vmatpush1.msra.mxu0 0.0
        %1041 = vmatprep.subr.mxu0 0.0
        %1042 = vmatpush1.msra.mxu0 0.0
        %1043 = vmatprep.subr.mxu0 0.0
        %1044 = vmatpush1.msra.mxu0 0.0
        %1045 = vmatprep.subr.mxu0 0.0
        %1046 = vmatpush1.msra.mxu0 0.0
        %1047 = vmatprep.subr.mxu0 0.0
        %1048 = vmatpush1.msra.mxu0 0.0
        %1049 = vmatprep.subr.mxu0 0.0
        %1050 = vmatpush1.msra.mxu0 0.0
        %1051 = vmatprep.subr.mxu0 0.0
        %1052 = vmatpush1.msra.mxu0 0.0
        %1053 = vmatprep.subr.mxu0 0.0
        %1054 = vmatpush1.msra.mxu0 0.0
        %1055 = vmatprep.subr.mxu0 0.0
        %1056 = vmatpush1.msra.mxu0 0.0
        %1057 = vmatprep.subr.mxu0 0.0
        %1058 = vmatpush1.msra.mxu0 0.0
        %1059 = vmatprep.subr.mxu0 0.0
        %1060 = vmatpush1.msra.mxu0 0.0
        %1061 = vmatprep.subr.mxu0 0.0
        %1062 = vmatpush1.msra.mxu0 0.0
        %1063 = vmatprep.subr.mxu0 0.0
        %1064 = vmatpush1.msra.mxu0 0.0
        %1065 = vmatprep.subr.mxu0 0.0
        %1066 = vmatpush1.msra.mxu0 0.0
        %1067 = vmatprep.subr.mxu0 0.0
        %1068 = vmatpush1.msra.mxu0 0.0
        %1069 = vmatprep.mubr.f32.mxu0 0.0
        %1070 = vmatmul.mubr.f32.gmra.mrb[0].mxu0 %v1003
        %v1071 = vpop.f32.mrb[0].mxu0
        %v1072 = vadd.f32 %v1000, %v1071
        %v1073 = vpop.f32.mrb[0].mxu0
        %1074 = vdwg.mxu0
        %v1075 = vld [vmem:[%s924] sm:$0xff]
        %v1076 = vld [vmem:[%s924 + $0x8] sm:$0xff]
        %v1077 = vld [vmem:[%s924 + $0x10] sm:$0xff]
        %v1078 = vld [vmem:[%s924 + $0x18] sm:$0xff]
        %1080 = vrot.lane.b32.xlu0 %v1072, 96
        %v1081 = vpop.permute.xlu0 %1080
        %vm1082 = vcmask 64512
        %v1083 = vsel %vm1082, %v1072, 0
        %v1085 = vsel %vm1082, %v1081, 0
        %1087 = vmatprep.subr.mxu0 0.0
        %1088 = vmatpush1.xpose.msra.mxu0 %v1085
        %1089 = vmatprep.subr.mxu0 0.0
        %1090 = vmatpush1.xpose.msra.mxu0 0.0
        %1091 = vmatprep.subr.mxu0 0.0
        %1092 = vmatpush1.xpose.msra.mxu0 0.0
        %1093 = vmatprep.subr.mxu0 0.0
        %1094 = vmatpush1.xpose.msra.mxu0 0.0
        %1095 = vmatprep.subr.mxu0 0.0
        %1096 = vmatpush1.xpose.msra.mxu0 0.0
        %1097 = vmatprep.subr.mxu0 0.0
        %1098 = vmatpush1.xpose.msra.mxu0 0.0
        %1099 = vmatprep.subr.mxu0 0.0
        %1100 = vmatpush1.xpose.msra.mxu0 0.0
        %1101 = vmatprep.subr.mxu0 0.0
        %1102 = vmatpush1.xpose.msra.mxu0 0.0
        %1103 = vmatprep.subr.mxu0 0.0
        %1104 = vmatpush1.xpose.msra.mxu0 0.0
        %1105 = vmatprep.subr.mxu0 0.0
        %1106 = vmatpush1.xpose.msra.mxu0 0.0
        %1107 = vmatprep.subr.mxu0 0.0
        %1108 = vmatpush1.xpose.msra.mxu0 0.0
        %1109 = vmatprep.subr.mxu0 0.0
        %1110 = vmatpush1.xpose.msra.mxu0 0.0
        %1111 = vmatprep.subr.mxu0 0.0
        %1112 = vmatpush1.xpose.msra.mxu0 0.0
        %1113 = vmatprep.subr.mxu0 0.0
        %1114 = vmatpush1.xpose.msra.mxu0 0.0
        %1115 = vmatprep.subr.mxu0 0.0
        %1116 = vmatpush1.xpose.msra.mxu0 0.0
        %1117 = vmatprep.subr.mxu0 0.0
        %1118 = vmatpush1.xpose.msra.mxu0 0.0
        %1119 = vmatprep.subr.mxu0 0.0
        %1120 = vmatpush1.xpose.msra.mxu0 0.0
        %1121 = vmatprep.subr.mxu0 0.0
        %1122 = vmatpush1.xpose.msra.mxu0 0.0
        %1123 = vmatprep.subr.mxu0 0.0
        %1124 = vmatpush1.xpose.msra.mxu0 0.0
        %1125 = vmatprep.subr.mxu0 0.0
        %1126 = vmatpush1.xpose.msra.mxu0 0.0
        %1127 = vmatprep.subr.mxu0 0.0
        %1128 = vmatpush1.xpose.msra.mxu0 0.0
        %1129 = vmatprep.subr.mxu0 0.0
        %1130 = vmatpush1.xpose.msra.mxu0 0.0
        %1131 = vmatprep.subr.mxu0 0.0
        %1132 = vmatpush1.xpose.msra.mxu0 0.0
        %1133 = vmatprep.subr.mxu0 0.0
        %1134 = vmatpush1.xpose.msra.mxu0 0.0
        %1135 = vmatprep.subr.mxu0 0.0
        %1136 = vmatpush1.xpose.msra.mxu0 0.0
        %1137 = vmatprep.subr.mxu0 0.0
        %1138 = vmatpush1.xpose.msra.mxu0 0.0
        %1139 = vmatprep.subr.mxu0 0.0
        %1140 = vmatpush1.xpose.msra.mxu0 0.0
        %1141 = vmatprep.subr.mxu0 0.0
        %1142 = vmatpush1.xpose.msra.mxu0 0.0
        %1143 = vmatprep.subr.mxu0 0.0
        %1144 = vmatpush1.xpose.msra.mxu0 0.0
        %1145 = vmatprep.subr.mxu0 0.0
        %1146 = vmatpush1.xpose.msra.mxu0 0.0
        %1147 = vmatprep.subr.mxu0 0.0
        %1148 = vmatpush1.xpose.msra.mxu0 0.0
        %1149 = vmatprep.subr.mxu0 0.0
        %1150 = vmatpush1.xpose.msra.mxu0 0.0
        %1151 = vmatprep.mubr.f32.mxu0 0.0
        %1152 = vmatmul.mubr.f32.gmra.mrb[0].mxu0 %v1083
        %v1153 = vpop.f32.mrb[0].mxu0
        %v1154 = vadd.f32 0.0, %v1153
        %v1155 = vpop.f32.mrb[0].mxu0
        %1156 = vdwg.mxu0
        %v1157 = vmul.f32 %v1154, 0.35355338
        %v1158 = vadd.f32 %v1157, %v977
        %v1159 = vsel %vm1082, %v1158, -inf
        %1160 = vmax.xlane.f32.xlu0 %v1159
        %v1161 = vpop.xlane.xlu0 %1160
        %v1162 = vsub.f32 %v1158, %v1161
        %v1163 = vmul.f32 %v1162, 1.442695
        %v1164 = vpow.pop %v1163
        %v1165 = vsel %vm1082, %v1164, 0.0
        %1166 = vadd.xlane.f32.xlu0 %v1165
        %v1167 = vpop.xlane.xlu0 %1166
        %v1168 = vrcp.pop %v1167
        %v1169 = vmul.f32 %v1164, %v1168
        %1170 = vrot.lane.b32.xlu0 %v1072, 64
        %v1171 = vpop.permute.xlu0 %1170
        %v1174 = vsel %vm1082, %v1169, 0
        %1176 = vmatprep.subr.mxu0 0.0
        %1177 = vmatpush1.msra.mxu0 %v1171
        %1178 = vmatprep.subr.mxu0 0.0
        %1179 = vmatpush1.msra.mxu0 0.0
        %1180 = vmatprep.subr.mxu0 0.0
        %1181 = vmatpush1.msra.mxu0 0.0
        %1182 = vmatprep.subr.mxu0 0.0
        %1183 = vmatpush1.msra.mxu0 0.0
        %1184 = vmatprep.subr.mxu0 0.0
        %1185 = vmatpush1.msra.mxu0 0.0
        %1186 = vmatprep.subr.mxu0 0.0
        %1187 = vmatpush1.msra.mxu0 0.0
        %1188 = vmatprep.subr.mxu0 0.0
        %1189 = vmatpush1.msra.mxu0 0.0
        %1190 = vmatprep.subr.mxu0 0.0
        %1191 = vmatpush1.msra.mxu0 0.0
        %1192 = vmatprep.subr.mxu0 0.0
        %1193 = vmatpush1.msra.mxu0 0.0
        %1194 = vmatprep.subr.mxu0 0.0
        %1195 = vmatpush1.msra.mxu0 0.0
        %1196 = vmatprep.subr.mxu0 0.0
        %1197 = vmatpush1.msra.mxu0 0.0
        %1198 = vmatprep.subr.mxu0 0.0
        %1199 = vmatpush1.msra.mxu0 0.0
        %1200 = vmatprep.subr.mxu0 0.0
        %1201 = vmatpush1.msra.mxu0 0.0
        %1202 = vmatprep.subr.mxu0 0.0
        %1203 = vmatpush1.msra.mxu0 0.0
        %1204 = vmatprep.subr.mxu0 0.0
        %1205 = vmatpush1.msra.mxu0 0.0
        %1206 = vmatprep.subr.mxu0 0.0
        %1207 = vmatpush1.msra.mxu0 0.0
        %1208 = vmatprep.subr.mxu0 0.0
        %1209 = vmatpush1.msra.mxu0 0.0
        %1210 = vmatprep.subr.mxu0 0.0
        %1211 = vmatpush1.msra.mxu0 0.0
        %1212 = vmatprep.subr.mxu0 0.0
        %1213 = vmatpush1.msra.mxu0 0.0
        %1214 = vmatprep.subr.mxu0 0.0
        %1215 = vmatpush1.msra.mxu0 0.0
        %1216 = vmatprep.subr.mxu0 0.0
        %1217 = vmatpush1.msra.mxu0 0.0
        %1218 = vmatprep.subr.mxu0 0.0
        %1219 = vmatpush1.msra.mxu0 0.0
        %1220 = vmatprep.subr.mxu0 0.0
        %1221 = vmatpush1.msra.mxu0 0.0
        %1222 = vmatprep.subr.mxu0 0.0
        %1223 = vmatpush1.msra.mxu0 0.0
        %1224 = vmatprep.subr.mxu0 0.0
        %1225 = vmatpush1.msra.mxu0 0.0
        %1226 = vmatprep.subr.mxu0 0.0
        %1227 = vmatpush1.msra.mxu0 0.0
        %1228 = vmatprep.subr.mxu0 0.0
        %1229 = vmatpush1.msra.mxu0 0.0
        %1230 = vmatprep.subr.mxu0 0.0
        %1231 = vmatpush1.msra.mxu0 0.0
        %1232 = vmatprep.subr.mxu0 0.0
        %1233 = vmatpush1.msra.mxu0 0.0
        %1234 = vmatprep.subr.mxu0 0.0
        %1235 = vmatpush1.msra.mxu0 0.0
        %1236 = vmatprep.subr.mxu0 0.0
        %1237 = vmatpush1.msra.mxu0 0.0
        %1238 = vmatprep.subr.mxu0 0.0
        %1239 = vmatpush1.msra.mxu0 0.0
        %1240 = vmatprep.mubr.f32.mxu0 0.0
        %1241 = vmatmul.mubr.f32.gmra.mrb[0].mxu0 %v1174
        %v1242 = vpop.f32.mrb[0].mxu0
        %v1243 = vadd.f32 0.0, %v1242
        %v1244 = vpop.f32.mrb[0].mxu0
        %1245 = vdwg.mxu0
        %1246 = vrot.lane.b32.xlu0 %v1072, 120
        %v1247 = vpop.permute.xlu0 %1246
        %1248 = vrot.lane.b32.xlu0 %v1072, 88
        %v1249 = vpop.permute.xlu0 %1248
        %v1250 = vsel %vm1082, %v1247, 0
        %v1252 = vsel %vm1082, %v1249, 0
        %1254 = vmatprep.subr.mxu0 0.0
        %1255 = vmatpush1.xpose.msra.mxu0 %v1252
        %1256 = vmatprep.subr.mxu0 0.0
        %1257 = vmatpush1.xpose.msra.mxu0 0.0
        %1258 = vmatprep.subr.mxu0 0.0
        %1259 = vmatpush1.xpose.msra.mxu0 0.0
        %1260 = vmatprep.subr.mxu0 0.0
        %1261 = vmatpush1.xpose.msra.mxu0 0.0
        %1262 = vmatprep.subr.mxu0 0.0
        %1263 = vmatpush1.xpose.msra.mxu0 0.0
        %1264 = vmatprep.subr.mxu0 0.0
        %1265 = vmatpush1.xpose.msra.mxu0 0.0
        %1266 = vmatprep.subr.mxu0 0.0
        %1267 = vmatpush1.xpose.msra.mxu0 0.0
        %1268 = vmatprep.subr.mxu0 0.0
        %1269 = vmatpush1.xpose.msra.mxu0 0.0
        %1270 = vmatprep.subr.mxu0 0.0
        %1271 = vmatpush1.xpose.msra.mxu0 0.0
        %1272 = vmatprep.subr.mxu0 0.0
        %1273 = vmatpush1.xpose.msra.mxu0 0.0
        %1274 = vmatprep.subr.mxu0 0.0
        %1275 = vmatpush1.xpose.msra.mxu0 0.0
        %1276 = vmatprep.subr.mxu0 0.0
        %1277 = vmatpush1.xpose.msra.mxu0 0.0
        %1278 = vmatprep.subr.mxu0 0.0
        %1279 = vmatpush1.xpose.msra.mxu0 0.0
        %1280 = vmatprep.subr.mxu0 0.0
        %1281 = vmatpush1.xpose.msra.mxu0 0.0
        %1282 = vmatprep.subr.mxu0 0.0
        %1283 = vmatpush1.xpose.msra.mxu0 0.0
        %1284 = vmatprep.subr.mxu0 0.0
        %1285 = vmatpush1.xpose.msra.mxu0 0.0
        %1286 = vmatprep.subr.mxu0 0.0
        %1287 = vmatpush1.xpose.msra.mxu0 0.0
        %1288 = vmatprep.subr.mxu0 0.0
        %1289 = vmatpush1.xpose.msra.mxu0 0.0
        %1290 = vmatprep.subr.mxu0 0.0
        %1291 = vmatpush1.xpose.msra.mxu0 0.0
        %1292 = vmatprep.subr.mxu0 0.0
        %1293 = vmatpush1.xpose.msra.mxu0 0.0
        %1294 = vmatprep.subr.mxu0 0.0
        %1295 = vmatpush1.xpose.msra.mxu0 0.0
        %1296 = vmatprep.subr.mxu0 0.0
        %1297 = vmatpush1.xpose.msra.mxu0 0.0
        %1298 = vmatprep.subr.mxu0 0.0
        %1299 = vmatpush1.xpose.msra.mxu0 0.0
        %1300 = vmatprep.subr.mxu0 0.0
        %1301 = vmatpush1.xpose.msra.mxu0 0.0
        %1302 = vmatprep.subr.mxu0 0.0
        %1303 = vmatpush1.xpose.msra.mxu0 0.0
        %1304 = vmatprep.subr.mxu0 0.0
        %1305 = vmatpush1.xpose.msra.mxu0 0.0
        %1306 = vmatprep.subr.mxu0 0.0
        %1307 = vmatpush1.xpose.msra.mxu0 0.0
        %1308 = vmatprep.subr.mxu0 0.0
        %1309 = vmatpush1.xpose.msra.mxu0 0.0
        %1310 = vmatprep.subr.mxu0 0.0
        %1311 = vmatpush1.xpose.msra.mxu0 0.0
        %1312 = vmatprep.subr.mxu0 0.0
        %1313 = vmatpush1.xpose.msra.mxu0 0.0
        %1314 = vmatprep.subr.mxu0 0.0
        %1315 = vmatpush1.xpose.msra.mxu0 0.0
        %1316 = vmatprep.subr.mxu0 0.0
        %1317 = vmatpush1.xpose.msra.mxu0 0.0
        %1318 = vmatprep.mubr.f32.mxu0 0.0
        %1319 = vmatmul.mubr.f32.gmra.mrb[0].mxu0 %v1250
        %v1320 = vpop.f32.mrb[0].mxu0
        %v1321 = vadd.f32 0.0, %v1320
        %v1322 = vpop.f32.mrb[0].mxu0
        %1323 = vdwg.mxu0
        %v1324 = vmul.f32 %v1321, 0.35355338
        %v1325 = vadd.f32 %v1324, %v977
        %v1326 = vsel %vm1082, %v1325, -inf
        %1327 = vmax.xlane.f32.xlu0 %v1326
        %v1328 = vpop.xlane.xlu0 %1327
        %v1329 = vsub.f32 %v1325, %v1328
        %v1330 = vmul.f32 %v1329, 1.442695
        %v1331 = vpow.pop %v1330
        %v1332 = vsel %vm1082, %v1331, 0.0
        %1333 = vadd.xlane.f32.xlu0 %v1332
        %v1334 = vpop.xlane.xlu0 %1333
        %v1335 = vrcp.pop %v1334
        %v1336 = vmul.f32 %v1331, %v1335
        %1337 = vrot.lane.b32.xlu0 %v1072, 56
        %v1338 = vpop.permute.xlu0 %1337
        %v1341 = vsel %vm1082, %v1336, 0
        %1343 = vmatprep.subr.mxu0 0.0
        %1344 = vmatpush1.msra.mxu0 %v1338
        %1345 = vmatprep.subr.mxu0 0.0
        %1346 = vmatpush1.msra.mxu0 0.0
        %1347 = vmatprep.subr.mxu0 0.0
        %1348 = vmatpush1.msra.mxu0 0.0
        %1349 = vmatprep.subr.mxu0 0.0
        %1350 = vmatpush1.msra.mxu0 0.0
        %1351 = vmatprep.subr.mxu0 0.0
        %1352 = vmatpush1.msra.mxu0 0.0
        %1353 = vmatprep.subr.mxu0 0.0
        %1354 = vmatpush1.msra.mxu0 0.0
        %1355 = vmatprep.subr.mxu0 0.0
        %1356 = vmatpush1.msra.mxu0 0.0
        %1357 = vmatprep.subr.mxu0 0.0
        %1358 = vmatpush1.msra.mxu0 0.0
        %1359 = vmatprep.subr.mxu0 0.0
        %1360 = vmatpush1.msra.mxu0 0.0
        %1361 = vmatprep.subr.mxu0 0.0
        %1362 = vmatpush1.msra.mxu0 0.0
        %1363 = vmatprep.subr.mxu0 0.0
        %1364 = vmatpush1.msra.mxu0 0.0
        %1365 = vmatprep.subr.mxu0 0.0
        %1366 = vmatpush1.msra.mxu0 0.0
        %1367 = vmatprep.subr.mxu0 0.0
        %1368 = vmatpush1.msra.mxu0 0.0
        %1369 = vmatprep.subr.mxu0 0.0
        %1370 = vmatpush1.msra.mxu0 0.0
        %1371 = vmatprep.subr.mxu0 0.0
        %1372 = vmatpush1.msra.mxu0 0.0
        %1373 = vmatprep.subr.mxu0 0.0
        %1374 = vmatpush1.msra.mxu0 0.0
        %1375 = vmatprep.subr.mxu0 0.0
        %1376 = vmatpush1.msra.mxu0 0.0
        %1377 = vmatprep.subr.mxu0 0.0
        %1378 = vmatpush1.msra.mxu0 0.0
        %1379 = vmatprep.subr.mxu0 0.0
        %1380 = vmatpush1.msra.mxu0 0.0
        %1381 = vmatprep.subr.mxu0 0.0
        %1382 = vmatpush1.msra.mxu0 0.0
        %1383 = vmatprep.subr.mxu0 0.0
        %1384 = vmatpush1.msra.mxu0 0.0
        %1385 = vmatprep.subr.mxu0 0.0
        %1386 = vmatpush1.msra.mxu0 0.0
        %1387 = vmatprep.subr.mxu0 0.0
        %1388 = vmatpush1.msra.mxu0 0.0
        %1389 = vmatprep.subr.mxu0 0.0
        %1390 = vmatpush1.msra.mxu0 0.0
        %1391 = vmatprep.subr.mxu0 0.0
        %1392 = vmatpush1.msra.mxu0 0.0
        %1393 = vmatprep.subr.mxu0 0.0
        %1394 = vmatpush1.msra.mxu0 0.0
        %1395 = vmatprep.subr.mxu0 0.0
        %1396 = vmatpush1.msra.mxu0 0.0
        %1397 = vmatprep.subr.mxu0 0.0
        %1398 = vmatpush1.msra.mxu0 0.0
        %1399 = vmatprep.subr.mxu0 0.0
        %1400 = vmatpush1.msra.mxu0 0.0
        %1401 = vmatprep.subr.mxu0 0.0
        %1402 = vmatpush1.msra.mxu0 0.0
        %1403 = vmatprep.subr.mxu0 0.0
        %1404 = vmatpush1.msra.mxu0 0.0
        %1405 = vmatprep.subr.mxu0 0.0
        %1406 = vmatpush1.msra.mxu0 0.0
        %1407 = vmatprep.mubr.f32.mxu0 0.0
        %1408 = vmatmul.mubr.f32.gmra.mrb[0].mxu0 %v1341
        %v1409 = vpop.f32.mrb[0].mxu0
        %v1410 = vadd.f32 0.0, %v1409
        %v1411 = vpop.f32.mrb[0].mxu0
        %1412 = vdwg.mxu0
        %v1414 = vsel %vm1082, %v1410, 0
        %1416 = vmatprep.subr.mxu0 0.0
        %1417 = vmatpush1.msra.mxu0 %v1076
        %1418 = vmatprep.subr.mxu0 0.0
        %1419 = vmatpush1.msra.mxu0 0.0
        %1420 = vmatprep.subr.mxu0 0.0
        %1421 = vmatpush1.msra.mxu0 0.0
        %1422 = vmatprep.subr.mxu0 0.0
        %1423 = vmatpush1.msra.mxu0 0.0
        %1424 = vmatprep.subr.mxu0 0.0
        %1425 = vmatpush1.msra.mxu0 0.0
        %1426 = vmatprep.subr.mxu0 0.0
        %1427 = vmatpush1.msra.mxu0 0.0
        %1428 = vmatprep.subr.mxu0 0.0
        %1429 = vmatpush1.msra.mxu0 0.0
        %1430 = vmatprep.subr.mxu0 0.0
        %1431 = vmatpush1.msra.mxu0 0.0
        %1432 = vmatprep.subr.mxu0 0.0
        %1433 = vmatpush1.msra.mxu0 0.0
        %1434 = vmatprep.subr.mxu0 0.0
        %1435 = vmatpush1.msra.mxu0 0.0
        %1436 = vmatprep.subr.mxu0 0.0
        %1437 = vmatpush1.msra.mxu0 0.0
        %1438 = vmatprep.subr.mxu0 0.0
        %1439 = vmatpush1.msra.mxu0 0.0
        %1440 = vmatprep.subr.mxu0 0.0
        %1441 = vmatpush1.msra.mxu0 0.0
        %1442 = vmatprep.subr.mxu0 0.0
        %1443 = vmatpush1.msra.mxu0 0.0
        %1444 = vmatprep.subr.mxu0 0.0
        %1445 = vmatpush1.msra.mxu0 0.0
        %1446 = vmatprep.subr.mxu0 0.0
        %1447 = vmatpush1.msra.mxu0 0.0
        %1448 = vmatprep.subr.mxu0 0.0
        %1449 = vmatpush1.msra.mxu0 0.0
        %1450 = vmatprep.subr.mxu0 0.0
        %1451 = vmatpush1.msra.mxu0 0.0
        %1452 = vmatprep.subr.mxu0 0.0
        %1453 = vmatpush1.msra.mxu0 0.0
        %1454 = vmatprep.subr.mxu0 0.0
        %1455 = vmatpush1.msra.mxu0 0.0
        %1456 = vmatprep.subr.mxu0 0.0
        %1457 = vmatpush1.msra.mxu0 0.0
        %1458 = vmatprep.subr.mxu0 0.0
        %1459 = vmatpush1.msra.mxu0 0.0
        %1460 = vmatprep.subr.mxu0 0.0
        %1461 = vmatpush1.msra.mxu0 0.0
        %1462 = vmatprep.subr.mxu0 0.0
        %1463 = vmatpush1.msra.mxu0 0.0
        %1464 = vmatprep.subr.mxu0 0.0
        %1465 = vmatpush1.msra.mxu0 0.0
        %1466 = vmatprep.subr.mxu0 0.0
        %1467 = vmatpush1.msra.mxu0 0.0
        %1468 = vmatprep.subr.mxu0 0.0
        %1469 = vmatpush1.msra.mxu0 0.0
        %1470 = vmatprep.subr.mxu0 0.0
        %1471 = vmatpush1.msra.mxu0 0.0
        %1472 = vmatprep.subr.mxu0 0.0
        %1473 = vmatpush1.msra.mxu0 0.0
        %1474 = vmatprep.subr.mxu0 0.0
        %1475 = vmatpush1.msra.mxu0 0.0
        %1476 = vmatprep.subr.mxu0 0.0
        %1477 = vmatpush1.msra.mxu0 0.0
        %1478 = vmatprep.subr.mxu0 0.0
        %1479 = vmatpush1.msra.mxu0 0.0
        %1480 = vmatprep.mubr.f32.mxu0 0.0
        %1481 = vmatmul.mubr.f32.gmra.mrb[0].mxu0 %v1414
        %v1482 = vpop.f32.mrb[0].mxu0
        %v1483 = vadd.f32 0.0, %v1482
        %v1484 = vpop.f32.mrb[0].mxu0
        %1485 = vdwg.mxu0
        %v1487 = vsel %vm1082, %v1243, 0
        %1489 = vmatprep.subr.mxu0 0.0
        %1490 = vmatpush1.msra.mxu0 %v1075
        %1491 = vmatprep.subr.mxu0 0.0
        %1492 = vmatpush1.msra.mxu0 0.0
        %1493 = vmatprep.subr.mxu0 0.0
        %1494 = vmatpush1.msra.mxu0 0.0
        %1495 = vmatprep.subr.mxu0 0.0
        %1496 = vmatpush1.msra.mxu0 0.0
        %1497 = vmatprep.subr.mxu0 0.0
        %1498 = vmatpush1.msra.mxu0 0.0
        %1499 = vmatprep.subr.mxu0 0.0
        %1500 = vmatpush1.msra.mxu0 0.0
        %1501 = vmatprep.subr.mxu0 0.0
        %1502 = vmatpush1.msra.mxu0 0.0
        %1503 = vmatprep.subr.mxu0 0.0
        %1504 = vmatpush1.msra.mxu0 0.0
        %1505 = vmatprep.subr.mxu0 0.0
        %1506 = vmatpush1.msra.mxu0 0.0
        %1507 = vmatprep.subr.mxu0 0.0
        %1508 = vmatpush1.msra.mxu0 0.0
        %1509 = vmatprep.subr.mxu0 0.0
        %1510 = vmatpush1.msra.mxu0 0.0
        %1511 = vmatprep.subr.mxu0 0.0
        %1512 = vmatpush1.msra.mxu0 0.0
        %1513 = vmatprep.subr.mxu0 0.0
        %1514 = vmatpush1.msra.mxu0 0.0
        %1515 = vmatprep.subr.mxu0 0.0
        %1516 = vmatpush1.msra.mxu0 0.0
        %1517 = vmatprep.subr.mxu0 0.0
        %1518 = vmatpush1.msra.mxu0 0.0
        %1519 = vmatprep.subr.mxu0 0.0
        %1520 = vmatpush1.msra.mxu0 0.0
        %1521 = vmatprep.subr.mxu0 0.0
        %1522 = vmatpush1.msra.mxu0 0.0
        %1523 = vmatprep.subr.mxu0 0.0
        %1524 = vmatpush1.msra.mxu0 0.0
        %1525 = vmatprep.subr.mxu0 0.0
        %1526 = vmatpush1.msra.mxu0 0.0
        %1527 = vmatprep.subr.mxu0 0.0
        %1528 = vmatpush1.msra.mxu0 0.0
        %1529 = vmatprep.subr.mxu0 0.0
        %1530 = vmatpush1.msra.mxu0 0.0
        %1531 = vmatprep.subr.mxu0 0.0
        %1532 = vmatpush1.msra.mxu0 0.0
        %1533 = vmatprep.subr.mxu0 0.0
        %1534 = vmatpush1.msra.mxu0 0.0
        %1535 = vmatprep.subr.mxu0 0.0
        %1536 = vmatpush1.msra.mxu0 0.0
        %1537 = vmatprep.subr.mxu0 0.0
        %1538 = vmatpush1.msra.mxu0 0.0
        %1539 = vmatprep.subr.mxu0 0.0
        %1540 = vmatpush1.msra.mxu0 0.0
        %1541 = vmatprep.subr.mxu0 0.0
        %1542 = vmatpush1.msra.mxu0 0.0
        %1543 = vmatprep.subr.mxu0 0.0
        %1544 = vmatpush1.msra.mxu0 0.0
        %1545 = vmatprep.subr.mxu0 0.0
        %1546 = vmatpush1.msra.mxu0 0.0
        %1547 = vmatprep.subr.mxu0 0.0
        %1548 = vmatpush1.msra.mxu0 0.0
        %1549 = vmatprep.subr.mxu0 0.0
        %1550 = vmatpush1.msra.mxu0 0.0
        %1551 = vmatprep.subr.mxu0 0.0
        %1552 = vmatpush1.msra.mxu0 0.0
        %1553 = vmatprep.mubr.f32.mxu0 0.0
        %1554 = vmatmul.mubr.f32.gmra.mrb[0].mxu0 %v1487
        %v1555 = vpop.f32.mrb[0].mxu0
        %v1556 = vadd.f32 %v1483, %v1555
        %v1557 = vpop.f32.mrb[0].mxu0
        %1558 = vdwg.mxu0
        %1559 = vrot.lane.b32.xlu0 %v1072, 112
        %v1560 = vpop.permute.xlu0 %1559
        %1561 = vrot.lane.b32.xlu0 %v1072, 80
        %v1562 = vpop.permute.xlu0 %1561
        %v1563 = vsel %vm1082, %v1560, 0
        %v1565 = vsel %vm1082, %v1562, 0
        %1567 = vmatprep.subr.mxu0 0.0
        %1568 = vmatpush1.xpose.msra.mxu0 %v1565
        %1569 = vmatprep.subr.mxu0 0.0
        %1570 = vmatpush1.xpose.msra.mxu0 0.0
        %1571 = vmatprep.subr.mxu0 0.0
        %1572 = vmatpush1.xpose.msra.mxu0 0.0
        %1573 = vmatprep.subr.mxu0 0.0
        %1574 = vmatpush1.xpose.msra.mxu0 0.0
        %1575 = vmatprep.subr.mxu0 0.0
        %1576 = vmatpush1.xpose.msra.mxu0 0.0
        %1577 = vmatprep.subr.mxu0 0.0
        %1578 = vmatpush1.xpose.msra.mxu0 0.0
        %1579 = vmatprep.subr.mxu0 0.0
        %1580 = vmatpush1.xpose.msra.mxu0 0.0
        %1581 = vmatprep.subr.mxu0 0.0
        %1582 = vmatpush1.xpose.msra.mxu0 0.0
        %1583 = vmatprep.subr.mxu0 0.0
        %1584 = vmatpush1.xpose.msra.mxu0 0.0
        %1585 = vmatprep.subr.mxu0 0.0
        %1586 = vmatpush1.xpose.msra.mxu0 0.0
        %1587 = vmatprep.subr.mxu0 0.0
        %1588 = vmatpush1.xpose.msra.mxu0 0.0
        %1589 = vmatprep.subr.mxu0 0.0
        %1590 = vmatpush1.xpose.msra.mxu0 0.0
        %1591 = vmatprep.subr.mxu0 0.0
        %1592 = vmatpush1.xpose.msra.mxu0 0.0
        %1593 = vmatprep.subr.mxu0 0.0
        %1594 = vmatpush1.xpose.msra.mxu0 0.0
        %1595 = vmatprep.subr.mxu0 0.0
        %1596 = vmatpush1.xpose.msra.mxu0 0.0
        %1597 = vmatprep.subr.mxu0 0.0
        %1598 = vmatpush1.xpose.msra.mxu0 0.0
        %1599 = vmatprep.subr.mxu0 0.0
        %1600 = vmatpush1.xpose.msra.mxu0 0.0
        %1601 = vmatprep.subr.mxu0 0.0
        %1602 = vmatpush1.xpose.msra.mxu0 0.0
        %1603 = vmatprep.subr.mxu0 0.0
        %1604 = vmatpush1.xpose.msra.mxu0 0.0
        %1605 = vmatprep.subr.mxu0 0.0
        %1606 = vmatpush1.xpose.msra.mxu0 0.0
        %1607 = vmatprep.subr.mxu0 0.0
        %1608 = vmatpush1.xpose.msra.mxu0 0.0
        %1609 = vmatprep.subr.mxu0 0.0
        %1610 = vmatpush1.xpose.msra.mxu0 0.0
        %1611 = vmatprep.subr.mxu0 0.0
        %1612 = vmatpush1.xpose.msra.mxu0 0.0
        %1613 = vmatprep.subr.mxu0 0.0
        %1614 = vmatpush1.xpose.msra.mxu0 0.0
        %1615 = vmatprep.subr.mxu0 0.0
        %1616 = vmatpush1.xpose.msra.mxu0 0.0
        %1617 = vmatprep.subr.mxu0 0.0
        %1618 = vmatpush1.xpose.msra.mxu0 0.0
        %1619 = vmatprep.subr.mxu0 0.0
        %1620 = vmatpush1.xpose.msra.mxu0 0.0
        %1621 = vmatprep.subr.mxu0 0.0
        %1622 = vmatpush1.xpose.msra.mxu0 0.0
        %1623 = vmatprep.subr.mxu0 0.0
        %1624 = vmatpush1.xpose.msra.mxu0 0.0
        %1625 = vmatprep.subr.mxu0 0.0
        %1626 = vmatpush1.xpose.msra.mxu0 0.0
        %1627 = vmatprep.subr.mxu0 0.0
        %1628 = vmatpush1.xpose.msra.mxu0 0.0
        %1629 = vmatprep.subr.mxu0 0.0
        %1630 = vmatpush1.xpose.msra.mxu0 0.0
        %1631 = vmatprep.mubr.f32.mxu0 0.0
        %1632 = vmatmul.mubr.f32.gmra.mrb[0].mxu0 %v1563
        %v1633 = vpop.f32.mrb[0].mxu0
        %v1634 = vadd.f32 0.0, %v1633
        %v1635 = vpop.f32.mrb[0].mxu0
        %1636 = vdwg.mxu0
        %v1637 = vmul.f32 %v1634, 0.35355338
        %v1638 = vadd.f32 %v1637, %v977
        %v1639 = vsel %vm1082, %v1638, -inf
        %1640 = vmax.xlane.f32.xlu0 %v1639
        %v1641 = vpop.xlane.xlu0 %1640
        %v1642 = vsub.f32 %v1638, %v1641
        %v1643 = vmul.f32 %v1642, 1.442695
        %v1644 = vpow.pop %v1643
        %v1645 = vsel %vm1082, %v1644, 0.0
        %1646 = vadd.xlane.f32.xlu0 %v1645
        %v1647 = vpop.xlane.xlu0 %1646
        %v1648 = vrcp.pop %v1647
        %v1649 = vmul.f32 %v1644, %v1648
        %1650 = vrot.lane.b32.xlu0 %v1072, 48
        %v1651 = vpop.permute.xlu0 %1650
        %v1654 = vsel %vm1082, %v1649, 0
        %1656 = vmatprep.subr.mxu0 0.0
        %1657 = vmatpush1.msra.mxu0 %v1651
        %1658 = vmatprep.subr.mxu0 0.0
        %1659 = vmatpush1.msra.mxu0 0.0
        %1660 = vmatprep.subr.mxu0 0.0
        %1661 = vmatpush1.msra.mxu0 0.0
        %1662 = vmatprep.subr.mxu0 0.0
        %1663 = vmatpush1.msra.mxu0 0.0
        %1664 = vmatprep.subr.mxu0 0.0
        %1665 = vmatpush1.msra.mxu0 0.0
        %1666 = vmatprep.subr.mxu0 0.0
        %1667 = vmatpush1.msra.mxu0 0.0
        %1668 = vmatprep.subr.mxu0 0.0
        %1669 = vmatpush1.msra.mxu0 0.0
        %1670 = vmatprep.subr.mxu0 0.0
        %1671 = vmatpush1.msra.mxu0 0.0
        %1672 = vmatprep.subr.mxu0 0.0
        %1673 = vmatpush1.msra.mxu0 0.0
        %1674 = vmatprep.subr.mxu0 0.0
        %1675 = vmatpush1.msra.mxu0 0.0
        %1676 = vmatprep.subr.mxu0 0.0
        %1677 = vmatpush1.msra.mxu0 0.0
        %1678 = vmatprep.subr.mxu0 0.0
        %1679 = vmatpush1.msra.mxu0 0.0
        %1680 = vmatprep.subr.mxu0 0.0
        %1681 = vmatpush1.msra.mxu0 0.0
        %1682 = vmatprep.subr.mxu0 0.0
        %1683 = vmatpush1.msra.mxu0 0.0
        %1684 = vmatprep.subr.mxu0 0.0
        %1685 = vmatpush1.msra.mxu0 0.0
        %1686 = vmatprep.subr.mxu0 0.0
        %1687 = vmatpush1.msra.mxu0 0.0
        %1688 = vmatprep.subr.mxu0 0.0
        %1689 = vmatpush1.msra.mxu0 0.0
        %1690 = vmatprep.subr.mxu0 0.0
        %1691 = vmatpush1.msra.mxu0 0.0
        %1692 = vmatprep.subr.mxu0 0.0
        %1693 = vmatpush1.msra.mxu0 0.0
        %1694 = vmatprep.subr.mxu0 0.0
        %1695 = vmatpush1.msra.mxu0 0.0
        %1696 = vmatprep.subr.mxu0 0.0
        %1697 = vmatpush1.msra.mxu0 0.0
        %1698 = vmatprep.subr.mxu0 0.0
        %1699 = vmatpush1.msra.mxu0 0.0
        %1700 = vmatprep.subr.mxu0 0.0
        %1701 = vmatpush1.msra.mxu0 0.0
        %1702 = vmatprep.subr.mxu0 0.0
        %1703 = vmatpush1.msra.mxu0 0.0
        %1704 = vmatprep.subr.mxu0 0.0
        %1705 = vmatpush1.msra.mxu0 0.0
        %1706 = vmatprep.subr.mxu0 0.0
        %1707 = vmatpush1.msra.mxu0 0.0
        %1708 = vmatprep.subr.mxu0 0.0
        %1709 = vmatpush1.msra.mxu0 0.0
        %1710 = vmatprep.subr.mxu0 0.0
        %1711 = vmatpush1.msra.mxu0 0.0
        %1712 = vmatprep.subr.mxu0 0.0
        %1713 = vmatpush1.msra.mxu0 0.0
        %1714 = vmatprep.subr.mxu0 0.0
        %1715 = vmatpush1.msra.mxu0 0.0
        %1716 = vmatprep.subr.mxu0 0.0
        %1717 = vmatpush1.msra.mxu0 0.0
        %1718 = vmatprep.subr.mxu0 0.0
        %1719 = vmatpush1.msra.mxu0 0.0
        %1720 = vmatprep.mubr.f32.mxu0 0.0
        %1721 = vmatmul.mubr.f32.gmra.mrb[0].mxu0 %v1654
        %v1722 = vpop.f32.mrb[0].mxu0
        %v1723 = vadd.f32 0.0, %v1722
        %v1724 = vpop.f32.mrb[0].mxu0
        %1725 = vdwg.mxu0
        %v1727 = vsel %vm1082, %v1723, 0
        %1729 = vmatprep.subr.mxu0 0.0
        %1730 = vmatpush1.msra.mxu0 %v1077
        %1731 = vmatprep.subr.mxu0 0.0
        %1732 = vmatpush1.msra.mxu0 0.0
        %1733 = vmatprep.subr.mxu0 0.0
        %1734 = vmatpush1.msra.mxu0 0.0
        %1735 = vmatprep.subr.mxu0 0.0
        %1736 = vmatpush1.msra.mxu0 0.0
        %1737 = vmatprep.subr.mxu0 0.0
        %1738 = vmatpush1.msra.mxu0 0.0
        %1739 = vmatprep.subr.mxu0 0.0
        %1740 = vmatpush1.msra.mxu0 0.0
        %1741 = vmatprep.subr.mxu0 0.0
        %1742 = vmatpush1.msra.mxu0 0.0
        %1743 = vmatprep.subr.mxu0 0.0
        %1744 = vmatpush1.msra.mxu0 0.0
        %1745 = vmatprep.subr.mxu0 0.0
        %1746 = vmatpush1.msra.mxu0 0.0
        %1747 = vmatprep.subr.mxu0 0.0
        %1748 = vmatpush1.msra.mxu0 0.0
        %1749 = vmatprep.subr.mxu0 0.0
        %1750 = vmatpush1.msra.mxu0 0.0
        %1751 = vmatprep.subr.mxu0 0.0
        %1752 = vmatpush1.msra.mxu0 0.0
        %1753 = vmatprep.subr.mxu0 0.0
        %1754 = vmatpush1.msra.mxu0 0.0
        %1755 = vmatprep.subr.mxu0 0.0
        %1756 = vmatpush1.msra.mxu0 0.0
        %1757 = vmatprep.subr.mxu0 0.0
        %1758 = vmatpush1.msra.mxu0 0.0
        %1759 = vmatprep.subr.mxu0 0.0
        %1760 = vmatpush1.msra.mxu0 0.0
        %1761 = vmatprep.subr.mxu0 0.0
        %1762 = vmatpush1.msra.mxu0 0.0
        %1763 = vmatprep.subr.mxu0 0.0
        %1764 = vmatpush1.msra.mxu0 0.0
        %1765 = vmatprep.subr.mxu0 0.0
        %1766 = vmatpush1.msra.mxu0 0.0
        %1767 = vmatprep.subr.mxu0 0.0
        %1768 = vmatpush1.msra.mxu0 0.0
        %1769 = vmatprep.subr.mxu0 0.0
        %1770 = vmatpush1.msra.mxu0 0.0
        %1771 = vmatprep.subr.mxu0 0.0
        %1772 = vmatpush1.msra.mxu0 0.0
        %1773 = vmatprep.subr.mxu0 0.0
        %1774 = vmatpush1.msra.mxu0 0.0
        %1775 = vmatprep.subr.mxu0 0.0
        %1776 = vmatpush1.msra.mxu0 0.0
        %1777 = vmatprep.subr.mxu0 0.0
        %1778 = vmatpush1.msra.mxu0 0.0
        %1779 = vmatprep.subr.mxu0 0.0
        %1780 = vmatpush1.msra.mxu0 0.0
        %1781 = vmatprep.subr.mxu0 0.0
        %1782 = vmatpush1.msra.mxu0 0.0
        %1783 = vmatprep.subr.mxu0 0.0
        %1784 = vmatpush1.msra.mxu0 0.0
        %1785 = vmatprep.subr.mxu0 0.0
        %1786 = vmatpush1.msra.mxu0 0.0
        %1787 = vmatprep.subr.mxu0 0.0
        %1788 = vmatpush1.msra.mxu0 0.0
        %1789 = vmatprep.subr.mxu0 0.0
        %1790 = vmatpush1.msra.mxu0 0.0
        %1791 = vmatprep.subr.mxu0 0.0
        %1792 = vmatpush1.msra.mxu0 0.0
        %1793 = vmatprep.mubr.f32.mxu0 0.0
        %1794 = vmatmul.mubr.f32.gmra.mrb[0].mxu0 %v1727
        %v1795 = vpop.f32.mrb[0].mxu0
        %v1796 = vadd.f32 0.0, %v1795
        %v1797 = vpop.f32.mrb[0].mxu0
        %1798 = vdwg.mxu0
        %v1799 = vadd.f32 %v1556, %v1796
        %1800 = vrot.lane.b32.xlu0 %v1072, 104
        %v1801 = vpop.permute.xlu0 %1800
        %1802 = vrot.lane.b32.xlu0 %v1072, 72
        %v1803 = vpop.permute.xlu0 %1802
        %v1804 = vsel %vm1082, %v1801, 0
        %v1806 = vsel %vm1082, %v1803, 0
        %1808 = vmatprep.subr.mxu0 0.0
        %1809 = vmatpush1.xpose.msra.mxu0 %v1806
        %1810 = vmatprep.subr.mxu0 0.0
        %1811 = vmatpush1.xpose.msra.mxu0 0.0
        %1812 = vmatprep.subr.mxu0 0.0
        %1813 = vmatpush1.xpose.msra.mxu0 0.0
        %1814 = vmatprep.subr.mxu0 0.0
        %1815 = vmatpush1.xpose.msra.mxu0 0.0
        %1816 = vmatprep.subr.mxu0 0.0
        %1817 = vmatpush1.xpose.msra.mxu0 0.0
        %1818 = vmatprep.subr.mxu0 0.0
        %1819 = vmatpush1.xpose.msra.mxu0 0.0
        %1820 = vmatprep.subr.mxu0 0.0
        %1821 = vmatpush1.xpose.msra.mxu0 0.0
        %1822 = vmatprep.subr.mxu0 0.0
        %1823 = vmatpush1.xpose.msra.mxu0 0.0
        %1824 = vmatprep.subr.mxu0 0.0
        %1825 = vmatpush1.xpose.msra.mxu0 0.0
        %1826 = vmatprep.subr.mxu0 0.0
        %1827 = vmatpush1.xpose.msra.mxu0 0.0
        %1828 = vmatprep.subr.mxu0 0.0
        %1829 = vmatpush1.xpose.msra.mxu0 0.0
        %1830 = vmatprep.subr.mxu0 0.0
        %1831 = vmatpush1.xpose.msra.mxu0 0.0
        %1832 = vmatprep.subr.mxu0 0.0
        %1833 = vmatpush1.xpose.msra.mxu0 0.0
        %1834 = vmatprep.subr.mxu0 0.0
        %1835 = vmatpush1.xpose.msra.mxu0 0.0
        %1836 = vmatprep.subr.mxu0 0.0
        %1837 = vmatpush1.xpose.msra.mxu0 0.0
        %1838 = vmatprep.subr.mxu0 0.0
        %1839 = vmatpush1.xpose.msra.mxu0 0.0
        %1840 = vmatprep.subr.mxu0 0.0
        %1841 = vmatpush1.xpose.msra.mxu0 0.0
        %1842 = vmatprep.subr.mxu0 0.0
        %1843 = vmatpush1.xpose.msra.mxu0 0.0
        %1844 = vmatprep.subr.mxu0 0.0
        %1845 = vmatpush1.xpose.msra.mxu0 0.0
        %1846 = vmatprep.subr.mxu0 0.0
        %1847 = vmatpush1.xpose.msra.mxu0 0.0
        %1848 = vmatprep.subr.mxu0 0.0
        %1849 = vmatpush1.xpose.msra.mxu0 0.0
        %1850 = vmatprep.subr.mxu0 0.0
        %1851 = vmatpush1.xpose.msra.mxu0 0.0
        %1852 = vmatprep.subr.mxu0 0.0
        %1853 = vmatpush1.xpose.msra.mxu0 0.0
        %1854 = vmatprep.subr.mxu0 0.0
        %1855 = vmatpush1.xpose.msra.mxu0 0.0
        %1856 = vmatprep.subr.mxu0 0.0
        %1857 = vmatpush1.xpose.msra.mxu0 0.0
        %1858 = vmatprep.subr.mxu0 0.0
        %1859 = vmatpush1.xpose.msra.mxu0 0.0
        %1860 = vmatprep.subr.mxu0 0.0
        %1861 = vmatpush1.xpose.msra.mxu0 0.0
        %1862 = vmatprep.subr.mxu0 0.0
        %1863 = vmatpush1.xpose.msra.mxu0 0.0
        %1864 = vmatprep.subr.mxu0 0.0
        %1865 = vmatpush1.xpose.msra.mxu0 0.0
        %1866 = vmatprep.subr.mxu0 0.0
        %1867 = vmatpush1.xpose.msra.mxu0 0.0
        %1868 = vmatprep.subr.mxu0 0.0
        %1869 = vmatpush1.xpose.msra.mxu0 0.0
        %1870 = vmatprep.subr.mxu0 0.0
        %1871 = vmatpush1.xpose.msra.mxu0 0.0
        %1872 = vmatprep.mubr.f32.mxu0 0.0
        %1873 = vmatmul.mubr.f32.gmra.mrb[0].mxu0 %v1804
        %v1874 = vpop.f32.mrb[0].mxu0
        %v1875 = vadd.f32 0.0, %v1874
        %v1876 = vpop.f32.mrb[0].mxu0
        %1877 = vdwg.mxu0
        %v1878 = vmul.f32 %v1875, 0.35355338
        %v1879 = vadd.f32 %v1878, %v977
        %v1880 = vsel %vm1082, %v1879, -inf
        %1881 = vmax.xlane.f32.xlu0 %v1880
        %v1882 = vpop.xlane.xlu0 %1881
        %v1883 = vsub.f32 %v1879, %v1882
        %v1884 = vmul.f32 %v1883, 1.442695
        %v1885 = vpow.pop %v1884
        %v1886 = vsel %vm1082, %v1885, 0.0
        %1887 = vadd.xlane.f32.xlu0 %v1886
        %v1888 = vpop.xlane.xlu0 %1887
        %v1889 = vrcp.pop %v1888
        %v1890 = vmul.f32 %v1885, %v1889
        %1891 = vrot.lane.b32.xlu0 %v1072, 40
        %v1892 = vpop.permute.xlu0 %1891
        %v1895 = vsel %vm1082, %v1890, 0
        %1897 = vmatprep.subr.mxu0 0.0
        %1898 = vmatpush1.msra.mxu0 %v1892
        %1899 = vmatprep.subr.mxu0 0.0
        %1900 = vmatpush1.msra.mxu0 0.0
        %1901 = vmatprep.subr.mxu0 0.0
        %1902 = vmatpush1.msra.mxu0 0.0
        %1903 = vmatprep.subr.mxu0 0.0
        %1904 = vmatpush1.msra.mxu0 0.0
        %1905 = vmatprep.subr.mxu0 0.0
        %1906 = vmatpush1.msra.mxu0 0.0
        %1907 = vmatprep.subr.mxu0 0.0
        %1908 = vmatpush1.msra.mxu0 0.0
        %1909 = vmatprep.subr.mxu0 0.0
        %1910 = vmatpush1.msra.mxu0 0.0
        %1911 = vmatprep.subr.mxu0 0.0
        %1912 = vmatpush1.msra.mxu0 0.0
        %1913 = vmatprep.subr.mxu0 0.0
        %1914 = vmatpush1.msra.mxu0 0.0
        %1915 = vmatprep.subr.mxu0 0.0
        %1916 = vmatpush1.msra.mxu0 0.0
        %1917 = vmatprep.subr.mxu0 0.0
        %1918 = vmatpush1.msra.mxu0 0.0
        %1919 = vmatprep.subr.mxu0 0.0
        %1920 = vmatpush1.msra.mxu0 0.0
        %1921 = vmatprep.subr.mxu0 0.0
        %1922 = vmatpush1.msra.mxu0 0.0
        %1923 = vmatprep.subr.mxu0 0.0
        %1924 = vmatpush1.msra.mxu0 0.0
        %1925 = vmatprep.subr.mxu0 0.0
        %1926 = vmatpush1.msra.mxu0 0.0
        %1927 = vmatprep.subr.mxu0 0.0
        %1928 = vmatpush1.msra.mxu0 0.0
        %1929 = vmatprep.subr.mxu0 0.0
        %1930 = vmatpush1.msra.mxu0 0.0
        %1931 = vmatprep.subr.mxu0 0.0
        %1932 = vmatpush1.msra.mxu0 0.0
        %1933 = vmatprep.subr.mxu0 0.0
        %1934 = vmatpush1.msra.mxu0 0.0
        %1935 = vmatprep.subr.mxu0 0.0
        %1936 = vmatpush1.msra.mxu0 0.0
        %1937 = vmatprep.subr.mxu0 0.0
        %1938 = vmatpush1.msra.mxu0 0.0
        %1939 = vmatprep.subr.mxu0 0.0
        %1940 = vmatpush1.msra.mxu0 0.0
        %1941 = vmatprep.subr.mxu0 0.0
        %1942 = vmatpush1.msra.mxu0 0.0
        %1943 = vmatprep.subr.mxu0 0.0
        %1944 = vmatpush1.msra.mxu0 0.0
        %1945 = vmatprep.subr.mxu0 0.0
        %1946 = vmatpush1.msra.mxu0 0.0
        %1947 = vmatprep.subr.mxu0 0.0
        %1948 = vmatpush1.msra.mxu0 0.0
        %1949 = vmatprep.subr.mxu0 0.0
        %1950 = vmatpush1.msra.mxu0 0.0
        %1951 = vmatprep.subr.mxu0 0.0
        %1952 = vmatpush1.msra.mxu0 0.0
        %1953 = vmatprep.subr.mxu0 0.0
        %1954 = vmatpush1.msra.mxu0 0.0
        %1955 = vmatprep.subr.mxu0 0.0
        %1956 = vmatpush1.msra.mxu0 0.0
        %1957 = vmatprep.subr.mxu0 0.0
        %1958 = vmatpush1.msra.mxu0 0.0
        %1959 = vmatprep.subr.mxu0 0.0
        %1960 = vmatpush1.msra.mxu0 0.0
        %1961 = vmatprep.mubr.f32.mxu0 0.0
        %1962 = vmatmul.mubr.f32.gmra.mrb[0].mxu0 %v1895
        %v1963 = vpop.f32.mrb[0].mxu0
        %v1964 = vadd.f32 0.0, %v1963
        %v1965 = vpop.f32.mrb[0].mxu0
        %1966 = vdwg.mxu0
        %v1968 = vsel %vm1082, %v1964, 0
        %1970 = vmatprep.subr.mxu0 0.0
        %1971 = vmatpush1.msra.mxu0 %v1078
        %1972 = vmatprep.subr.mxu0 0.0
        %1973 = vmatpush1.msra.mxu0 0.0
        %1974 = vmatprep.subr.mxu0 0.0
        %1975 = vmatpush1.msra.mxu0 0.0
        %1976 = vmatprep.subr.mxu0 0.0
        %1977 = vmatpush1.msra.mxu0 0.0
        %1978 = vmatprep.subr.mxu0 0.0
        %1979 = vmatpush1.msra.mxu0 0.0
        %1980 = vmatprep.subr.mxu0 0.0
        %1981 = vmatpush1.msra.mxu0 0.0
        %1982 = vmatprep.subr.mxu0 0.0
        %1983 = vmatpush1.msra.mxu0 0.0
        %1984 = vmatprep.subr.mxu0 0.0
        %1985 = vmatpush1.msra.mxu0 0.0
        %1986 = vmatprep.subr.mxu0 0.0
        %1987 = vmatpush1.msra.mxu0 0.0
        %1988 = vmatprep.subr.mxu0 0.0
        %1989 = vmatpush1.msra.mxu0 0.0
        %1990 = vmatprep.subr.mxu0 0.0
        %1991 = vmatpush1.msra.mxu0 0.0
        %1992 = vmatprep.subr.mxu0 0.0
        %1993 = vmatpush1.msra.mxu0 0.0
        %1994 = vmatprep.subr.mxu0 0.0
        %1995 = vmatpush1.msra.mxu0 0.0
        %1996 = vmatprep.subr.mxu0 0.0
        %1997 = vmatpush1.msra.mxu0 0.0
        %1998 = vmatprep.subr.mxu0 0.0
        %1999 = vmatpush1.msra.mxu0 0.0
        %2000 = vmatprep.subr.mxu0 0.0
        %2001 = vmatpush1.msra.mxu0 0.0
        %2002 = vmatprep.subr.mxu0 0.0
        %2003 = vmatpush1.msra.mxu0 0.0
        %2004 = vmatprep.subr.mxu0 0.0
        %2005 = vmatpush1.msra.mxu0 0.0
        %2006 = vmatprep.subr.mxu0 0.0
        %2007 = vmatpush1.msra.mxu0 0.0
        %2008 = vmatprep.subr.mxu0 0.0
        %2009 = vmatpush1.msra.mxu0 0.0
        %2010 = vmatprep.subr.mxu0 0.0
        %2011 = vmatpush1.msra.mxu0 0.0
        %2012 = vmatprep.subr.mxu0 0.0
        %2013 = vmatpush1.msra.mxu0 0.0
        %2014 = vmatprep.subr.mxu0 0.0
        %2015 = vmatpush1.msra.mxu0 0.0
        %2016 = vmatprep.subr.mxu0 0.0
        %2017 = vmatpush1.msra.mxu0 0.0
        %2018 = vmatprep.subr.mxu0 0.0
        %2019 = vmatpush1.msra.mxu0 0.0
        %2020 = vmatprep.subr.mxu0 0.0
        %2021 = vmatpush1.msra.mxu0 0.0
        %2022 = vmatprep.subr.mxu0 0.0
        %2023 = vmatpush1.msra.mxu0 0.0
        %2024 = vmatprep.subr.mxu0 0.0
        %2025 = vmatpush1.msra.mxu0 0.0
        %2026 = vmatprep.subr.mxu0 0.0
        %2027 = vmatpush1.msra.mxu0 0.0
        %2028 = vmatprep.subr.mxu0 0.0
        %2029 = vmatpush1.msra.mxu0 0.0
        %2030 = vmatprep.subr.mxu0 0.0
        %2031 = vmatpush1.msra.mxu0 0.0
        %2032 = vmatprep.subr.mxu0 0.0
        %2033 = vmatpush1.msra.mxu0 0.0
        %2034 = vmatprep.mubr.f32.mxu0 0.0
        %2035 = vmatmul.mubr.f32.gmra.mrb[0].mxu0 %v1968
        %v2036 = vpop.f32.mrb[0].mxu0
        %v2037 = vadd.f32 0.0, %v2036
        %v2038 = vpop.f32.mrb[0].mxu0
        %2039 = vdwg.mxu0
        %v2040 = vadd.f32 %v1799, %v2037
        %v2041 = vadd.f32 %v975, %v2040
        %v2042 = vld [vmem:[%s927] sm:$0x1]
        %v2044 = vlaneseq
        %v2045 = vshrl.u32 %v2044, 7
        %v2046 = vsub.s32 0, %v2045
        %v2047 = vrot.slane %v2042, %v2046
        %v2049 = vadd.f32 %v2041, %v2047
        %s2050 = sadd.s32 %s979, 1
        %s2051 = sld [smem:[#allocation4 + %s2050]]
        %v2052 = vmul.f32 %v2049, %v2049
        %v2053 = vsel %vm982, %v2052, 0.0
        %2054 = vadd.xlane.f32.xlu0 %v2053
        %v2055 = vpop.xlane.xlu0 %2054
        %v2056 = vmax.f32 %v2055, 1e-10
        %v2057 = vrsqrt.pop %v2056
        %v2058 = vstv %s2051
        %v2059 = vmul.f32 %v2058, %v2057
        %v2060 = vmul.f32 %v2049, %v2059
        %v2061 = vld [vmem:[%s932] sm:$0xff]
        %v2062 = vld [vmem:[%s932 + $0x8] sm:$0xff]
        %v2063 = vld [vmem:[%s932 + $0x10] sm:$0xff]
        %v2064 = vld [vmem:[%s932 + $0x18] sm:$0xff]
        %v2065 = vld [vmem:[%s935] sm:$0x1]
        %v2067 = vlaneseq
        %v2068 = vshrl.u32 %v2067, 7
        %v2069 = vsub.s32 0, %v2068
        %v2070 = vrot.slane %v2065, %v2069
        %v2073 = vsel %vm982, %v2060, 0
        %2075 = vmatprep.subr.mxu0 0.0
        %2076 = vmatpush1.msra.mxu0 %v2061
        %2077 = vmatprep.subr.mxu0 0.0
        %2078 = vmatpush1.msra.mxu0 %v2062
        %2079 = vmatprep.subr.mxu0 0.0
        %2080 = vmatpush1.msra.mxu0 %v2063
        %2081 = vmatprep.subr.mxu0 0.0
        %2082 = vmatpush1.msra.mxu0 %v2064
        %2083 = vmatprep.subr.mxu0 0.0
        %2084 = vmatpush1.msra.mxu0 0.0
        %2085 = vmatprep.subr.mxu0 0.0
        %2086 = vmatpush1.msra.mxu0 0.0
        %2087 = vmatprep.subr.mxu0 0.0
        %2088 = vmatpush1.msra.mxu0 0.0
        %2089 = vmatprep.subr.mxu0 0.0
        %2090 = vmatpush1.msra.mxu0 0.0
        %2091 = vmatprep.subr.mxu0 0.0
        %2092 = vmatpush1.msra.mxu0 0.0
        %2093 = vmatprep.subr.mxu0 0.0
        %2094 = vmatpush1.msra.mxu0 0.0
        %2095 = vmatprep.subr.mxu0 0.0
        %2096 = vmatpush1.msra.mxu0 0.0
        %2097 = vmatprep.subr.mxu0 0.0
        %2098 = vmatpush1.msra.mxu0 0.0
        %2099 = vmatprep.subr.mxu0 0.0
        %2100 = vmatpush1.msra.mxu0 0.0
        %2101 = vmatprep.subr.mxu0 0.0
        %2102 = vmatpush1.msra.mxu0 0.0
        %2103 = vmatprep.subr.mxu0 0.0
        %2104 = vmatpush1.msra.mxu0 0.0
        %2105 = vmatprep.subr.mxu0 0.0
        %2106 = vmatpush1.msra.mxu0 0.0
        %2107 = vmatprep.subr.mxu0 0.0
        %2108 = vmatpush1.msra.mxu0 0.0
        %2109 = vmatprep.subr.mxu0 0.0
        %2110 = vmatpush1.msra.mxu0 0.0
        %2111 = vmatprep.subr.mxu0 0.0
        %2112 = vmatpush1.msra.mxu0 0.0
        %2113 = vmatprep.subr.mxu0 0.0
        %2114 = vmatpush1.msra.mxu0 0.0
        %2115 = vmatprep.subr.mxu0 0.0
        %2116 = vmatpush1.msra.mxu0 0.0
        %2117 = vmatprep.subr.mxu0 0.0
        %2118 = vmatpush1.msra.mxu0 0.0
        %2119 = vmatprep.subr.mxu0 0.0
        %2120 = vmatpush1.msra.mxu0 0.0
        %2121 = vmatprep.subr.mxu0 0.0
        %2122 = vmatpush1.msra.mxu0 0.0
        %2123 = vmatprep.subr.mxu0 0.0
        %2124 = vmatpush1.msra.mxu0 0.0
        %2125 = vmatprep.subr.mxu0 0.0
        %2126 = vmatpush1.msra.mxu0 0.0
        %2127 = vmatprep.subr.mxu0 0.0
        %2128 = vmatpush1.msra.mxu0 0.0
        %2129 = vmatprep.subr.mxu0 0.0
        %2130 = vmatpush1.msra.mxu0 0.0
        %2131 = vmatprep.subr.mxu0 0.0
        %2132 = vmatpush1.msra.mxu0 0.0
        %2133 = vmatprep.subr.mxu0 0.0
        %2134 = vmatpush1.msra.mxu0 0.0
        %2135 = vmatprep.subr.mxu0 0.0
        %2136 = vmatpush1.msra.mxu0 0.0
        %2137 = vmatprep.subr.mxu0 0.0
        %2138 = vmatpush1.msra.mxu0 0.0
        %2139 = vmatprep.mubr.f32.mxu0 0.0
        %2140 = vmatmul.mubr.f32.gmra.mrb[0].mxu0 %v2073
        %v2141 = vpop.f32.mrb[0].mxu0
        %v2142 = vadd.f32 %v2070, %v2141
        %v2143 = vpop.f32.mrb[0].mxu0
        %2144 = vdwg.mxu0
        %v2145 = vld [vmem:[%s940] sm:$0xff]
        %v2146 = vld [vmem:[%s940 + $0x8] sm:$0xff]
        %v2147 = vld [vmem:[%s940 + $0x10] sm:$0xff]
        %v2148 = vld [vmem:[%s940 + $0x18] sm:$0xff]
        %v2149 = vld [vmem:[%s943] sm:$0x1]
        %v2151 = vlaneseq
        %v2152 = vshrl.u32 %v2151, 7
        %v2153 = vsub.s32 0, %v2152
        %v2154 = vrot.slane %v2149, %v2153
        %v2157 = vsel %vm982, %v976, 0
        %2159 = vmatprep.subr.mxu0 0.0
        %2160 = vmatpush1.msra.mxu0 %v2145
        %2161 = vmatprep.subr.mxu0 0.0
        %2162 = vmatpush1.msra.mxu0 %v2146
        %2163 = vmatprep.subr.mxu0 0.0
        %2164 = vmatpush1.msra.mxu0 %v2147
        %2165 = vmatprep.subr.mxu0 0.0
        %2166 = vmatpush1.msra.mxu0 %v2148
        %2167 = vmatprep.subr.mxu0 0.0
        %2168 = vmatpush1.msra.mxu0 0.0
        %2169 = vmatprep.subr.mxu0 0.0
        %2170 = vmatpush1.msra.mxu0 0.0
        %2171 = vmatprep.subr.mxu0 0.0
        %2172 = vmatpush1.msra.mxu0 0.0
        %2173 = vmatprep.subr.mxu0 0.0
        %2174 = vmatpush1.msra.mxu0 0.0
        %2175 = vmatprep.subr.mxu0 0.0
        %2176 = vmatpush1.msra.mxu0 0.0
        %2177 = vmatprep.subr.mxu0 0.0
        %2178 = vmatpush1.msra.mxu0 0.0
        %2179 = vmatprep.subr.mxu0 0.0
        %2180 = vmatpush1.msra.mxu0 0.0
        %2181 = vmatprep.subr.mxu0 0.0
        %2182 = vmatpush1.msra.mxu0 0.0
        %2183 = vmatprep.subr.mxu0 0.0
        %2184 = vmatpush1.msra.mxu0 0.0
        %2185 = vmatprep.subr.mxu0 0.0
        %2186 = vmatpush1.msra.mxu0 0.0
        %2187 = vmatprep.subr.mxu0 0.0
        %2188 = vmatpush1.msra.mxu0 0.0
        %2189 = vmatprep.subr.mxu0 0.0
        %2190 = vmatpush1.msra.mxu0 0.0
        %2191 = vmatprep.subr.mxu0 0.0
        %2192 = vmatpush1.msra.mxu0 0.0
        %2193 = vmatprep.subr.mxu0 0.0
        %2194 = vmatpush1.msra.mxu0 0.0
        %2195 = vmatprep.subr.mxu0 0.0
        %2196 = vmatpush1.msra.mxu0 0.0
        %2197 = vmatprep.subr.mxu0 0.0
        %2198 = vmatpush1.msra.mxu0 0.0
        %2199 = vmatprep.subr.mxu0 0.0
        %2200 = vmatpush1.msra.mxu0 0.0
        %2201 = vmatprep.subr.mxu0 0.0
        %2202 = vmatpush1.msra.mxu0 0.0
        %2203 = vmatprep.subr.mxu0 0.0
        %2204 = vmatpush1.msra.mxu0 0.0
        %2205 = vmatprep.subr.mxu0 0.0
        %2206 = vmatpush1.msra.mxu0 0.0
        %2207 = vmatprep.subr.mxu0 0.0
        %2208 = vmatpush1.msra.mxu0 0.0
        %2209 = vmatprep.subr.mxu0 0.0
        %2210 = vmatpush1.msra.mxu0 0.0
        %2211 = vmatprep.subr.mxu0 0.0
        %2212 = vmatpush1.msra.mxu0 0.0
        %2213 = vmatprep.subr.mxu0 0.0
        %2214 = vmatpush1.msra.mxu0 0.0
        %2215 = vmatprep.subr.mxu0 0.0
        %2216 = vmatpush1.msra.mxu0 0.0
        %2217 = vmatprep.subr.mxu0 0.0
        %2218 = vmatpush1.msra.mxu0 0.0
        %2219 = vmatprep.subr.mxu0 0.0
        %2220 = vmatpush1.msra.mxu0 0.0
        %2221 = vmatprep.subr.mxu0 0.0
        %2222 = vmatpush1.msra.mxu0 0.0
        %2223 = vmatprep.mubr.f32.mxu0 0.0
        %2224 = vmatmul.mubr.f32.gmra.mrb[0].mxu0 %v2157
        %v2225 = vpop.f32.mrb[0].mxu0
        %v2226 = vadd.f32 %v2154, %v2225
        %v2227 = vpop.f32.mrb[0].mxu0
        %2228 = vdwg.mxu0
        %v2229 = vld [vmem:[%s948] sm:$0xff]
        %v2230 = vld [vmem:[%s948 + $0x8] sm:$0xff]
        %v2231 = vld [vmem:[%s948 + $0x10] sm:$0xff]
        %v2232 = vld [vmem:[%s948 + $0x18] sm:$0xff]
        %v2234 = vsel %vm1082, %v2142, 0
        %v2237 = vsel %vm1082, %v2226, 0
        %2239 = vmatprep.subr.mxu0 0.0
        %2240 = vmatpush1.xpose.msra.mxu0 %v2237
        %2241 = vmatprep.subr.mxu0 0.0
        %2242 = vmatpush1.xpose.msra.mxu0 0.0
        %2243 = vmatprep.subr.mxu0 0.0
        %2244 = vmatpush1.xpose.msra.mxu0 0.0
        %2245 = vmatprep.subr.mxu0 0.0
        %2246 = vmatpush1.xpose.msra.mxu0 0.0
        %2247 = vmatprep.subr.mxu0 0.0
        %2248 = vmatpush1.xpose.msra.mxu0 0.0
        %2249 = vmatprep.subr.mxu0 0.0
        %2250 = vmatpush1.xpose.msra.mxu0 0.0
        %2251 = vmatprep.subr.mxu0 0.0
        %2252 = vmatpush1.xpose.msra.mxu0 0.0
        %2253 = vmatprep.subr.mxu0 0.0
        %2254 = vmatpush1.xpose.msra.mxu0 0.0
        %2255 = vmatprep.subr.mxu0 0.0
        %2256 = vmatpush1.xpose.msra.mxu0 0.0
        %2257 = vmatprep.subr.mxu0 0.0
        %2258 = vmatpush1.xpose.msra.mxu0 0.0
        %2259 = vmatprep.subr.mxu0 0.0
        %2260 = vmatpush1.xpose.msra.mxu0 0.0
        %2261 = vmatprep.subr.mxu0 0.0
        %2262 = vmatpush1.xpose.msra.mxu0 0.0
        %2263 = vmatprep.subr.mxu0 0.0
        %2264 = vmatpush1.xpose.msra.mxu0 0.0
        %2265 = vmatprep.subr.mxu0 0.0
        %2266 = vmatpush1.xpose.msra.mxu0 0.0
        %2267 = vmatprep.subr.mxu0 0.0
        %2268 = vmatpush1.xpose.msra.mxu0 0.0
        %2269 = vmatprep.subr.mxu0 0.0
        %2270 = vmatpush1.xpose.msra.mxu0 0.0
        %2271 = vmatprep.subr.mxu0 0.0
        %2272 = vmatpush1.xpose.msra.mxu0 0.0
        %2273 = vmatprep.subr.mxu0 0.0
        %2274 = vmatpush1.xpose.msra.mxu0 0.0
        %2275 = vmatprep.subr.mxu0 0.0
        %2276 = vmatpush1.xpose.msra.mxu0 0.0
        %2277 = vmatprep.subr.mxu0 0.0
        %2278 = vmatpush1.xpose.msra.mxu0 0.0
        %2279 = vmatprep.subr.mxu0 0.0
        %2280 = vmatpush1.xpose.msra.mxu0 0.0
        %2281 = vmatprep.subr.mxu0 0.0
        %2282 = vmatpush1.xpose.msra.mxu0 0.0
        %2283 = vmatprep.subr.mxu0 0.0
        %2284 = vmatpush1.xpose.msra.mxu0 0.0
        %2285 = vmatprep.subr.mxu0 0.0
        %2286 = vmatpush1.xpose.msra.mxu0 0.0
        %2287 = vmatprep.subr.mxu0 0.0
        %2288 = vmatpush1.xpose.msra.mxu0 0.0
        %2289 = vmatprep.subr.mxu0 0.0
        %2290 = vmatpush1.xpose.msra.mxu0 0.0
        %2291 = vmatprep.subr.mxu0 0.0
        %2292 = vmatpush1.xpose.msra.mxu0 0.0
        %2293 = vmatprep.subr.mxu0 0.0
        %2294 = vmatpush1.xpose.msra.mxu0 0.0
        %2295 = vmatprep.subr.mxu0 0.0
        %2296 = vmatpush1.xpose.msra.mxu0 0.0
        %2297 = vmatprep.subr.mxu0 0.0
        %2298 = vmatpush1.xpose.msra.mxu0 0.0
        %2299 = vmatprep.subr.mxu0 0.0
        %2300 = vmatpush1.xpose.msra.mxu0 0.0
        %2301 = vmatprep.subr.mxu0 0.0
        %2302 = vmatpush1.xpose.msra.mxu0 0.0
        %2303 = vmatprep.mubr.f32.mxu0 0.0
        %2304 = vmatmul.mubr.f32.gmra.mrb[0].mxu0 %v2234
        %v2305 = vpop.f32.mrb[0].mxu0
        %v2306 = vadd.f32 0.0, %v2305
        %v2307 = vpop.f32.mrb[0].mxu0
        %2308 = vdwg.mxu0
        %v2309 = vmul.f32 %v2306, 0.35355338
        %v2310 = vadd.f32 %v2309, %v978
        %v2311 = vsel %vm1082, %v2310, -inf
        %2312 = vmax.xlane.f32.xlu0 %v2311
        %v2313 = vpop.xlane.xlu0 %2312
        %v2314 = vsub.f32 %v2310, %v2313
        %v2315 = vmul.f32 %v2314, 1.442695
        %v2316 = vpow.pop %v2315
        %v2317 = vsel %vm1082, %v2316, 0.0
        %2318 = vadd.xlane.f32.xlu0 %v2317
        %v2319 = vpop.xlane.xlu0 %2318
        %v2320 = vrcp.pop %v2319
        %v2321 = vmul.f32 %v2316, %v2320
        %2322 = vrot.lane.b32.xlu0 %v2226, 96
        %v2323 = vpop.permute.xlu0 %2322
        %v2326 = vsel %vm1082, %v2321, 0
        %2328 = vmatprep.subr.mxu0 0.0
        %2329 = vmatpush1.msra.mxu0 %v2323
        %2330 = vmatprep.subr.mxu0 0.0
        %2331 = vmatpush1.msra.mxu0 0.0
        %2332 = vmatprep.subr.mxu0 0.0
        %2333 = vmatpush1.msra.mxu0 0.0
        %2334 = vmatprep.subr.mxu0 0.0
        %2335 = vmatpush1.msra.mxu0 0.0
        %2336 = vmatprep.subr.mxu0 0.0
        %2337 = vmatpush1.msra.mxu0 0.0
        %2338 = vmatprep.subr.mxu0 0.0
        %2339 = vmatpush1.msra.mxu0 0.0
        %2340 = vmatprep.subr.mxu0 0.0
        %2341 = vmatpush1.msra.mxu0 0.0
        %2342 = vmatprep.subr.mxu0 0.0
        %2343 = vmatpush1.msra.mxu0 0.0
        %2344 = vmatprep.subr.mxu0 0.0
        %2345 = vmatpush1.msra.mxu0 0.0
        %2346 = vmatprep.subr.mxu0 0.0
        %2347 = vmatpush1.msra.mxu0 0.0
        %2348 = vmatprep.subr.mxu0 0.0
        %2349 = vmatpush1.msra.mxu0 0.0
        %2350 = vmatprep.subr.mxu0 0.0
        %2351 = vmatpush1.msra.mxu0 0.0
        %2352 = vmatprep.subr.mxu0 0.0
        %2353 = vmatpush1.msra.mxu0 0.0
        %2354 = vmatprep.subr.mxu0 0.0
        %2355 = vmatpush1.msra.mxu0 0.0
        %2356 = vmatprep.subr.mxu0 0.0
        %2357 = vmatpush1.msra.mxu0 0.0
        %2358 = vmatprep.subr.mxu0 0.0
        %2359 = vmatpush1.msra.mxu0 0.0
        %2360 = vmatprep.subr.mxu0 0.0
        %2361 = vmatpush1.msra.mxu0 0.0
        %2362 = vmatprep.subr.mxu0 0.0
        %2363 = vmatpush1.msra.mxu0 0.0
        %2364 = vmatprep.subr.mxu0 0.0
        %2365 = vmatpush1.msra.mxu0 0.0
        %2366 = vmatprep.subr.mxu0 0.0
        %2367 = vmatpush1.msra.mxu0 0.0
        %2368 = vmatprep.subr.mxu0 0.0
        %2369 = vmatpush1.msra.mxu0 0.0
        %2370 = vmatprep.subr.mxu0 0.0
        %2371 = vmatpush1.msra.mxu0 0.0
        %2372 = vmatprep.subr.mxu0 0.0
        %2373 = vmatpush1.msra.mxu0 0.0
        %2374 = vmatprep.subr.mxu0 0.0
        %2375 = vmatpush1.msra.mxu0 0.0
        %2376 = vmatprep.subr.mxu0 0.0
        %2377 = vmatpush1.msra.mxu0 0.0
        %2378 = vmatprep.subr.mxu0 0.0
        %2379 = vmatpush1.msra.mxu0 0.0
        %2380 = vmatprep.subr.mxu0 0.0
        %2381 = vmatpush1.msra.mxu0 0.0
        %2382 = vmatprep.subr.mxu0 0.0
        %2383 = vmatpush1.msra.mxu0 0.0
        %2384 = vmatprep.subr.mxu0 0.0
        %2385 = vmatpush1.msra.mxu0 0.0
        %2386 = vmatprep.subr.mxu0 0.0
        %2387 = vmatpush1.msra.mxu0 0.0
        %2388 = vmatprep.subr.mxu0 0.0
        %2389 = vmatpush1.msra.mxu0 0.0
        %2390 = vmatprep.subr.mxu0 0.0
        %2391 = vmatpush1.msra.mxu0 0.0
        %2392 = vmatprep.mubr.f32.mxu0 0.0
        %2393 = vmatmul.mubr.f32.gmra.mrb[0].mxu0 %v2326
        %v2394 = vpop.f32.mrb[0].mxu0
        %v2395 = vadd.f32 0.0, %v2394
        %v2396 = vpop.f32.mrb[0].mxu0
        %2397 = vdwg.mxu0
        %2398 = vrot.lane.b32.xlu0 %v2142, 120
        %v2399 = vpop.permute.xlu0 %2398
        %2400 = vrot.lane.b32.xlu0 %v2226, 120
        %v2401 = vpop.permute.xlu0 %2400
        %v2402 = vsel %vm1082, %v2399, 0
        %v2404 = vsel %vm1082, %v2401, 0
        %2406 = vmatprep.subr.mxu0 0.0
        %2407 = vmatpush1.xpose.msra.mxu0 %v2404
        %2408 = vmatprep.subr.mxu0 0.0
        %2409 = vmatpush1.xpose.msra.mxu0 0.0
        %2410 = vmatprep.subr.mxu0 0.0
        %2411 = vmatpush1.xpose.msra.mxu0 0.0
        %2412 = vmatprep.subr.mxu0 0.0
        %2413 = vmatpush1.xpose.msra.mxu0 0.0
        %2414 = vmatprep.subr.mxu0 0.0
        %2415 = vmatpush1.xpose.msra.mxu0 0.0
        %2416 = vmatprep.subr.mxu0 0.0
        %2417 = vmatpush1.xpose.msra.mxu0 0.0
        %2418 = vmatprep.subr.mxu0 0.0
        %2419 = vmatpush1.xpose.msra.mxu0 0.0
        %2420 = vmatprep.subr.mxu0 0.0
        %2421 = vmatpush1.xpose.msra.mxu0 0.0
        %2422 = vmatprep.subr.mxu0 0.0
        %2423 = vmatpush1.xpose.msra.mxu0 0.0
        %2424 = vmatprep.subr.mxu0 0.0
        %2425 = vmatpush1.xpose.msra.mxu0 0.0
        %2426 = vmatprep.subr.mxu0 0.0
        %2427 = vmatpush1.xpose.msra.mxu0 0.0
        %2428 = vmatprep.subr.mxu0 0.0
        %2429 = vmatpush1.xpose.msra.mxu0 0.0
        %2430 = vmatprep.subr.mxu0 0.0
        %2431 = vmatpush1.xpose.msra.mxu0 0.0
        %2432 = vmatprep.subr.mxu0 0.0
        %2433 = vmatpush1.xpose.msra.mxu0 0.0
        %2434 = vmatprep.subr.mxu0 0.0
        %2435 = vmatpush1.xpose.msra.mxu0 0.0
        %2436 = vmatprep.subr.mxu0 0.0
        %2437 = vmatpush1.xpose.msra.mxu0 0.0
        %2438 = vmatprep.subr.mxu0 0.0
        %2439 = vmatpush1.xpose.msra.mxu0 0.0
        %2440 = vmatprep.subr.mxu0 0.0
        %2441 = vmatpush1.xpose.msra.mxu0 0.0
        %2442 = vmatprep.subr.mxu0 0.0
        %2443 = vmatpush1.xpose.msra.mxu0 0.0
        %2444 = vmatprep.subr.mxu0 0.0
        %2445 = vmatpush1.xpose.msra.mxu0 0.0
        %2446 = vmatprep.subr.mxu0 0.0
        %2447 = vmatpush1.xpose.msra.mxu0 0.0
        %2448 = vmatprep.subr.mxu0 0.0
        %2449 = vmatpush1.xpose.msra.mxu0 0.0
        %2450 = vmatprep.subr.mxu0 0.0
        %2451 = vmatpush1.xpose.msra.mxu0 0.0
        %2452 = vmatprep.subr.mxu0 0.0
        %2453 = vmatpush1.xpose.msra.mxu0 0.0
        %2454 = vmatprep.subr.mxu0 0.0
        %2455 = vmatpush1.xpose.msra.mxu0 0.0
        %2456 = vmatprep.subr.mxu0 0.0
        %2457 = vmatpush1.xpose.msra.mxu0 0.0
        %2458 = vmatprep.subr.mxu0 0.0
        %2459 = vmatpush1.xpose.msra.mxu0 0.0
        %2460 = vmatprep.subr.mxu0 0.0
        %2461 = vmatpush1.xpose.msra.mxu0 0.0
        %2462 = vmatprep.subr.mxu0 0.0
        %2463 = vmatpush1.xpose.msra.mxu0 0.0
        %2464 = vmatprep.subr.mxu0 0.0
        %2465 = vmatpush1.xpose.msra.mxu0 0.0
        %2466 = vmatprep.subr.mxu0 0.0
        %2467 = vmatpush1.xpose.msra.mxu0 0.0
        %2468 = vmatprep.subr.mxu0 0.0
        %2469 = vmatpush1.xpose.msra.mxu0 0.0
        %2470 = vmatprep.mubr.f32.mxu0 0.0
        %2471 = vmatmul.mubr.f32.gmra.mrb[0].mxu0 %v2402
        %v2472 = vpop.f32.mrb[0].mxu0
        %v2473 = vadd.f32 0.0, %v2472
        %v2474 = vpop.f32.mrb[0].mxu0
        %2475 = vdwg.mxu0
        %v2476 = vmul.f32 %v2473, 0.35355338
        %v2477 = vadd.f32 %v2476, %v978
        %v2478 = vsel %vm1082, %v2477, -inf
        %2479 = vmax.xlane.f32.xlu0 %v2478
        %v2480 = vpop.xlane.xlu0 %2479
        %v2481 = vsub.f32 %v2477, %v2480
        %v2482 = vmul.f32 %v2481, 1.442695
        %v2483 = vpow.pop %v2482
        %v2484 = vsel %vm1082, %v2483, 0.0
        %2485 = vadd.xlane.f32.xlu0 %v2484
        %v2486 = vpop.xlane.xlu0 %2485
        %v2487 = vrcp.pop %v2486
        %v2488 = vmul.f32 %v2483, %v2487
        %2489 = vrot.lane.b32.xlu0 %v2226, 88
        %v2490 = vpop.permute.xlu0 %2489
        %v2493 = vsel %vm1082, %v2488, 0
        %2495 = vmatprep.subr.mxu0 0.0
        %2496 = vmatpush1.msra.mxu0 %v2490
        %2497 = vmatprep.subr.mxu0 0.0
        %2498 = vmatpush1.msra.mxu0 0.0
        %2499 = vmatprep.subr.mxu0 0.0
        %2500 = vmatpush1.msra.mxu0 0.0
        %2501 = vmatprep.subr.mxu0 0.0
        %2502 = vmatpush1.msra.mxu0 0.0
        %2503 = vmatprep.subr.mxu0 0.0
        %2504 = vmatpush1.msra.mxu0 0.0
        %2505 = vmatprep.subr.mxu0 0.0
        %2506 = vmatpush1.msra.mxu0 0.0
        %2507 = vmatprep.subr.mxu0 0.0
        %2508 = vmatpush1.msra.mxu0 0.0
        %2509 = vmatprep.subr.mxu0 0.0
        %2510 = vmatpush1.msra.mxu0 0.0
        %2511 = vmatprep.subr.mxu0 0.0
        %2512 = vmatpush1.msra.mxu0 0.0
        %2513 = vmatprep.subr.mxu0 0.0
        %2514 = vmatpush1.msra.mxu0 0.0
        %2515 = vmatprep.subr.mxu0 0.0
        %2516 = vmatpush1.msra.mxu0 0.0
        %2517 = vmatprep.subr.mxu0 0.0
        %2518 = vmatpush1.msra.mxu0 0.0
        %2519 = vmatprep.subr.mxu0 0.0
        %2520 = vmatpush1.msra.mxu0 0.0
        %2521 = vmatprep.subr.mxu0 0.0
        %2522 = vmatpush1.msra.mxu0 0.0
        %2523 = vmatprep.subr.mxu0 0.0
        %2524 = vmatpush1.msra.mxu0 0.0
        %2525 = vmatprep.subr.mxu0 0.0
        %2526 = vmatpush1.msra.mxu0 0.0
        %2527 = vmatprep.subr.mxu0 0.0
        %2528 = vmatpush1.msra.mxu0 0.0
        %2529 = vmatprep.subr.mxu0 0.0
        %2530 = vmatpush1.msra.mxu0 0.0
        %2531 = vmatprep.subr.mxu0 0.0
        %2532 = vmatpush1.msra.mxu0 0.0
        %2533 = vmatprep.subr.mxu0 0.0
        %2534 = vmatpush1.msra.mxu0 0.0
        %2535 = vmatprep.subr.mxu0 0.0
        %2536 = vmatpush1.msra.mxu0 0.0
        %2537 = vmatprep.subr.mxu0 0.0
        %2538 = vmatpush1.msra.mxu0 0.0
        %2539 = vmatprep.subr.mxu0 0.0
        %2540 = vmatpush1.msra.mxu0 0.0
        %2541 = vmatprep.subr.mxu0 0.0
        %2542 = vmatpush1.msra.mxu0 0.0
        %2543 = vmatprep.subr.mxu0 0.0
        %2544 = vmatpush1.msra.mxu0 0.0
        %2545 = vmatprep.subr.mxu0 0.0
        %2546 = vmatpush1.msra.mxu0 0.0
        %2547 = vmatprep.subr.mxu0 0.0
        %2548 = vmatpush1.msra.mxu0 0.0
        %2549 = vmatprep.subr.mxu0 0.0
        %2550 = vmatpush1.msra.mxu0 0.0
        %2551 = vmatprep.subr.mxu0 0.0
        %2552 = vmatpush1.msra.mxu0 0.0
        %2553 = vmatprep.subr.mxu0 0.0
        %2554 = vmatpush1.msra.mxu0 0.0
        %2555 = vmatprep.subr.mxu0 0.0
        %2556 = vmatpush1.msra.mxu0 0.0
        %2557 = vmatprep.subr.mxu0 0.0
        %2558 = vmatpush1.msra.mxu0 0.0
        %2559 = vmatprep.mubr.f32.mxu0 0.0
        %2560 = vmatmul.mubr.f32.gmra.mrb[0].mxu0 %v2493
        %v2561 = vpop.f32.mrb[0].mxu0
        %v2562 = vadd.f32 0.0, %v2561
        %v2563 = vpop.f32.mrb[0].mxu0
        %2564 = vdwg.mxu0
        %v2566 = vsel %vm1082, %v2562, 0
        %2568 = vmatprep.subr.mxu0 0.0
        %2569 = vmatpush1.msra.mxu0 %v2230
        %2570 = vmatprep.subr.mxu0 0.0
        %2571 = vmatpush1.msra.mxu0 0.0
        %2572 = vmatprep.subr.mxu0 0.0
        %2573 = vmatpush1.msra.mxu0 0.0
        %2574 = vmatprep.subr.mxu0 0.0
        %2575 = vmatpush1.msra.mxu0 0.0
        %2576 = vmatprep.subr.mxu0 0.0
        %2577 = vmatpush1.msra.mxu0 0.0
        %2578 = vmatprep.subr.mxu0 0.0
        %2579 = vmatpush1.msra.mxu0 0.0
        %2580 = vmatprep.subr.mxu0 0.0
        %2581 = vmatpush1.msra.mxu0 0.0
        %2582 = vmatprep.subr.mxu0 0.0
        %2583 = vmatpush1.msra.mxu0 0.0
        %2584 = vmatprep.subr.mxu0 0.0
        %2585 = vmatpush1.msra.mxu0 0.0
        %2586 = vmatprep.subr.mxu0 0.0
        %2587 = vmatpush1.msra.mxu0 0.0
        %2588 = vmatprep.subr.mxu0 0.0
        %2589 = vmatpush1.msra.mxu0 0.0
        %2590 = vmatprep.subr.mxu0 0.0
        %2591 = vmatpush1.msra.mxu0 0.0
        %2592 = vmatprep.subr.mxu0 0.0
        %2593 = vmatpush1.msra.mxu0 0.0
        %2594 = vmatprep.subr.mxu0 0.0
        %2595 = vmatpush1.msra.mxu0 0.0
        %2596 = vmatprep.subr.mxu0 0.0
        %2597 = vmatpush1.msra.mxu0 0.0
        %2598 = vmatprep.subr.mxu0 0.0
        %2599 = vmatpush1.msra.mxu0 0.0
        %2600 = vmatprep.subr.mxu0 0.0
        %2601 = vmatpush1.msra.mxu0 0.0
        %2602 = vmatprep.subr.mxu0 0.0
        %2603 = vmatpush1.msra.mxu0 0.0
        %2604 = vmatprep.subr.mxu0 0.0
        %2605 = vmatpush1.msra.mxu0 0.0
        %2606 = vmatprep.subr.mxu0 0.0
        %2607 = vmatpush1.msra.mxu0 0.0
        %2608 = vmatprep.subr.mxu0 0.0
        %2609 = vmatpush1.msra.mxu0 0.0
        %2610 = vmatprep.subr.mxu0 0.0
        %2611 = vmatpush1.msra.mxu0 0.0
        %2612 = vmatprep.subr.mxu0 0.0
        %2613 = vmatpush1.msra.mxu0 0.0
        %2614 = vmatprep.subr.mxu0 0.0
        %2615 = vmatpush1.msra.mxu0 0.0
        %2616 = vmatprep.subr.mxu0 0.0
        %2617 = vmatpush1.msra.mxu0 0.0
        %2618 = vmatprep.subr.mxu0 0.0
        %2619 = vmatpush1.msra.mxu0 0.0
        %2620 = vmatprep.subr.mxu0 0.0
        %2621 = vmatpush1.msra.mxu0 0.0
        %2622 = vmatprep.subr.mxu0 0.0
        %2623 = vmatpush1.msra.mxu0 0.0
        %2624 = vmatprep.subr.mxu0 0.0
        %2625 = vmatpush1.msra.mxu0 0.0
        %2626 = vmatprep.subr.mxu0 0.0
        %2627 = vmatpush1.msra.mxu0 0.0
        %2628 = vmatprep.subr.mxu0 0.0
        %2629 = vmatpush1.msra.mxu0 0.0
        %2630 = vmatprep.subr.mxu0 0.0
        %2631 = vmatpush1.msra.mxu0 0.0
        %2632 = vmatprep.mubr.f32.mxu0 0.0
        %2633 = vmatmul.mubr.f32.gmra.mrb[0].mxu0 %v2566
        %v2634 = vpop.f32.mrb[0].mxu0
        %v2635 = vadd.f32 0.0, %v2634
        %v2636 = vpop.f32.mrb[0].mxu0
        %2637 = vdwg.mxu0
        %v2639 = vsel %vm1082, %v2395, 0
        %2641 = vmatprep.subr.mxu0 0.0
        %2642 = vmatpush1.msra.mxu0 %v2229
        %2643 = vmatprep.subr.mxu0 0.0
        %2644 = vmatpush1.msra.mxu0 0.0
        %2645 = vmatprep.subr.mxu0 0.0
        %2646 = vmatpush1.msra.mxu0 0.0
        %2647 = vmatprep.subr.mxu0 0.0
        %2648 = vmatpush1.msra.mxu0 0.0
        %2649 = vmatprep.subr.mxu0 0.0
        %2650 = vmatpush1.msra.mxu0 0.0
        %2651 = vmatprep.subr.mxu0 0.0
        %2652 = vmatpush1.msra.mxu0 0.0
        %2653 = vmatprep.subr.mxu0 0.0
        %2654 = vmatpush1.msra.mxu0 0.0
        %2655 = vmatprep.subr.mxu0 0.0
        %2656 = vmatpush1.msra.mxu0 0.0
        %2657 = vmatprep.subr.mxu0 0.0
        %2658 = vmatpush1.msra.mxu0 0.0
        %2659 = vmatprep.subr.mxu0 0.0
        %2660 = vmatpush1.msra.mxu0 0.0
        %2661 = vmatprep.subr.mxu0 0.0
        %2662 = vmatpush1.msra.mxu0 0.0
        %2663 = vmatprep.subr.mxu0 0.0
        %2664 = vmatpush1.msra.mxu0 0.0
        %2665 = vmatprep.subr.mxu0 0.0
        %2666 = vmatpush1.msra.mxu0 0.0
        %2667 = vmatprep.subr.mxu0 0.0
        %2668 = vmatpush1.msra.mxu0 0.0
        %2669 = vmatprep.subr.mxu0 0.0
        %2670 = vmatpush1.msra.mxu0 0.0
        %2671 = vmatprep.subr.mxu0 0.0
        %2672 = vmatpush1.msra.mxu0 0.0
        %2673 = vmatprep.subr.mxu0 0.0
        %2674 = vmatpush1.msra.mxu0 0.0
        %2675 = vmatprep.subr.mxu0 0.0
        %2676 = vmatpush1.msra.mxu0 0.0
        %2677 = vmatprep.subr.mxu0 0.0
        %2678 = vmatpush1.msra.mxu0 0.0
        %2679 = vmatprep.subr.mxu0 0.0
        %2680 = vmatpush1.msra.mxu0 0.0
        %2681 = vmatprep.subr.mxu0 0.0
        %2682 = vmatpush1.msra.mxu0 0.0
        %2683 = vmatprep.subr.mxu0 0.0
        %2684 = vmatpush1.msra.mxu0 0.0
        %2685 = vmatprep.subr.mxu0 0.0
        %2686 = vmatpush1.msra.mxu0 0.0
        %2687 = vmatprep.subr.mxu0 0.0
        %2688 = vmatpush1.msra.mxu0 0.0
        %2689 = vmatprep.subr.mxu0 0.0
        %2690 = vmatpush1.msra.mxu0 0.0
        %2691 = vmatprep.subr.mxu0 0.0
        %2692 = vmatpush1.msra.mxu0 0.0
        %2693 = vmatprep.subr.mxu0 0.0
        %2694 = vmatpush1.msra.mxu0 0.0
        %2695 = vmatprep.subr.mxu0 0.0
        %2696 = vmatpush1.msra.mxu0 0.0
        %2697 = vmatprep.subr.mxu0 0.0
        %2698 = vmatpush1.msra.mxu0 0.0
        %2699 = vmatprep.subr.mxu0 0.0
        %2700 = vmatpush1.msra.mxu0 0.0
        %2701 = vmatprep.subr.mxu0 0.0
        %2702 = vmatpush1.msra.mxu0 0.0
        %2703 = vmatprep.subr.mxu0 0.0
        %2704 = vmatpush1.msra.mxu0 0.0
        %2705 = vmatprep.mubr.f32.mxu0 0.0
        %2706 = vmatmul.mubr.f32.gmra.mrb[0].mxu0 %v2639
        %v2707 = vpop.f32.mrb[0].mxu0
        %v2708 = vadd.f32 %v2635, %v2707
        %v2709 = vpop.f32.mrb[0].mxu0
        %2710 = vdwg.mxu0
        %2711 = vrot.lane.b32.xlu0 %v2142, 112
        %v2712 = vpop.permute.xlu0 %2711
        %2713 = vrot.lane.b32.xlu0 %v2226, 112
        %v2714 = vpop.permute.xlu0 %2713
        %v2715 = vsel %vm1082, %v2712, 0
        %v2717 = vsel %vm1082, %v2714, 0
        %2719 = vmatprep.subr.mxu0 0.0
        %2720 = vmatpush1.xpose.msra.mxu0 %v2717
        %2721 = vmatprep.subr.mxu0 0.0
        %2722 = vmatpush1.xpose.msra.mxu0 0.0
        %2723 = vmatprep.subr.mxu0 0.0
        %2724 = vmatpush1.xpose.msra.mxu0 0.0
        %2725 = vmatprep.subr.mxu0 0.0
        %2726 = vmatpush1.xpose.msra.mxu0 0.0
        %2727 = vmatprep.subr.mxu0 0.0
        %2728 = vmatpush1.xpose.msra.mxu0 0.0
        %2729 = vmatprep.subr.mxu0 0.0
        %2730 = vmatpush1.xpose.msra.mxu0 0.0
        %2731 = vmatprep.subr.mxu0 0.0
        %2732 = vmatpush1.xpose.msra.mxu0 0.0
        %2733 = vmatprep.subr.mxu0 0.0
        %2734 = vmatpush1.xpose.msra.mxu0 0.0
        %2735 = vmatprep.subr.mxu0 0.0
        %2736 = vmatpush1.xpose.msra.mxu0 0.0
        %2737 = vmatprep.subr.mxu0 0.0
        %2738 = vmatpush1.xpose.msra.mxu0 0.0
        %2739 = vmatprep.subr.mxu0 0.0
        %2740 = vmatpush1.xpose.msra.mxu0 0.0
        %2741 = vmatprep.subr.mxu0 0.0
        %2742 = vmatpush1.xpose.msra.mxu0 0.0
        %2743 = vmatprep.subr.mxu0 0.0
        %2744 = vmatpush1.xpose.msra.mxu0 0.0
        %2745 = vmatprep.subr.mxu0 0.0
        %2746 = vmatpush1.xpose.msra.mxu0 0.0
        %2747 = vmatprep.subr.mxu0 0.0
        %2748 = vmatpush1.xpose.msra.mxu0 0.0
        %2749 = vmatprep.subr.mxu0 0.0
        %2750 = vmatpush1.xpose.msra.mxu0 0.0
        %2751 = vmatprep.subr.mxu0 0.0
        %2752 = vmatpush1.xpose.msra.mxu0 0.0
        %2753 = vmatprep.subr.mxu0 0.0
        %2754 = vmatpush1.xpose.msra.mxu0 0.0
        %2755 = vmatprep.subr.mxu0 0.0
        %2756 = vmatpush1.xpose.msra.mxu0 0.0
        %2757 = vmatprep.subr.mxu0 0.0
        %2758 = vmatpush1.xpose.msra.mxu0 0.0
        %2759 = vmatprep.subr.mxu0 0.0
        %2760 = vmatpush1.xpose.msra.mxu0 0.0
        %2761 = vmatprep.subr.mxu0 0.0
        %2762 = vmatpush1.xpose.msra.mxu0 0.0
        %2763 = vmatprep.subr.mxu0 0.0
        %2764 = vmatpush1.xpose.msra.mxu0 0.0
        %2765 = vmatprep.subr.mxu0 0.0
        %2766 = vmatpush1.xpose.msra.mxu0 0.0
        %2767 = vmatprep.subr.mxu0 0.0
        %2768 = vmatpush1.xpose.msra.mxu0 0.0
        %2769 = vmatprep.subr.mxu0 0.0
        %2770 = vmatpush1.xpose.msra.mxu0 0.0
        %2771 = vmatprep.subr.mxu0 0.0
        %2772 = vmatpush1.xpose.msra.mxu0 0.0
        %2773 = vmatprep.subr.mxu0 0.0
        %2774 = vmatpush1.xpose.msra.mxu0 0.0
        %2775 = vmatprep.subr.mxu0 0.0
        %2776 = vmatpush1.xpose.msra.mxu0 0.0
        %2777 = vmatprep.subr.mxu0 0.0
        %2778 = vmatpush1.xpose.msra.mxu0 0.0
        %2779 = vmatprep.subr.mxu0 0.0
        %2780 = vmatpush1.xpose.msra.mxu0 0.0
        %2781 = vmatprep.subr.mxu0 0.0
        %2782 = vmatpush1.xpose.msra.mxu0 0.0
        %2783 = vmatprep.mubr.f32.mxu0 0.0
        %2784 = vmatmul.mubr.f32.gmra.mrb[0].mxu0 %v2715
        %v2785 = vpop.f32.mrb[0].mxu0
        %v2786 = vadd.f32 0.0, %v2785
        %v2787 = vpop.f32.mrb[0].mxu0
        %2788 = vdwg.mxu0
        %v2789 = vmul.f32 %v2786, 0.35355338
        %v2790 = vadd.f32 %v2789, %v978
        %v2791 = vsel %vm1082, %v2790, -inf
        %2792 = vmax.xlane.f32.xlu0 %v2791
        %v2793 = vpop.xlane.xlu0 %2792
        %v2794 = vsub.f32 %v2790, %v2793
        %v2795 = vmul.f32 %v2794, 1.442695
        %v2796 = vpow.pop %v2795
        %v2797 = vsel %vm1082, %v2796, 0.0
        %2798 = vadd.xlane.f32.xlu0 %v2797
        %v2799 = vpop.xlane.xlu0 %2798
        %v2800 = vrcp.pop %v2799
        %v2801 = vmul.f32 %v2796, %v2800
        %2802 = vrot.lane.b32.xlu0 %v2226, 80
        %v2803 = vpop.permute.xlu0 %2802
        %v2806 = vsel %vm1082, %v2801, 0
        %2808 = vmatprep.subr.mxu0 0.0
        %2809 = vmatpush1.msra.mxu0 %v2803
        %2810 = vmatprep.subr.mxu0 0.0
        %2811 = vmatpush1.msra.mxu0 0.0
        %2812 = vmatprep.subr.mxu0 0.0
        %2813 = vmatpush1.msra.mxu0 0.0
        %2814 = vmatprep.subr.mxu0 0.0
        %2815 = vmatpush1.msra.mxu0 0.0
        %2816 = vmatprep.subr.mxu0 0.0
        %2817 = vmatpush1.msra.mxu0 0.0
        %2818 = vmatprep.subr.mxu0 0.0
        %2819 = vmatpush1.msra.mxu0 0.0
        %2820 = vmatprep.subr.mxu0 0.0
        %2821 = vmatpush1.msra.mxu0 0.0
        %2822 = vmatprep.subr.mxu0 0.0
        %2823 = vmatpush1.msra.mxu0 0.0
        %2824 = vmatprep.subr.mxu0 0.0
        %2825 = vmatpush1.msra.mxu0 0.0
        %2826 = vmatprep.subr.mxu0 0.0
        %2827 = vmatpush1.msra.mxu0 0.0
        %2828 = vmatprep.subr.mxu0 0.0
        %2829 = vmatpush1.msra.mxu0 0.0
        %2830 = vmatprep.subr.mxu0 0.0
        %2831 = vmatpush1.msra.mxu0 0.0
        %2832 = vmatprep.subr.mxu0 0.0
        %2833 = vmatpush1.msra.mxu0 0.0
        %2834 = vmatprep.subr.mxu0 0.0
        %2835 = vmatpush1.msra.mxu0 0.0
        %2836 = vmatprep.subr.mxu0 0.0
        %2837 = vmatpush1.msra.mxu0 0.0
        %2838 = vmatprep.subr.mxu0 0.0
        %2839 = vmatpush1.msra.mxu0 0.0
        %2840 = vmatprep.subr.mxu0 0.0
        %2841 = vmatpush1.msra.mxu0 0.0
        %2842 = vmatprep.subr.mxu0 0.0
        %2843 = vmatpush1.msra.mxu0 0.0
        %2844 = vmatprep.subr.mxu0 0.0
        %2845 = vmatpush1.msra.mxu0 0.0
        %2846 = vmatprep.subr.mxu0 0.0
        %2847 = vmatpush1.msra.mxu0 0.0
        %2848 = vmatprep.subr.mxu0 0.0
        %2849 = vmatpush1.msra.mxu0 0.0
        %2850 = vmatprep.subr.mxu0 0.0
        %2851 = vmatpush1.msra.mxu0 0.0
        %2852 = vmatprep.subr.mxu0 0.0
        %2853 = vmatpush1.msra.mxu0 0.0
        %2854 = vmatprep.subr.mxu0 0.0
        %2855 = vmatpush1.msra.mxu0 0.0
        %2856 = vmatprep.subr.mxu0 0.0
        %2857 = vmatpush1.msra.mxu0 0.0
        %2858 = vmatprep.subr.mxu0 0.0
        %2859 = vmatpush1.msra.mxu0 0.0
        %2860 = vmatprep.subr.mxu0 0.0
        %2861 = vmatpush1.msra.mxu0 0.0
        %2862 = vmatprep.subr.mxu0 0.0
        %2863 = vmatpush1.msra.mxu0 0.0
        %2864 = vmatprep.subr.mxu0 0.0
        %2865 = vmatpush1.msra.mxu0 0.0
        %2866 = vmatprep.subr.mxu0 0.0
        %2867 = vmatpush1.msra.mxu0 0.0
        %2868 = vmatprep.subr.mxu0 0.0
        %2869 = vmatpush1.msra.mxu0 0.0
        %2870 = vmatprep.subr.mxu0 0.0
        %2871 = vmatpush1.msra.mxu0 0.0
        %2872 = vmatprep.mubr.f32.mxu0 0.0
        %2873 = vmatmul.mubr.f32.gmra.mrb[0].mxu0 %v2806
        %v2874 = vpop.f32.mrb[0].mxu0
        %v2875 = vadd.f32 0.0, %v2874
        %v2876 = vpop.f32.mrb[0].mxu0
        %2877 = vdwg.mxu0
        %v2879 = vsel %vm1082, %v2875, 0
        %2881 = vmatprep.subr.mxu0 0.0
        %2882 = vmatpush1.msra.mxu0 %v2231
        %2883 = vmatprep.subr.mxu0 0.0
        %2884 = vmatpush1.msra.mxu0 0.0
        %2885 = vmatprep.subr.mxu0 0.0
        %2886 = vmatpush1.msra.mxu0 0.0
        %2887 = vmatprep.subr.mxu0 0.0
        %2888 = vmatpush1.msra.mxu0 0.0
        %2889 = vmatprep.subr.mxu0 0.0
        %2890 = vmatpush1.msra.mxu0 0.0
        %2891 = vmatprep.subr.mxu0 0.0
        %2892 = vmatpush1.msra.mxu0 0.0
        %2893 = vmatprep.subr.mxu0 0.0
        %2894 = vmatpush1.msra.mxu0 0.0
        %2895 = vmatprep.subr.mxu0 0.0
        %2896 = vmatpush1.msra.mxu0 0.0
        %2897 = vmatprep.subr.mxu0 0.0
        %2898 = vmatpush1.msra.mxu0 0.0
        %2899 = vmatprep.subr.mxu0 0.0
        %2900 = vmatpush1.msra.mxu0 0.0
        %2901 = vmatprep.subr.mxu0 0.0
        %2902 = vmatpush1.msra.mxu0 0.0
        %2903 = vmatprep.subr.mxu0 0.0
        %2904 = vmatpush1.msra.mxu0 0.0
        %2905 = vmatprep.subr.mxu0 0.0
        %2906 = vmatpush1.msra.mxu0 0.0
        %2907 = vmatprep.subr.mxu0 0.0
        %2908 = vmatpush1.msra.mxu0 0.0
        %2909 = vmatprep.subr.mxu0 0.0
        %2910 = vmatpush1.msra.mxu0 0.0
        %2911 = vmatprep.subr.mxu0 0.0
        %2912 = vmatpush1.msra.mxu0 0.0
        %2913 = vmatprep.subr.mxu0 0.0
        %2914 = vmatpush1.msra.mxu0 0.0
        %2915 = vmatprep.subr.mxu0 0.0
        %2916 = vmatpush1.msra.mxu0 0.0
        %2917 = vmatprep.subr.mxu0 0.0
        %2918 = vmatpush1.msra.mxu0 0.0
        %2919 = vmatprep.subr.mxu0 0.0
        %2920 = vmatpush1.msra.mxu0 0.0
        %2921 = vmatprep.subr.mxu0 0.0
        %2922 = vmatpush1.msra.mxu0 0.0
        %2923 = vmatprep.subr.mxu0 0.0
        %2924 = vmatpush1.msra.mxu0 0.0
        %2925 = vmatprep.subr.mxu0 0.0
        %2926 = vmatpush1.msra.mxu0 0.0
        %2927 = vmatprep.subr.mxu0 0.0
        %2928 = vmatpush1.msra.mxu0 0.0
        %2929 = vmatprep.subr.mxu0 0.0
        %2930 = vmatpush1.msra.mxu0 0.0
        %2931 = vmatprep.subr.mxu0 0.0
        %2932 = vmatpush1.msra.mxu0 0.0
        %2933 = vmatprep.subr.mxu0 0.0
        %2934 = vmatpush1.msra.mxu0 0.0
        %2935 = vmatprep.subr.mxu0 0.0
        %2936 = vmatpush1.msra.mxu0 0.0
        %2937 = vmatprep.subr.mxu0 0.0
        %2938 = vmatpush1.msra.mxu0 0.0
        %2939 = vmatprep.subr.mxu0 0.0
        %2940 = vmatpush1.msra.mxu0 0.0
        %2941 = vmatprep.subr.mxu0 0.0
        %2942 = vmatpush1.msra.mxu0 0.0
        %2943 = vmatprep.subr.mxu0 0.0
        %2944 = vmatpush1.msra.mxu0 0.0
        %2945 = vmatprep.mubr.f32.mxu0 0.0
        %2946 = vmatmul.mubr.f32.gmra.mrb[0].mxu0 %v2879
        %v2947 = vpop.f32.mrb[0].mxu0
        %v2948 = vadd.f32 0.0, %v2947
        %v2949 = vpop.f32.mrb[0].mxu0
        %2950 = vdwg.mxu0
        %v2951 = vadd.f32 %v2708, %v2948
        %2952 = vrot.lane.b32.xlu0 %v2142, 104
        %v2953 = vpop.permute.xlu0 %2952
        %2954 = vrot.lane.b32.xlu0 %v2226, 104
        %v2955 = vpop.permute.xlu0 %2954
        %v2956 = vsel %vm1082, %v2953, 0
        %v2958 = vsel %vm1082, %v2955, 0
        %2960 = vmatprep.subr.mxu0 0.0
        %2961 = vmatpush1.xpose.msra.mxu0 %v2958
        %2962 = vmatprep.subr.mxu0 0.0
        %2963 = vmatpush1.xpose.msra.mxu0 0.0
        %2964 = vmatprep.subr.mxu0 0.0
        %2965 = vmatpush1.xpose.msra.mxu0 0.0
        %2966 = vmatprep.subr.mxu0 0.0
        %2967 = vmatpush1.xpose.msra.mxu0 0.0
        %2968 = vmatprep.subr.mxu0 0.0
        %2969 = vmatpush1.xpose.msra.mxu0 0.0
        %2970 = vmatprep.subr.mxu0 0.0
        %2971 = vmatpush1.xpose.msra.mxu0 0.0
        %2972 = vmatprep.subr.mxu0 0.0
        %2973 = vmatpush1.xpose.msra.mxu0 0.0
        %2974 = vmatprep.subr.mxu0 0.0
        %2975 = vmatpush1.xpose.msra.mxu0 0.0
        %2976 = vmatprep.subr.mxu0 0.0
        %2977 = vmatpush1.xpose.msra.mxu0 0.0
        %2978 = vmatprep.subr.mxu0 0.0
        %2979 = vmatpush1.xpose.msra.mxu0 0.0
        %2980 = vmatprep.subr.mxu0 0.0
        %2981 = vmatpush1.xpose.msra.mxu0 0.0
        %2982 = vmatprep.subr.mxu0 0.0
        %2983 = vmatpush1.xpose.msra.mxu0 0.0
        %2984 = vmatprep.subr.mxu0 0.0
        %2985 = vmatpush1.xpose.msra.mxu0 0.0
        %2986 = vmatprep.subr.mxu0 0.0
        %2987 = vmatpush1.xpose.msra.mxu0 0.0
        %2988 = vmatprep.subr.mxu0 0.0
        %2989 = vmatpush1.xpose.msra.mxu0 0.0
        %2990 = vmatprep.subr.mxu0 0.0
        %2991 = vmatpush1.xpose.msra.mxu0 0.0
        %2992 = vmatprep.subr.mxu0 0.0
        %2993 = vmatpush1.xpose.msra.mxu0 0.0
        %2994 = vmatprep.subr.mxu0 0.0
        %2995 = vmatpush1.xpose.msra.mxu0 0.0
        %2996 = vmatprep.subr.mxu0 0.0
        %2997 = vmatpush1.xpose.msra.mxu0 0.0
        %2998 = vmatprep.subr.mxu0 0.0
        %2999 = vmatpush1.xpose.msra.mxu0 0.0
        %3000 = vmatprep.subr.mxu0 0.0
        %3001 = vmatpush1.xpose.msra.mxu0 0.0
        %3002 = vmatprep.subr.mxu0 0.0
        %3003 = vmatpush1.xpose.msra.mxu0 0.0
        %3004 = vmatprep.subr.mxu0 0.0
        %3005 = vmatpush1.xpose.msra.mxu0 0.0
        %3006 = vmatprep.subr.mxu0 0.0
        %3007 = vmatpush1.xpose.msra.mxu0 0.0
        %3008 = vmatprep.subr.mxu0 0.0
        %3009 = vmatpush1.xpose.msra.mxu0 0.0
        %3010 = vmatprep.subr.mxu0 0.0
        %3011 = vmatpush1.xpose.msra.mxu0 0.0
        %3012 = vmatprep.subr.mxu0 0.0
        %3013 = vmatpush1.xpose.msra.mxu0 0.0
        %3014 = vmatprep.subr.mxu0 0.0
        %3015 = vmatpush1.xpose.msra.mxu0 0.0
        %3016 = vmatprep.subr.mxu0 0.0
        %3017 = vmatpush1.xpose.msra.mxu0 0.0
        %3018 = vmatprep.subr.mxu0 0.0
        %3019 = vmatpush1.xpose.msra.mxu0 0.0
        %3020 = vmatprep.subr.mxu0 0.0
        %3021 = vmatpush1.xpose.msra.mxu0 0.0
        %3022 = vmatprep.subr.mxu0 0.0
        %3023 = vmatpush1.xpose.msra.mxu0 0.0
        %3024 = vmatprep.mubr.f32.mxu0 0.0
        %3025 = vmatmul.mubr.f32.gmra.mrb[0].mxu0 %v2956
        %v3026 = vpop.f32.mrb[0].mxu0
        %v3027 = vadd.f32 0.0, %v3026
        %v3028 = vpop.f32.mrb[0].mxu0
        %3029 = vdwg.mxu0
        %v3030 = vmul.f32 %v3027, 0.35355338
        %v3031 = vadd.f32 %v3030, %v978
        %v3032 = vsel %vm1082, %v3031, -inf
        %3033 = vmax.xlane.f32.xlu0 %v3032
        %v3034 = vpop.xlane.xlu0 %3033
        %v3035 = vsub.f32 %v3031, %v3034
        %v3036 = vmul.f32 %v3035, 1.442695
        %v3037 = vpow.pop %v3036
        %v3038 = vsel %vm1082, %v3037, 0.0
        %3039 = vadd.xlane.f32.xlu0 %v3038
        %v3040 = vpop.xlane.xlu0 %3039
        %v3041 = vrcp.pop %v3040
        %v3042 = vmul.f32 %v3037, %v3041
        %3043 = vrot.lane.b32.xlu0 %v2226, 72
        %v3044 = vpop.permute.xlu0 %3043
        %v3047 = vsel %vm1082, %v3042, 0
        %3049 = vmatprep.subr.mxu0 0.0
        %3050 = vmatpush1.msra.mxu0 %v3044
        %3051 = vmatprep.subr.mxu0 0.0
        %3052 = vmatpush1.msra.mxu0 0.0
        %3053 = vmatprep.subr.mxu0 0.0
        %3054 = vmatpush1.msra.mxu0 0.0
        %3055 = vmatprep.subr.mxu0 0.0
        %3056 = vmatpush1.msra.mxu0 0.0
        %3057 = vmatprep.subr.mxu0 0.0
        %3058 = vmatpush1.msra.mxu0 0.0
        %3059 = vmatprep.subr.mxu0 0.0
        %3060 = vmatpush1.msra.mxu0 0.0
        %3061 = vmatprep.subr.mxu0 0.0
        %3062 = vmatpush1.msra.mxu0 0.0
        %3063 = vmatprep.subr.mxu0 0.0
        %3064 = vmatpush1.msra.mxu0 0.0
        %3065 = vmatprep.subr.mxu0 0.0
        %3066 = vmatpush1.msra.mxu0 0.0
        %3067 = vmatprep.subr.mxu0 0.0
        %3068 = vmatpush1.msra.mxu0 0.0
        %3069 = vmatprep.subr.mxu0 0.0
        %3070 = vmatpush1.msra.mxu0 0.0
        %3071 = vmatprep.subr.mxu0 0.0
        %3072 = vmatpush1.msra.mxu0 0.0
        %3073 = vmatprep.subr.mxu0 0.0
        %3074 = vmatpush1.msra.mxu0 0.0
        %3075 = vmatprep.subr.mxu0 0.0
        %3076 = vmatpush1.msra.mxu0 0.0
        %3077 = vmatprep.subr.mxu0 0.0
        %3078 = vmatpush1.msra.mxu0 0.0
        %3079 = vmatprep.subr.mxu0 0.0
        %3080 = vmatpush1.msra.mxu0 0.0
        %3081 = vmatprep.subr.mxu0 0.0
        %3082 = vmatpush1.msra.mxu0 0.0
        %3083 = vmatprep.subr.mxu0 0.0
        %3084 = vmatpush1.msra.mxu0 0.0
        %3085 = vmatprep.subr.mxu0 0.0
        %3086 = vmatpush1.msra.mxu0 0.0
        %3087 = vmatprep.subr.mxu0 0.0
        %3088 = vmatpush1.msra.mxu0 0.0
        %3089 = vmatprep.subr.mxu0 0.0
        %3090 = vmatpush1.msra.mxu0 0.0
        %3091 = vmatprep.subr.mxu0 0.0
        %3092 = vmatpush1.msra.mxu0 0.0
        %3093 = vmatprep.subr.mxu0 0.0
        %3094 = vmatpush1.msra.mxu0 0.0
        %3095 = vmatprep.subr.mxu0 0.0
        %3096 = vmatpush1.msra.mxu0 0.0
        %3097 = vmatprep.subr.mxu0 0.0
        %3098 = vmatpush1.msra.mxu0 0.0
        %3099 = vmatprep.subr.mxu0 0.0
        %3100 = vmatpush1.msra.mxu0 0.0
        %3101 = vmatprep.subr.mxu0 0.0
        %3102 = vmatpush1.msra.mxu0 0.0
        %3103 = vmatprep.subr.mxu0 0.0
        %3104 = vmatpush1.msra.mxu0 0.0
        %3105 = vmatprep.subr.mxu0 0.0
        %3106 = vmatpush1.msra.mxu0 0.0
        %3107 = vmatprep.subr.mxu0 0.0
        %3108 = vmatpush1.msra.mxu0 0.0
        %3109 = vmatprep.subr.mxu0 0.0
        %3110 = vmatpush1.msra.mxu0 0.0
        %3111 = vmatprep.subr.mxu0 0.0
        %3112 = vmatpush1.msra.mxu0 0.0
        %3113 = vmatprep.mubr.f32.mxu0 0.0
        %3114 = vmatmul.mubr.f32.gmra.mrb[0].mxu0 %v3047
        %v3115 = vpop.f32.mrb[0].mxu0
        %v3116 = vadd.f32 0.0, %v3115
        %v3117 = vpop.f32.mrb[0].mxu0
        %3118 = vdwg.mxu0
        %v3120 = vsel %vm1082, %v3116, 0
        %3122 = vmatprep.subr.mxu0 0.0
        %3123 = vmatpush1.msra.mxu0 %v2232
        %3124 = vmatprep.subr.mxu0 0.0
        %3125 = vmatpush1.msra.mxu0 0.0
        %3126 = vmatprep.subr.mxu0 0.0
        %3127 = vmatpush1.msra.mxu0 0.0
        %3128 = vmatprep.subr.mxu0 0.0
        %3129 = vmatpush1.msra.mxu0 0.0
        %3130 = vmatprep.subr.mxu0 0.0
        %3131 = vmatpush1.msra.mxu0 0.0
        %3132 = vmatprep.subr.mxu0 0.0
        %3133 = vmatpush1.msra.mxu0 0.0
        %3134 = vmatprep.subr.mxu0 0.0
        %3135 = vmatpush1.msra.mxu0 0.0
        %3136 = vmatprep.subr.mxu0 0.0
        %3137 = vmatpush1.msra.mxu0 0.0
        %3138 = vmatprep.subr.mxu0 0.0
        %3139 = vmatpush1.msra.mxu0 0.0
        %3140 = vmatprep.subr.mxu0 0.0
        %3141 = vmatpush1.msra.mxu0 0.0
        %3142 = vmatprep.subr.mxu0 0.0
        %3143 = vmatpush1.msra.mxu0 0.0
        %3144 = vmatprep.subr.mxu0 0.0
        %3145 = vmatpush1.msra.mxu0 0.0
        %3146 = vmatprep.subr.mxu0 0.0
        %3147 = vmatpush1.msra.mxu0 0.0
        %3148 = vmatprep.subr.mxu0 0.0
        %3149 = vmatpush1.msra.mxu0 0.0
        %3150 = vmatprep.subr.mxu0 0.0
        %3151 = vmatpush1.msra.mxu0 0.0
        %3152 = vmatprep.subr.mxu0 0.0
        %3153 = vmatpush1.msra.mxu0 0.0
        %3154 = vmatprep.subr.mxu0 0.0
        %3155 = vmatpush1.msra.mxu0 0.0
        %3156 = vmatprep.subr.mxu0 0.0
        %3157 = vmatpush1.msra.mxu0 0.0
        %3158 = vmatprep.subr.mxu0 0.0
        %3159 = vmatpush1.msra.mxu0 0.0
        %3160 = vmatprep.subr.mxu0 0.0
        %3161 = vmatpush1.msra.mxu0 0.0
        %3162 = vmatprep.subr.mxu0 0.0
        %3163 = vmatpush1.msra.mxu0 0.0
        %3164 = vmatprep.subr.mxu0 0.0
        %3165 = vmatpush1.msra.mxu0 0.0
        %3166 = vmatprep.subr.mxu0 0.0
        %3167 = vmatpush1.msra.mxu0 0.0
        %3168 = vmatprep.subr.mxu0 0.0
        %3169 = vmatpush1.msra.mxu0 0.0
        %3170 = vmatprep.subr.mxu0 0.0
        %3171 = vmatpush1.msra.mxu0 0.0
        %3172 = vmatprep.subr.mxu0 0.0
        %3173 = vmatpush1.msra.mxu0 0.0
        %3174 = vmatprep.subr.mxu0 0.0
        %3175 = vmatpush1.msra.mxu0 0.0
        %3176 = vmatprep.subr.mxu0 0.0
        %3177 = vmatpush1.msra.mxu0 0.0
        %3178 = vmatprep.subr.mxu0 0.0
        %3179 = vmatpush1.msra.mxu0 0.0
        %3180 = vmatprep.subr.mxu0 0.0
        %3181 = vmatpush1.msra.mxu0 0.0
        %3182 = vmatprep.subr.mxu0 0.0
        %3183 = vmatpush1.msra.mxu0 0.0
        %3184 = vmatprep.subr.mxu0 0.0
        %3185 = vmatpush1.msra.mxu0 0.0
        %3186 = vmatprep.mubr.f32.mxu0 0.0
        %3187 = vmatmul.mubr.f32.gmra.mrb[0].mxu0 %v3120
        %v3188 = vpop.f32.mrb[0].mxu0
        %v3189 = vadd.f32 0.0, %v3188
        %v3190 = vpop.f32.mrb[0].mxu0
        %3191 = vdwg.mxu0
        %v3192 = vadd.f32 %v2951, %v3189
        %v3193 = vadd.f32 %v2049, %v3192
        %v3194 = vld [vmem:[%s951] sm:$0x1]
        %v3196 = vlaneseq
        %v3197 = vshrl.u32 %v3196, 7
        %v3198 = vsub.s32 0, %v3197
        %v3199 = vrot.slane %v3194, %v3198
        %v3201 = vadd.f32 %v3193, %v3199
        %s3202 = sadd.s32 %s979, 2
        %s3203 = sld [smem:[#allocation4 + %s3202]]
        %v3204 = vmul.f32 %v3201, %v3201
        %v3205 = vsel %vm982, %v3204, 0.0
        %3206 = vadd.xlane.f32.xlu0 %v3205
        %v3207 = vpop.xlane.xlu0 %3206
        %v3208 = vmax.f32 %v3207, 1e-10
        %v3209 = vrsqrt.pop %v3208
        %v3210 = vstv %s3203
        %v3211 = vmul.f32 %v3210, %v3209
        %v3212 = vmul.f32 %v3201, %v3211
        %v3213 = vld [vmem:[%s956] sm:$0xff]
        %v3214 = vld [vmem:[%s956 + $0x8] sm:$0xff]
        %v3215 = vld [vmem:[%s956 + $0x10] sm:$0xff]
        %v3216 = vld [vmem:[%s956 + $0x18] sm:$0xff]
        %v3217 = vld [vmem:[%s959] sm:$0x1]
        %v3219 = vlaneseq
        %v3220 = vshrl.u32 %v3219, 7
        %v3221 = vsub.s32 0, %v3220
        %v3222 = vrot.slane %v3217, %v3221
        %v3225 = vsel %vm982, %v3212, 0
        %3227 = vmatprep.subr.mxu0 0.0
        %3228 = vmatpush1.msra.mxu0 %v3213
        %3229 = vmatprep.subr.mxu0 0.0
        %3230 = vmatpush1.msra.mxu0 %v3214
        %3231 = vmatprep.subr.mxu0 0.0
        %3232 = vmatpush1.msra.mxu0 %v3215
        %3233 = vmatprep.subr.mxu0 0.0
        %3234 = vmatpush1.msra.mxu0 %v3216
        %3235 = vmatprep.subr.mxu0 0.0
        %3236 = vmatpush1.msra.mxu0 0.0
        %3237 = vmatprep.subr.mxu0 0.0
        %3238 = vmatpush1.msra.mxu0 0.0
        %3239 = vmatprep.subr.mxu0 0.0
        %3240 = vmatpush1.msra.mxu0 0.0
        %3241 = vmatprep.subr.mxu0 0.0
        %3242 = vmatpush1.msra.mxu0 0.0
        %3243 = vmatprep.subr.mxu0 0.0
        %3244 = vmatpush1.msra.mxu0 0.0
        %3245 = vmatprep.subr.mxu0 0.0
        %3246 = vmatpush1.msra.mxu0 0.0
        %3247 = vmatprep.subr.mxu0 0.0
        %3248 = vmatpush1.msra.mxu0 0.0
        %3249 = vmatprep.subr.mxu0 0.0
        %3250 = vmatpush1.msra.mxu0 0.0
        %3251 = vmatprep.subr.mxu0 0.0
        %3252 = vmatpush1.msra.mxu0 0.0
        %3253 = vmatprep.subr.mxu0 0.0
        %3254 = vmatpush1.msra.mxu0 0.0
        %3255 = vmatprep.subr.mxu0 0.0
        %3256 = vmatpush1.msra.mxu0 0.0
        %3257 = vmatprep.subr.mxu0 0.0
        %3258 = vmatpush1.msra.mxu0 0.0
        %3259 = vmatprep.subr.mxu0 0.0
        %3260 = vmatpush1.msra.mxu0 0.0
        %3261 = vmatprep.subr.mxu0 0.0
        %3262 = vmatpush1.msra.mxu0 0.0
        %3263 = vmatprep.subr.mxu0 0.0
        %3264 = vmatpush1.msra.mxu0 0.0
        %3265 = vmatprep.subr.mxu0 0.0
        %3266 = vmatpush1.msra.mxu0 0.0
        %3267 = vmatprep.subr.mxu0 0.0
        %3268 = vmatpush1.msra.mxu0 0.0
        %3269 = vmatprep.subr.mxu0 0.0
        %3270 = vmatpush1.msra.mxu0 0.0
        %3271 = vmatprep.subr.mxu0 0.0
        %3272 = vmatpush1.msra.mxu0 0.0
        %3273 = vmatprep.subr.mxu0 0.0
        %3274 = vmatpush1.msra.mxu0 0.0
        %3275 = vmatprep.subr.mxu0 0.0
        %3276 = vmatpush1.msra.mxu0 0.0
        %3277 = vmatprep.subr.mxu0 0.0
        %3278 = vmatpush1.msra.mxu0 0.0
        %3279 = vmatprep.subr.mxu0 0.0
        %3280 = vmatpush1.msra.mxu0 0.0
        %3281 = vmatprep.subr.mxu0 0.0
        %3282 = vmatpush1.msra.mxu0 0.0
        %3283 = vmatprep.subr.mxu0 0.0
        %3284 = vmatpush1.msra.mxu0 0.0
        %3285 = vmatprep.subr.mxu0 0.0
        %3286 = vmatpush1.msra.mxu0 0.0
        %3287 = vmatprep.subr.mxu0 0.0
        %3288 = vmatpush1.msra.mxu0 0.0
        %3289 = vmatprep.subr.mxu0 0.0
        %3290 = vmatpush1.msra.mxu0 0.0
        %3291 = vmatprep.mubr.f32.mxu0 0.0
        %3292 = vmatmul.mubr.f32.gmra.mrb[0].mxu0 %v3225
        %v3293 = vpop.f32.mrb[0].mxu0
        %v3294 = vadd.f32 %v3222, %v3293
        %v3295 = vpop.f32.mrb[0].mxu0
        %3296 = vdwg.mxu0
        %v3297 = vmax.f32 %v3294, 0.0
        %v3298 = vld [vmem:[%s964] sm:$0xff]
        %v3299 = vld [vmem:[%s964 + $0x8] sm:$0xff]
        %v3300 = vld [vmem:[%s964 + $0x10] sm:$0xff]
        %v3301 = vld [vmem:[%s964 + $0x18] sm:$0xff]
        %v3302 = vld [vmem:[%s964 + $0x20] sm:$0xff]
        %v3303 = vld [vmem:[%s964 + $0x28] sm:$0xff]
        %v3304 = vld [vmem:[%s964 + $0x30] sm:$0xff]
        %v3305 = vld [vmem:[%s964 + $0x38] sm:$0xff]
        %vm3306 = vcmask 523264
        %v3308 = vsel %vm3306, %v3297, 0
        %3310 = vmatprep.subr.mxu0 0.0
        %3311 = vmatpush1.msra.mxu0 %v3298
        %3312 = vmatprep.subr.mxu0 0.0
        %3313 = vmatpush1.msra.mxu0 %v3299
        %3314 = vmatprep.subr.mxu0 0.0
        %3315 = vmatpush1.msra.mxu0 %v3300
        %3316 = vmatprep.subr.mxu0 0.0
        %3317 = vmatpush1.msra.mxu0 %v3301
        %3318 = vmatprep.subr.mxu0 0.0
        %3319 = vmatpush1.msra.mxu0 %v3302
        %3320 = vmatprep.subr.mxu0 0.0
        %3321 = vmatpush1.msra.mxu0 %v3303
        %3322 = vmatprep.subr.mxu0 0.0
        %3323 = vmatpush1.msra.mxu0 %v3304
        %3324 = vmatprep.subr.mxu0 0.0
        %3325 = vmatpush1.msra.mxu0 %v3305
        %3326 = vmatprep.subr.mxu0 0.0
        %3327 = vmatpush1.msra.mxu0 0.0
        %3328 = vmatprep.subr.mxu0 0.0
        %3329 = vmatpush1.msra.mxu0 0.0
        %3330 = vmatprep.subr.mxu0 0.0
        %3331 = vmatpush1.msra.mxu0 0.0
        %3332 = vmatprep.subr.mxu0 0.0
        %3333 = vmatpush1.msra.mxu0 0.0
        %3334 = vmatprep.subr.mxu0 0.0
        %3335 = vmatpush1.msra.mxu0 0.0
        %3336 = vmatprep.subr.mxu0 0.0
        %3337 = vmatpush1.msra.mxu0 0.0
        %3338 = vmatprep.subr.mxu0 0.0
        %3339 = vmatpush1.msra.mxu0 0.0
        %3340 = vmatprep.subr.mxu0 0.0
        %3341 = vmatpush1.msra.mxu0 0.0
        %3342 = vmatprep.subr.mxu0 0.0
        %3343 = vmatpush1.msra.mxu0 0.0
        %3344 = vmatprep.subr.mxu0 0.0
        %3345 = vmatpush1.msra.mxu0 0.0
        %3346 = vmatprep.subr.mxu0 0.0
        %3347 = vmatpush1.msra.mxu0 0.0
        %3348 = vmatprep.subr.mxu0 0.0
        %3349 = vmatpush1.msra.mxu0 0.0
        %3350 = vmatprep.subr.mxu0 0.0
        %3351 = vmatpush1.msra.mxu0 0.0
        %3352 = vmatprep.subr.mxu0 0.0
        %3353 = vmatpush1.msra.mxu0 0.0
        %3354 = vmatprep.subr.mxu0 0.0
        %3355 = vmatpush1.msra.mxu0 0.0
        %3356 = vmatprep.subr.mxu0 0.0
        %3357 = vmatpush1.msra.mxu0 0.0
        %3358 = vmatprep.subr.mxu0 0.0
        %3359 = vmatpush1.msra.mxu0 0.0
        %3360 = vmatprep.subr.mxu0 0.0
        %3361 = vmatpush1.msra.mxu0 0.0
        %3362 = vmatprep.subr.mxu0 0.0
        %3363 = vmatpush1.msra.mxu0 0.0
        %3364 = vmatprep.subr.mxu0 0.0
        %3365 = vmatpush1.msra.mxu0 0.0
        %3366 = vmatprep.subr.mxu0 0.0
        %3367 = vmatpush1.msra.mxu0 0.0
        %3368 = vmatprep.subr.mxu0 0.0
        %3369 = vmatpush1.msra.mxu0 0.0
        %3370 = vmatprep.subr.mxu0 0.0
        %3371 = vmatpush1.msra.mxu0 0.0
        %3372 = vmatprep.subr.mxu0 0.0
        %3373 = vmatpush1.msra.mxu0 0.0
        %3374 = vmatprep.mubr.f32.mxu0 0.0
        %3375 = vmatmul.mubr.f32.gmra.mrb[0].mxu0 %v3308
        %v3376 = vpop.f32.mrb[0].mxu0
        %v3377 = vadd.f32 0.0, %v3376
        %v3378 = vpop.f32.mrb[0].mxu0
        %3379 = vdwg.mxu0
        %v3380 = vadd.f32 %v3201, %v3377
        %v3381 = vld [vmem:[%s967] sm:$0x1]
        %v3383 = vlaneseq
        %v3384 = vshrl.u32 %v3383, 7
        %v3385 = vsub.s32 0, %v3384
        %v3386 = vrot.slane %v3381, %v3385
        %v3388 = vadd.f32 %v3380, %v3386
        %3389 = vst.msk [vmem:[#allocation2] sm:$0xff] %vm982, %v3388
        %p3390 = scmp.eq.s32.totalorder %s42, 1
        // Predicated region
        $region113: #{model_forward.3} parent=103 // pred_check
          %p3391 = pneg %p3390
        $region114: #{model_forward.3} parent=103 // pred_check_branch
          %3393 = sbr.rel (%p3391) target = $region116
        $region115: #{model_forward.3} parent=103 // pred_region
          %s3394 = sld [smem:[#allocation3]]
          %v3395 = vmul.f32 %v3388, %v3388
          %v3396 = vsel %vm982, %v3395, 0.0
          %3397 = vadd.xlane.f32.xlu0 %v3396
          %v3398 = vpop.xlane.xlu0 %3397
          %v3399 = vmax.f32 %v3398, 1e-10
          %v3400 = vrsqrt.pop %v3399
          %v3401 = vstv %s3394
          %v3402 = vmul.f32 %v3401, %v3400
          %v3403 = vmul.f32 %v3388, %v3402
          %v3404 = vld [vmem:[%s20] sm:$0xff]
          %v3405 = vld [vmem:[%s20 + $0x8] sm:$0xff]
          %v3406 = vld [vmem:[%s20 + $0x10] sm:$0xff]
          %v3407 = vld [vmem:[%s20 + $0x18] sm:$0xff]
          %v3408 = vld [vmem:[%s20 + $0x20] sm:$0xff]
          %v3409 = vld [vmem:[%s20 + $0x28] sm:$0xff]
          %v3410 = vld [vmem:[%s20 + $0x30] sm:$0xff]
          %v3411 = vld [vmem:[%s20 + $0x38] sm:$0xff]
          %v3412 = vld [vmem:[%s20 + $0x40] sm:$0xff]
          %v3413 = vld [vmem:[%s20 + $0x48] sm:$0xff]
          %v3414 = vld [vmem:[%s20 + $0x50] sm:$0xff]
          %v3415 = vld [vmem:[%s20 + $0x58] sm:$0xff]
          %v3416 = vld [vmem:[%s20 + $0x60] sm:$0xff]
          %v3417 = vld [vmem:[%s20 + $0x68] sm:$0xff]
          %v3418 = vld [vmem:[%s20 + $0x70] sm:$0xff]
          %v3419 = vld [vmem:[%s20 + $0x78] sm:$0xff]
          %v3421 = vsel %vm982, %v3403, 0
          %v3424 = vsel %vm982, %v3404, 0
          %v3427 = vsel %vm982, %v3405, 0
          %v3430 = vsel %vm982, %v3406, 0
          %v3433 = vsel %vm982, %v3407, 0
          %v3436 = vsel %vm982, %v3408, 0
          %v3439 = vsel %vm982, %v3409, 0
          %v3442 = vsel %vm982, %v3410, 0
          %v3445 = vsel %vm982, %v3411, 0
          %v3448 = vsel %vm982, %v3412, 0
          %v3451 = vsel %vm982, %v3413, 0
          %v3454 = vsel %vm982, %v3414, 0
          %v3457 = vsel %vm982, %v3415, 0
          %v3460 = vsel %vm982, %v3416, 0
          %v3463 = vsel %vm982, %v3417, 0
          %v3466 = vsel %vm982, %v3418, 0
          %v3469 = vsel %vm982, %v3419, 0
          %3471 = vmatprep.subr.mxu0 0.0
          %3472 = vmatpush1.xpose.msra.mxu0 %v3424
          %3473 = vmatprep.subr.mxu0 0.0
          %3474 = vmatpush1.xpose.msra.mxu0 %v3427
          %3475 = vmatprep.subr.mxu0 0.0
          %3476 = vmatpush1.xpose.msra.mxu0 %v3430
          %3477 = vmatprep.subr.mxu0 0.0
          %3478 = vmatpush1.xpose.msra.mxu0 %v3433
          %3479 = vmatprep.subr.mxu0 0.0
          %3480 = vmatpush1.xpose.msra.mxu0 %v3436
          %3481 = vmatprep.subr.mxu0 0.0
          %3482 = vmatpush1.xpose.msra.mxu0 %v3439
          %3483 = vmatprep.subr.mxu0 0.0
          %3484 = vmatpush1.xpose.msra.mxu0 %v3442
          %3485 = vmatprep.subr.mxu0 0.0
          %3486 = vmatpush1.xpose.msra.mxu0 %v3445
          %3487 = vmatprep.subr.mxu0 0.0
          %3488 = vmatpush1.xpose.msra.mxu0 %v3448
          %3489 = vmatprep.subr.mxu0 0.0
          %3490 = vmatpush1.xpose.msra.mxu0 %v3451
          %3491 = vmatprep.subr.mxu0 0.0
          %3492 = vmatpush1.xpose.msra.mxu0 %v3454
          %3493 = vmatprep.subr.mxu0 0.0
          %3494 = vmatpush1.xpose.msra.mxu0 %v3457
          %3495 = vmatprep.subr.mxu0 0.0
          %3496 = vmatpush1.xpose.msra.mxu0 %v3460
          %3497 = vmatprep.subr.mxu0 0.0
          %3498 = vmatpush1.xpose.msra.mxu0 %v3463
          %3499 = vmatprep.subr.mxu0 0.0
          %3500 = vmatpush1.xpose.msra.mxu0 %v3466
          %3501 = vmatprep.subr.mxu0 0.0
          %3502 = vmatpush1.xpose.msra.mxu0 %v3469
          %3503 = vmatprep.subr.mxu0 0.0
          %3504 = vmatpush1.xpose.msra.mxu0 0.0
          %3505 = vmatprep.subr.mxu0 0.0
          %3506 = vmatpush1.xpose.msra.mxu0 0.0
          %3507 = vmatprep.subr.mxu0 0.0
          %3508 = vmatpush1.xpose.msra.mxu0 0.0
          %3509 = vmatprep.subr.mxu0 0.0
          %3510 = vmatpush1.xpose.msra.mxu0 0.0
          %3511 = vmatprep.subr.mxu0 0.0
          %3512 = vmatpush1.xpose.msra.mxu0 0.0
          %3513 = vmatprep.subr.mxu0 0.0
          %3514 = vmatpush1.xpose.msra.mxu0 0.0
          %3515 = vmatprep.subr.mxu0 0.0
          %3516 = vmatpush1.xpose.msra.mxu0 0.0
          %3517 = vmatprep.subr.mxu0 0.0
          %3518 = vmatpush1.xpose.msra.mxu0 0.0
          %3519 = vmatprep.subr.mxu0 0.0
          %3520 = vmatpush1.xpose.msra.mxu0 0.0
          %3521 = vmatprep.subr.mxu0 0.0
          %3522 = vmatpush1.xpose.msra.mxu0 0.0
          %3523 = vmatprep.subr.mxu0 0.0
          %3524 = vmatpush1.xpose.msra.mxu0 0.0
          %3525 = vmatprep.subr.mxu0 0.0
          %3526 = vmatpush1.xpose.msra.mxu0 0.0
          %3527 = vmatprep.subr.mxu0 0.0
          %3528 = vmatpush1.xpose.msra.mxu0 0.0
          %3529 = vmatprep.subr.mxu0 0.0
          %3530 = vmatpush1.xpose.msra.mxu0 0.0
          %3531 = vmatprep.subr.mxu0 0.0
          %3532 = vmatpush1.xpose.msra.mxu0 0.0
          %3533 = vmatprep.subr.mxu0 0.0
          %3534 = vmatpush1.xpose.msra.mxu0 0.0
          %3535 = vmatprep.mubr.f32.mxu0 0.0
          %3536 = vmatmul.mubr.f32.gmra.mrb[0].mxu0 %v3421
          %v3537 = vpop.f32.mrb[0].mxu0
          %v3538 = vadd.f32 0.0, %v3537
          %v3539 = vpop.f32.mrb[0].mxu0
          %3540 = vdwg.mxu0
          %3541 = vst [vmem:[%s895] sm:$0xff] %v3538
        $region116: #{model_forward.3} parent=103 // pred_fallthru
          _
        %s3542 = sand.u32 %s588, 1
        %s3543 = scalar_lea.sflag [#allocation5], %s3542
        %s3544 = sand.u32 %s588, 1
        %s3545 = smul.addr %s3544, 8
        %s3546 = scalar_lea.vmem [#allocation7], %s3545
        // Predicated region
        $region117: #{model_forward.3} parent=103 // pred_check
          %p3547 = pneg %p598
        $region118: #{model_forward.3} parent=103 // pred_check_branch
          %3549 = sbr.rel (%p3547) target = $region120
        $region119: #{model_forward.3} parent=103 // pred_region
          %s3551 = ssub.s32 128, 128
          %3552 = vsyncadd %s3543, %s3551
          %s3553 = smul.addr %s41, 128
          %s3554 = scalar_lea.hbm %s21, %s3553
          %s3556 = sshll.u32 %s3546, 4
          %s3557 = int_to_ptr.vmem [resolvable:$true] %s3556
          %3559 = dma.vmem_to_hbm [thread:$0]  %s3557, 128, %s3554, %s3543
        $region120: #{model_forward.3} parent=103 // pred_fallthru
          _
      $region104: #{model_forward.3} parent=5 // pred_fallthru
        _
      %p3560 = scmp.le.s32.totalorder 2, %s32
      // Predicated region
      $region121: #{model_forward.3} parent=5 // pred_check
        %p3561 = pneg %p3560
      $region122: #{model_forward.3} parent=5 // pred_check_branch
        %3563 = sbr.rel (%p3561) target = $region124
      $region123: #{model_forward.3} parent=5 // pred_region
        %s3564 = ssub.s32 %s32, 2
        // Predicated region
        $region125: #{model_forward.3} parent=123 // pred_check
          %p3565 = pneg %p604
        $region126: #{model_forward.3} parent=123 // pred_check_branch
          %3567 = sbr.rel (%p3565) target = $region128
        $region127: #{model_forward.3} parent=123 // pred_region
          %s3568 = sand.u32 %s589, 1
          %s3569 = scalar_lea.sflag [#allocation5], %s3568
          %s3570 = sand.u32 %s589, 1
          %s3571 = smul.addr %s3570, 8
          %s3572 = scalar_lea.vmem [#allocation7], %s3571
          %3573 = dma.done %s3569, 128
        $region128: #{model_forward.3} parent=123 // pred_fallthru
          _
      $region124: #{model_forward.3} parent=5 // pred_fallthru
        _
    $region6: #{model_forward.3} parent=1 // loop_footer
      %s36 = sadd.s32 1, %s32
    $region7: #{model_forward.3} parent=1 // loop_footer_branch
      %31 = sbr.rel target = $region3
    $region8: #{model_forward.3} parent=1 // loop_exit
      _
    %3574 = vsyncpa [#allocation5], 1
    %s3575 = scalar_lea.sflag [#allocation5], 1
    %3576 = vsyncpa %s3575, 1
    %3577 = vsyncpa [#allocation6], 1
    %s3578 = scalar_lea.sflag [#allocation6], 1
    %3579 = vsyncpa %s3578, 1

</llo_original>
